<compile_context>
chip_gen: v6e
topology: v6e:2x2x1
jax: 0.10.0
libtpu: 0.0.40
codegen_flags: <defaults>
</compile_context>

<pallas_src>
import jax
import jax.numpy as jnp
from jax.experimental import pallas as pl
from jax.experimental.pallas import tpu as pltpu


def _round_up(x, m):
    return (x + m - 1) // m * m


# ----------------------------- Pallas kernels ------------------------------

def _onn_layer_kernel(p_ref, w_ref, b_ref, o_ref):
    """Fused Self-ONN layer for one image.

    p_ref: (4, P, K)   im2col patches grouped by pooling-window corner,
                       P = Hp*Wp pooled pixels, K = 9*Cin, cols ordered (ky,kx,ci).
    w_ref: (3*K, Cout) bf16, rows ordered (power, ky, kx, ci).
    b_ref: (1, Cout)   f32.
    o_ref: (P, Cout)   f32 pooled activations, rows ordered (hp, wp).
    """
    w = w_ref[...]

    def corner_preact(j):
        p = p_ref[j]                               # (P, K) f32
        p2 = p * p
        p3 = p2 * p
        # Fuse the poly powers into one contraction dim -> single MXU dot.
        pw = jnp.concatenate([p, p2, p3], axis=-1).astype(jnp.bfloat16)
        return jnp.dot(pw, w, preferred_element_type=jnp.float32)

    acc = corner_preact(0)
    for j in range(1, 4):                          # 2x2 max-pool over corners
        acc = jnp.maximum(acc, corner_preact(j))
    # tanh is monotone and bias is shared, so pool(tanh(z+b)) == tanh(pool(z)+b).
    o_ref[...] = jnp.tanh(acc + b_ref[...])


def _fc_head_kernel(x_ref, w1_ref, b1_ref, w2_ref, b2_ref, o_ref):
    """Fused Linear(1600,640)+tanh+Linear(640,10)+softmax for a tile of rows."""
    h = jnp.dot(x_ref[...].astype(jnp.bfloat16), w1_ref[...],
                preferred_element_type=jnp.float32)
    h = jnp.tanh(h + b1_ref[...])
    z = jnp.dot(h.astype(jnp.bfloat16), w2_ref[...],
                preferred_element_type=jnp.float32)
    z = z + b2_ref[...]
    z = z - jnp.max(z, axis=-1, keepdims=True)
    e = jnp.exp(z)
    denom = jnp.sum(e, axis=-1, keepdims=True)
    o_ref[...] = e * pl.reciprocal(denom, approx=True)


# ----------------------------- pallas_call wrappers -------------------------

def onn_layer_call(patches, w_mat, bias):
    """patches: (N, 4, P, K) f32; w_mat: (3K, Cout) bf16; bias: (1, Cout) f32."""
    N, _, P, K = patches.shape
    K3, Cout = w_mat.shape
    return pl.pallas_call(
        _onn_layer_kernel,
        out_shape=jax.ShapeDtypeStruct((N, P, Cout), jnp.float32),
        grid=(N,),
        in_specs=[
            pl.BlockSpec((None, 4, P, K), lambda n: (n, 0, 0, 0)),
            pl.BlockSpec((K3, Cout), lambda n: (0, 0)),   # resident weights
            pl.BlockSpec((1, Cout), lambda n: (0, 0)),    # resident bias
        ],
        out_specs=pl.BlockSpec((None, P, Cout), lambda n: (n, 0, 0)),
        compiler_params=pltpu.CompilerParams(
            dimension_semantics=("parallel",)),
    )(patches, w_mat, bias)


def fc_head_call(x, w1, b1, w2, b2):
    """x: (N, 1600) f32 NHWC-flat; w1: (1600, 640) bf16; w2: (640, 10) bf16."""
    N, F = x.shape
    H1 = w1.shape[1]
    C = w2.shape[1]
    tm = min(128, _round_up(N, 8))
    n_pad = _round_up(N, tm)
    if n_pad != N:
        x = jnp.pad(x, ((0, n_pad - N), (0, 0)))
    out = pl.pallas_call(
        _fc_head_kernel,
        out_shape=jax.ShapeDtypeStruct((n_pad, C), jnp.float32),
        grid=(n_pad // tm,),
        in_specs=[
            pl.BlockSpec((tm, F), lambda i: (i, 0)),
            pl.BlockSpec((F, H1), lambda i: (0, 0)),      # resident fc1 weight
            pl.BlockSpec((1, H1), lambda i: (0, 0)),
            pl.BlockSpec((H1, C), lambda i: (0, 0)),      # resident fc2 weight
            pl.BlockSpec((1, C), lambda i: (0, 0)),
        ],
        out_specs=pl.BlockSpec((tm, C), lambda i: (i, 0)),
        compiler_params=pltpu.CompilerParams(
            dimension_semantics=("parallel",)),
    )(x, w1, b1, w2, b2)
    return out[:N]


# ----------------------------- model glue ----------------------------------

def _im2col_pooled(x_nhwc):
    """3x3 valid-conv patches, grouped by 2x2 max-pool window corner.

    Returns (N, 4, Hp*Wp, 9*C) plus (Hp, Wp).  Corner order (py, px); patch
    column order (ky, kx, ci).  Floor-mode pooling crop is implicit.
    """
    N, H, W, C = x_nhwc.shape
    Hc, Wc = H - 2, W - 2
    Hp, Wp = Hc // 2, Wc // 2
    corners = []
    for py in range(2):
        for px in range(2):
            taps = [x_nhwc[:, py + ky: py + ky + 2 * Hp: 2,
                           px + kx: px + kx + 2 * Wp: 2, :]
                    for ky in range(3) for kx in range(3)]
            corners.append(
                jnp.concatenate(taps, axis=-1).reshape(N, Hp * Wp, 9 * C))
    return jnp.stack(corners, axis=1), Hp, Wp


def self_onn_forward(x_nchw, params):
    x = jnp.transpose(x_nchw, (0, 2, 3, 1))                    # NCHW -> NHWC
    N = x.shape[0]

    p1, hp1, wp1 = _im2col_pooled(x)                           # (N, 4, 169, 9)
    y1 = onn_layer_call(p1, params["w1"], params["b1"])        # (N, 169, 32)
    y1 = y1.reshape(N, hp1, wp1, 32)                           # free (row-major)

    p2, hp2, wp2 = _im2col_pooled(y1)                          # (N, 4, 25, 288)
    y2 = onn_layer_call(p2, params["w2"], params["b2"])        # (N, 25, 64)

    feats = y2.reshape(N, hp2 * wp2 * 64)                      # (N, 1600) NHWC-flat
    return fc_head_call(feats, params["w_fc1"], params["b_fc1"],
                        params["w_fc2"], params["b_fc2"])      # (N, 10)


# ----------------------------- params --------------------------------------

def init_torch_params(key):
    """PyTorch-layout params with uniform(-1/sqrt(fan_in), +) init."""
    ks = jax.random.split(key, 8)

    def u(k, shape, fan_in):
        bound = float(fan_in) ** -0.5
        return jax.random.uniform(k, shape, jnp.float32, -bound, bound)

    return {
        "w_conv1": u(ks[0], (32, 1, 3, 3, 3), 1 * 27),    # Conv3d(1, 32, [3,3,3])
        "b_conv1": u(ks[1], (32,), 1 * 27),
        "w_conv2": u(ks[2], (64, 32, 3, 3, 3), 32 * 27),  # Conv3d(32, 64, [3,3,3])
        "b_conv2": u(ks[3], (64,), 32 * 27),
        "w_fc1":   u(ks[4], (640, 1600), 1600),           # Linear(1600, 640)
        "b_fc1":   u(ks[5], (640,), 1600),
        "w_fc2":   u(ks[6], (10, 640), 640),              # Linear(640, 10)
        "b_fc2":   u(ks[7], (10,), 640),
    }


def pack_params(p):
    """One-time layout conversion (hoisted out of the forward pass)."""
    def conv_mat(w):   # (Cout, Cin, poly, kH, kW) -> (poly*kH*kW*Cin, Cout) bf16
        cout = w.shape[0]
        return (jnp.transpose(w, (2, 3, 4, 1, 0))
                .reshape(-1, cout).astype(jnp.bfloat16))

    # Permute fc1 columns from NCHW-flat (c*25 + h*5 + w) to NHWC-flat
    # ((h*5 + w)*64 + c) so the activation is consumed without a transpose.
    w_fc1 = (jnp.transpose(p["w_fc1"].reshape(640, 64, 5, 5), (2, 3, 1, 0))
             .reshape(1600, 640).astype(jnp.bfloat16))
    return {
        "w1": conv_mat(p["w_conv1"]), "b1": p["b_conv1"].reshape(1, -1),
        "w2": conv_mat(p["w_conv2"]), "b2": p["b_conv2"].reshape(1, -1),
        "w_fc1": w_fc1,               "b_fc1": p["b_fc1"].reshape(1, -1),
        "w_fc2": jnp.transpose(p["w_fc2"]).astype(jnp.bfloat16),
        "b_fc2": p["b_fc2"].reshape(1, -1),
    }


if __name__ == "__main__":
    key = jax.random.PRNGKey(0)
    k_in, k_par = jax.random.split(key)
    # 28x28 spatial size is dictated by Linear1(1600 = 64*5*5, 640); batch 2.
    x = jax.random.normal(k_in, (2, 1, 28, 28), jnp.float32)
    params = pack_params(init_torch_params(k_par))

    fwd = jax.jit(self_onn_forward)
    out = fwd(x, params)
    jax.block_until_ready(out)

    assert out.shape == (2, 10), out.shape
    assert bool(jnp.all(jnp.isfinite(out)))
    print("KERNEL_OK")
</pallas_src>

<mosaic_0001>
module attributes {stable_mosaic.version = 11 : i64} {
  func.func @_onn_layer_kernel(%arg0: i32, %arg1: memref<1x4x169x9xf32, #tpu.memory_space<vmem>>, %arg2: memref<27x32xbf16, #tpu.memory_space<vmem>>, %arg3: memref<1x32xf32, #tpu.memory_space<vmem>>, %arg4: memref<1x169x32xf32, #tpu.memory_space<vmem>>) attributes {dimension_semantics = [#tpu.dimension_semantics<parallel>], iteration_bounds = array<i64: 2>, scalar_prefetch = 0 : i64, scratch_operands = 0 : i64, tpu.core_type = #tpu.core_type<tc>, window_params = [{transform_indices = @transform_0, window_bounds = array<i64: 1, 4, 169, 9>}, {pipeline_mode = #tpu.pipeline_mode<synchronous>, transform_indices = @transform_1, window_bounds = array<i64: 27, 32>}, {pipeline_mode = #tpu.pipeline_mode<synchronous>, transform_indices = @transform_2, window_bounds = array<i64: 1, 32>}, {transform_indices = @transform_3, window_bounds = array<i64: 1, 169, 32>}]} {
    %c0 = arith.constant 0 : index
    %c0_0 = arith.constant 0 : index
    %0 = vector.load %arg2[%c0, %c0_0] : memref<27x32xbf16, #tpu.memory_space<vmem>>, vector<27x32xbf16>
    %c0_1 = arith.constant 0 : index
    %c0_2 = arith.constant 0 : index
    %c0_3 = arith.constant 0 : index
    %c0_4 = arith.constant 0 : index
    %1 = vector.load %arg1[%c0_1, %c0_2, %c0_3, %c0_4] : memref<1x4x169x9xf32, #tpu.memory_space<vmem>>, vector<1x1x169x9xf32>
    %2 = vector.shape_cast %1 : vector<1x1x169x9xf32> to vector<169x9xf32>
    %3 = arith.mulf %2, %2 : vector<169x9xf32>
    %4 = arith.mulf %3, %2 : vector<169x9xf32>
    %5 = tpu.concatenate %2, %3, %4 in 1 : vector<169x9xf32>, vector<169x9xf32>, vector<169x9xf32> -> vector<169x27xf32>
    %6 = arith.truncf %5 : vector<169x27xf32> to vector<169x27xbf16>
    %cst = arith.constant dense<0.000000e+00> : vector<169x32xf32>
    %7 = tpu.matmul %6, %0, %cst {dimension_numbers = #tpu.dot_dimension_numbers<[1], [0], [0], [1], [0, 0, 1, 1], [], []>} : vector<169x27xbf16>, vector<27x32xbf16>, vector<169x32xf32> -> vector<169x32xf32>
    %c0_5 = arith.constant 0 : index
    %c1 = arith.constant 1 : index
    %c0_6 = arith.constant 0 : index
    %c0_7 = arith.constant 0 : index
    %8 = vector.load %arg1[%c0_5, %c1, %c0_6, %c0_7] : memref<1x4x169x9xf32, #tpu.memory_space<vmem>>, vector<1x1x169x9xf32>
    %9 = vector.shape_cast %8 : vector<1x1x169x9xf32> to vector<169x9xf32>
    %10 = arith.mulf %9, %9 : vector<169x9xf32>
    %11 = arith.mulf %10, %9 : vector<169x9xf32>
    %12 = tpu.concatenate %9, %10, %11 in 1 : vector<169x9xf32>, vector<169x9xf32>, vector<169x9xf32> -> vector<169x27xf32>
    %13 = arith.truncf %12 : vector<169x27xf32> to vector<169x27xbf16>
    %cst_8 = arith.constant dense<0.000000e+00> : vector<169x32xf32>
    %14 = tpu.matmul %13, %0, %cst_8 {dimension_numbers = #tpu.dot_dimension_numbers<[1], [0], [0], [1], [0, 0, 1, 1], [], []>} : vector<169x27xbf16>, vector<27x32xbf16>, vector<169x32xf32> -> vector<169x32xf32>
    %15 = arith.maximumf %7, %14 : vector<169x32xf32>
    %c0_9 = arith.constant 0 : index
    %c2 = arith.constant 2 : index
    %c0_10 = arith.constant 0 : index
    %c0_11 = arith.constant 0 : index
    %16 = vector.load %arg1[%c0_9, %c2, %c0_10, %c0_11] : memref<1x4x169x9xf32, #tpu.memory_space<vmem>>, vector<1x1x169x9xf32>
    %17 = vector.shape_cast %16 : vector<1x1x169x9xf32> to vector<169x9xf32>
    %18 = arith.mulf %17, %17 : vector<169x9xf32>
    %19 = arith.mulf %18, %17 : vector<169x9xf32>
    %20 = tpu.concatenate %17, %18, %19 in 1 : vector<169x9xf32>, vector<169x9xf32>, vector<169x9xf32> -> vector<169x27xf32>
    %21 = arith.truncf %20 : vector<169x27xf32> to vector<169x27xbf16>
    %cst_12 = arith.constant dense<0.000000e+00> : vector<169x32xf32>
    %22 = tpu.matmul %21, %0, %cst_12 {dimension_numbers = #tpu.dot_dimension_numbers<[1], [0], [0], [1], [0, 0, 1, 1], [], []>} : vector<169x27xbf16>, vector<27x32xbf16>, vector<169x32xf32> -> vector<169x32xf32>
    %23 = arith.maximumf %15, %22 : vector<169x32xf32>
    %c0_13 = arith.constant 0 : index
    %c3 = arith.constant 3 : index
    %c0_14 = arith.constant 0 : index
    %c0_15 = arith.constant 0 : index
    %24 = vector.load %arg1[%c0_13, %c3, %c0_14, %c0_15] : memref<1x4x169x9xf32, #tpu.memory_space<vmem>>, vector<1x1x169x9xf32>
    %25 = vector.shape_cast %24 : vector<1x1x169x9xf32> to vector<169x9xf32>
    %26 = arith.mulf %25, %25 : vector<169x9xf32>
    %27 = arith.mulf %26, %25 : vector<169x9xf32>
    %28 = tpu.concatenate %25, %26, %27 in 1 : vector<169x9xf32>, vector<169x9xf32>, vector<169x9xf32> -> vector<169x27xf32>
    %29 = arith.truncf %28 : vector<169x27xf32> to vector<169x27xbf16>
    %cst_16 = arith.constant dense<0.000000e+00> : vector<169x32xf32>
    %30 = tpu.matmul %29, %0, %cst_16 {dimension_numbers = #tpu.dot_dimension_numbers<[1], [0], [0], [1], [0, 0, 1, 1], [], []>} : vector<169x27xbf16>, vector<27x32xbf16>, vector<169x32xf32> -> vector<169x32xf32>
    %31 = arith.maximumf %23, %30 : vector<169x32xf32>
    %c0_17 = arith.constant 0 : index
    %c0_18 = arith.constant 0 : index
    %32 = vector.load %arg3[%c0_17, %c0_18] : memref<1x32xf32, #tpu.memory_space<vmem>>, vector<1x32xf32>
    %33 = vector.broadcast %32 : vector<1x32xf32> to vector<169x32xf32>
    %34 = arith.addf %31, %33 : vector<169x32xf32>
    %35 = math.tanh %34 : vector<169x32xf32>
    %c0_19 = arith.constant 0 : index
    %c0_20 = arith.constant 0 : index
    %c0_21 = arith.constant 0 : index
    %36 = vector.load %arg4[%c0_19, %c0_20, %c0_21] : memref<1x169x32xf32, #tpu.memory_space<vmem>>, vector<1x169x32xf32>
    %37 = vector.shape_cast %36 : vector<1x169x32xf32> to vector<169x32xf32>
    %38 = vector.shape_cast %35 : vector<169x32xf32> to vector<1x169x32xf32>
    tpu.vector_store %arg4[%c0_19, %c0_20, %c0_21], %38 {strides = array<i32>} : memref<1x169x32xf32, #tpu.memory_space<vmem>>, vector<1x169x32xf32>,
    return
  }
  func.func @transform_0(%arg0: i32) -> (i32, i32, i32, i32) {
    %c0_i32 = arith.constant 0 : i32
    %c0_i32_0 = arith.constant 0 : i32
    %c0_i32_1 = arith.constant 0 : i32
    %c0_i32_2 = arith.constant 0 : i32
    return %arg0, %c0_i32, %c0_i32_0, %c0_i32_1 : i32, i32, i32, i32
  }
  func.func @transform_1(%arg0: i32) -> (i32, i32) {
    %c0_i32 = arith.constant 0 : i32
    %c0_i32_0 = arith.constant 0 : i32
    %c0_i32_1 = arith.constant 0 : i32
    return %c0_i32, %c0_i32_0 : i32, i32
  }
  func.func @transform_2(%arg0: i32) -> (i32, i32) {
    %c0_i32 = arith.constant 0 : i32
    %c0_i32_0 = arith.constant 0 : i32
    %c0_i32_1 = arith.constant 0 : i32
    return %c0_i32, %c0_i32_0 : i32, i32
  }
  func.func @transform_3(%arg0: i32) -> (i32, i32, i32) {
    %c0_i32 = arith.constant 0 : i32
    %c0_i32_0 = arith.constant 0 : i32
    %c0_i32_1 = arith.constant 0 : i32
    return %arg0, %c0_i32, %c0_i32_0 : i32, i32, i32
  }
}

module attributes {stable_mosaic.version = 11 : i64} {
  func.func @_onn_layer_kernel(%arg0: i32, %arg1: memref<1x4x25x288xf32, #tpu.memory_space<vmem>>, %arg2: memref<864x64xbf16, #tpu.memory_space<vmem>>, %arg3: memref<1x64xf32, #tpu.memory_space<vmem>>, %arg4: memref<1x25x64xf32, #tpu.memory_space<vmem>>) attributes {dimension_semantics = [#tpu.dimension_semantics<parallel>], iteration_bounds = array<i64: 2>, scalar_prefetch = 0 : i64, scratch_operands = 0 : i64, tpu.core_type = #tpu.core_type<tc>, window_params = [{transform_indices = @transform_0, window_bounds = array<i64: 1, 4, 25, 288>}, {pipeline_mode = #tpu.pipeline_mode<synchronous>, transform_indices = @transform_1, window_bounds = array<i64: 864, 64>}, {pipeline_mode = #tpu.pipeline_mode<synchronous>, transform_indices = @transform_2, window_bounds = array<i64: 1, 64>}, {transform_indices = @transform_3, window_bounds = array<i64: 1, 25, 64>}]} {
    %c0 = arith.constant 0 : index
    %c0_0 = arith.constant 0 : index
    %0 = vector.load %arg2[%c0, %c0_0] : memref<864x64xbf16, #tpu.memory_space<vmem>>, vector<864x64xbf16>
    %c0_1 = arith.constant 0 : index
    %c0_2 = arith.constant 0 : index
    %c0_3 = arith.constant 0 : index
    %c0_4 = arith.constant 0 : index
    %1 = vector.load %arg1[%c0_1, %c0_2, %c0_3, %c0_4] : memref<1x4x25x288xf32, #tpu.memory_space<vmem>>, vector<1x1x25x288xf32>
    %2 = vector.shape_cast %1 : vector<1x1x25x288xf32> to vector<25x288xf32>
    %3 = arith.mulf %2, %2 : vector<25x288xf32>
    %4 = arith.mulf %3, %2 : vector<25x288xf32>
    %5 = tpu.concatenate %2, %3, %4 in 1 : vector<25x288xf32>, vector<25x288xf32>, vector<25x288xf32> -> vector<25x864xf32>
    %6 = arith.truncf %5 : vector<25x864xf32> to vector<25x864xbf16>
    %cst = arith.constant dense<0.000000e+00> : vector<25x64xf32>
    %7 = tpu.matmul %6, %0, %cst {dimension_numbers = #tpu.dot_dimension_numbers<[1], [0], [0], [1], [0, 0, 1, 1], [], []>} : vector<25x864xbf16>, vector<864x64xbf16>, vector<25x64xf32> -> vector<25x64xf32>
    %c0_5 = arith.constant 0 : index
    %c1 = arith.constant 1 : index
    %c0_6 = arith.constant 0 : index
    %c0_7 = arith.constant 0 : index
    %8 = vector.load %arg1[%c0_5, %c1, %c0_6, %c0_7] : memref<1x4x25x288xf32, #tpu.memory_space<vmem>>, vector<1x1x25x288xf32>
    %9 = vector.shape_cast %8 : vector<1x1x25x288xf32> to vector<25x288xf32>
    %10 = arith.mulf %9, %9 : vector<25x288xf32>
    %11 = arith.mulf %10, %9 : vector<25x288xf32>
    %12 = tpu.concatenate %9, %10, %11 in 1 : vector<25x288xf32>, vector<25x288xf32>, vector<25x288xf32> -> vector<25x864xf32>
    %13 = arith.truncf %12 : vector<25x864xf32> to vector<25x864xbf16>
    %cst_8 = arith.constant dense<0.000000e+00> : vector<25x64xf32>
    %14 = tpu.matmul %13, %0, %cst_8 {dimension_numbers = #tpu.dot_dimension_numbers<[1], [0], [0], [1], [0, 0, 1, 1], [], []>} : vector<25x864xbf16>, vector<864x64xbf16>, vector<25x64xf32> -> vector<25x64xf32>
    %15 = arith.maximumf %7, %14 : vector<25x64xf32>
    %c0_9 = arith.constant 0 : index
    %c2 = arith.constant 2 : index
    %c0_10 = arith.constant 0 : index
    %c0_11 = arith.constant 0 : index
    %16 = vector.load %arg1[%c0_9, %c2, %c0_10, %c0_11] : memref<1x4x25x288xf32, #tpu.memory_space<vmem>>, vector<1x1x25x288xf32>
    %17 = vector.shape_cast %16 : vector<1x1x25x288xf32> to vector<25x288xf32>
    %18 = arith.mulf %17, %17 : vector<25x288xf32>
    %19 = arith.mulf %18, %17 : vector<25x288xf32>
    %20 = tpu.concatenate %17, %18, %19 in 1 : vector<25x288xf32>, vector<25x288xf32>, vector<25x288xf32> -> vector<25x864xf32>
    %21 = arith.truncf %20 : vector<25x864xf32> to vector<25x864xbf16>
    %cst_12 = arith.constant dense<0.000000e+00> : vector<25x64xf32>
    %22 = tpu.matmul %21, %0, %cst_12 {dimension_numbers = #tpu.dot_dimension_numbers<[1], [0], [0], [1], [0, 0, 1, 1], [], []>} : vector<25x864xbf16>, vector<864x64xbf16>, vector<25x64xf32> -> vector<25x64xf32>
    %23 = arith.maximumf %15, %22 : vector<25x64xf32>
    %c0_13 = arith.constant 0 : index
    %c3 = arith.constant 3 : index
    %c0_14 = arith.constant 0 : index
    %c0_15 = arith.constant 0 : index
    %24 = vector.load %arg1[%c0_13, %c3, %c0_14, %c0_15] : memref<1x4x25x288xf32, #tpu.memory_space<vmem>>, vector<1x1x25x288xf32>
    %25 = vector.shape_cast %24 : vector<1x1x25x288xf32> to vector<25x288xf32>
    %26 = arith.mulf %25, %25 : vector<25x288xf32>
    %27 = arith.mulf %26, %25 : vector<25x288xf32>
    %28 = tpu.concatenate %25, %26, %27 in 1 : vector<25x288xf32>, vector<25x288xf32>, vector<25x288xf32> -> vector<25x864xf32>
    %29 = arith.truncf %28 : vector<25x864xf32> to vector<25x864xbf16>
    %cst_16 = arith.constant dense<0.000000e+00> : vector<25x64xf32>
    %30 = tpu.matmul %29, %0, %cst_16 {dimension_numbers = #tpu.dot_dimension_numbers<[1], [0], [0], [1], [0, 0, 1, 1], [], []>} : vector<25x864xbf16>, vector<864x64xbf16>, vector<25x64xf32> -> vector<25x64xf32>
    %31 = arith.maximumf %23, %30 : vector<25x64xf32>
    %c0_17 = arith.constant 0 : index
    %c0_18 = arith.constant 0 : index
    %32 = vector.load %arg3[%c0_17, %c0_18] : memref<1x64xf32, #tpu.memory_space<vmem>>, vector<1x64xf32>
    %33 = vector.broadcast %32 : vector<1x64xf32> to vector<25x64xf32>
    %34 = arith.addf %31, %33 : vector<25x64xf32>
    %35 = math.tanh %34 : vector<25x64xf32>
    %c0_19 = arith.constant 0 : index
    %c0_20 = arith.constant 0 : index
    %c0_21 = arith.constant 0 : index
    %36 = vector.load %arg4[%c0_19, %c0_20, %c0_21] : memref<1x25x64xf32, #tpu.memory_space<vmem>>, vector<1x25x64xf32>
    %37 = vector.shape_cast %36 : vector<1x25x64xf32> to vector<25x64xf32>
    %38 = vector.shape_cast %35 : vector<25x64xf32> to vector<1x25x64xf32>
    tpu.vector_store %arg4[%c0_19, %c0_20, %c0_21], %38 {strides = array<i32>} : memref<1x25x64xf32, #tpu.memory_space<vmem>>, vector<1x25x64xf32>,
    return
  }
  func.func @transform_0(%arg0: i32) -> (i32, i32, i32, i32) {
    %c0_i32 = arith.constant 0 : i32
    %c0_i32_0 = arith.constant 0 : i32
    %c0_i32_1 = arith.constant 0 : i32
    %c0_i32_2 = arith.constant 0 : i32
    return %arg0, %c0_i32, %c0_i32_0, %c0_i32_1 : i32, i32, i32, i32
  }
  func.func @transform_1(%arg0: i32) -> (i32, i32) {
    %c0_i32 = arith.constant 0 : i32
    %c0_i32_0 = arith.constant 0 : i32
    %c0_i32_1 = arith.constant 0 : i32
    return %c0_i32, %c0_i32_0 : i32, i32
  }
  func.func @transform_2(%arg0: i32) -> (i32, i32) {
    %c0_i32 = arith.constant 0 : i32
    %c0_i32_0 = arith.constant 0 : i32
    %c0_i32_1 = arith.constant 0 : i32
    return %c0_i32, %c0_i32_0 : i32, i32
  }
  func.func @transform_3(%arg0: i32) -> (i32, i32, i32) {
    %c0_i32 = arith.constant 0 : i32
    %c0_i32_0 = arith.constant 0 : i32
    %c0_i32_1 = arith.constant 0 : i32
    return %arg0, %c0_i32, %c0_i32_0 : i32, i32, i32
  }
}

module attributes {stable_mosaic.version = 11 : i64} {
  func.func @_fc_head_kernel(%arg0: i32, %arg1: memref<8x1600xf32, #tpu.memory_space<vmem>>, %arg2: memref<1600x640xbf16, #tpu.memory_space<vmem>>, %arg3: memref<1x640xf32, #tpu.memory_space<vmem>>, %arg4: memref<640x10xbf16, #tpu.memory_space<vmem>>, %arg5: memref<1x10xf32, #tpu.memory_space<vmem>>, %arg6: memref<8x10xf32, #tpu.memory_space<vmem>>) attributes {dimension_semantics = [#tpu.dimension_semantics<parallel>], iteration_bounds = array<i64: 1>, scalar_prefetch = 0 : i64, scratch_operands = 0 : i64, tpu.core_type = #tpu.core_type<tc>, window_params = [{transform_indices = @transform_0, window_bounds = array<i64: 8, 1600>}, {pipeline_mode = #tpu.pipeline_mode<synchronous>, transform_indices = @transform_1, window_bounds = array<i64: 1600, 640>}, {pipeline_mode = #tpu.pipeline_mode<synchronous>, transform_indices = @transform_2, window_bounds = array<i64: 1, 640>}, {pipeline_mode = #tpu.pipeline_mode<synchronous>, transform_indices = @transform_3, window_bounds = array<i64: 640, 10>}, {pipeline_mode = #tpu.pipeline_mode<synchronous>, transform_indices = @transform_4, window_bounds = array<i64: 1, 10>}, {transform_indices = @transform_5, window_bounds = array<i64: 8, 10>}]} {
    %c0 = arith.constant 0 : index
    %c0_0 = arith.constant 0 : index
    %0 = vector.load %arg1[%c0, %c0_0] : memref<8x1600xf32, #tpu.memory_space<vmem>>, vector<8x1600xf32>
    %1 = arith.truncf %0 : vector<8x1600xf32> to vector<8x1600xbf16>
    %c0_1 = arith.constant 0 : index
    %c0_2 = arith.constant 0 : index
    %2 = vector.load %arg2[%c0_1, %c0_2] : memref<1600x640xbf16, #tpu.memory_space<vmem>>, vector<1600x640xbf16>
    %cst = arith.constant dense<0.000000e+00> : vector<8x640xf32>
    %3 = tpu.matmul %1, %2, %cst {dimension_numbers = #tpu.dot_dimension_numbers<[1], [0], [0], [1], [0, 0, 1, 1], [], []>} : vector<8x1600xbf16>, vector<1600x640xbf16>, vector<8x640xf32> -> vector<8x640xf32>
    %c0_3 = arith.constant 0 : index
    %c0_4 = arith.constant 0 : index
    %4 = vector.load %arg3[%c0_3, %c0_4] : memref<1x640xf32, #tpu.memory_space<vmem>>, vector<1x640xf32>
    %5 = vector.broadcast %4 : vector<1x640xf32> to vector<8x640xf32>
    %6 = arith.addf %3, %5 : vector<8x640xf32>
    %7 = math.tanh %6 : vector<8x640xf32>
    %8 = arith.truncf %7 : vector<8x640xf32> to vector<8x640xbf16>
    %c0_5 = arith.constant 0 : index
    %c0_6 = arith.constant 0 : index
    %9 = vector.load %arg4[%c0_5, %c0_6] : memref<640x10xbf16, #tpu.memory_space<vmem>>, vector<640x10xbf16>
    %cst_7 = arith.constant dense<0.000000e+00> : vector<8x10xf32>
    %10 = tpu.matmul %8, %9, %cst_7 {dimension_numbers = #tpu.dot_dimension_numbers<[1], [0], [0], [1], [0, 0, 1, 1], [], []>} : vector<8x640xbf16>, vector<640x10xbf16>, vector<8x10xf32> -> vector<8x10xf32>
    %c0_8 = arith.constant 0 : index
    %c0_9 = arith.constant 0 : index
    %11 = vector.load %arg5[%c0_8, %c0_9] : memref<1x10xf32, #tpu.memory_space<vmem>>, vector<1x10xf32>
    %12 = vector.broadcast %11 : vector<1x10xf32> to vector<8x10xf32>
    %13 = arith.addf %10, %12 : vector<8x10xf32>
    %cst_10 = arith.constant dense<0xFF800000> : vector<8xf32>
    %14 = vector.multi_reduction <maximumf>, %13, %cst_10 [1] : vector<8x10xf32> to vector<8xf32>
    %15 = vector.shape_cast %14 : vector<8xf32> to vector<8x1xf32>
    %16 = vector.broadcast %15 : vector<8x1xf32> to vector<8x10xf32>
    %17 = arith.subf %13, %16 : vector<8x10xf32>
    %18 = math.exp %17 : vector<8x10xf32>
    %cst_11 = arith.constant dense<0.000000e+00> : vector<8xf32>
    %19 = vector.multi_reduction <add>, %18, %cst_11 [1] : vector<8x10xf32> to vector<8xf32>
    %20 = vector.shape_cast %19 : vector<8xf32> to vector<8x1xf32>
    %21 = tpu.reciprocal %20 {approx = true} : vector<8x1xf32> -> vector<8x1xf32>
    %22 = vector.broadcast %21 : vector<8x1xf32> to vector<8x10xf32>
    %23 = arith.mulf %18, %22 : vector<8x10xf32>
    %c0_12 = arith.constant 0 : index
    %c0_13 = arith.constant 0 : index
    %24 = vector.load %arg6[%c0_12, %c0_13] : memref<8x10xf32, #tpu.memory_space<vmem>>, vector<8x10xf32>
    tpu.vector_store %arg6[%c0_12, %c0_13], %23 {strides = array<i32>} : memref<8x10xf32, #tpu.memory_space<vmem>>, vector<8x10xf32>,
    return
  }
  func.func @transform_0(%arg0: i32) -> (i32, i32) {
    %c0_i32 = arith.constant 0 : i32
    %c0_i32_0 = arith.constant 0 : i32
    return %arg0, %c0_i32 : i32, i32
  }
  func.func @transform_1(%arg0: i32) -> (i32, i32) {
    %c0_i32 = arith.constant 0 : i32
    %c0_i32_0 = arith.constant 0 : i32
    %c0_i32_1 = arith.constant 0 : i32
    return %c0_i32, %c0_i32_0 : i32, i32
  }
  func.func @transform_2(%arg0: i32) -> (i32, i32) {
    %c0_i32 = arith.constant 0 : i32
    %c0_i32_0 = arith.constant 0 : i32
    %c0_i32_1 = arith.constant 0 : i32
    return %c0_i32, %c0_i32_0 : i32, i32
  }
  func.func @transform_3(%arg0: i32) -> (i32, i32) {
    %c0_i32 = arith.constant 0 : i32
    %c0_i32_0 = arith.constant 0 : i32
    %c0_i32_1 = arith.constant 0 : i32
    return %c0_i32, %c0_i32_0 : i32, i32
  }
  func.func @transform_4(%arg0: i32) -> (i32, i32) {
    %c0_i32 = arith.constant 0 : i32
    %c0_i32_0 = arith.constant 0 : i32
    %c0_i32_1 = arith.constant 0 : i32
    return %c0_i32, %c0_i32_0 : i32, i32
  }
  func.func @transform_5(%arg0: i32) -> (i32, i32) {
    %c0_i32 = arith.constant 0 : i32
    %c0_i32_0 = arith.constant 0 : i32
    return %arg0, %c0_i32 : i32, i32
  }
}

</mosaic_0001>

<llo_original>
// kernel: self_onn_forward.3
$region0: #{self_onn_forward.3}
  #allocation0 [shape = 'u32[]', space=smem, size = 0x4, offset = 0x4, fixed_abs, tag = 'smem constant byte address 0x4 - core index']
  #allocation1 [shape = 'u32[144,128]{1,0:T(1,128)}', space=vmem, size = 0x12000, scoped, tag = 'internal scratch']
  %s0 = inlined_call_operand.vmem [shape: f32[2,4,169,9], index: 0, kind: input, shape index: {}]
  %s1 = inlined_call_operand.vmem [shape: bf16[27,32], index: 1, kind: input, shape index: {}]
  %s2 = inlined_call_operand.vmem [shape: f32[1,32], index: 2, kind: input, shape index: {}]
  %s3 = inlined_call_operand.vmem [shape: f32[2,169,32], index: 3, kind: output, shape index: {}]
  %s4 = sld [smem:[#allocation0]]
  $region45: #{self_onn_forward.3} parent=0
    _
  %s6 = ssub.s32 1, %s4
  %s7 = scalar_select 0, %s6, %s4
  loop: start=0, step=1, limit=4
  $region2: #{self_onn_forward.3} parent=0 // loop_pre_header
    _
  $region3: #{self_onn_forward.3} parent=0 // loop_header
    %s9 = sphi 0, %s13
    %p10 = scmp.ge.s32.totalorder %s9, 4
    %s19 = sphi 0, %s21
    %s22 = sphi 0, %s19
    %s23 = sphi 0, %s22
    %s39 = sphi 0, %s23
    %s43 = sphi 0, %s43
    %s45 = sphi 0, %s43
    %s46 = sphi 0, %s45
    %s60 = sphi 0, %s46
    %s64 = sphi 0, %s64
    %s66 = sphi 0, %s64
    %s67 = sphi 0, %s66
    %s81 = sphi 0, %s67
    %s87 = sphi 0, %s89
    %s90 = sphi 0, %s87
    %s91 = sphi 0, %s90
    %s107 = sphi 0, %s91
  $region4: #{self_onn_forward.3} parent=0 // loop_header_branch
    %12 = sbr.rel (%p10) target = $region8
  $region5: #{self_onn_forward.3} parent=0 // loop_body
    %s14 = ssub.s32 %s9, 1
    %s15 = ssub.s32 %s9, 2
    %s16 = sadd.s32 %s9, 1
    %s17 = ssub.s32 %s9, %s16
    %p18 = scmp.eq.s32.totalorder %s17, 0
    %s20 = sadd.s32 %s19, 1
    %s21 = scalar_select %p18, %s19, %s20
    %p24 = pneg %p18
    %p25 = scmp.eq.s32.totalorder %s9, 1
    %p26 = por %p24, %p25
    %p27 = scmp.ne.s32.totalorder %s19, %s22
    %p28 = scmp.eq.s32.totalorder %s9, 0
    %p29 = por %p27, %p28
    %p30 = scmp.ne.s32.totalorder %s19, %s22
    %p31 = scmp.eq.s32.totalorder %s14, 1
    %p32 = por %p30, %p31
    %p33 = scmp.ne.s32.totalorder %s22, %s23
    %p34 = scmp.eq.s32.totalorder %s14, 0
    %p35 = por %p33, %p34
    %p36 = scmp.ne.s32.totalorder %s22, %s23
    %p37 = scmp.eq.s32.totalorder %s15, 1
    %p38 = por %p36, %p37
    %p40 = scmp.ne.s32.totalorder %s23, %s39
    %p41 = scmp.eq.s32.totalorder %s15, 0
    %p42 = por %p40, %p41
    %s44 = sadd.s32 %s43, 1
    %p47 = scmp.eq.s32.totalorder %s9, 1
    %p48 = scmp.ne.s32.totalorder %s43, %s45
    %p49 = scmp.eq.s32.totalorder %s9, 0
    %p50 = por %p48, %p49
    %p51 = scmp.ne.s32.totalorder %s43, %s45
    %p52 = scmp.eq.s32.totalorder %s14, 1
    %p53 = por %p51, %p52
    %p54 = scmp.ne.s32.totalorder %s45, %s46
    %p55 = scmp.eq.s32.totalorder %s14, 0
    %p56 = por %p54, %p55
    %p57 = scmp.ne.s32.totalorder %s45, %s46
    %p58 = scmp.eq.s32.totalorder %s15, 1
    %p59 = por %p57, %p58
    %p61 = scmp.ne.s32.totalorder %s46, %s60
    %p62 = scmp.eq.s32.totalorder %s15, 0
    %p63 = por %p61, %p62
    %s65 = sadd.s32 %s64, 1
    %p68 = scmp.eq.s32.totalorder %s9, 1
    %p69 = scmp.ne.s32.totalorder %s64, %s66
    %p70 = scmp.eq.s32.totalorder %s9, 0
    %p71 = por %p69, %p70
    %p72 = scmp.ne.s32.totalorder %s64, %s66
    %p73 = scmp.eq.s32.totalorder %s14, 1
    %p74 = por %p72, %p73
    %p75 = scmp.ne.s32.totalorder %s66, %s67
    %p76 = scmp.eq.s32.totalorder %s14, 0
    %p77 = por %p75, %p76
    %p78 = scmp.ne.s32.totalorder %s66, %s67
    %p79 = scmp.eq.s32.totalorder %s15, 1
    %p80 = por %p78, %p79
    %p82 = scmp.ne.s32.totalorder %s67, %s81
    %p83 = scmp.eq.s32.totalorder %s15, 0
    %p84 = por %p82, %p83
    %s85 = ssub.s32 %s9, %s16
    %p86 = scmp.eq.s32.totalorder %s85, 0
    %s88 = sadd.s32 %s87, 1
    %s89 = scalar_select %p86, %s87, %s88
    %p92 = pneg %p86
    %p93 = scmp.eq.s32.totalorder %s9, 1
    %p94 = por %p92, %p93
    %p95 = scmp.ne.s32.totalorder %s87, %s90
    %p96 = scmp.eq.s32.totalorder %s9, 0
    %p97 = por %p95, %p96
    %p98 = scmp.ne.s32.totalorder %s87, %s90
    %p99 = scmp.eq.s32.totalorder %s14, 1
    %p100 = por %p98, %p99
    %p101 = scmp.ne.s32.totalorder %s90, %s91
    %p102 = scmp.eq.s32.totalorder %s14, 0
    %p103 = por %p101, %p102
    %p104 = scmp.ne.s32.totalorder %s90, %s91
    %p105 = scmp.eq.s32.totalorder %s15, 1
    %p106 = por %p104, %p105
    %p108 = scmp.ne.s32.totalorder %s91, %s107
    %p109 = scmp.eq.s32.totalorder %s15, 0
    %p110 = por %p108, %p109
    %p111 = scmp.le.s32.totalorder 1, %s9
    %p112 = scmp.lt.s32.totalorder %s9, 3
    %p113 = pnand %p111, %p112
    %p114 = pneg %p113
    // Predicated region
    $region9: #{self_onn_forward.3} parent=5 // pred_check
      _
    $region10: #{self_onn_forward.3} parent=5 // pred_check_branch
      %116 = sbr.rel (%p113) target = $region12
    $region11: #{self_onn_forward.3} parent=5 // pred_region
      %s117 = ssub.s32 %s9, 1
      // Predicated region
      $region13: #{self_onn_forward.3} parent=11 // pred_check
        %p118 = pneg %p56
      $region14: #{self_onn_forward.3} parent=11 // pred_check_branch
        %120 = sbr.rel (%p118) target = $region16
      $region15: #{self_onn_forward.3} parent=11 // pred_region
        _
      $region16: #{self_onn_forward.3} parent=11 // pred_fallthru
        _
      // Predicated region
      $region17: #{self_onn_forward.3} parent=11 // pred_check
        %p121 = pneg %p77
      $region18: #{self_onn_forward.3} parent=11 // pred_check_branch
        %123 = sbr.rel (%p121) target = $region20
      $region19: #{self_onn_forward.3} parent=11 // pred_region
        _
      $region20: #{self_onn_forward.3} parent=11 // pred_fallthru
        _
    $region12: #{self_onn_forward.3} parent=5 // pred_fallthru
      _
    %p124 = scmp.lt.s32.totalorder %s9, 2
    // Predicated region
    $region21: #{self_onn_forward.3} parent=5 // pred_check
      %p125 = pneg %p124
    $region22: #{self_onn_forward.3} parent=5 // pred_check_branch
      %127 = sbr.rel (%p125) target = $region24
    $region23: #{self_onn_forward.3} parent=5 // pred_region
      // Predicated region
      $region25: #{self_onn_forward.3} parent=23 // pred_check
        %p128 = pneg %p29
      $region26: #{self_onn_forward.3} parent=23 // pred_check_branch
        %130 = sbr.rel (%p128) target = $region28
      $region27: #{self_onn_forward.3} parent=23 // pred_region
        %p131 = scmp.lt.s32.totalorder %s9, 1
        %s132 = scalar_select %p131, %s9, 1
        %s133 = smul.addr %s132, 88
        %s134 = smul.addr %s133, 8
        %s135 = scalar_lea.vmem %s0, %s134
      $region28: #{self_onn_forward.3} parent=23 // pred_fallthru
        _
    $region24: #{self_onn_forward.3} parent=5 // pred_fallthru
      _
    %p136 = scmp.le.s32.totalorder 1, %s9
    %p137 = scmp.lt.s32.totalorder %s9, 3
    %p138 = pnand %p136, %p137
    %p139 = pneg %p138
    // Predicated region
    $region29: #{self_onn_forward.3} parent=5 // pred_check
      _
    $region30: #{self_onn_forward.3} parent=5 // pred_check_branch
      %141 = sbr.rel (%p138) target = $region32
    $region31: #{self_onn_forward.3} parent=5 // pred_region
      %s142 = ssub.s32 %s9, 1
      %p143 = scmp.lt.s32.totalorder %s14, 1
      %s144 = scalar_select %p143, %s14, 1
      %s145 = smul.addr %s144, 88
      %s146 = smul.addr %s145, 8
      %s147 = scalar_lea.vmem %s0, %s146
      %p148 = pneg %p35
      %p149 = pneg %p32
      %p150 = pneg %p56
      %p151 = pneg %p53
      %p152 = pneg %p77
      %p153 = pneg %p74
      %p154 = pneg %p103
      %p155 = pneg %p100
      %p156 = scmp.lt.s32.totalorder %s14, 1
      %s157 = scalar_select %p156, %s14, 1
      %s158 = smul.addr %s157, 22
      %s159 = smul.addr %s158, 8
      %s160 = scalar_lea.vmem %s3, %s159
      %p161 = scmp.lt.s32.totalorder %s14, 1
      %s162 = scalar_select %p161, %s14, 1
      %s163 = smul.addr %s162, 88
      %s164 = smul.addr %s163, 8
      %s165 = scalar_lea.vmem %s0, %s164
      %p166 = scmp.lt.s32.totalorder %s14, 1
      %s167 = scalar_select %p166, %s14, 1
      %s168 = smul.addr %s167, 22
      %s169 = smul.addr %s168, 8
      %s170 = scalar_lea.vmem %s3, %s169
      %v172 = vld [vmem:[%s1] sm:$0xf]
      %v173 = vld [vmem:[%s1 + $0x4] sm:$0xf]
      %v174 = vld [vmem:[%s1 + $0x8] sm:$0xf]
      %v175 = vld [vmem:[%s1 + $0xc] sm:$0x3]
      %v176 = vld [vmem:[%s165] sm:$0xff]
      %v177 = vld [vmem:[%s165 + $0x8] sm:$0xff]
      %v178 = vld [vmem:[%s165 + $0x10] sm:$0xff]
      %v179 = vld [vmem:[%s165 + $0x18] sm:$0xff]
      %v180 = vld [vmem:[%s165 + $0x20] sm:$0xff]
      %v181 = vld [vmem:[%s165 + $0x28] sm:$0xff]
      %v182 = vld [vmem:[%s165 + $0x30] sm:$0xff]
      %v183 = vld [vmem:[%s165 + $0x38] sm:$0xff]
      %v184 = vld [vmem:[%s165 + $0x40] sm:$0xff]
      %v185 = vld [vmem:[%s165 + $0x48] sm:$0xff]
      %v186 = vld [vmem:[%s165 + $0x50] sm:$0xff]
      %v187 = vld [vmem:[%s165 + $0x58] sm:$0xff]
      %v188 = vld [vmem:[%s165 + $0x60] sm:$0xff]
      %v189 = vld [vmem:[%s165 + $0x68] sm:$0xff]
      %v190 = vld [vmem:[%s165 + $0x70] sm:$0xff]
      %v191 = vld [vmem:[%s165 + $0x78] sm:$0xff]
      %v192 = vld [vmem:[%s165 + $0x80] sm:$0xff]
      %v193 = vld [vmem:[%s165 + $0x88] sm:$0xff]
      %v194 = vld [vmem:[%s165 + $0x90] sm:$0xff]
      %v195 = vld [vmem:[%s165 + $0x98] sm:$0xff]
      %v196 = vld [vmem:[%s165 + $0xa0] sm:$0xff]
      %v197 = vld [vmem:[%s165 + $0xa8] sm:$0x1]
      %v198 = vmul.f32 %v176, %v176
      %v199 = vmul.f32 %v177, %v177
      %v200 = vmul.f32 %v178, %v178
      %v201 = vmul.f32 %v179, %v179
      %v202 = vmul.f32 %v180, %v180
      %v203 = vmul.f32 %v181, %v181
      %v204 = vmul.f32 %v182, %v182
      %v205 = vmul.f32 %v183, %v183
      %v206 = vmul.f32 %v184, %v184
      %v207 = vmul.f32 %v185, %v185
      %v208 = vmul.f32 %v186, %v186
      %v209 = vmul.f32 %v187, %v187
      %v210 = vmul.f32 %v188, %v188
      %v211 = vmul.f32 %v189, %v189
      %v212 = vmul.f32 %v190, %v190
      %v213 = vmul.f32 %v191, %v191
      %v214 = vmul.f32 %v192, %v192
      %v215 = vmul.f32 %v193, %v193
      %v216 = vmul.f32 %v194, %v194
      %v217 = vmul.f32 %v195, %v195
      %v218 = vmul.f32 %v196, %v196
      %v219 = vmul.f32 %v197, %v197
      %v220 = vmul.f32 %v198, %v176
      %v221 = vmul.f32 %v199, %v177
      %v222 = vmul.f32 %v200, %v178
      %v223 = vmul.f32 %v201, %v179
      %v224 = vmul.f32 %v202, %v180
      %v225 = vmul.f32 %v203, %v181
      %v226 = vmul.f32 %v204, %v182
      %v227 = vmul.f32 %v205, %v183
      %v228 = vmul.f32 %v206, %v184
      %v229 = vmul.f32 %v207, %v185
      %v230 = vmul.f32 %v208, %v186
      %v231 = vmul.f32 %v209, %v187
      %v232 = vmul.f32 %v210, %v188
      %v233 = vmul.f32 %v211, %v189
      %v234 = vmul.f32 %v212, %v190
      %v235 = vmul.f32 %v213, %v191
      %v236 = vmul.f32 %v214, %v192
      %v237 = vmul.f32 %v215, %v193
      %v238 = vmul.f32 %v216, %v194
      %v239 = vmul.f32 %v217, %v195
      %v240 = vmul.f32 %v218, %v196
      %v241 = vmul.f32 %v219, %v197
      %264 = vrot.lane.b32.xlu0 %v198, 9
      %v265 = vpop.permute.xlu0 %264
      %266 = vrot.lane.b32.xlu0 %v199, 9
      %v267 = vpop.permute.xlu0 %266
      %268 = vrot.lane.b32.xlu0 %v200, 9
      %v269 = vpop.permute.xlu0 %268
      %270 = vrot.lane.b32.xlu0 %v201, 9
      %v271 = vpop.permute.xlu0 %270
      %272 = vrot.lane.b32.xlu0 %v202, 9
      %v273 = vpop.permute.xlu0 %272
      %274 = vrot.lane.b32.xlu0 %v203, 9
      %v275 = vpop.permute.xlu0 %274
      %276 = vrot.lane.b32.xlu0 %v204, 9
      %v277 = vpop.permute.xlu0 %276
      %278 = vrot.lane.b32.xlu0 %v205, 9
      %v279 = vpop.permute.xlu0 %278
      %280 = vrot.lane.b32.xlu0 %v206, 9
      %v281 = vpop.permute.xlu0 %280
      %282 = vrot.lane.b32.xlu0 %v207, 9
      %v283 = vpop.permute.xlu0 %282
      %284 = vrot.lane.b32.xlu0 %v208, 9
      %v285 = vpop.permute.xlu0 %284
      %286 = vrot.lane.b32.xlu0 %v209, 9
      %v287 = vpop.permute.xlu0 %286
      %288 = vrot.lane.b32.xlu0 %v210, 9
      %v289 = vpop.permute.xlu0 %288
      %290 = vrot.lane.b32.xlu0 %v211, 9
      %v291 = vpop.permute.xlu0 %290
      %292 = vrot.lane.b32.xlu0 %v212, 9
      %v293 = vpop.permute.xlu0 %292
      %294 = vrot.lane.b32.xlu0 %v213, 9
      %v295 = vpop.permute.xlu0 %294
      %296 = vrot.lane.b32.xlu0 %v214, 9
      %v297 = vpop.permute.xlu0 %296
      %298 = vrot.lane.b32.xlu0 %v215, 9
      %v299 = vpop.permute.xlu0 %298
      %300 = vrot.lane.b32.xlu0 %v216, 9
      %v301 = vpop.permute.xlu0 %300
      %302 = vrot.lane.b32.xlu0 %v217, 9
      %v303 = vpop.permute.xlu0 %302
      %304 = vrot.lane.b32.xlu0 %v218, 9
      %v305 = vpop.permute.xlu0 %304
      %306 = vrot.lane.b32.xlu0 %v219, 9
      %v307 = vpop.permute.xlu0 %306
      %352 = vrot.lane.b32.xlu0 %v220, 18
      %v353 = vpop.permute.xlu0 %352
      %354 = vrot.lane.b32.xlu0 %v221, 18
      %v355 = vpop.permute.xlu0 %354
      %356 = vrot.lane.b32.xlu0 %v222, 18
      %v357 = vpop.permute.xlu0 %356
      %358 = vrot.lane.b32.xlu0 %v223, 18
      %v359 = vpop.permute.xlu0 %358
      %360 = vrot.lane.b32.xlu0 %v224, 18
      %v361 = vpop.permute.xlu0 %360
      %362 = vrot.lane.b32.xlu0 %v225, 18
      %v363 = vpop.permute.xlu0 %362
      %364 = vrot.lane.b32.xlu0 %v226, 18
      %v365 = vpop.permute.xlu0 %364
      %366 = vrot.lane.b32.xlu0 %v227, 18
      %v367 = vpop.permute.xlu0 %366
      %368 = vrot.lane.b32.xlu0 %v228, 18
      %v369 = vpop.permute.xlu0 %368
      %370 = vrot.lane.b32.xlu0 %v229, 18
      %v371 = vpop.permute.xlu0 %370
      %372 = vrot.lane.b32.xlu0 %v230, 18
      %v373 = vpop.permute.xlu0 %372
      %374 = vrot.lane.b32.xlu0 %v231, 18
      %v375 = vpop.permute.xlu0 %374
      %376 = vrot.lane.b32.xlu0 %v232, 18
      %v377 = vpop.permute.xlu0 %376
      %378 = vrot.lane.b32.xlu0 %v233, 18
      %v379 = vpop.permute.xlu0 %378
      %380 = vrot.lane.b32.xlu0 %v234, 18
      %v381 = vpop.permute.xlu0 %380
      %382 = vrot.lane.b32.xlu0 %v235, 18
      %v383 = vpop.permute.xlu0 %382
      %384 = vrot.lane.b32.xlu0 %v236, 18
      %v385 = vpop.permute.xlu0 %384
      %386 = vrot.lane.b32.xlu0 %v237, 18
      %v387 = vpop.permute.xlu0 %386
      %388 = vrot.lane.b32.xlu0 %v238, 18
      %v389 = vpop.permute.xlu0 %388
      %390 = vrot.lane.b32.xlu0 %v239, 18
      %v391 = vpop.permute.xlu0 %390
      %392 = vrot.lane.b32.xlu0 %v240, 18
      %v393 = vpop.permute.xlu0 %392
      %394 = vrot.lane.b32.xlu0 %v241, 18
      %v395 = vpop.permute.xlu0 %394
      %vm418 = vcmask 72704
      %v419 = vsel %vm418, %v176, %v265
      %v420 = vsel %vm418, %v177, %v267
      %v421 = vsel %vm418, %v178, %v269
      %v422 = vsel %vm418, %v179, %v271
      %v423 = vsel %vm418, %v180, %v273
      %v424 = vsel %vm418, %v181, %v275
      %v425 = vsel %vm418, %v182, %v277
      %v426 = vsel %vm418, %v183, %v279
      %v427 = vsel %vm418, %v184, %v281
      %v428 = vsel %vm418, %v185, %v283
      %v429 = vsel %vm418, %v186, %v285
      %v430 = vsel %vm418, %v187, %v287
      %v431 = vsel %vm418, %v188, %v289
      %v432 = vsel %vm418, %v189, %v291
      %v433 = vsel %vm418, %v190, %v293
      %v434 = vsel %vm418, %v191, %v295
      %v435 = vsel %vm418, %v192, %v297
      %v436 = vsel %vm418, %v193, %v299
      %v437 = vsel %vm418, %v194, %v301
      %v438 = vsel %vm418, %v195, %v303
      %v439 = vsel %vm418, %v196, %v305
      %v440 = vsel %vm418, %v197, %v307
      %vm441 = vcmask 146432
      %v442 = vsel %vm441, %v419, %v353
      %v443 = vsel %vm441, %v420, %v355
      %v444 = vsel %vm441, %v421, %v357
      %v445 = vsel %vm441, %v422, %v359
      %v446 = vsel %vm441, %v423, %v361
      %v447 = vsel %vm441, %v424, %v363
      %v448 = vsel %vm441, %v425, %v365
      %v449 = vsel %vm441, %v426, %v367
      %v450 = vsel %vm441, %v427, %v369
      %v451 = vsel %vm441, %v428, %v371
      %v452 = vsel %vm441, %v429, %v373
      %v453 = vsel %vm441, %v430, %v375
      %v454 = vsel %vm441, %v431, %v377
      %v455 = vsel %vm441, %v432, %v379
      %v456 = vsel %vm441, %v433, %v381
      %v457 = vsel %vm441, %v434, %v383
      %v458 = vsel %vm441, %v435, %v385
      %v459 = vsel %vm441, %v436, %v387
      %v460 = vsel %vm441, %v437, %v389
      %v461 = vsel %vm441, %v438, %v391
      %v462 = vsel %vm441, %v439, %v393
      %v463 = vsel %vm441, %v440, %v395
      %v464 = vpack.c.bf16 %v443, %v442
      %v465 = vpack.c.bf16 %v445, %v444
      %v466 = vpack.c.bf16 %v447, %v446
      %v467 = vpack.c.bf16 %v449, %v448
      %v468 = vpack.c.bf16 %v451, %v450
      %v469 = vpack.c.bf16 %v453, %v452
      %v470 = vpack.c.bf16 %v455, %v454
      %v471 = vpack.c.bf16 %v457, %v456
      %v472 = vpack.c.bf16 %v459, %v458
      %v473 = vpack.c.bf16 %v461, %v460
      %v474 = vpack.c.bf16 %v463, %v462
      %v479 = vunpack.c.l.b16 %v172
      %v480 = vunpack.c.l.b16 %v173
      %v481 = vunpack.c.l.b16 %v174
      %v482 = vunpack.c.l.b16 %v175
      %v483 = vpack.c.b16 %v480, %v479
      %v484 = vpack.c.b16 %v482, %v481
      %vm486 = vcmask 220160
      %v488 = vsel %vm486, %v464, 0
      %v491 = vsel %vm486, %v465, 0
      %v494 = vsel %vm486, %v466, 0
      %v497 = vsel %vm486, %v467, 0
      %v500 = vsel %vm486, %v468, 0
      %v503 = vsel %vm486, %v469, 0
      %v506 = vsel %vm486, %v470, 0
      %v509 = vsel %vm486, %v471, 0
      %v512 = vsel %vm486, %v472, 0
      %v515 = vsel %vm486, %v473, 0
      %v518 = vsel %vm486, %v474, 0
      %vm520 = vcmask 1044480
      %vm521 = vcmask 1045504
      %v522 = vsel %vm520, 4294967295, 65535
      %v523 = vsel %vm521, %v522, 0
      %v525 = vand.u32 %v484, %v523
      %527 = vmatprep.subr.bf16.mxu0 0
      %528 = vmatpush1.bf16.msra.mxu0 0
      %529 = vmatprep.subr.bf16.mxu0 0
      %530 = vmatpush1.bf16.msra.mxu0 0
      %531 = vmatprep.subr.bf16.mxu0 0
      %532 = vmatpush1.bf16.msra.mxu0 0
      %533 = vmatprep.subr.bf16.mxu0 0
      %534 = vmatpush1.bf16.msra.mxu0 0
      %535 = vmatprep.subr.bf16.mxu0 0
      %536 = vmatpush1.bf16.msra.mxu0 0
      %537 = vmatprep.subr.bf16.mxu0 0
      %538 = vmatpush1.bf16.msra.mxu0 0
      %539 = vmatprep.subr.bf16.mxu0 0
      %540 = vmatpush1.bf16.msra.mxu0 %v525
      %541 = vmatprep.subr.bf16.mxu0 0
      %542 = vmatpush1.bf16.msra.mxu0 %v483
      %543 = vmatprep.subr.bf16.mxu0 0
      %544 = vmatpush2.bf16.msra.mxu0 0
      %545 = vmatprep.subr.bf16.mxu0 0
      %546 = vmatpush2.bf16.msra.mxu0 0
      %547 = vmatprep.subr.bf16.mxu0 0
      %548 = vmatpush2.bf16.msra.mxu0 0
      %549 = vmatprep.subr.bf16.mxu0 0
      %550 = vmatpush2.bf16.msra.mxu0 0
      %551 = vmatprep.subr.bf16.mxu0 0
      %552 = vmatpush2.bf16.msra.mxu0 0
      %553 = vmatprep.subr.bf16.mxu0 0
      %554 = vmatpush2.bf16.msra.mxu0 0
      %555 = vmatprep.subr.bf16.mxu0 0
      %556 = vmatpush2.bf16.msra.mxu0 0
      %557 = vmatprep.subr.bf16.mxu0 0
      %558 = vmatpush2.bf16.msra.mxu0 0
      %559 = vmatprep.mubr.bf16.mxu0 0
      %560 = vmatmul.mubr.bf16.gmra.mxu0 %v488
      %v561 = vpop.f32.mrf.mxu0
      %v562 = vadd.f32 0.0, %v561
      %v563 = vpop.f32.mrf.mxu0
      %v564 = vpop.f32.mrf.mxu0
      %v565 = vadd.f32 0.0, %v564
      %v566 = vpop.f32.mrf.mxu0
      %567 = vmatprep.mubr.bf16.mxu0 0
      %568 = vmatmul.mubr.bf16.gmra.mxu0 %v491
      %v569 = vpop.f32.mrf.mxu0
      %v570 = vadd.f32 0.0, %v569
      %v571 = vpop.f32.mrf.mxu0
      %v572 = vpop.f32.mrf.mxu0
      %v573 = vadd.f32 0.0, %v572
      %v574 = vpop.f32.mrf.mxu0
      %575 = vmatprep.mubr.bf16.mxu0 0
      %576 = vmatmul.mubr.bf16.gmra.mxu0 %v494
      %v577 = vpop.f32.mrf.mxu0
      %v578 = vadd.f32 0.0, %v577
      %v579 = vpop.f32.mrf.mxu0
      %v580 = vpop.f32.mrf.mxu0
      %v581 = vadd.f32 0.0, %v580
      %v582 = vpop.f32.mrf.mxu0
      %583 = vmatprep.mubr.bf16.mxu0 0
      %584 = vmatmul.mubr.bf16.gmra.mxu0 %v497
      %v585 = vpop.f32.mrf.mxu0
      %v586 = vadd.f32 0.0, %v585
      %v587 = vpop.f32.mrf.mxu0
      %v588 = vpop.f32.mrf.mxu0
      %v589 = vadd.f32 0.0, %v588
      %v590 = vpop.f32.mrf.mxu0
      %591 = vmatprep.mubr.bf16.mxu0 0
      %592 = vmatmul.mubr.bf16.gmra.mxu0 %v500
      %v593 = vpop.f32.mrf.mxu0
      %v594 = vadd.f32 0.0, %v593
      %v595 = vpop.f32.mrf.mxu0
      %v596 = vpop.f32.mrf.mxu0
      %v597 = vadd.f32 0.0, %v596
      %v598 = vpop.f32.mrf.mxu0
      %599 = vmatprep.mubr.bf16.mxu0 0
      %600 = vmatmul.mubr.bf16.gmra.mxu0 %v503
      %v601 = vpop.f32.mrf.mxu0
      %v602 = vadd.f32 0.0, %v601
      %v603 = vpop.f32.mrf.mxu0
      %v604 = vpop.f32.mrf.mxu0
      %v605 = vadd.f32 0.0, %v604
      %v606 = vpop.f32.mrf.mxu0
      %607 = vmatprep.mubr.bf16.mxu0 0
      %608 = vmatmul.mubr.bf16.gmra.mxu0 %v506
      %v609 = vpop.f32.mrf.mxu0
      %v610 = vadd.f32 0.0, %v609
      %v611 = vpop.f32.mrf.mxu0
      %v612 = vpop.f32.mrf.mxu0
      %v613 = vadd.f32 0.0, %v612
      %v614 = vpop.f32.mrf.mxu0
      %615 = vmatprep.mubr.bf16.mxu0 0
      %616 = vmatmul.mubr.bf16.gmra.mxu0 %v509
      %v617 = vpop.f32.mrf.mxu0
      %v618 = vadd.f32 0.0, %v617
      %v619 = vpop.f32.mrf.mxu0
      %v620 = vpop.f32.mrf.mxu0
      %v621 = vadd.f32 0.0, %v620
      %v622 = vpop.f32.mrf.mxu0
      %623 = vmatprep.mubr.bf16.mxu0 0
      %624 = vmatmul.mubr.bf16.gmra.mxu0 %v512
      %v625 = vpop.f32.mrf.mxu0
      %v626 = vadd.f32 0.0, %v625
      %v627 = vpop.f32.mrf.mxu0
      %v628 = vpop.f32.mrf.mxu0
      %v629 = vadd.f32 0.0, %v628
      %v630 = vpop.f32.mrf.mxu0
      %631 = vmatprep.mubr.bf16.mxu0 0
      %632 = vmatmul.mubr.bf16.gmra.mxu0 %v515
      %v633 = vpop.f32.mrf.mxu0
      %v634 = vadd.f32 0.0, %v633
      %v635 = vpop.f32.mrf.mxu0
      %v636 = vpop.f32.mrf.mxu0
      %v637 = vadd.f32 0.0, %v636
      %v638 = vpop.f32.mrf.mxu0
      %639 = vmatprep.mubr.bf16.mxu0 0
      %640 = vmatmul.mubr.bf16.gmra.mxu0 %v518
      %v641 = vpop.f32.mrf.mxu0
      %v642 = vadd.f32 0.0, %v641
      %v643 = vpop.f32.mrf.mxu0
      %v644 = vpop.f32.mrf.mxu0
      %v645 = vadd.f32 0.0, %v644
      %v646 = vpop.f32.mrf.mxu0
      %647 = vdwg.mxu0
      %s648 = scalar_lea.vmem %s165, 176
      %v649 = vld [vmem:[%s648] sm:$0xff]
      %v650 = vld [vmem:[%s648 + $0x8] sm:$0xff]
      %v651 = vld [vmem:[%s648 + $0x10] sm:$0xff]
      %v652 = vld [vmem:[%s648 + $0x18] sm:$0xff]
      %v653 = vld [vmem:[%s648 + $0x20] sm:$0xff]
      %v654 = vld [vmem:[%s648 + $0x28] sm:$0xff]
      %v655 = vld [vmem:[%s648 + $0x30] sm:$0xff]
      %v656 = vld [vmem:[%s648 + $0x38] sm:$0xff]
      %v657 = vld [vmem:[%s648 + $0x40] sm:$0xff]
      %v658 = vld [vmem:[%s648 + $0x48] sm:$0xff]
      %v659 = vld [vmem:[%s648 + $0x50] sm:$0xff]
      %v660 = vld [vmem:[%s648 + $0x58] sm:$0xff]
      %v661 = vld [vmem:[%s648 + $0x60] sm:$0xff]
      %v662 = vld [vmem:[%s648 + $0x68] sm:$0xff]
      %v663 = vld [vmem:[%s648 + $0x70] sm:$0xff]
      %v664 = vld [vmem:[%s648 + $0x78] sm:$0xff]
      %v665 = vld [vmem:[%s648 + $0x80] sm:$0xff]
      %v666 = vld [vmem:[%s648 + $0x88] sm:$0xff]
      %v667 = vld [vmem:[%s648 + $0x90] sm:$0xff]
      %v668 = vld [vmem:[%s648 + $0x98] sm:$0xff]
      %v669 = vld [vmem:[%s648 + $0xa0] sm:$0xff]
      %v670 = vld [vmem:[%s648 + $0xa8] sm:$0x1]
      %v671 = vmul.f32 %v649, %v649
      %v672 = vmul.f32 %v650, %v650
      %v673 = vmul.f32 %v651, %v651
      %v674 = vmul.f32 %v652, %v652
      %v675 = vmul.f32 %v653, %v653
      %v676 = vmul.f32 %v654, %v654
      %v677 = vmul.f32 %v655, %v655
      %v678 = vmul.f32 %v656, %v656
      %v679 = vmul.f32 %v657, %v657
      %v680 = vmul.f32 %v658, %v658
      %v681 = vmul.f32 %v659, %v659
      %v682 = vmul.f32 %v660, %v660
      %v683 = vmul.f32 %v661, %v661
      %v684 = vmul.f32 %v662, %v662
      %v685 = vmul.f32 %v663, %v663
      %v686 = vmul.f32 %v664, %v664
      %v687 = vmul.f32 %v665, %v665
      %v688 = vmul.f32 %v666, %v666
      %v689 = vmul.f32 %v667, %v667
      %v690 = vmul.f32 %v668, %v668
      %v691 = vmul.f32 %v669, %v669
      %v692 = vmul.f32 %v670, %v670
      %v693 = vmul.f32 %v671, %v649
      %v694 = vmul.f32 %v672, %v650
      %v695 = vmul.f32 %v673, %v651
      %v696 = vmul.f32 %v674, %v652
      %v697 = vmul.f32 %v675, %v653
      %v698 = vmul.f32 %v676, %v654
      %v699 = vmul.f32 %v677, %v655
      %v700 = vmul.f32 %v678, %v656
      %v701 = vmul.f32 %v679, %v657
      %v702 = vmul.f32 %v680, %v658
      %v703 = vmul.f32 %v681, %v659
      %v704 = vmul.f32 %v682, %v660
      %v705 = vmul.f32 %v683, %v661
      %v706 = vmul.f32 %v684, %v662
      %v707 = vmul.f32 %v685, %v663
      %v708 = vmul.f32 %v686, %v664
      %v709 = vmul.f32 %v687, %v665
      %v710 = vmul.f32 %v688, %v666
      %v711 = vmul.f32 %v689, %v667
      %v712 = vmul.f32 %v690, %v668
      %v713 = vmul.f32 %v691, %v669
      %v714 = vmul.f32 %v692, %v670
      %737 = vrot.lane.b32.xlu0 %v671, 9
      %v738 = vpop.permute.xlu0 %737
      %739 = vrot.lane.b32.xlu0 %v672, 9
      %v740 = vpop.permute.xlu0 %739
      %741 = vrot.lane.b32.xlu0 %v673, 9
      %v742 = vpop.permute.xlu0 %741
      %743 = vrot.lane.b32.xlu0 %v674, 9
      %v744 = vpop.permute.xlu0 %743
      %745 = vrot.lane.b32.xlu0 %v675, 9
      %v746 = vpop.permute.xlu0 %745
      %747 = vrot.lane.b32.xlu0 %v676, 9
      %v748 = vpop.permute.xlu0 %747
      %749 = vrot.lane.b32.xlu0 %v677, 9
      %v750 = vpop.permute.xlu0 %749
      %751 = vrot.lane.b32.xlu0 %v678, 9
      %v752 = vpop.permute.xlu0 %751
      %753 = vrot.lane.b32.xlu0 %v679, 9
      %v754 = vpop.permute.xlu0 %753
      %755 = vrot.lane.b32.xlu0 %v680, 9
      %v756 = vpop.permute.xlu0 %755
      %757 = vrot.lane.b32.xlu0 %v681, 9
      %v758 = vpop.permute.xlu0 %757
      %759 = vrot.lane.b32.xlu0 %v682, 9
      %v760 = vpop.permute.xlu0 %759
      %761 = vrot.lane.b32.xlu0 %v683, 9
      %v762 = vpop.permute.xlu0 %761
      %763 = vrot.lane.b32.xlu0 %v684, 9
      %v764 = vpop.permute.xlu0 %763
      %765 = vrot.lane.b32.xlu0 %v685, 9
      %v766 = vpop.permute.xlu0 %765
      %767 = vrot.lane.b32.xlu0 %v686, 9
      %v768 = vpop.permute.xlu0 %767
      %769 = vrot.lane.b32.xlu0 %v687, 9
      %v770 = vpop.permute.xlu0 %769
      %771 = vrot.lane.b32.xlu0 %v688, 9
      %v772 = vpop.permute.xlu0 %771
      %773 = vrot.lane.b32.xlu0 %v689, 9
      %v774 = vpop.permute.xlu0 %773
      %775 = vrot.lane.b32.xlu0 %v690, 9
      %v776 = vpop.permute.xlu0 %775
      %777 = vrot.lane.b32.xlu0 %v691, 9
      %v778 = vpop.permute.xlu0 %777
      %779 = vrot.lane.b32.xlu0 %v692, 9
      %v780 = vpop.permute.xlu0 %779
      %825 = vrot.lane.b32.xlu0 %v693, 18
      %v826 = vpop.permute.xlu0 %825
      %827 = vrot.lane.b32.xlu0 %v694, 18
      %v828 = vpop.permute.xlu0 %827
      %829 = vrot.lane.b32.xlu0 %v695, 18
      %v830 = vpop.permute.xlu0 %829
      %831 = vrot.lane.b32.xlu0 %v696, 18
      %v832 = vpop.permute.xlu0 %831
      %833 = vrot.lane.b32.xlu0 %v697, 18
      %v834 = vpop.permute.xlu0 %833
      %835 = vrot.lane.b32.xlu0 %v698, 18
      %v836 = vpop.permute.xlu0 %835
      %837 = vrot.lane.b32.xlu0 %v699, 18
      %v838 = vpop.permute.xlu0 %837
      %839 = vrot.lane.b32.xlu0 %v700, 18
      %v840 = vpop.permute.xlu0 %839
      %841 = vrot.lane.b32.xlu0 %v701, 18
      %v842 = vpop.permute.xlu0 %841
      %843 = vrot.lane.b32.xlu0 %v702, 18
      %v844 = vpop.permute.xlu0 %843
      %845 = vrot.lane.b32.xlu0 %v703, 18
      %v846 = vpop.permute.xlu0 %845
      %847 = vrot.lane.b32.xlu0 %v704, 18
      %v848 = vpop.permute.xlu0 %847
      %849 = vrot.lane.b32.xlu0 %v705, 18
      %v850 = vpop.permute.xlu0 %849
      %851 = vrot.lane.b32.xlu0 %v706, 18
      %v852 = vpop.permute.xlu0 %851
      %853 = vrot.lane.b32.xlu0 %v707, 18
      %v854 = vpop.permute.xlu0 %853
      %855 = vrot.lane.b32.xlu0 %v708, 18
      %v856 = vpop.permute.xlu0 %855
      %857 = vrot.lane.b32.xlu0 %v709, 18
      %v858 = vpop.permute.xlu0 %857
      %859 = vrot.lane.b32.xlu0 %v710, 18
      %v860 = vpop.permute.xlu0 %859
      %861 = vrot.lane.b32.xlu0 %v711, 18
      %v862 = vpop.permute.xlu0 %861
      %863 = vrot.lane.b32.xlu0 %v712, 18
      %v864 = vpop.permute.xlu0 %863
      %865 = vrot.lane.b32.xlu0 %v713, 18
      %v866 = vpop.permute.xlu0 %865
      %867 = vrot.lane.b32.xlu0 %v714, 18
      %v868 = vpop.permute.xlu0 %867
      %v891 = vsel %vm418, %v649, %v738
      %v892 = vsel %vm418, %v650, %v740
      %v893 = vsel %vm418, %v651, %v742
      %v894 = vsel %vm418, %v652, %v744
      %v895 = vsel %vm418, %v653, %v746
      %v896 = vsel %vm418, %v654, %v748
      %v897 = vsel %vm418, %v655, %v750
      %v898 = vsel %vm418, %v656, %v752
      %v899 = vsel %vm418, %v657, %v754
      %v900 = vsel %vm418, %v658, %v756
      %v901 = vsel %vm418, %v659, %v758
      %v902 = vsel %vm418, %v660, %v760
      %v903 = vsel %vm418, %v661, %v762
      %v904 = vsel %vm418, %v662, %v764
      %v905 = vsel %vm418, %v663, %v766
      %v906 = vsel %vm418, %v664, %v768
      %v907 = vsel %vm418, %v665, %v770
      %v908 = vsel %vm418, %v666, %v772
      %v909 = vsel %vm418, %v667, %v774
      %v910 = vsel %vm418, %v668, %v776
      %v911 = vsel %vm418, %v669, %v778
      %v912 = vsel %vm418, %v670, %v780
      %v913 = vsel %vm441, %v891, %v826
      %v914 = vsel %vm441, %v892, %v828
      %v915 = vsel %vm441, %v893, %v830
      %v916 = vsel %vm441, %v894, %v832
      %v917 = vsel %vm441, %v895, %v834
      %v918 = vsel %vm441, %v896, %v836
      %v919 = vsel %vm441, %v897, %v838
      %v920 = vsel %vm441, %v898, %v840
      %v921 = vsel %vm441, %v899, %v842
      %v922 = vsel %vm441, %v900, %v844
      %v923 = vsel %vm441, %v901, %v846
      %v924 = vsel %vm441, %v902, %v848
      %v925 = vsel %vm441, %v903, %v850
      %v926 = vsel %vm441, %v904, %v852
      %v927 = vsel %vm441, %v905, %v854
      %v928 = vsel %vm441, %v906, %v856
      %v929 = vsel %vm441, %v907, %v858
      %v930 = vsel %vm441, %v908, %v860
      %v931 = vsel %vm441, %v909, %v862
      %v932 = vsel %vm441, %v910, %v864
      %v933 = vsel %vm441, %v911, %v866
      %v934 = vsel %vm441, %v912, %v868
      %v935 = vpack.c.bf16 %v914, %v913
      %v936 = vpack.c.bf16 %v916, %v915
      %v937 = vpack.c.bf16 %v918, %v917
      %v938 = vpack.c.bf16 %v920, %v919
      %v939 = vpack.c.bf16 %v922, %v921
      %v940 = vpack.c.bf16 %v924, %v923
      %v941 = vpack.c.bf16 %v926, %v925
      %v942 = vpack.c.bf16 %v928, %v927
      %v943 = vpack.c.bf16 %v930, %v929
      %v944 = vpack.c.bf16 %v932, %v931
      %v945 = vpack.c.bf16 %v934, %v933
      %v947 = vsel %vm486, %v935, 0
      %v950 = vsel %vm486, %v936, 0
      %v953 = vsel %vm486, %v937, 0
      %v956 = vsel %vm486, %v938, 0
      %v959 = vsel %vm486, %v939, 0
      %v962 = vsel %vm486, %v940, 0
      %v965 = vsel %vm486, %v941, 0
      %v968 = vsel %vm486, %v942, 0
      %v971 = vsel %vm486, %v943, 0
      %v974 = vsel %vm486, %v944, 0
      %v977 = vsel %vm486, %v945, 0
      %979 = vmatprep.subr.bf16.mxu0 0
      %980 = vmatpush1.bf16.msra.mxu0 0
      %981 = vmatprep.subr.bf16.mxu0 0
      %982 = vmatpush1.bf16.msra.mxu0 0
      %983 = vmatprep.subr.bf16.mxu0 0
      %984 = vmatpush1.bf16.msra.mxu0 0
      %985 = vmatprep.subr.bf16.mxu0 0
      %986 = vmatpush1.bf16.msra.mxu0 0
      %987 = vmatprep.subr.bf16.mxu0 0
      %988 = vmatpush1.bf16.msra.mxu0 0
      %989 = vmatprep.subr.bf16.mxu0 0
      %990 = vmatpush1.bf16.msra.mxu0 0
      %991 = vmatprep.subr.bf16.mxu0 0
      %992 = vmatpush1.bf16.msra.mxu0 %v525
      %993 = vmatprep.subr.bf16.mxu0 0
      %994 = vmatpush1.bf16.msra.mxu0 %v483
      %995 = vmatprep.subr.bf16.mxu0 0
      %996 = vmatpush2.bf16.msra.mxu0 0
      %997 = vmatprep.subr.bf16.mxu0 0
      %998 = vmatpush2.bf16.msra.mxu0 0
      %999 = vmatprep.subr.bf16.mxu0 0
      %1000 = vmatpush2.bf16.msra.mxu0 0
      %1001 = vmatprep.subr.bf16.mxu0 0
      %1002 = vmatpush2.bf16.msra.mxu0 0
      %1003 = vmatprep.subr.bf16.mxu0 0
      %1004 = vmatpush2.bf16.msra.mxu0 0
      %1005 = vmatprep.subr.bf16.mxu0 0
      %1006 = vmatpush2.bf16.msra.mxu0 0
      %1007 = vmatprep.subr.bf16.mxu0 0
      %1008 = vmatpush2.bf16.msra.mxu0 0
      %1009 = vmatprep.subr.bf16.mxu0 0
      %1010 = vmatpush2.bf16.msra.mxu0 0
      %1011 = vmatprep.mubr.bf16.mxu0 0
      %1012 = vmatmul.mubr.bf16.gmra.mxu0 %v947
      %v1013 = vpop.f32.mrf.mxu0
      %v1014 = vadd.f32 0.0, %v1013
      %v1015 = vpop.f32.mrf.mxu0
      %v1016 = vpop.f32.mrf.mxu0
      %v1017 = vadd.f32 0.0, %v1016
      %v1018 = vpop.f32.mrf.mxu0
      %1019 = vmatprep.mubr.bf16.mxu0 0
      %1020 = vmatmul.mubr.bf16.gmra.mxu0 %v950
      %v1021 = vpop.f32.mrf.mxu0
      %v1022 = vadd.f32 0.0, %v1021
      %v1023 = vpop.f32.mrf.mxu0
      %v1024 = vpop.f32.mrf.mxu0
      %v1025 = vadd.f32 0.0, %v1024
      %v1026 = vpop.f32.mrf.mxu0
      %1027 = vmatprep.mubr.bf16.mxu0 0
      %1028 = vmatmul.mubr.bf16.gmra.mxu0 %v953
      %v1029 = vpop.f32.mrf.mxu0
      %v1030 = vadd.f32 0.0, %v1029
      %v1031 = vpop.f32.mrf.mxu0
      %v1032 = vpop.f32.mrf.mxu0
      %v1033 = vadd.f32 0.0, %v1032
      %v1034 = vpop.f32.mrf.mxu0
      %1035 = vmatprep.mubr.bf16.mxu0 0
      %1036 = vmatmul.mubr.bf16.gmra.mxu0 %v956
      %v1037 = vpop.f32.mrf.mxu0
      %v1038 = vadd.f32 0.0, %v1037
      %v1039 = vpop.f32.mrf.mxu0
      %v1040 = vpop.f32.mrf.mxu0
      %v1041 = vadd.f32 0.0, %v1040
      %v1042 = vpop.f32.mrf.mxu0
      %1043 = vmatprep.mubr.bf16.mxu0 0
      %1044 = vmatmul.mubr.bf16.gmra.mxu0 %v959
      %v1045 = vpop.f32.mrf.mxu0
      %v1046 = vadd.f32 0.0, %v1045
      %v1047 = vpop.f32.mrf.mxu0
      %v1048 = vpop.f32.mrf.mxu0
      %v1049 = vadd.f32 0.0, %v1048
      %v1050 = vpop.f32.mrf.mxu0
      %1051 = vmatprep.mubr.bf16.mxu0 0
      %1052 = vmatmul.mubr.bf16.gmra.mxu0 %v962
      %v1053 = vpop.f32.mrf.mxu0
      %v1054 = vadd.f32 0.0, %v1053
      %v1055 = vpop.f32.mrf.mxu0
      %v1056 = vpop.f32.mrf.mxu0
      %v1057 = vadd.f32 0.0, %v1056
      %v1058 = vpop.f32.mrf.mxu0
      %1059 = vmatprep.mubr.bf16.mxu0 0
      %1060 = vmatmul.mubr.bf16.gmra.mxu0 %v965
      %v1061 = vpop.f32.mrf.mxu0
      %v1062 = vadd.f32 0.0, %v1061
      %v1063 = vpop.f32.mrf.mxu0
      %v1064 = vpop.f32.mrf.mxu0
      %v1065 = vadd.f32 0.0, %v1064
      %v1066 = vpop.f32.mrf.mxu0
      %1067 = vmatprep.mubr.bf16.mxu0 0
      %1068 = vmatmul.mubr.bf16.gmra.mxu0 %v968
      %v1069 = vpop.f32.mrf.mxu0
      %v1070 = vadd.f32 0.0, %v1069
      %v1071 = vpop.f32.mrf.mxu0
      %v1072 = vpop.f32.mrf.mxu0
      %v1073 = vadd.f32 0.0, %v1072
      %v1074 = vpop.f32.mrf.mxu0
      %1075 = vmatprep.mubr.bf16.mxu0 0
      %1076 = vmatmul.mubr.bf16.gmra.mxu0 %v971
      %v1077 = vpop.f32.mrf.mxu0
      %v1078 = vadd.f32 0.0, %v1077
      %v1079 = vpop.f32.mrf.mxu0
      %v1080 = vpop.f32.mrf.mxu0
      %v1081 = vadd.f32 0.0, %v1080
      %v1082 = vpop.f32.mrf.mxu0
      %1083 = vmatprep.mubr.bf16.mxu0 0
      %1084 = vmatmul.mubr.bf16.gmra.mxu0 %v974
      %v1085 = vpop.f32.mrf.mxu0
      %v1086 = vadd.f32 0.0, %v1085
      %v1087 = vpop.f32.mrf.mxu0
      %v1088 = vpop.f32.mrf.mxu0
      %v1089 = vadd.f32 0.0, %v1088
      %v1090 = vpop.f32.mrf.mxu0
      %1091 = vmatprep.mubr.bf16.mxu0 0
      %1092 = vmatmul.mubr.bf16.gmra.mxu0 %v977
      %v1093 = vpop.f32.mrf.mxu0
      %v1094 = vadd.f32 0.0, %v1093
      %v1095 = vpop.f32.mrf.mxu0
      %v1096 = vpop.f32.mrf.mxu0
      %v1097 = vadd.f32 0.0, %v1096
      %v1098 = vpop.f32.mrf.mxu0
      %1099 = vdwg.mxu0
      %v1100 = vmax.f32 %v562, %v1014
      %v1101 = vmax.f32 %v565, %v1017
      %v1102 = vmax.f32 %v570, %v1022
      %v1103 = vmax.f32 %v573, %v1025
      %v1104 = vmax.f32 %v578, %v1030
      %v1105 = vmax.f32 %v581, %v1033
      %v1106 = vmax.f32 %v586, %v1038
      %v1107 = vmax.f32 %v589, %v1041
      %v1108 = vmax.f32 %v594, %v1046
      %v1109 = vmax.f32 %v597, %v1049
      %v1110 = vmax.f32 %v602, %v1054
      %v1111 = vmax.f32 %v605, %v1057
      %v1112 = vmax.f32 %v610, %v1062
      %v1113 = vmax.f32 %v613, %v1065
      %v1114 = vmax.f32 %v618, %v1070
      %v1115 = vmax.f32 %v621, %v1073
      %v1116 = vmax.f32 %v626, %v1078
      %v1117 = vmax.f32 %v629, %v1081
      %v1118 = vmax.f32 %v634, %v1086
      %v1119 = vmax.f32 %v637, %v1089
      %v1120 = vmax.f32 %v642, %v1094
      %v1121 = vmax.f32 %v645, %v1097
      %s1122 = scalar_lea.vmem %s165, 352
      %v1123 = vld [vmem:[%s1122] sm:$0xff]
      %v1124 = vld [vmem:[%s1122 + $0x8] sm:$0xff]
      %v1125 = vld [vmem:[%s1122 + $0x10] sm:$0xff]
      %v1126 = vld [vmem:[%s1122 + $0x18] sm:$0xff]
      %v1127 = vld [vmem:[%s1122 + $0x20] sm:$0xff]
      %v1128 = vld [vmem:[%s1122 + $0x28] sm:$0xff]
      %v1129 = vld [vmem:[%s1122 + $0x30] sm:$0xff]
      %v1130 = vld [vmem:[%s1122 + $0x38] sm:$0xff]
      %v1131 = vld [vmem:[%s1122 + $0x40] sm:$0xff]
      %v1132 = vld [vmem:[%s1122 + $0x48] sm:$0xff]
      %v1133 = vld [vmem:[%s1122 + $0x50] sm:$0xff]
      %v1134 = vld [vmem:[%s1122 + $0x58] sm:$0xff]
      %v1135 = vld [vmem:[%s1122 + $0x60] sm:$0xff]
      %v1136 = vld [vmem:[%s1122 + $0x68] sm:$0xff]
      %v1137 = vld [vmem:[%s1122 + $0x70] sm:$0xff]
      %v1138 = vld [vmem:[%s1122 + $0x78] sm:$0xff]
      %v1139 = vld [vmem:[%s1122 + $0x80] sm:$0xff]
      %v1140 = vld [vmem:[%s1122 + $0x88] sm:$0xff]
      %v1141 = vld [vmem:[%s1122 + $0x90] sm:$0xff]
      %v1142 = vld [vmem:[%s1122 + $0x98] sm:$0xff]
      %v1143 = vld [vmem:[%s1122 + $0xa0] sm:$0xff]
      %v1144 = vld [vmem:[%s1122 + $0xa8] sm:$0x1]
      %v1145 = vmul.f32 %v1123, %v1123
      %v1146 = vmul.f32 %v1124, %v1124
      %v1147 = vmul.f32 %v1125, %v1125
      %v1148 = vmul.f32 %v1126, %v1126
      %v1149 = vmul.f32 %v1127, %v1127
      %v1150 = vmul.f32 %v1128, %v1128
      %v1151 = vmul.f32 %v1129, %v1129
      %v1152 = vmul.f32 %v1130, %v1130
      %v1153 = vmul.f32 %v1131, %v1131
      %v1154 = vmul.f32 %v1132, %v1132
      %v1155 = vmul.f32 %v1133, %v1133
      %v1156 = vmul.f32 %v1134, %v1134
      %v1157 = vmul.f32 %v1135, %v1135
      %v1158 = vmul.f32 %v1136, %v1136
      %v1159 = vmul.f32 %v1137, %v1137
      %v1160 = vmul.f32 %v1138, %v1138
      %v1161 = vmul.f32 %v1139, %v1139
      %v1162 = vmul.f32 %v1140, %v1140
      %v1163 = vmul.f32 %v1141, %v1141
      %v1164 = vmul.f32 %v1142, %v1142
      %v1165 = vmul.f32 %v1143, %v1143
      %v1166 = vmul.f32 %v1144, %v1144
      %v1167 = vmul.f32 %v1145, %v1123
      %v1168 = vmul.f32 %v1146, %v1124
      %v1169 = vmul.f32 %v1147, %v1125
      %v1170 = vmul.f32 %v1148, %v1126
      %v1171 = vmul.f32 %v1149, %v1127
      %v1172 = vmul.f32 %v1150, %v1128
      %v1173 = vmul.f32 %v1151, %v1129
      %v1174 = vmul.f32 %v1152, %v1130
      %v1175 = vmul.f32 %v1153, %v1131
      %v1176 = vmul.f32 %v1154, %v1132
      %v1177 = vmul.f32 %v1155, %v1133
      %v1178 = vmul.f32 %v1156, %v1134
      %v1179 = vmul.f32 %v1157, %v1135
      %v1180 = vmul.f32 %v1158, %v1136
      %v1181 = vmul.f32 %v1159, %v1137
      %v1182 = vmul.f32 %v1160, %v1138
      %v1183 = vmul.f32 %v1161, %v1139
      %v1184 = vmul.f32 %v1162, %v1140
      %v1185 = vmul.f32 %v1163, %v1141
      %v1186 = vmul.f32 %v1164, %v1142
      %v1187 = vmul.f32 %v1165, %v1143
      %v1188 = vmul.f32 %v1166, %v1144
      %1211 = vrot.lane.b32.xlu0 %v1145, 9
      %v1212 = vpop.permute.xlu0 %1211
      %1213 = vrot.lane.b32.xlu0 %v1146, 9
      %v1214 = vpop.permute.xlu0 %1213
      %1215 = vrot.lane.b32.xlu0 %v1147, 9
      %v1216 = vpop.permute.xlu0 %1215
      %1217 = vrot.lane.b32.xlu0 %v1148, 9
      %v1218 = vpop.permute.xlu0 %1217
      %1219 = vrot.lane.b32.xlu0 %v1149, 9
      %v1220 = vpop.permute.xlu0 %1219
      %1221 = vrot.lane.b32.xlu0 %v1150, 9
      %v1222 = vpop.permute.xlu0 %1221
      %1223 = vrot.lane.b32.xlu0 %v1151, 9
      %v1224 = vpop.permute.xlu0 %1223
      %1225 = vrot.lane.b32.xlu0 %v1152, 9
      %v1226 = vpop.permute.xlu0 %1225
      %1227 = vrot.lane.b32.xlu0 %v1153, 9
      %v1228 = vpop.permute.xlu0 %1227
      %1229 = vrot.lane.b32.xlu0 %v1154, 9
      %v1230 = vpop.permute.xlu0 %1229
      %1231 = vrot.lane.b32.xlu0 %v1155, 9
      %v1232 = vpop.permute.xlu0 %1231
      %1233 = vrot.lane.b32.xlu0 %v1156, 9
      %v1234 = vpop.permute.xlu0 %1233
      %1235 = vrot.lane.b32.xlu0 %v1157, 9
      %v1236 = vpop.permute.xlu0 %1235
      %1237 = vrot.lane.b32.xlu0 %v1158, 9
      %v1238 = vpop.permute.xlu0 %1237
      %1239 = vrot.lane.b32.xlu0 %v1159, 9
      %v1240 = vpop.permute.xlu0 %1239
      %1241 = vrot.lane.b32.xlu0 %v1160, 9
      %v1242 = vpop.permute.xlu0 %1241
      %1243 = vrot.lane.b32.xlu0 %v1161, 9
      %v1244 = vpop.permute.xlu0 %1243
      %1245 = vrot.lane.b32.xlu0 %v1162, 9
      %v1246 = vpop.permute.xlu0 %1245
      %1247 = vrot.lane.b32.xlu0 %v1163, 9
      %v1248 = vpop.permute.xlu0 %1247
      %1249 = vrot.lane.b32.xlu0 %v1164, 9
      %v1250 = vpop.permute.xlu0 %1249
      %1251 = vrot.lane.b32.xlu0 %v1165, 9
      %v1252 = vpop.permute.xlu0 %1251
      %1253 = vrot.lane.b32.xlu0 %v1166, 9
      %v1254 = vpop.permute.xlu0 %1253
      %1299 = vrot.lane.b32.xlu0 %v1167, 18
      %v1300 = vpop.permute.xlu0 %1299
      %1301 = vrot.lane.b32.xlu0 %v1168, 18
      %v1302 = vpop.permute.xlu0 %1301
      %1303 = vrot.lane.b32.xlu0 %v1169, 18
      %v1304 = vpop.permute.xlu0 %1303
      %1305 = vrot.lane.b32.xlu0 %v1170, 18
      %v1306 = vpop.permute.xlu0 %1305
      %1307 = vrot.lane.b32.xlu0 %v1171, 18
      %v1308 = vpop.permute.xlu0 %1307
      %1309 = vrot.lane.b32.xlu0 %v1172, 18
      %v1310 = vpop.permute.xlu0 %1309
      %1311 = vrot.lane.b32.xlu0 %v1173, 18
      %v1312 = vpop.permute.xlu0 %1311
      %1313 = vrot.lane.b32.xlu0 %v1174, 18
      %v1314 = vpop.permute.xlu0 %1313
      %1315 = vrot.lane.b32.xlu0 %v1175, 18
      %v1316 = vpop.permute.xlu0 %1315
      %1317 = vrot.lane.b32.xlu0 %v1176, 18
      %v1318 = vpop.permute.xlu0 %1317
      %1319 = vrot.lane.b32.xlu0 %v1177, 18
      %v1320 = vpop.permute.xlu0 %1319
      %1321 = vrot.lane.b32.xlu0 %v1178, 18
      %v1322 = vpop.permute.xlu0 %1321
      %1323 = vrot.lane.b32.xlu0 %v1179, 18
      %v1324 = vpop.permute.xlu0 %1323
      %1325 = vrot.lane.b32.xlu0 %v1180, 18
      %v1326 = vpop.permute.xlu0 %1325
      %1327 = vrot.lane.b32.xlu0 %v1181, 18
      %v1328 = vpop.permute.xlu0 %1327
      %1329 = vrot.lane.b32.xlu0 %v1182, 18
      %v1330 = vpop.permute.xlu0 %1329
      %1331 = vrot.lane.b32.xlu0 %v1183, 18
      %v1332 = vpop.permute.xlu0 %1331
      %1333 = vrot.lane.b32.xlu0 %v1184, 18
      %v1334 = vpop.permute.xlu0 %1333
      %1335 = vrot.lane.b32.xlu0 %v1185, 18
      %v1336 = vpop.permute.xlu0 %1335
      %1337 = vrot.lane.b32.xlu0 %v1186, 18
      %v1338 = vpop.permute.xlu0 %1337
      %1339 = vrot.lane.b32.xlu0 %v1187, 18
      %v1340 = vpop.permute.xlu0 %1339
      %1341 = vrot.lane.b32.xlu0 %v1188, 18
      %v1342 = vpop.permute.xlu0 %1341
      %v1365 = vsel %vm418, %v1123, %v1212
      %v1366 = vsel %vm418, %v1124, %v1214
      %v1367 = vsel %vm418, %v1125, %v1216
      %v1368 = vsel %vm418, %v1126, %v1218
      %v1369 = vsel %vm418, %v1127, %v1220
      %v1370 = vsel %vm418, %v1128, %v1222
      %v1371 = vsel %vm418, %v1129, %v1224
      %v1372 = vsel %vm418, %v1130, %v1226
      %v1373 = vsel %vm418, %v1131, %v1228
      %v1374 = vsel %vm418, %v1132, %v1230
      %v1375 = vsel %vm418, %v1133, %v1232
      %v1376 = vsel %vm418, %v1134, %v1234
      %v1377 = vsel %vm418, %v1135, %v1236
      %v1378 = vsel %vm418, %v1136, %v1238
      %v1379 = vsel %vm418, %v1137, %v1240
      %v1380 = vsel %vm418, %v1138, %v1242
      %v1381 = vsel %vm418, %v1139, %v1244
      %v1382 = vsel %vm418, %v1140, %v1246
      %v1383 = vsel %vm418, %v1141, %v1248
      %v1384 = vsel %vm418, %v1142, %v1250
      %v1385 = vsel %vm418, %v1143, %v1252
      %v1386 = vsel %vm418, %v1144, %v1254
      %v1387 = vsel %vm441, %v1365, %v1300
      %v1388 = vsel %vm441, %v1366, %v1302
      %v1389 = vsel %vm441, %v1367, %v1304
      %v1390 = vsel %vm441, %v1368, %v1306
      %v1391 = vsel %vm441, %v1369, %v1308
      %v1392 = vsel %vm441, %v1370, %v1310
      %v1393 = vsel %vm441, %v1371, %v1312
      %v1394 = vsel %vm441, %v1372, %v1314
      %v1395 = vsel %vm441, %v1373, %v1316
      %v1396 = vsel %vm441, %v1374, %v1318
      %v1397 = vsel %vm441, %v1375, %v1320
      %v1398 = vsel %vm441, %v1376, %v1322
      %v1399 = vsel %vm441, %v1377, %v1324
      %v1400 = vsel %vm441, %v1378, %v1326
      %v1401 = vsel %vm441, %v1379, %v1328
      %v1402 = vsel %vm441, %v1380, %v1330
      %v1403 = vsel %vm441, %v1381, %v1332
      %v1404 = vsel %vm441, %v1382, %v1334
      %v1405 = vsel %vm441, %v1383, %v1336
      %v1406 = vsel %vm441, %v1384, %v1338
      %v1407 = vsel %vm441, %v1385, %v1340
      %v1408 = vsel %vm441, %v1386, %v1342
      %v1409 = vpack.c.bf16 %v1388, %v1387
      %v1410 = vpack.c.bf16 %v1390, %v1389
      %v1411 = vpack.c.bf16 %v1392, %v1391
      %v1412 = vpack.c.bf16 %v1394, %v1393
      %v1413 = vpack.c.bf16 %v1396, %v1395
      %v1414 = vpack.c.bf16 %v1398, %v1397
      %v1415 = vpack.c.bf16 %v1400, %v1399
      %v1416 = vpack.c.bf16 %v1402, %v1401
      %v1417 = vpack.c.bf16 %v1404, %v1403
      %v1418 = vpack.c.bf16 %v1406, %v1405
      %v1419 = vpack.c.bf16 %v1408, %v1407
      %v1421 = vsel %vm486, %v1409, 0
      %v1424 = vsel %vm486, %v1410, 0
      %v1427 = vsel %vm486, %v1411, 0
      %v1430 = vsel %vm486, %v1412, 0
      %v1433 = vsel %vm486, %v1413, 0
      %v1436 = vsel %vm486, %v1414, 0
      %v1439 = vsel %vm486, %v1415, 0
      %v1442 = vsel %vm486, %v1416, 0
      %v1445 = vsel %vm486, %v1417, 0
      %v1448 = vsel %vm486, %v1418, 0
      %v1451 = vsel %vm486, %v1419, 0
      %1453 = vmatprep.subr.bf16.mxu0 0
      %1454 = vmatpush1.bf16.msra.mxu0 0
      %1455 = vmatprep.subr.bf16.mxu0 0
      %1456 = vmatpush1.bf16.msra.mxu0 0
      %1457 = vmatprep.subr.bf16.mxu0 0
      %1458 = vmatpush1.bf16.msra.mxu0 0
      %1459 = vmatprep.subr.bf16.mxu0 0
      %1460 = vmatpush1.bf16.msra.mxu0 0
      %1461 = vmatprep.subr.bf16.mxu0 0
      %1462 = vmatpush1.bf16.msra.mxu0 0
      %1463 = vmatprep.subr.bf16.mxu0 0
      %1464 = vmatpush1.bf16.msra.mxu0 0
      %1465 = vmatprep.subr.bf16.mxu0 0
      %1466 = vmatpush1.bf16.msra.mxu0 %v525
      %1467 = vmatprep.subr.bf16.mxu0 0
      %1468 = vmatpush1.bf16.msra.mxu0 %v483
      %1469 = vmatprep.subr.bf16.mxu0 0
      %1470 = vmatpush2.bf16.msra.mxu0 0
      %1471 = vmatprep.subr.bf16.mxu0 0
      %1472 = vmatpush2.bf16.msra.mxu0 0
      %1473 = vmatprep.subr.bf16.mxu0 0
      %1474 = vmatpush2.bf16.msra.mxu0 0
      %1475 = vmatprep.subr.bf16.mxu0 0
      %1476 = vmatpush2.bf16.msra.mxu0 0
      %1477 = vmatprep.subr.bf16.mxu0 0
      %1478 = vmatpush2.bf16.msra.mxu0 0
      %1479 = vmatprep.subr.bf16.mxu0 0
      %1480 = vmatpush2.bf16.msra.mxu0 0
      %1481 = vmatprep.subr.bf16.mxu0 0
      %1482 = vmatpush2.bf16.msra.mxu0 0
      %1483 = vmatprep.subr.bf16.mxu0 0
      %1484 = vmatpush2.bf16.msra.mxu0 0
      %1485 = vmatprep.mubr.bf16.mxu0 0
      %1486 = vmatmul.mubr.bf16.gmra.mxu0 %v1421
      %v1487 = vpop.f32.mrf.mxu0
      %v1488 = vadd.f32 0.0, %v1487
      %v1489 = vpop.f32.mrf.mxu0
      %v1490 = vpop.f32.mrf.mxu0
      %v1491 = vadd.f32 0.0, %v1490
      %v1492 = vpop.f32.mrf.mxu0
      %1493 = vmatprep.mubr.bf16.mxu0 0
      %1494 = vmatmul.mubr.bf16.gmra.mxu0 %v1424
      %v1495 = vpop.f32.mrf.mxu0
      %v1496 = vadd.f32 0.0, %v1495
      %v1497 = vpop.f32.mrf.mxu0
      %v1498 = vpop.f32.mrf.mxu0
      %v1499 = vadd.f32 0.0, %v1498
      %v1500 = vpop.f32.mrf.mxu0
      %1501 = vmatprep.mubr.bf16.mxu0 0
      %1502 = vmatmul.mubr.bf16.gmra.mxu0 %v1427
      %v1503 = vpop.f32.mrf.mxu0
      %v1504 = vadd.f32 0.0, %v1503
      %v1505 = vpop.f32.mrf.mxu0
      %v1506 = vpop.f32.mrf.mxu0
      %v1507 = vadd.f32 0.0, %v1506
      %v1508 = vpop.f32.mrf.mxu0
      %1509 = vmatprep.mubr.bf16.mxu0 0
      %1510 = vmatmul.mubr.bf16.gmra.mxu0 %v1430
      %v1511 = vpop.f32.mrf.mxu0
      %v1512 = vadd.f32 0.0, %v1511
      %v1513 = vpop.f32.mrf.mxu0
      %v1514 = vpop.f32.mrf.mxu0
      %v1515 = vadd.f32 0.0, %v1514
      %v1516 = vpop.f32.mrf.mxu0
      %1517 = vmatprep.mubr.bf16.mxu0 0
      %1518 = vmatmul.mubr.bf16.gmra.mxu0 %v1433
      %v1519 = vpop.f32.mrf.mxu0
      %v1520 = vadd.f32 0.0, %v1519
      %v1521 = vpop.f32.mrf.mxu0
      %v1522 = vpop.f32.mrf.mxu0
      %v1523 = vadd.f32 0.0, %v1522
      %v1524 = vpop.f32.mrf.mxu0
      %1525 = vmatprep.mubr.bf16.mxu0 0
      %1526 = vmatmul.mubr.bf16.gmra.mxu0 %v1436
      %v1527 = vpop.f32.mrf.mxu0
      %v1528 = vadd.f32 0.0, %v1527
      %v1529 = vpop.f32.mrf.mxu0
      %v1530 = vpop.f32.mrf.mxu0
      %v1531 = vadd.f32 0.0, %v1530
      %v1532 = vpop.f32.mrf.mxu0
      %1533 = vmatprep.mubr.bf16.mxu0 0
      %1534 = vmatmul.mubr.bf16.gmra.mxu0 %v1439
      %v1535 = vpop.f32.mrf.mxu0
      %v1536 = vadd.f32 0.0, %v1535
      %v1537 = vpop.f32.mrf.mxu0
      %v1538 = vpop.f32.mrf.mxu0
      %v1539 = vadd.f32 0.0, %v1538
      %v1540 = vpop.f32.mrf.mxu0
      %1541 = vmatprep.mubr.bf16.mxu0 0
      %1542 = vmatmul.mubr.bf16.gmra.mxu0 %v1442
      %v1543 = vpop.f32.mrf.mxu0
      %v1544 = vadd.f32 0.0, %v1543
      %v1545 = vpop.f32.mrf.mxu0
      %v1546 = vpop.f32.mrf.mxu0
      %v1547 = vadd.f32 0.0, %v1546
      %v1548 = vpop.f32.mrf.mxu0
      %1549 = vmatprep.mubr.bf16.mxu0 0
      %1550 = vmatmul.mubr.bf16.gmra.mxu0 %v1445
      %v1551 = vpop.f32.mrf.mxu0
      %v1552 = vadd.f32 0.0, %v1551
      %v1553 = vpop.f32.mrf.mxu0
      %v1554 = vpop.f32.mrf.mxu0
      %v1555 = vadd.f32 0.0, %v1554
      %v1556 = vpop.f32.mrf.mxu0
      %1557 = vmatprep.mubr.bf16.mxu0 0
      %1558 = vmatmul.mubr.bf16.gmra.mxu0 %v1448
      %v1559 = vpop.f32.mrf.mxu0
      %v1560 = vadd.f32 0.0, %v1559
      %v1561 = vpop.f32.mrf.mxu0
      %v1562 = vpop.f32.mrf.mxu0
      %v1563 = vadd.f32 0.0, %v1562
      %v1564 = vpop.f32.mrf.mxu0
      %1565 = vmatprep.mubr.bf16.mxu0 0
      %1566 = vmatmul.mubr.bf16.gmra.mxu0 %v1451
      %v1567 = vpop.f32.mrf.mxu0
      %v1568 = vadd.f32 0.0, %v1567
      %v1569 = vpop.f32.mrf.mxu0
      %v1570 = vpop.f32.mrf.mxu0
      %v1571 = vadd.f32 0.0, %v1570
      %v1572 = vpop.f32.mrf.mxu0
      %1573 = vdwg.mxu0
      %v1574 = vmax.f32 %v1100, %v1488
      %v1575 = vmax.f32 %v1101, %v1491
      %v1576 = vmax.f32 %v1102, %v1496
      %v1577 = vmax.f32 %v1103, %v1499
      %v1578 = vmax.f32 %v1104, %v1504
      %v1579 = vmax.f32 %v1105, %v1507
      %v1580 = vmax.f32 %v1106, %v1512
      %v1581 = vmax.f32 %v1107, %v1515
      %v1582 = vmax.f32 %v1108, %v1520
      %v1583 = vmax.f32 %v1109, %v1523
      %v1584 = vmax.f32 %v1110, %v1528
      %v1585 = vmax.f32 %v1111, %v1531
      %v1586 = vmax.f32 %v1112, %v1536
      %v1587 = vmax.f32 %v1113, %v1539
      %v1588 = vmax.f32 %v1114, %v1544
      %v1589 = vmax.f32 %v1115, %v1547
      %v1590 = vmax.f32 %v1116, %v1552
      %v1591 = vmax.f32 %v1117, %v1555
      %v1592 = vmax.f32 %v1118, %v1560
      %v1593 = vmax.f32 %v1119, %v1563
      %v1594 = vmax.f32 %v1120, %v1568
      %v1595 = vmax.f32 %v1121, %v1571
      %s1596 = scalar_lea.vmem %s165, 528
      %v1597 = vld [vmem:[%s1596] sm:$0xff]
      %v1598 = vld [vmem:[%s1596 + $0x8] sm:$0xff]
      %v1599 = vld [vmem:[%s1596 + $0x10] sm:$0xff]
      %v1600 = vld [vmem:[%s1596 + $0x18] sm:$0xff]
      %v1601 = vld [vmem:[%s1596 + $0x20] sm:$0xff]
      %v1602 = vld [vmem:[%s1596 + $0x28] sm:$0xff]
      %v1603 = vld [vmem:[%s1596 + $0x30] sm:$0xff]
      %v1604 = vld [vmem:[%s1596 + $0x38] sm:$0xff]
      %v1605 = vld [vmem:[%s1596 + $0x40] sm:$0xff]
      %v1606 = vld [vmem:[%s1596 + $0x48] sm:$0xff]
      %v1607 = vld [vmem:[%s1596 + $0x50] sm:$0xff]
      %v1608 = vld [vmem:[%s1596 + $0x58] sm:$0xff]
      %v1609 = vld [vmem:[%s1596 + $0x60] sm:$0xff]
      %v1610 = vld [vmem:[%s1596 + $0x68] sm:$0xff]
      %v1611 = vld [vmem:[%s1596 + $0x70] sm:$0xff]
      %v1612 = vld [vmem:[%s1596 + $0x78] sm:$0xff]
      %v1613 = vld [vmem:[%s1596 + $0x80] sm:$0xff]
      %v1614 = vld [vmem:[%s1596 + $0x88] sm:$0xff]
      %v1615 = vld [vmem:[%s1596 + $0x90] sm:$0xff]
      %v1616 = vld [vmem:[%s1596 + $0x98] sm:$0xff]
      %v1617 = vld [vmem:[%s1596 + $0xa0] sm:$0xff]
      %v1618 = vld [vmem:[%s1596 + $0xa8] sm:$0x1]
      %v1619 = vmul.f32 %v1597, %v1597
      %v1620 = vmul.f32 %v1598, %v1598
      %v1621 = vmul.f32 %v1599, %v1599
      %v1622 = vmul.f32 %v1600, %v1600
      %v1623 = vmul.f32 %v1601, %v1601
      %v1624 = vmul.f32 %v1602, %v1602
      %v1625 = vmul.f32 %v1603, %v1603
      %v1626 = vmul.f32 %v1604, %v1604
      %v1627 = vmul.f32 %v1605, %v1605
      %v1628 = vmul.f32 %v1606, %v1606
      %v1629 = vmul.f32 %v1607, %v1607
      %v1630 = vmul.f32 %v1608, %v1608
      %v1631 = vmul.f32 %v1609, %v1609
      %v1632 = vmul.f32 %v1610, %v1610
      %v1633 = vmul.f32 %v1611, %v1611
      %v1634 = vmul.f32 %v1612, %v1612
      %v1635 = vmul.f32 %v1613, %v1613
      %v1636 = vmul.f32 %v1614, %v1614
      %v1637 = vmul.f32 %v1615, %v1615
      %v1638 = vmul.f32 %v1616, %v1616
      %v1639 = vmul.f32 %v1617, %v1617
      %v1640 = vmul.f32 %v1618, %v1618
      %v1641 = vmul.f32 %v1619, %v1597
      %v1642 = vmul.f32 %v1620, %v1598
      %v1643 = vmul.f32 %v1621, %v1599
      %v1644 = vmul.f32 %v1622, %v1600
      %v1645 = vmul.f32 %v1623, %v1601
      %v1646 = vmul.f32 %v1624, %v1602
      %v1647 = vmul.f32 %v1625, %v1603
      %v1648 = vmul.f32 %v1626, %v1604
      %v1649 = vmul.f32 %v1627, %v1605
      %v1650 = vmul.f32 %v1628, %v1606
      %v1651 = vmul.f32 %v1629, %v1607
      %v1652 = vmul.f32 %v1630, %v1608
      %v1653 = vmul.f32 %v1631, %v1609
      %v1654 = vmul.f32 %v1632, %v1610
      %v1655 = vmul.f32 %v1633, %v1611
      %v1656 = vmul.f32 %v1634, %v1612
      %v1657 = vmul.f32 %v1635, %v1613
      %v1658 = vmul.f32 %v1636, %v1614
      %v1659 = vmul.f32 %v1637, %v1615
      %v1660 = vmul.f32 %v1638, %v1616
      %v1661 = vmul.f32 %v1639, %v1617
      %v1662 = vmul.f32 %v1640, %v1618
      %1685 = vrot.lane.b32.xlu0 %v1619, 9
      %v1686 = vpop.permute.xlu0 %1685
      %1687 = vrot.lane.b32.xlu0 %v1620, 9
      %v1688 = vpop.permute.xlu0 %1687
      %1689 = vrot.lane.b32.xlu0 %v1621, 9
      %v1690 = vpop.permute.xlu0 %1689
      %1691 = vrot.lane.b32.xlu0 %v1622, 9
      %v1692 = vpop.permute.xlu0 %1691
      %1693 = vrot.lane.b32.xlu0 %v1623, 9
      %v1694 = vpop.permute.xlu0 %1693
      %1695 = vrot.lane.b32.xlu0 %v1624, 9
      %v1696 = vpop.permute.xlu0 %1695
      %1697 = vrot.lane.b32.xlu0 %v1625, 9
      %v1698 = vpop.permute.xlu0 %1697
      %1699 = vrot.lane.b32.xlu0 %v1626, 9
      %v1700 = vpop.permute.xlu0 %1699
      %1701 = vrot.lane.b32.xlu0 %v1627, 9
      %v1702 = vpop.permute.xlu0 %1701
      %1703 = vrot.lane.b32.xlu0 %v1628, 9
      %v1704 = vpop.permute.xlu0 %1703
      %1705 = vrot.lane.b32.xlu0 %v1629, 9
      %v1706 = vpop.permute.xlu0 %1705
      %1707 = vrot.lane.b32.xlu0 %v1630, 9
      %v1708 = vpop.permute.xlu0 %1707
      %1709 = vrot.lane.b32.xlu0 %v1631, 9
      %v1710 = vpop.permute.xlu0 %1709
      %1711 = vrot.lane.b32.xlu0 %v1632, 9
      %v1712 = vpop.permute.xlu0 %1711
      %1713 = vrot.lane.b32.xlu0 %v1633, 9
      %v1714 = vpop.permute.xlu0 %1713
      %1715 = vrot.lane.b32.xlu0 %v1634, 9
      %v1716 = vpop.permute.xlu0 %1715
      %1717 = vrot.lane.b32.xlu0 %v1635, 9
      %v1718 = vpop.permute.xlu0 %1717
      %1719 = vrot.lane.b32.xlu0 %v1636, 9
      %v1720 = vpop.permute.xlu0 %1719
      %1721 = vrot.lane.b32.xlu0 %v1637, 9
      %v1722 = vpop.permute.xlu0 %1721
      %1723 = vrot.lane.b32.xlu0 %v1638, 9
      %v1724 = vpop.permute.xlu0 %1723
      %1725 = vrot.lane.b32.xlu0 %v1639, 9
      %v1726 = vpop.permute.xlu0 %1725
      %1727 = vrot.lane.b32.xlu0 %v1640, 9
      %v1728 = vpop.permute.xlu0 %1727
      %1773 = vrot.lane.b32.xlu0 %v1641, 18
      %v1774 = vpop.permute.xlu0 %1773
      %1775 = vrot.lane.b32.xlu0 %v1642, 18
      %v1776 = vpop.permute.xlu0 %1775
      %1777 = vrot.lane.b32.xlu0 %v1643, 18
      %v1778 = vpop.permute.xlu0 %1777
      %1779 = vrot.lane.b32.xlu0 %v1644, 18
      %v1780 = vpop.permute.xlu0 %1779
      %1781 = vrot.lane.b32.xlu0 %v1645, 18
      %v1782 = vpop.permute.xlu0 %1781
      %1783 = vrot.lane.b32.xlu0 %v1646, 18
      %v1784 = vpop.permute.xlu0 %1783
      %1785 = vrot.lane.b32.xlu0 %v1647, 18
      %v1786 = vpop.permute.xlu0 %1785
      %1787 = vrot.lane.b32.xlu0 %v1648, 18
      %v1788 = vpop.permute.xlu0 %1787
      %1789 = vrot.lane.b32.xlu0 %v1649, 18
      %v1790 = vpop.permute.xlu0 %1789
      %1791 = vrot.lane.b32.xlu0 %v1650, 18
      %v1792 = vpop.permute.xlu0 %1791
      %1793 = vrot.lane.b32.xlu0 %v1651, 18
      %v1794 = vpop.permute.xlu0 %1793
      %1795 = vrot.lane.b32.xlu0 %v1652, 18
      %v1796 = vpop.permute.xlu0 %1795
      %1797 = vrot.lane.b32.xlu0 %v1653, 18
      %v1798 = vpop.permute.xlu0 %1797
      %1799 = vrot.lane.b32.xlu0 %v1654, 18
      %v1800 = vpop.permute.xlu0 %1799
      %1801 = vrot.lane.b32.xlu0 %v1655, 18
      %v1802 = vpop.permute.xlu0 %1801
      %1803 = vrot.lane.b32.xlu0 %v1656, 18
      %v1804 = vpop.permute.xlu0 %1803
      %1805 = vrot.lane.b32.xlu0 %v1657, 18
      %v1806 = vpop.permute.xlu0 %1805
      %1807 = vrot.lane.b32.xlu0 %v1658, 18
      %v1808 = vpop.permute.xlu0 %1807
      %1809 = vrot.lane.b32.xlu0 %v1659, 18
      %v1810 = vpop.permute.xlu0 %1809
      %1811 = vrot.lane.b32.xlu0 %v1660, 18
      %v1812 = vpop.permute.xlu0 %1811
      %1813 = vrot.lane.b32.xlu0 %v1661, 18
      %v1814 = vpop.permute.xlu0 %1813
      %1815 = vrot.lane.b32.xlu0 %v1662, 18
      %v1816 = vpop.permute.xlu0 %1815
      %v1839 = vsel %vm418, %v1597, %v1686
      %v1840 = vsel %vm418, %v1598, %v1688
      %v1841 = vsel %vm418, %v1599, %v1690
      %v1842 = vsel %vm418, %v1600, %v1692
      %v1843 = vsel %vm418, %v1601, %v1694
      %v1844 = vsel %vm418, %v1602, %v1696
      %v1845 = vsel %vm418, %v1603, %v1698
      %v1846 = vsel %vm418, %v1604, %v1700
      %v1847 = vsel %vm418, %v1605, %v1702
      %v1848 = vsel %vm418, %v1606, %v1704
      %v1849 = vsel %vm418, %v1607, %v1706
      %v1850 = vsel %vm418, %v1608, %v1708
      %v1851 = vsel %vm418, %v1609, %v1710
      %v1852 = vsel %vm418, %v1610, %v1712
      %v1853 = vsel %vm418, %v1611, %v1714
      %v1854 = vsel %vm418, %v1612, %v1716
      %v1855 = vsel %vm418, %v1613, %v1718
      %v1856 = vsel %vm418, %v1614, %v1720
      %v1857 = vsel %vm418, %v1615, %v1722
      %v1858 = vsel %vm418, %v1616, %v1724
      %v1859 = vsel %vm418, %v1617, %v1726
      %v1860 = vsel %vm418, %v1618, %v1728
      %v1861 = vsel %vm441, %v1839, %v1774
      %v1862 = vsel %vm441, %v1840, %v1776
      %v1863 = vsel %vm441, %v1841, %v1778
      %v1864 = vsel %vm441, %v1842, %v1780
      %v1865 = vsel %vm441, %v1843, %v1782
      %v1866 = vsel %vm441, %v1844, %v1784
      %v1867 = vsel %vm441, %v1845, %v1786
      %v1868 = vsel %vm441, %v1846, %v1788
      %v1869 = vsel %vm441, %v1847, %v1790
      %v1870 = vsel %vm441, %v1848, %v1792
      %v1871 = vsel %vm441, %v1849, %v1794
      %v1872 = vsel %vm441, %v1850, %v1796
      %v1873 = vsel %vm441, %v1851, %v1798
      %v1874 = vsel %vm441, %v1852, %v1800
      %v1875 = vsel %vm441, %v1853, %v1802
      %v1876 = vsel %vm441, %v1854, %v1804
      %v1877 = vsel %vm441, %v1855, %v1806
      %v1878 = vsel %vm441, %v1856, %v1808
      %v1879 = vsel %vm441, %v1857, %v1810
      %v1880 = vsel %vm441, %v1858, %v1812
      %v1881 = vsel %vm441, %v1859, %v1814
      %v1882 = vsel %vm441, %v1860, %v1816
      %v1883 = vpack.c.bf16 %v1862, %v1861
      %v1884 = vpack.c.bf16 %v1864, %v1863
      %v1885 = vpack.c.bf16 %v1866, %v1865
      %v1886 = vpack.c.bf16 %v1868, %v1867
      %v1887 = vpack.c.bf16 %v1870, %v1869
      %v1888 = vpack.c.bf16 %v1872, %v1871
      %v1889 = vpack.c.bf16 %v1874, %v1873
      %v1890 = vpack.c.bf16 %v1876, %v1875
      %v1891 = vpack.c.bf16 %v1878, %v1877
      %v1892 = vpack.c.bf16 %v1880, %v1879
      %v1893 = vpack.c.bf16 %v1882, %v1881
      %v1895 = vsel %vm486, %v1883, 0
      %v1898 = vsel %vm486, %v1884, 0
      %v1901 = vsel %vm486, %v1885, 0
      %v1904 = vsel %vm486, %v1886, 0
      %v1907 = vsel %vm486, %v1887, 0
      %v1910 = vsel %vm486, %v1888, 0
      %v1913 = vsel %vm486, %v1889, 0
      %v1916 = vsel %vm486, %v1890, 0
      %v1919 = vsel %vm486, %v1891, 0
      %v1922 = vsel %vm486, %v1892, 0
      %v1925 = vsel %vm486, %v1893, 0
      %1927 = vmatprep.subr.bf16.mxu0 0
      %1928 = vmatpush1.bf16.msra.mxu0 0
      %1929 = vmatprep.subr.bf16.mxu0 0
      %1930 = vmatpush1.bf16.msra.mxu0 0
      %1931 = vmatprep.subr.bf16.mxu0 0
      %1932 = vmatpush1.bf16.msra.mxu0 0
      %1933 = vmatprep.subr.bf16.mxu0 0
      %1934 = vmatpush1.bf16.msra.mxu0 0
      %1935 = vmatprep.subr.bf16.mxu0 0
      %1936 = vmatpush1.bf16.msra.mxu0 0
      %1937 = vmatprep.subr.bf16.mxu0 0
      %1938 = vmatpush1.bf16.msra.mxu0 0
      %1939 = vmatprep.subr.bf16.mxu0 0
      %1940 = vmatpush1.bf16.msra.mxu0 %v525
      %1941 = vmatprep.subr.bf16.mxu0 0
      %1942 = vmatpush1.bf16.msra.mxu0 %v483
      %1943 = vmatprep.subr.bf16.mxu0 0
      %1944 = vmatpush2.bf16.msra.mxu0 0
      %1945 = vmatprep.subr.bf16.mxu0 0
      %1946 = vmatpush2.bf16.msra.mxu0 0
      %1947 = vmatprep.subr.bf16.mxu0 0
      %1948 = vmatpush2.bf16.msra.mxu0 0
      %1949 = vmatprep.subr.bf16.mxu0 0
      %1950 = vmatpush2.bf16.msra.mxu0 0
      %1951 = vmatprep.subr.bf16.mxu0 0
      %1952 = vmatpush2.bf16.msra.mxu0 0
      %1953 = vmatprep.subr.bf16.mxu0 0
      %1954 = vmatpush2.bf16.msra.mxu0 0
      %1955 = vmatprep.subr.bf16.mxu0 0
      %1956 = vmatpush2.bf16.msra.mxu0 0
      %1957 = vmatprep.subr.bf16.mxu0 0
      %1958 = vmatpush2.bf16.msra.mxu0 0
      %1959 = vmatprep.mubr.bf16.mxu0 0
      %1960 = vmatmul.mubr.bf16.gmra.mxu0 %v1895
      %v1961 = vpop.f32.mrf.mxu0
      %v1962 = vadd.f32 0.0, %v1961
      %v1963 = vpop.f32.mrf.mxu0
      %v1964 = vpop.f32.mrf.mxu0
      %v1965 = vadd.f32 0.0, %v1964
      %v1966 = vpop.f32.mrf.mxu0
      %1967 = vmatprep.mubr.bf16.mxu0 0
      %1968 = vmatmul.mubr.bf16.gmra.mxu0 %v1898
      %v1969 = vpop.f32.mrf.mxu0
      %v1970 = vadd.f32 0.0, %v1969
      %v1971 = vpop.f32.mrf.mxu0
      %v1972 = vpop.f32.mrf.mxu0
      %v1973 = vadd.f32 0.0, %v1972
      %v1974 = vpop.f32.mrf.mxu0
      %1975 = vmatprep.mubr.bf16.mxu0 0
      %1976 = vmatmul.mubr.bf16.gmra.mxu0 %v1901
      %v1977 = vpop.f32.mrf.mxu0
      %v1978 = vadd.f32 0.0, %v1977
      %v1979 = vpop.f32.mrf.mxu0
      %v1980 = vpop.f32.mrf.mxu0
      %v1981 = vadd.f32 0.0, %v1980
      %v1982 = vpop.f32.mrf.mxu0
      %1983 = vmatprep.mubr.bf16.mxu0 0
      %1984 = vmatmul.mubr.bf16.gmra.mxu0 %v1904
      %v1985 = vpop.f32.mrf.mxu0
      %v1986 = vadd.f32 0.0, %v1985
      %v1987 = vpop.f32.mrf.mxu0
      %v1988 = vpop.f32.mrf.mxu0
      %v1989 = vadd.f32 0.0, %v1988
      %v1990 = vpop.f32.mrf.mxu0
      %1991 = vmatprep.mubr.bf16.mxu0 0
      %1992 = vmatmul.mubr.bf16.gmra.mxu0 %v1907
      %v1993 = vpop.f32.mrf.mxu0
      %v1994 = vadd.f32 0.0, %v1993
      %v1995 = vpop.f32.mrf.mxu0
      %v1996 = vpop.f32.mrf.mxu0
      %v1997 = vadd.f32 0.0, %v1996
      %v1998 = vpop.f32.mrf.mxu0
      %1999 = vmatprep.mubr.bf16.mxu0 0
      %2000 = vmatmul.mubr.bf16.gmra.mxu0 %v1910
      %v2001 = vpop.f32.mrf.mxu0
      %v2002 = vadd.f32 0.0, %v2001
      %v2003 = vpop.f32.mrf.mxu0
      %v2004 = vpop.f32.mrf.mxu0
      %v2005 = vadd.f32 0.0, %v2004
      %v2006 = vpop.f32.mrf.mxu0
      %2007 = vmatprep.mubr.bf16.mxu0 0
      %2008 = vmatmul.mubr.bf16.gmra.mxu0 %v1913
      %v2009 = vpop.f32.mrf.mxu0
      %v2010 = vadd.f32 0.0, %v2009
      %v2011 = vpop.f32.mrf.mxu0
      %v2012 = vpop.f32.mrf.mxu0
      %v2013 = vadd.f32 0.0, %v2012
      %v2014 = vpop.f32.mrf.mxu0
      %2015 = vmatprep.mubr.bf16.mxu0 0
      %2016 = vmatmul.mubr.bf16.gmra.mxu0 %v1916
      %v2017 = vpop.f32.mrf.mxu0
      %v2018 = vadd.f32 0.0, %v2017
      %v2019 = vpop.f32.mrf.mxu0
      %v2020 = vpop.f32.mrf.mxu0
      %v2021 = vadd.f32 0.0, %v2020
      %v2022 = vpop.f32.mrf.mxu0
      %2023 = vmatprep.mubr.bf16.mxu0 0
      %2024 = vmatmul.mubr.bf16.gmra.mxu0 %v1919
      %v2025 = vpop.f32.mrf.mxu0
      %v2026 = vadd.f32 0.0, %v2025
      %v2027 = vpop.f32.mrf.mxu0
      %v2028 = vpop.f32.mrf.mxu0
      %v2029 = vadd.f32 0.0, %v2028
      %v2030 = vpop.f32.mrf.mxu0
      %2031 = vmatprep.mubr.bf16.mxu0 0
      %2032 = vmatmul.mubr.bf16.gmra.mxu0 %v1922
      %v2033 = vpop.f32.mrf.mxu0
      %v2034 = vadd.f32 0.0, %v2033
      %v2035 = vpop.f32.mrf.mxu0
      %v2036 = vpop.f32.mrf.mxu0
      %v2037 = vadd.f32 0.0, %v2036
      %v2038 = vpop.f32.mrf.mxu0
      %2039 = vmatprep.mubr.bf16.mxu0 0
      %2040 = vmatmul.mubr.bf16.gmra.mxu0 %v1925
      %v2041 = vpop.f32.mrf.mxu0
      %v2042 = vadd.f32 0.0, %v2041
      %v2043 = vpop.f32.mrf.mxu0
      %v2044 = vpop.f32.mrf.mxu0
      %v2045 = vadd.f32 0.0, %v2044
      %v2046 = vpop.f32.mrf.mxu0
      %2047 = vdwg.mxu0
      %v2048 = vmax.f32 %v1574, %v1962
      %v2049 = vmax.f32 %v1575, %v1965
      %v2050 = vmax.f32 %v1576, %v1970
      %v2051 = vmax.f32 %v1577, %v1973
      %v2052 = vmax.f32 %v1578, %v1978
      %v2053 = vmax.f32 %v1579, %v1981
      %v2054 = vmax.f32 %v1580, %v1986
      %v2055 = vmax.f32 %v1581, %v1989
      %v2056 = vmax.f32 %v1582, %v1994
      %v2057 = vmax.f32 %v1583, %v1997
      %v2058 = vmax.f32 %v1584, %v2002
      %v2059 = vmax.f32 %v1585, %v2005
      %v2060 = vmax.f32 %v1586, %v2010
      %v2061 = vmax.f32 %v1587, %v2013
      %v2062 = vmax.f32 %v1588, %v2018
      %v2063 = vmax.f32 %v1589, %v2021
      %v2064 = vmax.f32 %v1590, %v2026
      %v2065 = vmax.f32 %v1591, %v2029
      %v2066 = vmax.f32 %v1592, %v2034
      %v2067 = vmax.f32 %v1593, %v2037
      %v2068 = vmax.f32 %v1594, %v2042
      %v2069 = vmax.f32 %v1595, %v2045
      %v2070 = vld [vmem:[%s2] sm:$0x1]
      %v2072 = vlaneseq
      %v2073 = vshrl.u32 %v2072, 7
      %v2074 = vsub.s32 0, %v2073
      %v2075 = vrot.slane %v2070, %v2074
      %v2077 = vadd.f32 %v2048, %v2075
      %v2078 = vadd.f32 %v2049, %v2075
      %v2079 = vadd.f32 %v2050, %v2075
      %v2080 = vadd.f32 %v2051, %v2075
      %v2081 = vadd.f32 %v2052, %v2075
      %v2082 = vadd.f32 %v2053, %v2075
      %v2083 = vadd.f32 %v2054, %v2075
      %v2084 = vadd.f32 %v2055, %v2075
      %v2085 = vadd.f32 %v2056, %v2075
      %v2086 = vadd.f32 %v2057, %v2075
      %v2087 = vadd.f32 %v2058, %v2075
      %v2088 = vadd.f32 %v2059, %v2075
      %v2089 = vadd.f32 %v2060, %v2075
      %v2090 = vadd.f32 %v2061, %v2075
      %v2091 = vadd.f32 %v2062, %v2075
      %v2092 = vadd.f32 %v2063, %v2075
      %v2093 = vadd.f32 %v2064, %v2075
      %v2094 = vadd.f32 %v2065, %v2075
      %v2095 = vadd.f32 %v2066, %v2075
      %v2096 = vadd.f32 %v2067, %v2075
      %v2097 = vadd.f32 %v2068, %v2075
      %v2098 = vadd.f32 %v2069, %v2075
      %v2099 = vtanh.pop %v2077
      %v2100 = vtanh.pop %v2078
      %v2101 = vtanh.pop %v2079
      %v2102 = vtanh.pop %v2080
      %v2103 = vtanh.pop %v2081
      %v2104 = vtanh.pop %v2082
      %v2105 = vtanh.pop %v2083
      %v2106 = vtanh.pop %v2084
      %v2107 = vtanh.pop %v2085
      %v2108 = vtanh.pop %v2086
      %v2109 = vtanh.pop %v2087
      %v2110 = vtanh.pop %v2088
      %v2111 = vtanh.pop %v2089
      %v2112 = vtanh.pop %v2090
      %v2113 = vtanh.pop %v2091
      %v2114 = vtanh.pop %v2092
      %v2115 = vtanh.pop %v2093
      %v2116 = vtanh.pop %v2094
      %v2117 = vtanh.pop %v2095
      %v2118 = vtanh.pop %v2096
      %v2119 = vtanh.pop %v2097
      %v2120 = vtanh.pop %v2098
      %vm2121 = vcmask 261120
      %2122 = vst.msk [vmem:[%s170] sm:$0xff] %vm2121, %v2099
      %2123 = vst.msk [vmem:[%s170 + $0x8] sm:$0xff] %vm2121, %v2100
      %2124 = vst.msk [vmem:[%s170 + $0x10] sm:$0xff] %vm2121, %v2101
      %2125 = vst.msk [vmem:[%s170 + $0x18] sm:$0xff] %vm2121, %v2102
      %2126 = vst.msk [vmem:[%s170 + $0x20] sm:$0xff] %vm2121, %v2103
      %2127 = vst.msk [vmem:[%s170 + $0x28] sm:$0xff] %vm2121, %v2104
      %2128 = vst.msk [vmem:[%s170 + $0x30] sm:$0xff] %vm2121, %v2105
      %2129 = vst.msk [vmem:[%s170 + $0x38] sm:$0xff] %vm2121, %v2106
      %2130 = vst.msk [vmem:[%s170 + $0x40] sm:$0xff] %vm2121, %v2107
      %2131 = vst.msk [vmem:[%s170 + $0x48] sm:$0xff] %vm2121, %v2108
      %2132 = vst.msk [vmem:[%s170 + $0x50] sm:$0xff] %vm2121, %v2109
      %2133 = vst.msk [vmem:[%s170 + $0x58] sm:$0xff] %vm2121, %v2110
      %2134 = vst.msk [vmem:[%s170 + $0x60] sm:$0xff] %vm2121, %v2111
      %2135 = vst.msk [vmem:[%s170 + $0x68] sm:$0xff] %vm2121, %v2112
      %2136 = vst.msk [vmem:[%s170 + $0x70] sm:$0xff] %vm2121, %v2113
      %2137 = vst.msk [vmem:[%s170 + $0x78] sm:$0xff] %vm2121, %v2114
      %2138 = vst.msk [vmem:[%s170 + $0x80] sm:$0xff] %vm2121, %v2115
      %2139 = vst.msk [vmem:[%s170 + $0x88] sm:$0xff] %vm2121, %v2116
      %2140 = vst.msk [vmem:[%s170 + $0x90] sm:$0xff] %vm2121, %v2117
      %2141 = vst.msk [vmem:[%s170 + $0x98] sm:$0xff] %vm2121, %v2118
      %2142 = vst.msk [vmem:[%s170 + $0xa0] sm:$0xff] %vm2121, %v2119
      %vm2143 = vcmask 253952
      %2144 = vst.msk [vmem:[%s170 + $0xa8] sm:$0x1] %vm2143, %v2120
      %p2145 = scmp.lt.s32.totalorder %s14, 1
      %s2146 = scalar_select %p2145, %s14, 1
      %s2147 = smul.addr %s2146, 22
      %s2148 = smul.addr %s2147, 8
      %s2149 = scalar_lea.vmem %s3, %s2148
      // Predicated region
      $region33: #{self_onn_forward.3} parent=31 // pred_check
        %p2150 = pneg %p100
      $region34: #{self_onn_forward.3} parent=31 // pred_check_branch
        %2152 = sbr.rel (%p2150) target = $region36
      $region35: #{self_onn_forward.3} parent=31 // pred_region
        _
      $region36: #{self_onn_forward.3} parent=31 // pred_fallthru
        _
    $region32: #{self_onn_forward.3} parent=5 // pred_fallthru
      _
    %p2153 = scmp.le.s32.totalorder 2, %s9
    // Predicated region
    $region37: #{self_onn_forward.3} parent=5 // pred_check
      %p2154 = pneg %p2153
    $region38: #{self_onn_forward.3} parent=5 // pred_check_branch
      %2156 = sbr.rel (%p2154) target = $region40
    $region39: #{self_onn_forward.3} parent=5 // pred_region
      %s2157 = ssub.s32 %s9, 2
      // Predicated region
      $region41: #{self_onn_forward.3} parent=39 // pred_check
        %p2158 = pneg %p106
      $region42: #{self_onn_forward.3} parent=39 // pred_check_branch
        %2160 = sbr.rel (%p2158) target = $region44
      $region43: #{self_onn_forward.3} parent=39 // pred_region
        %p2161 = scmp.lt.s32.totalorder %s15, 1
        %s2162 = scalar_select %p2161, %s15, 1
        %s2163 = smul.addr %s2162, 22
        %s2164 = smul.addr %s2163, 8
        %s2165 = scalar_lea.vmem %s3, %s2164
      $region44: #{self_onn_forward.3} parent=39 // pred_fallthru
        _
    $region40: #{self_onn_forward.3} parent=5 // pred_fallthru
      _
  $region6: #{self_onn_forward.3} parent=0 // loop_footer
    %s13 = sadd.s32 1, %s9
  $region7: #{self_onn_forward.3} parent=0 // loop_footer_branch
    %8 = sbr.rel target = $region3
  $region8: #{self_onn_forward.3} parent=0 // loop_exit
    _

// kernel: self_onn_forward.4
$region0: #{self_onn_forward.4}
  #allocation0 [shape = 'u32[]', space=smem, size = 0x4, offset = 0x4, fixed_abs, tag = 'smem constant byte address 0x4 - core index']
  #allocation1 [shape = 'u32[144,128]{1,0:T(1,128)}', space=vmem, size = 0x12000, scoped, tag = 'internal scratch']
  %s0 = inlined_call_operand.vmem [shape: f32[2,4,25,288], index: 0, kind: input, shape index: {}]
  %s1 = inlined_call_operand.vmem [shape: bf16[864,64], index: 1, kind: input, shape index: {}]
  %s2 = inlined_call_operand.vmem [shape: f32[1,64], index: 2, kind: input, shape index: {}]
  %s3 = inlined_call_operand.vmem [shape: f32[2,25,64], index: 3, kind: output, shape index: {}]
  %s4 = sld [smem:[#allocation0]]
  $region45: #{self_onn_forward.4} parent=0
    _
  %s6 = ssub.s32 1, %s4
  %s7 = scalar_select 0, %s6, %s4
  loop: start=0, step=1, limit=4
  $region2: #{self_onn_forward.4} parent=0 // loop_pre_header
    _
  $region3: #{self_onn_forward.4} parent=0 // loop_header
    %s9 = sphi 0, %s13
    %p10 = scmp.ge.s32.totalorder %s9, 4
    %s19 = sphi 0, %s21
    %s22 = sphi 0, %s19
    %s23 = sphi 0, %s22
    %s39 = sphi 0, %s23
    %s43 = sphi 0, %s43
    %s45 = sphi 0, %s43
    %s46 = sphi 0, %s45
    %s60 = sphi 0, %s46
    %s64 = sphi 0, %s64
    %s66 = sphi 0, %s64
    %s67 = sphi 0, %s66
    %s81 = sphi 0, %s67
    %s87 = sphi 0, %s89
    %s90 = sphi 0, %s87
    %s91 = sphi 0, %s90
    %s107 = sphi 0, %s91
  $region4: #{self_onn_forward.4} parent=0 // loop_header_branch
    %12 = sbr.rel (%p10) target = $region8
  $region5: #{self_onn_forward.4} parent=0 // loop_body
    %s14 = ssub.s32 %s9, 1
    %s15 = ssub.s32 %s9, 2
    %s16 = sadd.s32 %s9, 1
    %s17 = ssub.s32 %s9, %s16
    %p18 = scmp.eq.s32.totalorder %s17, 0
    %s20 = sadd.s32 %s19, 1
    %s21 = scalar_select %p18, %s19, %s20
    %p24 = pneg %p18
    %p25 = scmp.eq.s32.totalorder %s9, 1
    %p26 = por %p24, %p25
    %p27 = scmp.ne.s32.totalorder %s19, %s22
    %p28 = scmp.eq.s32.totalorder %s9, 0
    %p29 = por %p27, %p28
    %p30 = scmp.ne.s32.totalorder %s19, %s22
    %p31 = scmp.eq.s32.totalorder %s14, 1
    %p32 = por %p30, %p31
    %p33 = scmp.ne.s32.totalorder %s22, %s23
    %p34 = scmp.eq.s32.totalorder %s14, 0
    %p35 = por %p33, %p34
    %p36 = scmp.ne.s32.totalorder %s22, %s23
    %p37 = scmp.eq.s32.totalorder %s15, 1
    %p38 = por %p36, %p37
    %p40 = scmp.ne.s32.totalorder %s23, %s39
    %p41 = scmp.eq.s32.totalorder %s15, 0
    %p42 = por %p40, %p41
    %s44 = sadd.s32 %s43, 1
    %p47 = scmp.eq.s32.totalorder %s9, 1
    %p48 = scmp.ne.s32.totalorder %s43, %s45
    %p49 = scmp.eq.s32.totalorder %s9, 0
    %p50 = por %p48, %p49
    %p51 = scmp.ne.s32.totalorder %s43, %s45
    %p52 = scmp.eq.s32.totalorder %s14, 1
    %p53 = por %p51, %p52
    %p54 = scmp.ne.s32.totalorder %s45, %s46
    %p55 = scmp.eq.s32.totalorder %s14, 0
    %p56 = por %p54, %p55
    %p57 = scmp.ne.s32.totalorder %s45, %s46
    %p58 = scmp.eq.s32.totalorder %s15, 1
    %p59 = por %p57, %p58
    %p61 = scmp.ne.s32.totalorder %s46, %s60
    %p62 = scmp.eq.s32.totalorder %s15, 0
    %p63 = por %p61, %p62
    %s65 = sadd.s32 %s64, 1
    %p68 = scmp.eq.s32.totalorder %s9, 1
    %p69 = scmp.ne.s32.totalorder %s64, %s66
    %p70 = scmp.eq.s32.totalorder %s9, 0
    %p71 = por %p69, %p70
    %p72 = scmp.ne.s32.totalorder %s64, %s66
    %p73 = scmp.eq.s32.totalorder %s14, 1
    %p74 = por %p72, %p73
    %p75 = scmp.ne.s32.totalorder %s66, %s67
    %p76 = scmp.eq.s32.totalorder %s14, 0
    %p77 = por %p75, %p76
    %p78 = scmp.ne.s32.totalorder %s66, %s67
    %p79 = scmp.eq.s32.totalorder %s15, 1
    %p80 = por %p78, %p79
    %p82 = scmp.ne.s32.totalorder %s67, %s81
    %p83 = scmp.eq.s32.totalorder %s15, 0
    %p84 = por %p82, %p83
    %s85 = ssub.s32 %s9, %s16
    %p86 = scmp.eq.s32.totalorder %s85, 0
    %s88 = sadd.s32 %s87, 1
    %s89 = scalar_select %p86, %s87, %s88
    %p92 = pneg %p86
    %p93 = scmp.eq.s32.totalorder %s9, 1
    %p94 = por %p92, %p93
    %p95 = scmp.ne.s32.totalorder %s87, %s90
    %p96 = scmp.eq.s32.totalorder %s9, 0
    %p97 = por %p95, %p96
    %p98 = scmp.ne.s32.totalorder %s87, %s90
    %p99 = scmp.eq.s32.totalorder %s14, 1
    %p100 = por %p98, %p99
    %p101 = scmp.ne.s32.totalorder %s90, %s91
    %p102 = scmp.eq.s32.totalorder %s14, 0
    %p103 = por %p101, %p102
    %p104 = scmp.ne.s32.totalorder %s90, %s91
    %p105 = scmp.eq.s32.totalorder %s15, 1
    %p106 = por %p104, %p105
    %p108 = scmp.ne.s32.totalorder %s91, %s107
    %p109 = scmp.eq.s32.totalorder %s15, 0
    %p110 = por %p108, %p109
    %p111 = scmp.le.s32.totalorder 1, %s9
    %p112 = scmp.lt.s32.totalorder %s9, 3
    %p113 = pnand %p111, %p112
    %p114 = pneg %p113
    // Predicated region
    $region9: #{self_onn_forward.4} parent=5 // pred_check
      _
    $region10: #{self_onn_forward.4} parent=5 // pred_check_branch
      %116 = sbr.rel (%p113) target = $region12
    $region11: #{self_onn_forward.4} parent=5 // pred_region
      %s117 = ssub.s32 %s9, 1
      // Predicated region
      $region13: #{self_onn_forward.4} parent=11 // pred_check
        %p118 = pneg %p56
      $region14: #{self_onn_forward.4} parent=11 // pred_check_branch
        %120 = sbr.rel (%p118) target = $region16
      $region15: #{self_onn_forward.4} parent=11 // pred_region
        _
      $region16: #{self_onn_forward.4} parent=11 // pred_fallthru
        _
      // Predicated region
      $region17: #{self_onn_forward.4} parent=11 // pred_check
        %p121 = pneg %p77
      $region18: #{self_onn_forward.4} parent=11 // pred_check_branch
        %123 = sbr.rel (%p121) target = $region20
      $region19: #{self_onn_forward.4} parent=11 // pred_region
        _
      $region20: #{self_onn_forward.4} parent=11 // pred_fallthru
        _
    $region12: #{self_onn_forward.4} parent=5 // pred_fallthru
      _
    %p124 = scmp.lt.s32.totalorder %s9, 2
    // Predicated region
    $region21: #{self_onn_forward.4} parent=5 // pred_check
      %p125 = pneg %p124
    $region22: #{self_onn_forward.4} parent=5 // pred_check_branch
      %127 = sbr.rel (%p125) target = $region24
    $region23: #{self_onn_forward.4} parent=5 // pred_region
      // Predicated region
      $region25: #{self_onn_forward.4} parent=23 // pred_check
        %p128 = pneg %p29
      $region26: #{self_onn_forward.4} parent=23 // pred_check_branch
        %130 = sbr.rel (%p128) target = $region28
      $region27: #{self_onn_forward.4} parent=23 // pred_region
        %p131 = scmp.lt.s32.totalorder %s9, 1
        %s132 = scalar_select %p131, %s9, 1
        %s133 = smul.addr %s132, 48
        %s134 = smul.addr %s133, 8
        %s135 = scalar_lea.vmem %s0, %s134
      $region28: #{self_onn_forward.4} parent=23 // pred_fallthru
        _
    $region24: #{self_onn_forward.4} parent=5 // pred_fallthru
      _
    %p136 = scmp.le.s32.totalorder 1, %s9
    %p137 = scmp.lt.s32.totalorder %s9, 3
    %p138 = pnand %p136, %p137
    %p139 = pneg %p138
    // Predicated region
    $region29: #{self_onn_forward.4} parent=5 // pred_check
      _
    $region30: #{self_onn_forward.4} parent=5 // pred_check_branch
      %141 = sbr.rel (%p138) target = $region32
    $region31: #{self_onn_forward.4} parent=5 // pred_region
      %s142 = ssub.s32 %s9, 1
      %p143 = scmp.lt.s32.totalorder %s14, 1
      %s144 = scalar_select %p143, %s14, 1
      %s145 = smul.addr %s144, 48
      %s146 = smul.addr %s145, 8
      %s147 = scalar_lea.vmem %s0, %s146
      %p148 = pneg %p35
      %p149 = pneg %p32
      %p150 = pneg %p56
      %p151 = pneg %p53
      %p152 = pneg %p77
      %p153 = pneg %p74
      %p154 = pneg %p103
      %p155 = pneg %p100
      %p156 = scmp.lt.s32.totalorder %s14, 1
      %s157 = scalar_select %p156, %s14, 1
      %s158 = smul.addr %s157, 4
      %s159 = smul.addr %s158, 8
      %s160 = scalar_lea.vmem %s3, %s159
      %p161 = scmp.lt.s32.totalorder %s14, 1
      %s162 = scalar_select %p161, %s14, 1
      %s163 = smul.addr %s162, 48
      %s164 = smul.addr %s163, 8
      %s165 = scalar_lea.vmem %s0, %s164
      %p166 = scmp.lt.s32.totalorder %s14, 1
      %s167 = scalar_select %p166, %s14, 1
      %s168 = smul.addr %s167, 4
      %s169 = smul.addr %s168, 8
      %s170 = scalar_lea.vmem %s3, %s169
      %v172 = vld [vmem:[%s1] sm:$0xf]
      %v173 = vld [vmem:[%s1 + $0x4] sm:$0xf]
      %v174 = vld [vmem:[%s1 + $0x8] sm:$0xf]
      %v175 = vld [vmem:[%s1 + $0xc] sm:$0xf]
      %v176 = vld [vmem:[%s1 + $0x10] sm:$0xf]
      %v177 = vld [vmem:[%s1 + $0x14] sm:$0xf]
      %v178 = vld [vmem:[%s1 + $0x18] sm:$0xf]
      %v179 = vld [vmem:[%s1 + $0x1c] sm:$0xf]
      %v180 = vld [vmem:[%s1 + $0x20] sm:$0xf]
      %v181 = vld [vmem:[%s1 + $0x24] sm:$0xf]
      %v182 = vld [vmem:[%s1 + $0x28] sm:$0xf]
      %v183 = vld [vmem:[%s1 + $0x2c] sm:$0xf]
      %v184 = vld [vmem:[%s1 + $0x30] sm:$0xf]
      %v185 = vld [vmem:[%s1 + $0x34] sm:$0xf]
      %v186 = vld [vmem:[%s1 + $0x38] sm:$0xf]
      %v187 = vld [vmem:[%s1 + $0x3c] sm:$0xf]
      %v188 = vld [vmem:[%s1 + $0x40] sm:$0xf]
      %v189 = vld [vmem:[%s1 + $0x44] sm:$0xf]
      %v190 = vld [vmem:[%s1 + $0x48] sm:$0xf]
      %v191 = vld [vmem:[%s1 + $0x4c] sm:$0xf]
      %v192 = vld [vmem:[%s1 + $0x50] sm:$0xf]
      %v193 = vld [vmem:[%s1 + $0x54] sm:$0xf]
      %v194 = vld [vmem:[%s1 + $0x58] sm:$0xf]
      %v195 = vld [vmem:[%s1 + $0x5c] sm:$0xf]
      %v196 = vld [vmem:[%s1 + $0x60] sm:$0xf]
      %v197 = vld [vmem:[%s1 + $0x64] sm:$0xf]
      %v198 = vld [vmem:[%s1 + $0x68] sm:$0xf]
      %v199 = vld [vmem:[%s1 + $0x6c] sm:$0xf]
      %v200 = vld [vmem:[%s1 + $0x70] sm:$0xf]
      %v201 = vld [vmem:[%s1 + $0x74] sm:$0xf]
      %v202 = vld [vmem:[%s1 + $0x78] sm:$0xf]
      %v203 = vld [vmem:[%s1 + $0x7c] sm:$0xf]
      %v204 = vld [vmem:[%s1 + $0x80] sm:$0xf]
      %v205 = vld [vmem:[%s1 + $0x84] sm:$0xf]
      %v206 = vld [vmem:[%s1 + $0x88] sm:$0xf]
      %v207 = vld [vmem:[%s1 + $0x8c] sm:$0xf]
      %v208 = vld [vmem:[%s1 + $0x90] sm:$0xf]
      %v209 = vld [vmem:[%s1 + $0x94] sm:$0xf]
      %v210 = vld [vmem:[%s1 + $0x98] sm:$0xf]
      %v211 = vld [vmem:[%s1 + $0x9c] sm:$0xf]
      %v212 = vld [vmem:[%s1 + $0xa0] sm:$0xf]
      %v213 = vld [vmem:[%s1 + $0xa4] sm:$0xf]
      %v214 = vld [vmem:[%s1 + $0xa8] sm:$0xf]
      %v215 = vld [vmem:[%s1 + $0xac] sm:$0xf]
      %v216 = vld [vmem:[%s1 + $0xb0] sm:$0xf]
      %v217 = vld [vmem:[%s1 + $0xb4] sm:$0xf]
      %v218 = vld [vmem:[%s1 + $0xb8] sm:$0xf]
      %v219 = vld [vmem:[%s1 + $0xbc] sm:$0xf]
      %v220 = vld [vmem:[%s1 + $0xc0] sm:$0xf]
      %v221 = vld [vmem:[%s1 + $0xc4] sm:$0xf]
      %v222 = vld [vmem:[%s1 + $0xc8] sm:$0xf]
      %v223 = vld [vmem:[%s1 + $0xcc] sm:$0xf]
      %v224 = vld [vmem:[%s1 + $0xd0] sm:$0xf]
      %v225 = vld [vmem:[%s1 + $0xd4] sm:$0xf]
      %v226 = vld [vmem:[%s1 + $0xd8] sm:$0xf]
      %v227 = vld [vmem:[%s1 + $0xdc] sm:$0xf]
      %v228 = vld [vmem:[%s1 + $0xe0] sm:$0xf]
      %v229 = vld [vmem:[%s1 + $0xe4] sm:$0xf]
      %v230 = vld [vmem:[%s1 + $0xe8] sm:$0xf]
      %v231 = vld [vmem:[%s1 + $0xec] sm:$0xf]
      %v232 = vld [vmem:[%s1 + $0xf0] sm:$0xf]
      %v233 = vld [vmem:[%s1 + $0xf4] sm:$0xf]
      %v234 = vld [vmem:[%s1 + $0xf8] sm:$0xf]
      %v235 = vld [vmem:[%s1 + $0xfc] sm:$0xf]
      %v236 = vld [vmem:[%s1 + $0x100] sm:$0xf]
      %v237 = vld [vmem:[%s1 + $0x104] sm:$0xf]
      %v238 = vld [vmem:[%s1 + $0x108] sm:$0xf]
      %v239 = vld [vmem:[%s1 + $0x10c] sm:$0xf]
      %v240 = vld [vmem:[%s1 + $0x110] sm:$0xf]
      %v241 = vld [vmem:[%s1 + $0x114] sm:$0xf]
      %v242 = vld [vmem:[%s1 + $0x118] sm:$0xf]
      %v243 = vld [vmem:[%s1 + $0x11c] sm:$0xf]
      %v244 = vld [vmem:[%s1 + $0x120] sm:$0xf]
      %v245 = vld [vmem:[%s1 + $0x124] sm:$0xf]
      %v246 = vld [vmem:[%s1 + $0x128] sm:$0xf]
      %v247 = vld [vmem:[%s1 + $0x12c] sm:$0xf]
      %v248 = vld [vmem:[%s1 + $0x130] sm:$0xf]
      %v249 = vld [vmem:[%s1 + $0x134] sm:$0xf]
      %v250 = vld [vmem:[%s1 + $0x138] sm:$0xf]
      %v251 = vld [vmem:[%s1 + $0x13c] sm:$0xf]
      %v252 = vld [vmem:[%s1 + $0x140] sm:$0xf]
      %v253 = vld [vmem:[%s1 + $0x144] sm:$0xf]
      %v254 = vld [vmem:[%s1 + $0x148] sm:$0xf]
      %v255 = vld [vmem:[%s1 + $0x14c] sm:$0xf]
      %v256 = vld [vmem:[%s1 + $0x150] sm:$0xf]
      %v257 = vld [vmem:[%s1 + $0x154] sm:$0xf]
      %v258 = vld [vmem:[%s1 + $0x158] sm:$0xf]
      %v259 = vld [vmem:[%s1 + $0x15c] sm:$0xf]
      %v260 = vld [vmem:[%s1 + $0x160] sm:$0xf]
      %v261 = vld [vmem:[%s1 + $0x164] sm:$0xf]
      %v262 = vld [vmem:[%s1 + $0x168] sm:$0xf]
      %v263 = vld [vmem:[%s1 + $0x16c] sm:$0xf]
      %v264 = vld [vmem:[%s1 + $0x170] sm:$0xf]
      %v265 = vld [vmem:[%s1 + $0x174] sm:$0xf]
      %v266 = vld [vmem:[%s1 + $0x178] sm:$0xf]
      %v267 = vld [vmem:[%s1 + $0x17c] sm:$0xf]
      %v268 = vld [vmem:[%s1 + $0x180] sm:$0xf]
      %v269 = vld [vmem:[%s1 + $0x184] sm:$0xf]
      %v270 = vld [vmem:[%s1 + $0x188] sm:$0xf]
      %v271 = vld [vmem:[%s1 + $0x18c] sm:$0xf]
      %v272 = vld [vmem:[%s1 + $0x190] sm:$0xf]
      %v273 = vld [vmem:[%s1 + $0x194] sm:$0xf]
      %v274 = vld [vmem:[%s1 + $0x198] sm:$0xf]
      %v275 = vld [vmem:[%s1 + $0x19c] sm:$0xf]
      %v276 = vld [vmem:[%s1 + $0x1a0] sm:$0xf]
      %v277 = vld [vmem:[%s1 + $0x1a4] sm:$0xf]
      %v278 = vld [vmem:[%s1 + $0x1a8] sm:$0xf]
      %v279 = vld [vmem:[%s1 + $0x1ac] sm:$0xf]
      %v280 = vld [vmem:[%s165] sm:$0xff]
      %v281 = vld [vmem:[%s165 + $0x8] sm:$0xff]
      %v282 = vld [vmem:[%s165 + $0x10] sm:$0xff]
      %v283 = vld [vmem:[%s165 + $0x18] sm:$0xff]
      %v284 = vld [vmem:[%s165 + $0x20] sm:$0xff]
      %v285 = vld [vmem:[%s165 + $0x28] sm:$0xff]
      %v286 = vld [vmem:[%s165 + $0x30] sm:$0xff]
      %v287 = vld [vmem:[%s165 + $0x38] sm:$0xff]
      %v288 = vld [vmem:[%s165 + $0x40] sm:$0xff]
      %v289 = vld [vmem:[%s165 + $0x48] sm:$0x1]
      %v290 = vld [vmem:[%s165 + $0x50] sm:$0x1]
      %v291 = vld [vmem:[%s165 + $0x58] sm:$0x1]
      %v292 = vmul.f32 %v280, %v280
      %v293 = vmul.f32 %v281, %v281
      %v294 = vmul.f32 %v282, %v282
      %v295 = vmul.f32 %v283, %v283
      %v296 = vmul.f32 %v284, %v284
      %v297 = vmul.f32 %v285, %v285
      %v298 = vmul.f32 %v286, %v286
      %v299 = vmul.f32 %v287, %v287
      %v300 = vmul.f32 %v288, %v288
      %v301 = vmul.f32 %v289, %v289
      %v302 = vmul.f32 %v290, %v290
      %v303 = vmul.f32 %v291, %v291
      %v304 = vmul.f32 %v292, %v280
      %v305 = vmul.f32 %v293, %v281
      %v306 = vmul.f32 %v294, %v282
      %v307 = vmul.f32 %v295, %v283
      %v308 = vmul.f32 %v296, %v284
      %v309 = vmul.f32 %v297, %v285
      %v310 = vmul.f32 %v298, %v286
      %v311 = vmul.f32 %v299, %v287
      %v312 = vmul.f32 %v300, %v288
      %v313 = vmul.f32 %v301, %v289
      %v314 = vmul.f32 %v302, %v290
      %v315 = vmul.f32 %v303, %v291
      %328 = vrot.lane.b32.xlu0 %v292, 32
      %v329 = vpop.permute.xlu0 %328
      %330 = vrot.lane.b32.xlu0 %v293, 32
      %v331 = vpop.permute.xlu0 %330
      %332 = vrot.lane.b32.xlu0 %v294, 32
      %v333 = vpop.permute.xlu0 %332
      %334 = vrot.lane.b32.xlu0 %v295, 32
      %v335 = vpop.permute.xlu0 %334
      %336 = vrot.lane.b32.xlu0 %v296, 32
      %v337 = vpop.permute.xlu0 %336
      %338 = vrot.lane.b32.xlu0 %v297, 32
      %v339 = vpop.permute.xlu0 %338
      %340 = vrot.lane.b32.xlu0 %v298, 32
      %v341 = vpop.permute.xlu0 %340
      %342 = vrot.lane.b32.xlu0 %v299, 32
      %v343 = vpop.permute.xlu0 %342
      %344 = vrot.lane.b32.xlu0 %v300, 32
      %v345 = vpop.permute.xlu0 %344
      %346 = vrot.lane.b32.xlu0 %v301, 32
      %v347 = vpop.permute.xlu0 %346
      %348 = vrot.lane.b32.xlu0 %v302, 32
      %v349 = vpop.permute.xlu0 %348
      %350 = vrot.lane.b32.xlu0 %v303, 32
      %v351 = vpop.permute.xlu0 %350
      %vm352 = vcmask 261120
      %v353 = vsel %vm352, %v329, %v331
      %v354 = vsel %vm352, %v331, %v333
      %v355 = vsel %vm352, %v335, %v337
      %v356 = vsel %vm352, %v337, %v339
      %v357 = vsel %vm352, %v341, %v343
      %v358 = vsel %vm352, %v343, %v345
      %v359 = vsel %vm352, %v347, %v349
      %v360 = vsel %vm352, %v349, %v351
      %385 = vrot.lane.b32.xlu0 %v304, 64
      %v386 = vpop.permute.xlu0 %385
      %387 = vrot.lane.b32.xlu0 %v305, 64
      %v388 = vpop.permute.xlu0 %387
      %389 = vrot.lane.b32.xlu0 %v306, 64
      %v390 = vpop.permute.xlu0 %389
      %391 = vrot.lane.b32.xlu0 %v307, 64
      %v392 = vpop.permute.xlu0 %391
      %393 = vrot.lane.b32.xlu0 %v308, 64
      %v394 = vpop.permute.xlu0 %393
      %395 = vrot.lane.b32.xlu0 %v309, 64
      %v396 = vpop.permute.xlu0 %395
      %397 = vrot.lane.b32.xlu0 %v310, 64
      %v398 = vpop.permute.xlu0 %397
      %399 = vrot.lane.b32.xlu0 %v311, 64
      %v400 = vpop.permute.xlu0 %399
      %401 = vrot.lane.b32.xlu0 %v312, 64
      %v402 = vpop.permute.xlu0 %401
      %403 = vrot.lane.b32.xlu0 %v313, 64
      %v404 = vpop.permute.xlu0 %403
      %405 = vrot.lane.b32.xlu0 %v314, 64
      %v406 = vpop.permute.xlu0 %405
      %407 = vrot.lane.b32.xlu0 %v315, 64
      %v408 = vpop.permute.xlu0 %407
      %vm409 = vcmask 523264
      %v410 = vsel %vm409, %v386, %v388
      %v411 = vsel %vm409, %v388, %v390
      %v412 = vsel %vm409, %v392, %v394
      %v413 = vsel %vm409, %v394, %v396
      %v414 = vsel %vm409, %v398, %v400
      %v415 = vsel %vm409, %v400, %v402
      %v416 = vsel %vm409, %v404, %v406
      %v417 = vsel %vm409, %v406, %v408
      %v430 = vsel %vm352, %v282, %v329
      %v431 = vsel %vm352, %v285, %v335
      %v432 = vsel %vm352, %v288, %v341
      %v433 = vsel %vm352, %v291, %v347
      %v434 = vsel %vm409, %v354, %v386
      %v435 = vsel %vm409, %v356, %v392
      %v436 = vsel %vm409, %v358, %v398
      %v437 = vsel %vm409, %v360, %v404
      %v438 = vpack.c.bf16 %v283, %v280
      %v439 = vpack.c.bf16 %v284, %v281
      %v440 = vpack.c.bf16 %v431, %v430
      %v441 = vpack.c.bf16 %v355, %v353
      %v442 = vpack.c.bf16 %v435, %v434
      %v443 = vpack.c.bf16 %v412, %v410
      %v444 = vpack.c.bf16 %v413, %v411
      %v445 = vpack.c.bf16 %v289, %v286
      %v446 = vpack.c.bf16 %v290, %v287
      %v447 = vpack.c.bf16 %v433, %v432
      %v448 = vpack.c.bf16 %v359, %v357
      %v449 = vpack.c.bf16 %v437, %v436
      %v450 = vpack.c.bf16 %v416, %v414
      %v451 = vpack.c.bf16 %v417, %v415
      %v560 = vunpack.c.l.b16 %v172
      %v561 = vunpack.c.l.b16 %v173
      %v562 = vunpack.c.l.b16 %v174
      %v563 = vunpack.c.l.b16 %v175
      %v564 = vunpack.c.l.b16 %v176
      %v565 = vunpack.c.l.b16 %v177
      %v566 = vunpack.c.l.b16 %v178
      %v567 = vunpack.c.l.b16 %v179
      %v568 = vunpack.c.l.b16 %v180
      %v569 = vunpack.c.l.b16 %v181
      %v570 = vunpack.c.l.b16 %v182
      %v571 = vunpack.c.l.b16 %v183
      %v572 = vunpack.c.l.b16 %v184
      %v573 = vunpack.c.l.b16 %v185
      %v574 = vunpack.c.l.b16 %v186
      %v575 = vunpack.c.l.b16 %v187
      %v576 = vunpack.c.l.b16 %v188
      %v577 = vunpack.c.l.b16 %v189
      %v578 = vunpack.c.l.b16 %v190
      %v579 = vunpack.c.l.b16 %v191
      %v580 = vunpack.c.l.b16 %v192
      %v581 = vunpack.c.l.b16 %v193
      %v582 = vunpack.c.l.b16 %v194
      %v583 = vunpack.c.l.b16 %v195
      %v584 = vunpack.c.l.b16 %v196
      %v585 = vunpack.c.l.b16 %v197
      %v586 = vunpack.c.l.b16 %v198
      %v587 = vunpack.c.l.b16 %v199
      %v588 = vunpack.c.l.b16 %v200
      %v589 = vunpack.c.l.b16 %v201
      %v590 = vunpack.c.l.b16 %v202
      %v591 = vunpack.c.l.b16 %v203
      %v592 = vunpack.c.l.b16 %v204
      %v593 = vunpack.c.l.b16 %v205
      %v594 = vunpack.c.l.b16 %v206
      %v595 = vunpack.c.l.b16 %v207
      %v596 = vunpack.c.l.b16 %v208
      %v597 = vunpack.c.l.b16 %v209
      %v598 = vunpack.c.l.b16 %v210
      %v599 = vunpack.c.l.b16 %v211
      %v600 = vunpack.c.l.b16 %v212
      %v601 = vunpack.c.l.b16 %v213
      %v602 = vunpack.c.l.b16 %v214
      %v603 = vunpack.c.l.b16 %v215
      %v604 = vunpack.c.l.b16 %v216
      %v605 = vunpack.c.l.b16 %v217
      %v606 = vunpack.c.l.b16 %v218
      %v607 = vunpack.c.l.b16 %v219
      %v608 = vunpack.c.l.b16 %v220
      %v609 = vunpack.c.l.b16 %v221
      %v610 = vunpack.c.l.b16 %v222
      %v611 = vunpack.c.l.b16 %v223
      %v612 = vunpack.c.l.b16 %v224
      %v613 = vunpack.c.l.b16 %v225
      %v614 = vunpack.c.l.b16 %v226
      %v615 = vunpack.c.l.b16 %v227
      %v616 = vunpack.c.l.b16 %v228
      %v617 = vunpack.c.l.b16 %v229
      %v618 = vunpack.c.l.b16 %v230
      %v619 = vunpack.c.l.b16 %v231
      %v620 = vunpack.c.l.b16 %v232
      %v621 = vunpack.c.l.b16 %v233
      %v622 = vunpack.c.l.b16 %v234
      %v623 = vunpack.c.l.b16 %v235
      %v624 = vunpack.c.l.b16 %v236
      %v625 = vunpack.c.l.b16 %v237
      %v626 = vunpack.c.l.b16 %v238
      %v627 = vunpack.c.l.b16 %v239
      %v628 = vunpack.c.l.b16 %v240
      %v629 = vunpack.c.l.b16 %v241
      %v630 = vunpack.c.l.b16 %v242
      %v631 = vunpack.c.l.b16 %v243
      %v632 = vunpack.c.l.b16 %v244
      %v633 = vunpack.c.l.b16 %v245
      %v634 = vunpack.c.l.b16 %v246
      %v635 = vunpack.c.l.b16 %v247
      %v636 = vunpack.c.l.b16 %v248
      %v637 = vunpack.c.l.b16 %v249
      %v638 = vunpack.c.l.b16 %v250
      %v639 = vunpack.c.l.b16 %v251
      %v640 = vunpack.c.l.b16 %v252
      %v641 = vunpack.c.l.b16 %v253
      %v642 = vunpack.c.l.b16 %v254
      %v643 = vunpack.c.l.b16 %v255
      %v644 = vunpack.c.l.b16 %v256
      %v645 = vunpack.c.l.b16 %v257
      %v646 = vunpack.c.l.b16 %v258
      %v647 = vunpack.c.l.b16 %v259
      %v648 = vunpack.c.l.b16 %v260
      %v649 = vunpack.c.l.b16 %v261
      %v650 = vunpack.c.l.b16 %v262
      %v651 = vunpack.c.l.b16 %v263
      %v652 = vunpack.c.l.b16 %v264
      %v653 = vunpack.c.l.b16 %v265
      %v654 = vunpack.c.l.b16 %v266
      %v655 = vunpack.c.l.b16 %v267
      %v656 = vunpack.c.l.b16 %v268
      %v657 = vunpack.c.l.b16 %v269
      %v658 = vunpack.c.l.b16 %v270
      %v659 = vunpack.c.l.b16 %v271
      %v660 = vunpack.c.l.b16 %v272
      %v661 = vunpack.c.l.b16 %v273
      %v662 = vunpack.c.l.b16 %v274
      %v663 = vunpack.c.l.b16 %v275
      %v664 = vunpack.c.l.b16 %v276
      %v665 = vunpack.c.l.b16 %v277
      %v666 = vunpack.c.l.b16 %v278
      %v667 = vunpack.c.l.b16 %v279
      %v668 = vpack.c.b16 %v561, %v560
      %v669 = vpack.c.b16 %v563, %v562
      %v670 = vpack.c.b16 %v565, %v564
      %v671 = vpack.c.b16 %v567, %v566
      %v672 = vpack.c.b16 %v569, %v568
      %v673 = vpack.c.b16 %v571, %v570
      %v674 = vpack.c.b16 %v573, %v572
      %v675 = vpack.c.b16 %v575, %v574
      %v676 = vpack.c.b16 %v577, %v576
      %v677 = vpack.c.b16 %v579, %v578
      %v678 = vpack.c.b16 %v581, %v580
      %v679 = vpack.c.b16 %v583, %v582
      %v680 = vpack.c.b16 %v585, %v584
      %v681 = vpack.c.b16 %v587, %v586
      %v682 = vpack.c.b16 %v589, %v588
      %v683 = vpack.c.b16 %v591, %v590
      %v684 = vpack.c.b16 %v593, %v592
      %v685 = vpack.c.b16 %v595, %v594
      %v686 = vpack.c.b16 %v597, %v596
      %v687 = vpack.c.b16 %v599, %v598
      %v688 = vpack.c.b16 %v601, %v600
      %v689 = vpack.c.b16 %v603, %v602
      %v690 = vpack.c.b16 %v605, %v604
      %v691 = vpack.c.b16 %v607, %v606
      %v692 = vpack.c.b16 %v609, %v608
      %v693 = vpack.c.b16 %v611, %v610
      %v694 = vpack.c.b16 %v613, %v612
      %v695 = vpack.c.b16 %v615, %v614
      %v696 = vpack.c.b16 %v617, %v616
      %v697 = vpack.c.b16 %v619, %v618
      %v698 = vpack.c.b16 %v621, %v620
      %v699 = vpack.c.b16 %v623, %v622
      %v700 = vpack.c.b16 %v625, %v624
      %v701 = vpack.c.b16 %v627, %v626
      %v702 = vpack.c.b16 %v629, %v628
      %v703 = vpack.c.b16 %v631, %v630
      %v704 = vpack.c.b16 %v633, %v632
      %v705 = vpack.c.b16 %v635, %v634
      %v706 = vpack.c.b16 %v637, %v636
      %v707 = vpack.c.b16 %v639, %v638
      %v708 = vpack.c.b16 %v641, %v640
      %v709 = vpack.c.b16 %v643, %v642
      %v710 = vpack.c.b16 %v645, %v644
      %v711 = vpack.c.b16 %v647, %v646
      %v712 = vpack.c.b16 %v649, %v648
      %v713 = vpack.c.b16 %v651, %v650
      %v714 = vpack.c.b16 %v653, %v652
      %v715 = vpack.c.b16 %v655, %v654
      %v716 = vpack.c.b16 %v657, %v656
      %v717 = vpack.c.b16 %v659, %v658
      %v718 = vpack.c.b16 %v661, %v660
      %v719 = vpack.c.b16 %v663, %v662
      %v720 = vpack.c.b16 %v665, %v664
      %v721 = vpack.c.b16 %v667, %v666
      %vm776 = vcmask 785408
      %v778 = vsel %vm776, %v444, 0
      %v781 = vsel %vm776, %v451, 0
      %783 = vmatprep.subr.bf16.mxu0 0
      %784 = vmatpush1.bf16.msra.mxu0 %v675
      %785 = vmatprep.subr.bf16.mxu0 0
      %786 = vmatpush1.bf16.msra.mxu0 %v674
      %787 = vmatprep.subr.bf16.mxu0 0
      %788 = vmatpush1.bf16.msra.mxu0 %v673
      %789 = vmatprep.subr.bf16.mxu0 0
      %790 = vmatpush1.bf16.msra.mxu0 %v672
      %791 = vmatprep.subr.bf16.mxu0 0
      %792 = vmatpush1.bf16.msra.mxu0 %v671
      %793 = vmatprep.subr.bf16.mxu0 0
      %794 = vmatpush1.bf16.msra.mxu0 %v670
      %795 = vmatprep.subr.bf16.mxu0 0
      %796 = vmatpush1.bf16.msra.mxu0 %v669
      %797 = vmatprep.subr.bf16.mxu0 0
      %798 = vmatpush1.bf16.msra.mxu0 %v668
      %799 = vmatprep.subr.bf16.mxu0 0
      %800 = vmatpush2.bf16.msra.mxu0 %v683
      %801 = vmatprep.subr.bf16.mxu0 0
      %802 = vmatpush2.bf16.msra.mxu0 %v682
      %803 = vmatprep.subr.bf16.mxu0 0
      %804 = vmatpush2.bf16.msra.mxu0 %v681
      %805 = vmatprep.subr.bf16.mxu0 0
      %806 = vmatpush2.bf16.msra.mxu0 %v680
      %807 = vmatprep.subr.bf16.mxu0 0
      %808 = vmatpush2.bf16.msra.mxu0 %v679
      %809 = vmatprep.subr.bf16.mxu0 0
      %810 = vmatpush2.bf16.msra.mxu0 %v678
      %811 = vmatprep.subr.bf16.mxu0 0
      %812 = vmatpush2.bf16.msra.mxu0 %v677
      %813 = vmatprep.subr.bf16.mxu0 0
      %814 = vmatpush2.bf16.msra.mxu0 %v676
      %815 = vmatprep.mubr.bf16.mxu0 %v439
      %816 = vmatmul.mubr.bf16.gmra.mxu0 %v438
      %v817 = vpop.f32.mrf.mxu0
      %v818 = vadd.f32 0.0, %v817
      %v819 = vpop.f32.mrf.mxu0
      %v820 = vpop.f32.mrf.mxu0
      %v821 = vadd.f32 0.0, %v820
      %v822 = vpop.f32.mrf.mxu0
      %823 = vmatprep.mubr.bf16.mxu0 %v446
      %824 = vmatmul.mubr.bf16.gmra.mxu0 %v445
      %v825 = vpop.f32.mrf.mxu0
      %v826 = vadd.f32 0.0, %v825
      %v827 = vpop.f32.mrf.mxu0
      %v828 = vpop.f32.mrf.mxu0
      %v829 = vadd.f32 0.0, %v828
      %v830 = vpop.f32.mrf.mxu0
      %831 = vdwg.mxu0
      %832 = vmatprep.subr.bf16.mxu0 0
      %833 = vmatpush1.bf16.msra.mxu0 %v691
      %834 = vmatprep.subr.bf16.mxu0 0
      %835 = vmatpush1.bf16.msra.mxu0 %v690
      %836 = vmatprep.subr.bf16.mxu0 0
      %837 = vmatpush1.bf16.msra.mxu0 %v689
      %838 = vmatprep.subr.bf16.mxu0 0
      %839 = vmatpush1.bf16.msra.mxu0 %v688
      %840 = vmatprep.subr.bf16.mxu0 0
      %841 = vmatpush1.bf16.msra.mxu0 %v687
      %842 = vmatprep.subr.bf16.mxu0 0
      %843 = vmatpush1.bf16.msra.mxu0 %v686
      %844 = vmatprep.subr.bf16.mxu0 0
      %845 = vmatpush1.bf16.msra.mxu0 %v685
      %846 = vmatprep.subr.bf16.mxu0 0
      %847 = vmatpush1.bf16.msra.mxu0 %v684
      %848 = vmatprep.subr.bf16.mxu0 0
      %849 = vmatpush2.bf16.msra.mxu0 %v699
      %850 = vmatprep.subr.bf16.mxu0 0
      %851 = vmatpush2.bf16.msra.mxu0 %v698
      %852 = vmatprep.subr.bf16.mxu0 0
      %853 = vmatpush2.bf16.msra.mxu0 %v697
      %854 = vmatprep.subr.bf16.mxu0 0
      %855 = vmatpush2.bf16.msra.mxu0 %v696
      %856 = vmatprep.subr.bf16.mxu0 0
      %857 = vmatpush2.bf16.msra.mxu0 %v695
      %858 = vmatprep.subr.bf16.mxu0 0
      %859 = vmatpush2.bf16.msra.mxu0 %v694
      %860 = vmatprep.subr.bf16.mxu0 0
      %861 = vmatpush2.bf16.msra.mxu0 %v693
      %862 = vmatprep.subr.bf16.mxu0 0
      %863 = vmatpush2.bf16.msra.mxu0 %v692
      %864 = vmatprep.mubr.bf16.mxu0 %v441
      %865 = vmatmul.mubr.bf16.gmra.mxu0 %v440
      %v866 = vpop.f32.mrf.mxu0
      %v867 = vadd.f32 %v818, %v866
      %v868 = vpop.f32.mrf.mxu0
      %v869 = vpop.f32.mrf.mxu0
      %v870 = vadd.f32 %v821, %v869
      %v871 = vpop.f32.mrf.mxu0
      %872 = vmatprep.mubr.bf16.mxu0 %v448
      %873 = vmatmul.mubr.bf16.gmra.mxu0 %v447
      %v874 = vpop.f32.mrf.mxu0
      %v875 = vadd.f32 %v826, %v874
      %v876 = vpop.f32.mrf.mxu0
      %v877 = vpop.f32.mrf.mxu0
      %v878 = vadd.f32 %v829, %v877
      %v879 = vpop.f32.mrf.mxu0
      %880 = vdwg.mxu0
      %881 = vmatprep.subr.bf16.mxu0 0
      %882 = vmatpush1.bf16.msra.mxu0 %v707
      %883 = vmatprep.subr.bf16.mxu0 0
      %884 = vmatpush1.bf16.msra.mxu0 %v706
      %885 = vmatprep.subr.bf16.mxu0 0
      %886 = vmatpush1.bf16.msra.mxu0 %v705
      %887 = vmatprep.subr.bf16.mxu0 0
      %888 = vmatpush1.bf16.msra.mxu0 %v704
      %889 = vmatprep.subr.bf16.mxu0 0
      %890 = vmatpush1.bf16.msra.mxu0 %v703
      %891 = vmatprep.subr.bf16.mxu0 0
      %892 = vmatpush1.bf16.msra.mxu0 %v702
      %893 = vmatprep.subr.bf16.mxu0 0
      %894 = vmatpush1.bf16.msra.mxu0 %v701
      %895 = vmatprep.subr.bf16.mxu0 0
      %896 = vmatpush1.bf16.msra.mxu0 %v700
      %897 = vmatprep.subr.bf16.mxu0 0
      %898 = vmatpush2.bf16.msra.mxu0 %v715
      %899 = vmatprep.subr.bf16.mxu0 0
      %900 = vmatpush2.bf16.msra.mxu0 %v714
      %901 = vmatprep.subr.bf16.mxu0 0
      %902 = vmatpush2.bf16.msra.mxu0 %v713
      %903 = vmatprep.subr.bf16.mxu0 0
      %904 = vmatpush2.bf16.msra.mxu0 %v712
      %905 = vmatprep.subr.bf16.mxu0 0
      %906 = vmatpush2.bf16.msra.mxu0 %v711
      %907 = vmatprep.subr.bf16.mxu0 0
      %908 = vmatpush2.bf16.msra.mxu0 %v710
      %909 = vmatprep.subr.bf16.mxu0 0
      %910 = vmatpush2.bf16.msra.mxu0 %v709
      %911 = vmatprep.subr.bf16.mxu0 0
      %912 = vmatpush2.bf16.msra.mxu0 %v708
      %913 = vmatprep.mubr.bf16.mxu0 %v443
      %914 = vmatmul.mubr.bf16.gmra.mxu0 %v442
      %v915 = vpop.f32.mrf.mxu0
      %v916 = vadd.f32 %v867, %v915
      %v917 = vpop.f32.mrf.mxu0
      %v918 = vpop.f32.mrf.mxu0
      %v919 = vadd.f32 %v870, %v918
      %v920 = vpop.f32.mrf.mxu0
      %921 = vmatprep.mubr.bf16.mxu0 %v450
      %922 = vmatmul.mubr.bf16.gmra.mxu0 %v449
      %v923 = vpop.f32.mrf.mxu0
      %v924 = vadd.f32 %v875, %v923
      %v925 = vpop.f32.mrf.mxu0
      %v926 = vpop.f32.mrf.mxu0
      %v927 = vadd.f32 %v878, %v926
      %v928 = vpop.f32.mrf.mxu0
      %929 = vdwg.mxu0
      %930 = vmatprep.subr.bf16.mxu0 0
      %931 = vmatpush1.bf16.msra.mxu0 0
      %932 = vmatprep.subr.bf16.mxu0 0
      %933 = vmatpush1.bf16.msra.mxu0 0
      %934 = vmatprep.subr.bf16.mxu0 0
      %935 = vmatpush1.bf16.msra.mxu0 %v721
      %936 = vmatprep.subr.bf16.mxu0 0
      %937 = vmatpush1.bf16.msra.mxu0 %v720
      %938 = vmatprep.subr.bf16.mxu0 0
      %939 = vmatpush1.bf16.msra.mxu0 %v719
      %940 = vmatprep.subr.bf16.mxu0 0
      %941 = vmatpush1.bf16.msra.mxu0 %v718
      %942 = vmatprep.subr.bf16.mxu0 0
      %943 = vmatpush1.bf16.msra.mxu0 %v717
      %944 = vmatprep.subr.bf16.mxu0 0
      %945 = vmatpush1.bf16.msra.mxu0 %v716
      %946 = vmatprep.subr.bf16.mxu0 0
      %947 = vmatpush2.bf16.msra.mxu0 0
      %948 = vmatprep.subr.bf16.mxu0 0
      %949 = vmatpush2.bf16.msra.mxu0 0
      %950 = vmatprep.subr.bf16.mxu0 0
      %951 = vmatpush2.bf16.msra.mxu0 0
      %952 = vmatprep.subr.bf16.mxu0 0
      %953 = vmatpush2.bf16.msra.mxu0 0
      %954 = vmatprep.subr.bf16.mxu0 0
      %955 = vmatpush2.bf16.msra.mxu0 0
      %956 = vmatprep.subr.bf16.mxu0 0
      %957 = vmatpush2.bf16.msra.mxu0 0
      %958 = vmatprep.subr.bf16.mxu0 0
      %959 = vmatpush2.bf16.msra.mxu0 0
      %960 = vmatprep.subr.bf16.mxu0 0
      %961 = vmatpush2.bf16.msra.mxu0 0
      %962 = vmatprep.mubr.bf16.mxu0 0
      %963 = vmatmul.mubr.bf16.gmra.mxu0 %v778
      %v964 = vpop.f32.mrf.mxu0
      %v965 = vadd.f32 %v916, %v964
      %v966 = vpop.f32.mrf.mxu0
      %v967 = vpop.f32.mrf.mxu0
      %v968 = vadd.f32 %v919, %v967
      %v969 = vpop.f32.mrf.mxu0
      %970 = vmatprep.mubr.bf16.mxu0 0
      %971 = vmatmul.mubr.bf16.gmra.mxu0 %v781
      %v972 = vpop.f32.mrf.mxu0
      %v973 = vadd.f32 %v924, %v972
      %v974 = vpop.f32.mrf.mxu0
      %v975 = vpop.f32.mrf.mxu0
      %v976 = vadd.f32 %v927, %v975
      %v977 = vpop.f32.mrf.mxu0
      %978 = vdwg.mxu0
      %s979 = scalar_lea.vmem %s165, 96
      %v980 = vld [vmem:[%s979] sm:$0xff]
      %v981 = vld [vmem:[%s979 + $0x8] sm:$0xff]
      %v982 = vld [vmem:[%s979 + $0x10] sm:$0xff]
      %v983 = vld [vmem:[%s979 + $0x18] sm:$0xff]
      %v984 = vld [vmem:[%s979 + $0x20] sm:$0xff]
      %v985 = vld [vmem:[%s979 + $0x28] sm:$0xff]
      %v986 = vld [vmem:[%s979 + $0x30] sm:$0xff]
      %v987 = vld [vmem:[%s979 + $0x38] sm:$0xff]
      %v988 = vld [vmem:[%s979 + $0x40] sm:$0xff]
      %v989 = vld [vmem:[%s979 + $0x48] sm:$0x1]
      %v990 = vld [vmem:[%s979 + $0x50] sm:$0x1]
      %v991 = vld [vmem:[%s979 + $0x58] sm:$0x1]
      %v992 = vmul.f32 %v980, %v980
      %v993 = vmul.f32 %v981, %v981
      %v994 = vmul.f32 %v982, %v982
      %v995 = vmul.f32 %v983, %v983
      %v996 = vmul.f32 %v984, %v984
      %v997 = vmul.f32 %v985, %v985
      %v998 = vmul.f32 %v986, %v986
      %v999 = vmul.f32 %v987, %v987
      %v1000 = vmul.f32 %v988, %v988
      %v1001 = vmul.f32 %v989, %v989
      %v1002 = vmul.f32 %v990, %v990
      %v1003 = vmul.f32 %v991, %v991
      %v1004 = vmul.f32 %v992, %v980
      %v1005 = vmul.f32 %v993, %v981
      %v1006 = vmul.f32 %v994, %v982
      %v1007 = vmul.f32 %v995, %v983
      %v1008 = vmul.f32 %v996, %v984
      %v1009 = vmul.f32 %v997, %v985
      %v1010 = vmul.f32 %v998, %v986
      %v1011 = vmul.f32 %v999, %v987
      %v1012 = vmul.f32 %v1000, %v988
      %v1013 = vmul.f32 %v1001, %v989
      %v1014 = vmul.f32 %v1002, %v990
      %v1015 = vmul.f32 %v1003, %v991
      %1028 = vrot.lane.b32.xlu0 %v992, 32
      %v1029 = vpop.permute.xlu0 %1028
      %1030 = vrot.lane.b32.xlu0 %v993, 32
      %v1031 = vpop.permute.xlu0 %1030
      %1032 = vrot.lane.b32.xlu0 %v994, 32
      %v1033 = vpop.permute.xlu0 %1032
      %1034 = vrot.lane.b32.xlu0 %v995, 32
      %v1035 = vpop.permute.xlu0 %1034
      %1036 = vrot.lane.b32.xlu0 %v996, 32
      %v1037 = vpop.permute.xlu0 %1036
      %1038 = vrot.lane.b32.xlu0 %v997, 32
      %v1039 = vpop.permute.xlu0 %1038
      %1040 = vrot.lane.b32.xlu0 %v998, 32
      %v1041 = vpop.permute.xlu0 %1040
      %1042 = vrot.lane.b32.xlu0 %v999, 32
      %v1043 = vpop.permute.xlu0 %1042
      %1044 = vrot.lane.b32.xlu0 %v1000, 32
      %v1045 = vpop.permute.xlu0 %1044
      %1046 = vrot.lane.b32.xlu0 %v1001, 32
      %v1047 = vpop.permute.xlu0 %1046
      %1048 = vrot.lane.b32.xlu0 %v1002, 32
      %v1049 = vpop.permute.xlu0 %1048
      %1050 = vrot.lane.b32.xlu0 %v1003, 32
      %v1051 = vpop.permute.xlu0 %1050
      %v1052 = vsel %vm352, %v1029, %v1031
      %v1053 = vsel %vm352, %v1031, %v1033
      %v1054 = vsel %vm352, %v1035, %v1037
      %v1055 = vsel %vm352, %v1037, %v1039
      %v1056 = vsel %vm352, %v1041, %v1043
      %v1057 = vsel %vm352, %v1043, %v1045
      %v1058 = vsel %vm352, %v1047, %v1049
      %v1059 = vsel %vm352, %v1049, %v1051
      %1084 = vrot.lane.b32.xlu0 %v1004, 64
      %v1085 = vpop.permute.xlu0 %1084
      %1086 = vrot.lane.b32.xlu0 %v1005, 64
      %v1087 = vpop.permute.xlu0 %1086
      %1088 = vrot.lane.b32.xlu0 %v1006, 64
      %v1089 = vpop.permute.xlu0 %1088
      %1090 = vrot.lane.b32.xlu0 %v1007, 64
      %v1091 = vpop.permute.xlu0 %1090
      %1092 = vrot.lane.b32.xlu0 %v1008, 64
      %v1093 = vpop.permute.xlu0 %1092
      %1094 = vrot.lane.b32.xlu0 %v1009, 64
      %v1095 = vpop.permute.xlu0 %1094
      %1096 = vrot.lane.b32.xlu0 %v1010, 64
      %v1097 = vpop.permute.xlu0 %1096
      %1098 = vrot.lane.b32.xlu0 %v1011, 64
      %v1099 = vpop.permute.xlu0 %1098
      %1100 = vrot.lane.b32.xlu0 %v1012, 64
      %v1101 = vpop.permute.xlu0 %1100
      %1102 = vrot.lane.b32.xlu0 %v1013, 64
      %v1103 = vpop.permute.xlu0 %1102
      %1104 = vrot.lane.b32.xlu0 %v1014, 64
      %v1105 = vpop.permute.xlu0 %1104
      %1106 = vrot.lane.b32.xlu0 %v1015, 64
      %v1107 = vpop.permute.xlu0 %1106
      %v1108 = vsel %vm409, %v1085, %v1087
      %v1109 = vsel %vm409, %v1087, %v1089
      %v1110 = vsel %vm409, %v1091, %v1093
      %v1111 = vsel %vm409, %v1093, %v1095
      %v1112 = vsel %vm409, %v1097, %v1099
      %v1113 = vsel %vm409, %v1099, %v1101
      %v1114 = vsel %vm409, %v1103, %v1105
      %v1115 = vsel %vm409, %v1105, %v1107
      %v1128 = vsel %vm352, %v982, %v1029
      %v1129 = vsel %vm352, %v985, %v1035
      %v1130 = vsel %vm352, %v988, %v1041
      %v1131 = vsel %vm352, %v991, %v1047
      %v1132 = vsel %vm409, %v1053, %v1085
      %v1133 = vsel %vm409, %v1055, %v1091
      %v1134 = vsel %vm409, %v1057, %v1097
      %v1135 = vsel %vm409, %v1059, %v1103
      %v1136 = vpack.c.bf16 %v983, %v980
      %v1137 = vpack.c.bf16 %v984, %v981
      %v1138 = vpack.c.bf16 %v1129, %v1128
      %v1139 = vpack.c.bf16 %v1054, %v1052
      %v1140 = vpack.c.bf16 %v1133, %v1132
      %v1141 = vpack.c.bf16 %v1110, %v1108
      %v1142 = vpack.c.bf16 %v1111, %v1109
      %v1143 = vpack.c.bf16 %v989, %v986
      %v1144 = vpack.c.bf16 %v990, %v987
      %v1145 = vpack.c.bf16 %v1131, %v1130
      %v1146 = vpack.c.bf16 %v1058, %v1056
      %v1147 = vpack.c.bf16 %v1135, %v1134
      %v1148 = vpack.c.bf16 %v1114, %v1112
      %v1149 = vpack.c.bf16 %v1115, %v1113
      %v1151 = vsel %vm776, %v1142, 0
      %v1154 = vsel %vm776, %v1149, 0
      %1156 = vmatprep.subr.bf16.mxu0 0
      %1157 = vmatpush1.bf16.msra.mxu0 %v675
      %1158 = vmatprep.subr.bf16.mxu0 0
      %1159 = vmatpush1.bf16.msra.mxu0 %v674
      %1160 = vmatprep.subr.bf16.mxu0 0
      %1161 = vmatpush1.bf16.msra.mxu0 %v673
      %1162 = vmatprep.subr.bf16.mxu0 0
      %1163 = vmatpush1.bf16.msra.mxu0 %v672
      %1164 = vmatprep.subr.bf16.mxu0 0
      %1165 = vmatpush1.bf16.msra.mxu0 %v671
      %1166 = vmatprep.subr.bf16.mxu0 0
      %1167 = vmatpush1.bf16.msra.mxu0 %v670
      %1168 = vmatprep.subr.bf16.mxu0 0
      %1169 = vmatpush1.bf16.msra.mxu0 %v669
      %1170 = vmatprep.subr.bf16.mxu0 0
      %1171 = vmatpush1.bf16.msra.mxu0 %v668
      %1172 = vmatprep.subr.bf16.mxu0 0
      %1173 = vmatpush2.bf16.msra.mxu0 %v683
      %1174 = vmatprep.subr.bf16.mxu0 0
      %1175 = vmatpush2.bf16.msra.mxu0 %v682
      %1176 = vmatprep.subr.bf16.mxu0 0
      %1177 = vmatpush2.bf16.msra.mxu0 %v681
      %1178 = vmatprep.subr.bf16.mxu0 0
      %1179 = vmatpush2.bf16.msra.mxu0 %v680
      %1180 = vmatprep.subr.bf16.mxu0 0
      %1181 = vmatpush2.bf16.msra.mxu0 %v679
      %1182 = vmatprep.subr.bf16.mxu0 0
      %1183 = vmatpush2.bf16.msra.mxu0 %v678
      %1184 = vmatprep.subr.bf16.mxu0 0
      %1185 = vmatpush2.bf16.msra.mxu0 %v677
      %1186 = vmatprep.subr.bf16.mxu0 0
      %1187 = vmatpush2.bf16.msra.mxu0 %v676
      %1188 = vmatprep.mubr.bf16.mxu0 %v1137
      %1189 = vmatmul.mubr.bf16.gmra.mxu0 %v1136
      %v1190 = vpop.f32.mrf.mxu0
      %v1191 = vadd.f32 0.0, %v1190
      %v1192 = vpop.f32.mrf.mxu0
      %v1193 = vpop.f32.mrf.mxu0
      %v1194 = vadd.f32 0.0, %v1193
      %v1195 = vpop.f32.mrf.mxu0
      %1196 = vmatprep.mubr.bf16.mxu0 %v1144
      %1197 = vmatmul.mubr.bf16.gmra.mxu0 %v1143
      %v1198 = vpop.f32.mrf.mxu0
      %v1199 = vadd.f32 0.0, %v1198
      %v1200 = vpop.f32.mrf.mxu0
      %v1201 = vpop.f32.mrf.mxu0
      %v1202 = vadd.f32 0.0, %v1201
      %v1203 = vpop.f32.mrf.mxu0
      %1204 = vdwg.mxu0
      %1205 = vmatprep.subr.bf16.mxu0 0
      %1206 = vmatpush1.bf16.msra.mxu0 %v691
      %1207 = vmatprep.subr.bf16.mxu0 0
      %1208 = vmatpush1.bf16.msra.mxu0 %v690
      %1209 = vmatprep.subr.bf16.mxu0 0
      %1210 = vmatpush1.bf16.msra.mxu0 %v689
      %1211 = vmatprep.subr.bf16.mxu0 0
      %1212 = vmatpush1.bf16.msra.mxu0 %v688
      %1213 = vmatprep.subr.bf16.mxu0 0
      %1214 = vmatpush1.bf16.msra.mxu0 %v687
      %1215 = vmatprep.subr.bf16.mxu0 0
      %1216 = vmatpush1.bf16.msra.mxu0 %v686
      %1217 = vmatprep.subr.bf16.mxu0 0
      %1218 = vmatpush1.bf16.msra.mxu0 %v685
      %1219 = vmatprep.subr.bf16.mxu0 0
      %1220 = vmatpush1.bf16.msra.mxu0 %v684
      %1221 = vmatprep.subr.bf16.mxu0 0
      %1222 = vmatpush2.bf16.msra.mxu0 %v699
      %1223 = vmatprep.subr.bf16.mxu0 0
      %1224 = vmatpush2.bf16.msra.mxu0 %v698
      %1225 = vmatprep.subr.bf16.mxu0 0
      %1226 = vmatpush2.bf16.msra.mxu0 %v697
      %1227 = vmatprep.subr.bf16.mxu0 0
      %1228 = vmatpush2.bf16.msra.mxu0 %v696
      %1229 = vmatprep.subr.bf16.mxu0 0
      %1230 = vmatpush2.bf16.msra.mxu0 %v695
      %1231 = vmatprep.subr.bf16.mxu0 0
      %1232 = vmatpush2.bf16.msra.mxu0 %v694
      %1233 = vmatprep.subr.bf16.mxu0 0
      %1234 = vmatpush2.bf16.msra.mxu0 %v693
      %1235 = vmatprep.subr.bf16.mxu0 0
      %1236 = vmatpush2.bf16.msra.mxu0 %v692
      %1237 = vmatprep.mubr.bf16.mxu0 %v1139
      %1238 = vmatmul.mubr.bf16.gmra.mxu0 %v1138
      %v1239 = vpop.f32.mrf.mxu0
      %v1240 = vadd.f32 %v1191, %v1239
      %v1241 = vpop.f32.mrf.mxu0
      %v1242 = vpop.f32.mrf.mxu0
      %v1243 = vadd.f32 %v1194, %v1242
      %v1244 = vpop.f32.mrf.mxu0
      %1245 = vmatprep.mubr.bf16.mxu0 %v1146
      %1246 = vmatmul.mubr.bf16.gmra.mxu0 %v1145
      %v1247 = vpop.f32.mrf.mxu0
      %v1248 = vadd.f32 %v1199, %v1247
      %v1249 = vpop.f32.mrf.mxu0
      %v1250 = vpop.f32.mrf.mxu0
      %v1251 = vadd.f32 %v1202, %v1250
      %v1252 = vpop.f32.mrf.mxu0
      %1253 = vdwg.mxu0
      %1254 = vmatprep.subr.bf16.mxu0 0
      %1255 = vmatpush1.bf16.msra.mxu0 %v707
      %1256 = vmatprep.subr.bf16.mxu0 0
      %1257 = vmatpush1.bf16.msra.mxu0 %v706
      %1258 = vmatprep.subr.bf16.mxu0 0
      %1259 = vmatpush1.bf16.msra.mxu0 %v705
      %1260 = vmatprep.subr.bf16.mxu0 0
      %1261 = vmatpush1.bf16.msra.mxu0 %v704
      %1262 = vmatprep.subr.bf16.mxu0 0
      %1263 = vmatpush1.bf16.msra.mxu0 %v703
      %1264 = vmatprep.subr.bf16.mxu0 0
      %1265 = vmatpush1.bf16.msra.mxu0 %v702
      %1266 = vmatprep.subr.bf16.mxu0 0
      %1267 = vmatpush1.bf16.msra.mxu0 %v701
      %1268 = vmatprep.subr.bf16.mxu0 0
      %1269 = vmatpush1.bf16.msra.mxu0 %v700
      %1270 = vmatprep.subr.bf16.mxu0 0
      %1271 = vmatpush2.bf16.msra.mxu0 %v715
      %1272 = vmatprep.subr.bf16.mxu0 0
      %1273 = vmatpush2.bf16.msra.mxu0 %v714
      %1274 = vmatprep.subr.bf16.mxu0 0
      %1275 = vmatpush2.bf16.msra.mxu0 %v713
      %1276 = vmatprep.subr.bf16.mxu0 0
      %1277 = vmatpush2.bf16.msra.mxu0 %v712
      %1278 = vmatprep.subr.bf16.mxu0 0
      %1279 = vmatpush2.bf16.msra.mxu0 %v711
      %1280 = vmatprep.subr.bf16.mxu0 0
      %1281 = vmatpush2.bf16.msra.mxu0 %v710
      %1282 = vmatprep.subr.bf16.mxu0 0
      %1283 = vmatpush2.bf16.msra.mxu0 %v709
      %1284 = vmatprep.subr.bf16.mxu0 0
      %1285 = vmatpush2.bf16.msra.mxu0 %v708
      %1286 = vmatprep.mubr.bf16.mxu0 %v1141
      %1287 = vmatmul.mubr.bf16.gmra.mxu0 %v1140
      %v1288 = vpop.f32.mrf.mxu0
      %v1289 = vadd.f32 %v1240, %v1288
      %v1290 = vpop.f32.mrf.mxu0
      %v1291 = vpop.f32.mrf.mxu0
      %v1292 = vadd.f32 %v1243, %v1291
      %v1293 = vpop.f32.mrf.mxu0
      %1294 = vmatprep.mubr.bf16.mxu0 %v1148
      %1295 = vmatmul.mubr.bf16.gmra.mxu0 %v1147
      %v1296 = vpop.f32.mrf.mxu0
      %v1297 = vadd.f32 %v1248, %v1296
      %v1298 = vpop.f32.mrf.mxu0
      %v1299 = vpop.f32.mrf.mxu0
      %v1300 = vadd.f32 %v1251, %v1299
      %v1301 = vpop.f32.mrf.mxu0
      %1302 = vdwg.mxu0
      %1303 = vmatprep.subr.bf16.mxu0 0
      %1304 = vmatpush1.bf16.msra.mxu0 0
      %1305 = vmatprep.subr.bf16.mxu0 0
      %1306 = vmatpush1.bf16.msra.mxu0 0
      %1307 = vmatprep.subr.bf16.mxu0 0
      %1308 = vmatpush1.bf16.msra.mxu0 %v721
      %1309 = vmatprep.subr.bf16.mxu0 0
      %1310 = vmatpush1.bf16.msra.mxu0 %v720
      %1311 = vmatprep.subr.bf16.mxu0 0
      %1312 = vmatpush1.bf16.msra.mxu0 %v719
      %1313 = vmatprep.subr.bf16.mxu0 0
      %1314 = vmatpush1.bf16.msra.mxu0 %v718
      %1315 = vmatprep.subr.bf16.mxu0 0
      %1316 = vmatpush1.bf16.msra.mxu0 %v717
      %1317 = vmatprep.subr.bf16.mxu0 0
      %1318 = vmatpush1.bf16.msra.mxu0 %v716
      %1319 = vmatprep.subr.bf16.mxu0 0
      %1320 = vmatpush2.bf16.msra.mxu0 0
      %1321 = vmatprep.subr.bf16.mxu0 0
      %1322 = vmatpush2.bf16.msra.mxu0 0
      %1323 = vmatprep.subr.bf16.mxu0 0
      %1324 = vmatpush2.bf16.msra.mxu0 0
      %1325 = vmatprep.subr.bf16.mxu0 0
      %1326 = vmatpush2.bf16.msra.mxu0 0
      %1327 = vmatprep.subr.bf16.mxu0 0
      %1328 = vmatpush2.bf16.msra.mxu0 0
      %1329 = vmatprep.subr.bf16.mxu0 0
      %1330 = vmatpush2.bf16.msra.mxu0 0
      %1331 = vmatprep.subr.bf16.mxu0 0
      %1332 = vmatpush2.bf16.msra.mxu0 0
      %1333 = vmatprep.subr.bf16.mxu0 0
      %1334 = vmatpush2.bf16.msra.mxu0 0
      %1335 = vmatprep.mubr.bf16.mxu0 0
      %1336 = vmatmul.mubr.bf16.gmra.mxu0 %v1151
      %v1337 = vpop.f32.mrf.mxu0
      %v1338 = vadd.f32 %v1289, %v1337
      %v1339 = vpop.f32.mrf.mxu0
      %v1340 = vpop.f32.mrf.mxu0
      %v1341 = vadd.f32 %v1292, %v1340
      %v1342 = vpop.f32.mrf.mxu0
      %1343 = vmatprep.mubr.bf16.mxu0 0
      %1344 = vmatmul.mubr.bf16.gmra.mxu0 %v1154
      %v1345 = vpop.f32.mrf.mxu0
      %v1346 = vadd.f32 %v1297, %v1345
      %v1347 = vpop.f32.mrf.mxu0
      %v1348 = vpop.f32.mrf.mxu0
      %v1349 = vadd.f32 %v1300, %v1348
      %v1350 = vpop.f32.mrf.mxu0
      %1351 = vdwg.mxu0
      %v1352 = vmax.f32 %v965, %v1338
      %v1353 = vmax.f32 %v968, %v1341
      %v1354 = vmax.f32 %v973, %v1346
      %v1355 = vmax.f32 %v976, %v1349
      %s1356 = scalar_lea.vmem %s165, 192
      %v1357 = vld [vmem:[%s1356] sm:$0xff]
      %v1358 = vld [vmem:[%s1356 + $0x8] sm:$0xff]
      %v1359 = vld [vmem:[%s1356 + $0x10] sm:$0xff]
      %v1360 = vld [vmem:[%s1356 + $0x18] sm:$0xff]
      %v1361 = vld [vmem:[%s1356 + $0x20] sm:$0xff]
      %v1362 = vld [vmem:[%s1356 + $0x28] sm:$0xff]
      %v1363 = vld [vmem:[%s1356 + $0x30] sm:$0xff]
      %v1364 = vld [vmem:[%s1356 + $0x38] sm:$0xff]
      %v1365 = vld [vmem:[%s1356 + $0x40] sm:$0xff]
      %v1366 = vld [vmem:[%s1356 + $0x48] sm:$0x1]
      %v1367 = vld [vmem:[%s1356 + $0x50] sm:$0x1]
      %v1368 = vld [vmem:[%s1356 + $0x58] sm:$0x1]
      %v1369 = vmul.f32 %v1357, %v1357
      %v1370 = vmul.f32 %v1358, %v1358
      %v1371 = vmul.f32 %v1359, %v1359
      %v1372 = vmul.f32 %v1360, %v1360
      %v1373 = vmul.f32 %v1361, %v1361
      %v1374 = vmul.f32 %v1362, %v1362
      %v1375 = vmul.f32 %v1363, %v1363
      %v1376 = vmul.f32 %v1364, %v1364
      %v1377 = vmul.f32 %v1365, %v1365
      %v1378 = vmul.f32 %v1366, %v1366
      %v1379 = vmul.f32 %v1367, %v1367
      %v1380 = vmul.f32 %v1368, %v1368
      %v1381 = vmul.f32 %v1369, %v1357
      %v1382 = vmul.f32 %v1370, %v1358
      %v1383 = vmul.f32 %v1371, %v1359
      %v1384 = vmul.f32 %v1372, %v1360
      %v1385 = vmul.f32 %v1373, %v1361
      %v1386 = vmul.f32 %v1374, %v1362
      %v1387 = vmul.f32 %v1375, %v1363
      %v1388 = vmul.f32 %v1376, %v1364
      %v1389 = vmul.f32 %v1377, %v1365
      %v1390 = vmul.f32 %v1378, %v1366
      %v1391 = vmul.f32 %v1379, %v1367
      %v1392 = vmul.f32 %v1380, %v1368
      %1405 = vrot.lane.b32.xlu0 %v1369, 32
      %v1406 = vpop.permute.xlu0 %1405
      %1407 = vrot.lane.b32.xlu0 %v1370, 32
      %v1408 = vpop.permute.xlu0 %1407
      %1409 = vrot.lane.b32.xlu0 %v1371, 32
      %v1410 = vpop.permute.xlu0 %1409
      %1411 = vrot.lane.b32.xlu0 %v1372, 32
      %v1412 = vpop.permute.xlu0 %1411
      %1413 = vrot.lane.b32.xlu0 %v1373, 32
      %v1414 = vpop.permute.xlu0 %1413
      %1415 = vrot.lane.b32.xlu0 %v1374, 32
      %v1416 = vpop.permute.xlu0 %1415
      %1417 = vrot.lane.b32.xlu0 %v1375, 32
      %v1418 = vpop.permute.xlu0 %1417
      %1419 = vrot.lane.b32.xlu0 %v1376, 32
      %v1420 = vpop.permute.xlu0 %1419
      %1421 = vrot.lane.b32.xlu0 %v1377, 32
      %v1422 = vpop.permute.xlu0 %1421
      %1423 = vrot.lane.b32.xlu0 %v1378, 32
      %v1424 = vpop.permute.xlu0 %1423
      %1425 = vrot.lane.b32.xlu0 %v1379, 32
      %v1426 = vpop.permute.xlu0 %1425
      %1427 = vrot.lane.b32.xlu0 %v1380, 32
      %v1428 = vpop.permute.xlu0 %1427
      %v1429 = vsel %vm352, %v1406, %v1408
      %v1430 = vsel %vm352, %v1408, %v1410
      %v1431 = vsel %vm352, %v1412, %v1414
      %v1432 = vsel %vm352, %v1414, %v1416
      %v1433 = vsel %vm352, %v1418, %v1420
      %v1434 = vsel %vm352, %v1420, %v1422
      %v1435 = vsel %vm352, %v1424, %v1426
      %v1436 = vsel %vm352, %v1426, %v1428
      %1461 = vrot.lane.b32.xlu0 %v1381, 64
      %v1462 = vpop.permute.xlu0 %1461
      %1463 = vrot.lane.b32.xlu0 %v1382, 64
      %v1464 = vpop.permute.xlu0 %1463
      %1465 = vrot.lane.b32.xlu0 %v1383, 64
      %v1466 = vpop.permute.xlu0 %1465
      %1467 = vrot.lane.b32.xlu0 %v1384, 64
      %v1468 = vpop.permute.xlu0 %1467
      %1469 = vrot.lane.b32.xlu0 %v1385, 64
      %v1470 = vpop.permute.xlu0 %1469
      %1471 = vrot.lane.b32.xlu0 %v1386, 64
      %v1472 = vpop.permute.xlu0 %1471
      %1473 = vrot.lane.b32.xlu0 %v1387, 64
      %v1474 = vpop.permute.xlu0 %1473
      %1475 = vrot.lane.b32.xlu0 %v1388, 64
      %v1476 = vpop.permute.xlu0 %1475
      %1477 = vrot.lane.b32.xlu0 %v1389, 64
      %v1478 = vpop.permute.xlu0 %1477
      %1479 = vrot.lane.b32.xlu0 %v1390, 64
      %v1480 = vpop.permute.xlu0 %1479
      %1481 = vrot.lane.b32.xlu0 %v1391, 64
      %v1482 = vpop.permute.xlu0 %1481
      %1483 = vrot.lane.b32.xlu0 %v1392, 64
      %v1484 = vpop.permute.xlu0 %1483
      %v1485 = vsel %vm409, %v1462, %v1464
      %v1486 = vsel %vm409, %v1464, %v1466
      %v1487 = vsel %vm409, %v1468, %v1470
      %v1488 = vsel %vm409, %v1470, %v1472
      %v1489 = vsel %vm409, %v1474, %v1476
      %v1490 = vsel %vm409, %v1476, %v1478
      %v1491 = vsel %vm409, %v1480, %v1482
      %v1492 = vsel %vm409, %v1482, %v1484
      %v1505 = vsel %vm352, %v1359, %v1406
      %v1506 = vsel %vm352, %v1362, %v1412
      %v1507 = vsel %vm352, %v1365, %v1418
      %v1508 = vsel %vm352, %v1368, %v1424
      %v1509 = vsel %vm409, %v1430, %v1462
      %v1510 = vsel %vm409, %v1432, %v1468
      %v1511 = vsel %vm409, %v1434, %v1474
      %v1512 = vsel %vm409, %v1436, %v1480
      %v1513 = vpack.c.bf16 %v1360, %v1357
      %v1514 = vpack.c.bf16 %v1361, %v1358
      %v1515 = vpack.c.bf16 %v1506, %v1505
      %v1516 = vpack.c.bf16 %v1431, %v1429
      %v1517 = vpack.c.bf16 %v1510, %v1509
      %v1518 = vpack.c.bf16 %v1487, %v1485
      %v1519 = vpack.c.bf16 %v1488, %v1486
      %v1520 = vpack.c.bf16 %v1366, %v1363
      %v1521 = vpack.c.bf16 %v1367, %v1364
      %v1522 = vpack.c.bf16 %v1508, %v1507
      %v1523 = vpack.c.bf16 %v1435, %v1433
      %v1524 = vpack.c.bf16 %v1512, %v1511
      %v1525 = vpack.c.bf16 %v1491, %v1489
      %v1526 = vpack.c.bf16 %v1492, %v1490
      %v1528 = vsel %vm776, %v1519, 0
      %v1531 = vsel %vm776, %v1526, 0
      %1533 = vmatprep.subr.bf16.mxu0 0
      %1534 = vmatpush1.bf16.msra.mxu0 %v675
      %1535 = vmatprep.subr.bf16.mxu0 0
      %1536 = vmatpush1.bf16.msra.mxu0 %v674
      %1537 = vmatprep.subr.bf16.mxu0 0
      %1538 = vmatpush1.bf16.msra.mxu0 %v673
      %1539 = vmatprep.subr.bf16.mxu0 0
      %1540 = vmatpush1.bf16.msra.mxu0 %v672
      %1541 = vmatprep.subr.bf16.mxu0 0
      %1542 = vmatpush1.bf16.msra.mxu0 %v671
      %1543 = vmatprep.subr.bf16.mxu0 0
      %1544 = vmatpush1.bf16.msra.mxu0 %v670
      %1545 = vmatprep.subr.bf16.mxu0 0
      %1546 = vmatpush1.bf16.msra.mxu0 %v669
      %1547 = vmatprep.subr.bf16.mxu0 0
      %1548 = vmatpush1.bf16.msra.mxu0 %v668
      %1549 = vmatprep.subr.bf16.mxu0 0
      %1550 = vmatpush2.bf16.msra.mxu0 %v683
      %1551 = vmatprep.subr.bf16.mxu0 0
      %1552 = vmatpush2.bf16.msra.mxu0 %v682
      %1553 = vmatprep.subr.bf16.mxu0 0
      %1554 = vmatpush2.bf16.msra.mxu0 %v681
      %1555 = vmatprep.subr.bf16.mxu0 0
      %1556 = vmatpush2.bf16.msra.mxu0 %v680
      %1557 = vmatprep.subr.bf16.mxu0 0
      %1558 = vmatpush2.bf16.msra.mxu0 %v679
      %1559 = vmatprep.subr.bf16.mxu0 0
      %1560 = vmatpush2.bf16.msra.mxu0 %v678
      %1561 = vmatprep.subr.bf16.mxu0 0
      %1562 = vmatpush2.bf16.msra.mxu0 %v677
      %1563 = vmatprep.subr.bf16.mxu0 0
      %1564 = vmatpush2.bf16.msra.mxu0 %v676
      %1565 = vmatprep.mubr.bf16.mxu0 %v1514
      %1566 = vmatmul.mubr.bf16.gmra.mxu0 %v1513
      %v1567 = vpop.f32.mrf.mxu0
      %v1568 = vadd.f32 0.0, %v1567
      %v1569 = vpop.f32.mrf.mxu0
      %v1570 = vpop.f32.mrf.mxu0
      %v1571 = vadd.f32 0.0, %v1570
      %v1572 = vpop.f32.mrf.mxu0
      %1573 = vmatprep.mubr.bf16.mxu0 %v1521
      %1574 = vmatmul.mubr.bf16.gmra.mxu0 %v1520
      %v1575 = vpop.f32.mrf.mxu0
      %v1576 = vadd.f32 0.0, %v1575
      %v1577 = vpop.f32.mrf.mxu0
      %v1578 = vpop.f32.mrf.mxu0
      %v1579 = vadd.f32 0.0, %v1578
      %v1580 = vpop.f32.mrf.mxu0
      %1581 = vdwg.mxu0
      %1582 = vmatprep.subr.bf16.mxu0 0
      %1583 = vmatpush1.bf16.msra.mxu0 %v691
      %1584 = vmatprep.subr.bf16.mxu0 0
      %1585 = vmatpush1.bf16.msra.mxu0 %v690
      %1586 = vmatprep.subr.bf16.mxu0 0
      %1587 = vmatpush1.bf16.msra.mxu0 %v689
      %1588 = vmatprep.subr.bf16.mxu0 0
      %1589 = vmatpush1.bf16.msra.mxu0 %v688
      %1590 = vmatprep.subr.bf16.mxu0 0
      %1591 = vmatpush1.bf16.msra.mxu0 %v687
      %1592 = vmatprep.subr.bf16.mxu0 0
      %1593 = vmatpush1.bf16.msra.mxu0 %v686
      %1594 = vmatprep.subr.bf16.mxu0 0
      %1595 = vmatpush1.bf16.msra.mxu0 %v685
      %1596 = vmatprep.subr.bf16.mxu0 0
      %1597 = vmatpush1.bf16.msra.mxu0 %v684
      %1598 = vmatprep.subr.bf16.mxu0 0
      %1599 = vmatpush2.bf16.msra.mxu0 %v699
      %1600 = vmatprep.subr.bf16.mxu0 0
      %1601 = vmatpush2.bf16.msra.mxu0 %v698
      %1602 = vmatprep.subr.bf16.mxu0 0
      %1603 = vmatpush2.bf16.msra.mxu0 %v697
      %1604 = vmatprep.subr.bf16.mxu0 0
      %1605 = vmatpush2.bf16.msra.mxu0 %v696
      %1606 = vmatprep.subr.bf16.mxu0 0
      %1607 = vmatpush2.bf16.msra.mxu0 %v695
      %1608 = vmatprep.subr.bf16.mxu0 0
      %1609 = vmatpush2.bf16.msra.mxu0 %v694
      %1610 = vmatprep.subr.bf16.mxu0 0
      %1611 = vmatpush2.bf16.msra.mxu0 %v693
      %1612 = vmatprep.subr.bf16.mxu0 0
      %1613 = vmatpush2.bf16.msra.mxu0 %v692
      %1614 = vmatprep.mubr.bf16.mxu0 %v1516
      %1615 = vmatmul.mubr.bf16.gmra.mxu0 %v1515
      %v1616 = vpop.f32.mrf.mxu0
      %v1617 = vadd.f32 %v1568, %v1616
      %v1618 = vpop.f32.mrf.mxu0
      %v1619 = vpop.f32.mrf.mxu0
      %v1620 = vadd.f32 %v1571, %v1619
      %v1621 = vpop.f32.mrf.mxu0
      %1622 = vmatprep.mubr.bf16.mxu0 %v1523
      %1623 = vmatmul.mubr.bf16.gmra.mxu0 %v1522
      %v1624 = vpop.f32.mrf.mxu0
      %v1625 = vadd.f32 %v1576, %v1624
      %v1626 = vpop.f32.mrf.mxu0
      %v1627 = vpop.f32.mrf.mxu0
      %v1628 = vadd.f32 %v1579, %v1627
      %v1629 = vpop.f32.mrf.mxu0
      %1630 = vdwg.mxu0
      %1631 = vmatprep.subr.bf16.mxu0 0
      %1632 = vmatpush1.bf16.msra.mxu0 %v707
      %1633 = vmatprep.subr.bf16.mxu0 0
      %1634 = vmatpush1.bf16.msra.mxu0 %v706
      %1635 = vmatprep.subr.bf16.mxu0 0
      %1636 = vmatpush1.bf16.msra.mxu0 %v705
      %1637 = vmatprep.subr.bf16.mxu0 0
      %1638 = vmatpush1.bf16.msra.mxu0 %v704
      %1639 = vmatprep.subr.bf16.mxu0 0
      %1640 = vmatpush1.bf16.msra.mxu0 %v703
      %1641 = vmatprep.subr.bf16.mxu0 0
      %1642 = vmatpush1.bf16.msra.mxu0 %v702
      %1643 = vmatprep.subr.bf16.mxu0 0
      %1644 = vmatpush1.bf16.msra.mxu0 %v701
      %1645 = vmatprep.subr.bf16.mxu0 0
      %1646 = vmatpush1.bf16.msra.mxu0 %v700
      %1647 = vmatprep.subr.bf16.mxu0 0
      %1648 = vmatpush2.bf16.msra.mxu0 %v715
      %1649 = vmatprep.subr.bf16.mxu0 0
      %1650 = vmatpush2.bf16.msra.mxu0 %v714
      %1651 = vmatprep.subr.bf16.mxu0 0
      %1652 = vmatpush2.bf16.msra.mxu0 %v713
      %1653 = vmatprep.subr.bf16.mxu0 0
      %1654 = vmatpush2.bf16.msra.mxu0 %v712
      %1655 = vmatprep.subr.bf16.mxu0 0
      %1656 = vmatpush2.bf16.msra.mxu0 %v711
      %1657 = vmatprep.subr.bf16.mxu0 0
      %1658 = vmatpush2.bf16.msra.mxu0 %v710
      %1659 = vmatprep.subr.bf16.mxu0 0
      %1660 = vmatpush2.bf16.msra.mxu0 %v709
      %1661 = vmatprep.subr.bf16.mxu0 0
      %1662 = vmatpush2.bf16.msra.mxu0 %v708
      %1663 = vmatprep.mubr.bf16.mxu0 %v1518
      %1664 = vmatmul.mubr.bf16.gmra.mxu0 %v1517
      %v1665 = vpop.f32.mrf.mxu0
      %v1666 = vadd.f32 %v1617, %v1665
      %v1667 = vpop.f32.mrf.mxu0
      %v1668 = vpop.f32.mrf.mxu0
      %v1669 = vadd.f32 %v1620, %v1668
      %v1670 = vpop.f32.mrf.mxu0
      %1671 = vmatprep.mubr.bf16.mxu0 %v1525
      %1672 = vmatmul.mubr.bf16.gmra.mxu0 %v1524
      %v1673 = vpop.f32.mrf.mxu0
      %v1674 = vadd.f32 %v1625, %v1673
      %v1675 = vpop.f32.mrf.mxu0
      %v1676 = vpop.f32.mrf.mxu0
      %v1677 = vadd.f32 %v1628, %v1676
      %v1678 = vpop.f32.mrf.mxu0
      %1679 = vdwg.mxu0
      %1680 = vmatprep.subr.bf16.mxu0 0
      %1681 = vmatpush1.bf16.msra.mxu0 0
      %1682 = vmatprep.subr.bf16.mxu0 0
      %1683 = vmatpush1.bf16.msra.mxu0 0
      %1684 = vmatprep.subr.bf16.mxu0 0
      %1685 = vmatpush1.bf16.msra.mxu0 %v721
      %1686 = vmatprep.subr.bf16.mxu0 0
      %1687 = vmatpush1.bf16.msra.mxu0 %v720
      %1688 = vmatprep.subr.bf16.mxu0 0
      %1689 = vmatpush1.bf16.msra.mxu0 %v719
      %1690 = vmatprep.subr.bf16.mxu0 0
      %1691 = vmatpush1.bf16.msra.mxu0 %v718
      %1692 = vmatprep.subr.bf16.mxu0 0
      %1693 = vmatpush1.bf16.msra.mxu0 %v717
      %1694 = vmatprep.subr.bf16.mxu0 0
      %1695 = vmatpush1.bf16.msra.mxu0 %v716
      %1696 = vmatprep.subr.bf16.mxu0 0
      %1697 = vmatpush2.bf16.msra.mxu0 0
      %1698 = vmatprep.subr.bf16.mxu0 0
      %1699 = vmatpush2.bf16.msra.mxu0 0
      %1700 = vmatprep.subr.bf16.mxu0 0
      %1701 = vmatpush2.bf16.msra.mxu0 0
      %1702 = vmatprep.subr.bf16.mxu0 0
      %1703 = vmatpush2.bf16.msra.mxu0 0
      %1704 = vmatprep.subr.bf16.mxu0 0
      %1705 = vmatpush2.bf16.msra.mxu0 0
      %1706 = vmatprep.subr.bf16.mxu0 0
      %1707 = vmatpush2.bf16.msra.mxu0 0
      %1708 = vmatprep.subr.bf16.mxu0 0
      %1709 = vmatpush2.bf16.msra.mxu0 0
      %1710 = vmatprep.subr.bf16.mxu0 0
      %1711 = vmatpush2.bf16.msra.mxu0 0
      %1712 = vmatprep.mubr.bf16.mxu0 0
      %1713 = vmatmul.mubr.bf16.gmra.mxu0 %v1528
      %v1714 = vpop.f32.mrf.mxu0
      %v1715 = vadd.f32 %v1666, %v1714
      %v1716 = vpop.f32.mrf.mxu0
      %v1717 = vpop.f32.mrf.mxu0
      %v1718 = vadd.f32 %v1669, %v1717
      %v1719 = vpop.f32.mrf.mxu0
      %1720 = vmatprep.mubr.bf16.mxu0 0
      %1721 = vmatmul.mubr.bf16.gmra.mxu0 %v1531
      %v1722 = vpop.f32.mrf.mxu0
      %v1723 = vadd.f32 %v1674, %v1722
      %v1724 = vpop.f32.mrf.mxu0
      %v1725 = vpop.f32.mrf.mxu0
      %v1726 = vadd.f32 %v1677, %v1725
      %v1727 = vpop.f32.mrf.mxu0
      %1728 = vdwg.mxu0
      %v1729 = vmax.f32 %v1352, %v1715
      %v1730 = vmax.f32 %v1353, %v1718
      %v1731 = vmax.f32 %v1354, %v1723
      %v1732 = vmax.f32 %v1355, %v1726
      %s1733 = scalar_lea.vmem %s165, 288
      %v1734 = vld [vmem:[%s1733] sm:$0xff]
      %v1735 = vld [vmem:[%s1733 + $0x8] sm:$0xff]
      %v1736 = vld [vmem:[%s1733 + $0x10] sm:$0xff]
      %v1737 = vld [vmem:[%s1733 + $0x18] sm:$0xff]
      %v1738 = vld [vmem:[%s1733 + $0x20] sm:$0xff]
      %v1739 = vld [vmem:[%s1733 + $0x28] sm:$0xff]
      %v1740 = vld [vmem:[%s1733 + $0x30] sm:$0xff]
      %v1741 = vld [vmem:[%s1733 + $0x38] sm:$0xff]
      %v1742 = vld [vmem:[%s1733 + $0x40] sm:$0xff]
      %v1743 = vld [vmem:[%s1733 + $0x48] sm:$0x1]
      %v1744 = vld [vmem:[%s1733 + $0x50] sm:$0x1]
      %v1745 = vld [vmem:[%s1733 + $0x58] sm:$0x1]
      %v1746 = vmul.f32 %v1734, %v1734
      %v1747 = vmul.f32 %v1735, %v1735
      %v1748 = vmul.f32 %v1736, %v1736
      %v1749 = vmul.f32 %v1737, %v1737
      %v1750 = vmul.f32 %v1738, %v1738
      %v1751 = vmul.f32 %v1739, %v1739
      %v1752 = vmul.f32 %v1740, %v1740
      %v1753 = vmul.f32 %v1741, %v1741
      %v1754 = vmul.f32 %v1742, %v1742
      %v1755 = vmul.f32 %v1743, %v1743
      %v1756 = vmul.f32 %v1744, %v1744
      %v1757 = vmul.f32 %v1745, %v1745
      %v1758 = vmul.f32 %v1746, %v1734
      %v1759 = vmul.f32 %v1747, %v1735
      %v1760 = vmul.f32 %v1748, %v1736
      %v1761 = vmul.f32 %v1749, %v1737
      %v1762 = vmul.f32 %v1750, %v1738
      %v1763 = vmul.f32 %v1751, %v1739
      %v1764 = vmul.f32 %v1752, %v1740
      %v1765 = vmul.f32 %v1753, %v1741
      %v1766 = vmul.f32 %v1754, %v1742
      %v1767 = vmul.f32 %v1755, %v1743
      %v1768 = vmul.f32 %v1756, %v1744
      %v1769 = vmul.f32 %v1757, %v1745
      %1782 = vrot.lane.b32.xlu0 %v1746, 32
      %v1783 = vpop.permute.xlu0 %1782
      %1784 = vrot.lane.b32.xlu0 %v1747, 32
      %v1785 = vpop.permute.xlu0 %1784
      %1786 = vrot.lane.b32.xlu0 %v1748, 32
      %v1787 = vpop.permute.xlu0 %1786
      %1788 = vrot.lane.b32.xlu0 %v1749, 32
      %v1789 = vpop.permute.xlu0 %1788
      %1790 = vrot.lane.b32.xlu0 %v1750, 32
      %v1791 = vpop.permute.xlu0 %1790
      %1792 = vrot.lane.b32.xlu0 %v1751, 32
      %v1793 = vpop.permute.xlu0 %1792
      %1794 = vrot.lane.b32.xlu0 %v1752, 32
      %v1795 = vpop.permute.xlu0 %1794
      %1796 = vrot.lane.b32.xlu0 %v1753, 32
      %v1797 = vpop.permute.xlu0 %1796
      %1798 = vrot.lane.b32.xlu0 %v1754, 32
      %v1799 = vpop.permute.xlu0 %1798
      %1800 = vrot.lane.b32.xlu0 %v1755, 32
      %v1801 = vpop.permute.xlu0 %1800
      %1802 = vrot.lane.b32.xlu0 %v1756, 32
      %v1803 = vpop.permute.xlu0 %1802
      %1804 = vrot.lane.b32.xlu0 %v1757, 32
      %v1805 = vpop.permute.xlu0 %1804
      %v1806 = vsel %vm352, %v1783, %v1785
      %v1807 = vsel %vm352, %v1785, %v1787
      %v1808 = vsel %vm352, %v1789, %v1791
      %v1809 = vsel %vm352, %v1791, %v1793
      %v1810 = vsel %vm352, %v1795, %v1797
      %v1811 = vsel %vm352, %v1797, %v1799
      %v1812 = vsel %vm352, %v1801, %v1803
      %v1813 = vsel %vm352, %v1803, %v1805
      %1838 = vrot.lane.b32.xlu0 %v1758, 64
      %v1839 = vpop.permute.xlu0 %1838
      %1840 = vrot.lane.b32.xlu0 %v1759, 64
      %v1841 = vpop.permute.xlu0 %1840
      %1842 = vrot.lane.b32.xlu0 %v1760, 64
      %v1843 = vpop.permute.xlu0 %1842
      %1844 = vrot.lane.b32.xlu0 %v1761, 64
      %v1845 = vpop.permute.xlu0 %1844
      %1846 = vrot.lane.b32.xlu0 %v1762, 64
      %v1847 = vpop.permute.xlu0 %1846
      %1848 = vrot.lane.b32.xlu0 %v1763, 64
      %v1849 = vpop.permute.xlu0 %1848
      %1850 = vrot.lane.b32.xlu0 %v1764, 64
      %v1851 = vpop.permute.xlu0 %1850
      %1852 = vrot.lane.b32.xlu0 %v1765, 64
      %v1853 = vpop.permute.xlu0 %1852
      %1854 = vrot.lane.b32.xlu0 %v1766, 64
      %v1855 = vpop.permute.xlu0 %1854
      %1856 = vrot.lane.b32.xlu0 %v1767, 64
      %v1857 = vpop.permute.xlu0 %1856
      %1858 = vrot.lane.b32.xlu0 %v1768, 64
      %v1859 = vpop.permute.xlu0 %1858
      %1860 = vrot.lane.b32.xlu0 %v1769, 64
      %v1861 = vpop.permute.xlu0 %1860
      %v1862 = vsel %vm409, %v1839, %v1841
      %v1863 = vsel %vm409, %v1841, %v1843
      %v1864 = vsel %vm409, %v1845, %v1847
      %v1865 = vsel %vm409, %v1847, %v1849
      %v1866 = vsel %vm409, %v1851, %v1853
      %v1867 = vsel %vm409, %v1853, %v1855
      %v1868 = vsel %vm409, %v1857, %v1859
      %v1869 = vsel %vm409, %v1859, %v1861
      %v1882 = vsel %vm352, %v1736, %v1783
      %v1883 = vsel %vm352, %v1739, %v1789
      %v1884 = vsel %vm352, %v1742, %v1795
      %v1885 = vsel %vm352, %v1745, %v1801
      %v1886 = vsel %vm409, %v1807, %v1839
      %v1887 = vsel %vm409, %v1809, %v1845
      %v1888 = vsel %vm409, %v1811, %v1851
      %v1889 = vsel %vm409, %v1813, %v1857
      %v1890 = vpack.c.bf16 %v1737, %v1734
      %v1891 = vpack.c.bf16 %v1738, %v1735
      %v1892 = vpack.c.bf16 %v1883, %v1882
      %v1893 = vpack.c.bf16 %v1808, %v1806
      %v1894 = vpack.c.bf16 %v1887, %v1886
      %v1895 = vpack.c.bf16 %v1864, %v1862
      %v1896 = vpack.c.bf16 %v1865, %v1863
      %v1897 = vpack.c.bf16 %v1743, %v1740
      %v1898 = vpack.c.bf16 %v1744, %v1741
      %v1899 = vpack.c.bf16 %v1885, %v1884
      %v1900 = vpack.c.bf16 %v1812, %v1810
      %v1901 = vpack.c.bf16 %v1889, %v1888
      %v1902 = vpack.c.bf16 %v1868, %v1866
      %v1903 = vpack.c.bf16 %v1869, %v1867
      %v1905 = vsel %vm776, %v1896, 0
      %v1908 = vsel %vm776, %v1903, 0
      %1910 = vmatprep.subr.bf16.mxu0 0
      %1911 = vmatpush1.bf16.msra.mxu0 %v675
      %1912 = vmatprep.subr.bf16.mxu0 0
      %1913 = vmatpush1.bf16.msra.mxu0 %v674
      %1914 = vmatprep.subr.bf16.mxu0 0
      %1915 = vmatpush1.bf16.msra.mxu0 %v673
      %1916 = vmatprep.subr.bf16.mxu0 0
      %1917 = vmatpush1.bf16.msra.mxu0 %v672
      %1918 = vmatprep.subr.bf16.mxu0 0
      %1919 = vmatpush1.bf16.msra.mxu0 %v671
      %1920 = vmatprep.subr.bf16.mxu0 0
      %1921 = vmatpush1.bf16.msra.mxu0 %v670
      %1922 = vmatprep.subr.bf16.mxu0 0
      %1923 = vmatpush1.bf16.msra.mxu0 %v669
      %1924 = vmatprep.subr.bf16.mxu0 0
      %1925 = vmatpush1.bf16.msra.mxu0 %v668
      %1926 = vmatprep.subr.bf16.mxu0 0
      %1927 = vmatpush2.bf16.msra.mxu0 %v683
      %1928 = vmatprep.subr.bf16.mxu0 0
      %1929 = vmatpush2.bf16.msra.mxu0 %v682
      %1930 = vmatprep.subr.bf16.mxu0 0
      %1931 = vmatpush2.bf16.msra.mxu0 %v681
      %1932 = vmatprep.subr.bf16.mxu0 0
      %1933 = vmatpush2.bf16.msra.mxu0 %v680
      %1934 = vmatprep.subr.bf16.mxu0 0
      %1935 = vmatpush2.bf16.msra.mxu0 %v679
      %1936 = vmatprep.subr.bf16.mxu0 0
      %1937 = vmatpush2.bf16.msra.mxu0 %v678
      %1938 = vmatprep.subr.bf16.mxu0 0
      %1939 = vmatpush2.bf16.msra.mxu0 %v677
      %1940 = vmatprep.subr.bf16.mxu0 0
      %1941 = vmatpush2.bf16.msra.mxu0 %v676
      %1942 = vmatprep.mubr.bf16.mxu0 %v1891
      %1943 = vmatmul.mubr.bf16.gmra.mxu0 %v1890
      %v1944 = vpop.f32.mrf.mxu0
      %v1945 = vadd.f32 0.0, %v1944
      %v1946 = vpop.f32.mrf.mxu0
      %v1947 = vpop.f32.mrf.mxu0
      %v1948 = vadd.f32 0.0, %v1947
      %v1949 = vpop.f32.mrf.mxu0
      %1950 = vmatprep.mubr.bf16.mxu0 %v1898
      %1951 = vmatmul.mubr.bf16.gmra.mxu0 %v1897
      %v1952 = vpop.f32.mrf.mxu0
      %v1953 = vadd.f32 0.0, %v1952
      %v1954 = vpop.f32.mrf.mxu0
      %v1955 = vpop.f32.mrf.mxu0
      %v1956 = vadd.f32 0.0, %v1955
      %v1957 = vpop.f32.mrf.mxu0
      %1958 = vdwg.mxu0
      %1959 = vmatprep.subr.bf16.mxu0 0
      %1960 = vmatpush1.bf16.msra.mxu0 %v691
      %1961 = vmatprep.subr.bf16.mxu0 0
      %1962 = vmatpush1.bf16.msra.mxu0 %v690
      %1963 = vmatprep.subr.bf16.mxu0 0
      %1964 = vmatpush1.bf16.msra.mxu0 %v689
      %1965 = vmatprep.subr.bf16.mxu0 0
      %1966 = vmatpush1.bf16.msra.mxu0 %v688
      %1967 = vmatprep.subr.bf16.mxu0 0
      %1968 = vmatpush1.bf16.msra.mxu0 %v687
      %1969 = vmatprep.subr.bf16.mxu0 0
      %1970 = vmatpush1.bf16.msra.mxu0 %v686
      %1971 = vmatprep.subr.bf16.mxu0 0
      %1972 = vmatpush1.bf16.msra.mxu0 %v685
      %1973 = vmatprep.subr.bf16.mxu0 0
      %1974 = vmatpush1.bf16.msra.mxu0 %v684
      %1975 = vmatprep.subr.bf16.mxu0 0
      %1976 = vmatpush2.bf16.msra.mxu0 %v699
      %1977 = vmatprep.subr.bf16.mxu0 0
      %1978 = vmatpush2.bf16.msra.mxu0 %v698
      %1979 = vmatprep.subr.bf16.mxu0 0
      %1980 = vmatpush2.bf16.msra.mxu0 %v697
      %1981 = vmatprep.subr.bf16.mxu0 0
      %1982 = vmatpush2.bf16.msra.mxu0 %v696
      %1983 = vmatprep.subr.bf16.mxu0 0
      %1984 = vmatpush2.bf16.msra.mxu0 %v695
      %1985 = vmatprep.subr.bf16.mxu0 0
      %1986 = vmatpush2.bf16.msra.mxu0 %v694
      %1987 = vmatprep.subr.bf16.mxu0 0
      %1988 = vmatpush2.bf16.msra.mxu0 %v693
      %1989 = vmatprep.subr.bf16.mxu0 0
      %1990 = vmatpush2.bf16.msra.mxu0 %v692
      %1991 = vmatprep.mubr.bf16.mxu0 %v1893
      %1992 = vmatmul.mubr.bf16.gmra.mxu0 %v1892
      %v1993 = vpop.f32.mrf.mxu0
      %v1994 = vadd.f32 %v1945, %v1993
      %v1995 = vpop.f32.mrf.mxu0
      %v1996 = vpop.f32.mrf.mxu0
      %v1997 = vadd.f32 %v1948, %v1996
      %v1998 = vpop.f32.mrf.mxu0
      %1999 = vmatprep.mubr.bf16.mxu0 %v1900
      %2000 = vmatmul.mubr.bf16.gmra.mxu0 %v1899
      %v2001 = vpop.f32.mrf.mxu0
      %v2002 = vadd.f32 %v1953, %v2001
      %v2003 = vpop.f32.mrf.mxu0
      %v2004 = vpop.f32.mrf.mxu0
      %v2005 = vadd.f32 %v1956, %v2004
      %v2006 = vpop.f32.mrf.mxu0
      %2007 = vdwg.mxu0
      %2008 = vmatprep.subr.bf16.mxu0 0
      %2009 = vmatpush1.bf16.msra.mxu0 %v707
      %2010 = vmatprep.subr.bf16.mxu0 0
      %2011 = vmatpush1.bf16.msra.mxu0 %v706
      %2012 = vmatprep.subr.bf16.mxu0 0
      %2013 = vmatpush1.bf16.msra.mxu0 %v705
      %2014 = vmatprep.subr.bf16.mxu0 0
      %2015 = vmatpush1.bf16.msra.mxu0 %v704
      %2016 = vmatprep.subr.bf16.mxu0 0
      %2017 = vmatpush1.bf16.msra.mxu0 %v703
      %2018 = vmatprep.subr.bf16.mxu0 0
      %2019 = vmatpush1.bf16.msra.mxu0 %v702
      %2020 = vmatprep.subr.bf16.mxu0 0
      %2021 = vmatpush1.bf16.msra.mxu0 %v701
      %2022 = vmatprep.subr.bf16.mxu0 0
      %2023 = vmatpush1.bf16.msra.mxu0 %v700
      %2024 = vmatprep.subr.bf16.mxu0 0
      %2025 = vmatpush2.bf16.msra.mxu0 %v715
      %2026 = vmatprep.subr.bf16.mxu0 0
      %2027 = vmatpush2.bf16.msra.mxu0 %v714
      %2028 = vmatprep.subr.bf16.mxu0 0
      %2029 = vmatpush2.bf16.msra.mxu0 %v713
      %2030 = vmatprep.subr.bf16.mxu0 0
      %2031 = vmatpush2.bf16.msra.mxu0 %v712
      %2032 = vmatprep.subr.bf16.mxu0 0
      %2033 = vmatpush2.bf16.msra.mxu0 %v711
      %2034 = vmatprep.subr.bf16.mxu0 0
      %2035 = vmatpush2.bf16.msra.mxu0 %v710
      %2036 = vmatprep.subr.bf16.mxu0 0
      %2037 = vmatpush2.bf16.msra.mxu0 %v709
      %2038 = vmatprep.subr.bf16.mxu0 0
      %2039 = vmatpush2.bf16.msra.mxu0 %v708
      %2040 = vmatprep.mubr.bf16.mxu0 %v1895
      %2041 = vmatmul.mubr.bf16.gmra.mxu0 %v1894
      %v2042 = vpop.f32.mrf.mxu0
      %v2043 = vadd.f32 %v1994, %v2042
      %v2044 = vpop.f32.mrf.mxu0
      %v2045 = vpop.f32.mrf.mxu0
      %v2046 = vadd.f32 %v1997, %v2045
      %v2047 = vpop.f32.mrf.mxu0
      %2048 = vmatprep.mubr.bf16.mxu0 %v1902
      %2049 = vmatmul.mubr.bf16.gmra.mxu0 %v1901
      %v2050 = vpop.f32.mrf.mxu0
      %v2051 = vadd.f32 %v2002, %v2050
      %v2052 = vpop.f32.mrf.mxu0
      %v2053 = vpop.f32.mrf.mxu0
      %v2054 = vadd.f32 %v2005, %v2053
      %v2055 = vpop.f32.mrf.mxu0
      %2056 = vdwg.mxu0
      %2057 = vmatprep.subr.bf16.mxu0 0
      %2058 = vmatpush1.bf16.msra.mxu0 0
      %2059 = vmatprep.subr.bf16.mxu0 0
      %2060 = vmatpush1.bf16.msra.mxu0 0
      %2061 = vmatprep.subr.bf16.mxu0 0
      %2062 = vmatpush1.bf16.msra.mxu0 %v721
      %2063 = vmatprep.subr.bf16.mxu0 0
      %2064 = vmatpush1.bf16.msra.mxu0 %v720
      %2065 = vmatprep.subr.bf16.mxu0 0
      %2066 = vmatpush1.bf16.msra.mxu0 %v719
      %2067 = vmatprep.subr.bf16.mxu0 0
      %2068 = vmatpush1.bf16.msra.mxu0 %v718
      %2069 = vmatprep.subr.bf16.mxu0 0
      %2070 = vmatpush1.bf16.msra.mxu0 %v717
      %2071 = vmatprep.subr.bf16.mxu0 0
      %2072 = vmatpush1.bf16.msra.mxu0 %v716
      %2073 = vmatprep.subr.bf16.mxu0 0
      %2074 = vmatpush2.bf16.msra.mxu0 0
      %2075 = vmatprep.subr.bf16.mxu0 0
      %2076 = vmatpush2.bf16.msra.mxu0 0
      %2077 = vmatprep.subr.bf16.mxu0 0
      %2078 = vmatpush2.bf16.msra.mxu0 0
      %2079 = vmatprep.subr.bf16.mxu0 0
      %2080 = vmatpush2.bf16.msra.mxu0 0
      %2081 = vmatprep.subr.bf16.mxu0 0
      %2082 = vmatpush2.bf16.msra.mxu0 0
      %2083 = vmatprep.subr.bf16.mxu0 0
      %2084 = vmatpush2.bf16.msra.mxu0 0
      %2085 = vmatprep.subr.bf16.mxu0 0
      %2086 = vmatpush2.bf16.msra.mxu0 0
      %2087 = vmatprep.subr.bf16.mxu0 0
      %2088 = vmatpush2.bf16.msra.mxu0 0
      %2089 = vmatprep.mubr.bf16.mxu0 0
      %2090 = vmatmul.mubr.bf16.gmra.mxu0 %v1905
      %v2091 = vpop.f32.mrf.mxu0
      %v2092 = vadd.f32 %v2043, %v2091
      %v2093 = vpop.f32.mrf.mxu0
      %v2094 = vpop.f32.mrf.mxu0
      %v2095 = vadd.f32 %v2046, %v2094
      %v2096 = vpop.f32.mrf.mxu0
      %2097 = vmatprep.mubr.bf16.mxu0 0
      %2098 = vmatmul.mubr.bf16.gmra.mxu0 %v1908
      %v2099 = vpop.f32.mrf.mxu0
      %v2100 = vadd.f32 %v2051, %v2099
      %v2101 = vpop.f32.mrf.mxu0
      %v2102 = vpop.f32.mrf.mxu0
      %v2103 = vadd.f32 %v2054, %v2102
      %v2104 = vpop.f32.mrf.mxu0
      %2105 = vdwg.mxu0
      %v2106 = vmax.f32 %v1729, %v2092
      %v2107 = vmax.f32 %v1730, %v2095
      %v2108 = vmax.f32 %v1731, %v2100
      %v2109 = vmax.f32 %v1732, %v2103
      %v2110 = vld [vmem:[%s2] sm:$0x1]
      %v2112 = vlaneseq
      %v2113 = vshrl.u32 %v2112, 7
      %v2114 = vsub.s32 0, %v2113
      %v2115 = vrot.slane %v2110, %v2114
      %v2117 = vadd.f32 %v2106, %v2115
      %v2118 = vadd.f32 %v2107, %v2115
      %v2119 = vadd.f32 %v2108, %v2115
      %v2120 = vadd.f32 %v2109, %v2115
      %v2121 = vtanh.pop %v2117
      %v2122 = vtanh.pop %v2118
      %v2123 = vtanh.pop %v2119
      %v2124 = vtanh.pop %v2120
      %2125 = vst.msk [vmem:[%s170] sm:$0xff] %vm409, %v2121
      %2126 = vst.msk [vmem:[%s170 + $0x8] sm:$0xff] %vm409, %v2122
      %2127 = vst.msk [vmem:[%s170 + $0x10] sm:$0xff] %vm409, %v2123
      %vm2128 = vcmask 516096
      %2129 = vst.msk [vmem:[%s170 + $0x18] sm:$0x1] %vm2128, %v2124
      %p2130 = scmp.lt.s32.totalorder %s14, 1
      %s2131 = scalar_select %p2130, %s14, 1
      %s2132 = smul.addr %s2131, 4
      %s2133 = smul.addr %s2132, 8
      %s2134 = scalar_lea.vmem %s3, %s2133
      // Predicated region
      $region33: #{self_onn_forward.4} parent=31 // pred_check
        %p2135 = pneg %p100
      $region34: #{self_onn_forward.4} parent=31 // pred_check_branch
        %2137 = sbr.rel (%p2135) target = $region36
      $region35: #{self_onn_forward.4} parent=31 // pred_region
        _
      $region36: #{self_onn_forward.4} parent=31 // pred_fallthru
        _
    $region32: #{self_onn_forward.4} parent=5 // pred_fallthru
      _
    %p2138 = scmp.le.s32.totalorder 2, %s9
    // Predicated region
    $region37: #{self_onn_forward.4} parent=5 // pred_check
      %p2139 = pneg %p2138
    $region38: #{self_onn_forward.4} parent=5 // pred_check_branch
      %2141 = sbr.rel (%p2139) target = $region40
    $region39: #{self_onn_forward.4} parent=5 // pred_region
      %s2142 = ssub.s32 %s9, 2
      // Predicated region
      $region41: #{self_onn_forward.4} parent=39 // pred_check
        %p2143 = pneg %p106
      $region42: #{self_onn_forward.4} parent=39 // pred_check_branch
        %2145 = sbr.rel (%p2143) target = $region44
      $region43: #{self_onn_forward.4} parent=39 // pred_region
        %p2146 = scmp.lt.s32.totalorder %s15, 1
        %s2147 = scalar_select %p2146, %s15, 1
        %s2148 = smul.addr %s2147, 4
        %s2149 = smul.addr %s2148, 8
        %s2150 = scalar_lea.vmem %s3, %s2149
      $region44: #{self_onn_forward.4} parent=39 // pred_fallthru
        _
    $region40: #{self_onn_forward.4} parent=5 // pred_fallthru
      _
  $region6: #{self_onn_forward.4} parent=0 // loop_footer
    %s13 = sadd.s32 1, %s9
  $region7: #{self_onn_forward.4} parent=0 // loop_footer_branch
    %8 = sbr.rel target = $region3
  $region8: #{self_onn_forward.4} parent=0 // loop_exit
    _

// kernel: self_onn_forward.5
$region0: #{self_onn_forward.5}
  #allocation0 [shape = 'u32[]', space=smem, size = 0x4, offset = 0x4, fixed_abs, tag = 'smem constant byte address 0x4 - core index']
  #allocation1 [shape = 'u32[144,128]{1,0:T(1,128)}', space=vmem, size = 0x12000, scoped, tag = 'internal scratch']
  %s0 = inlined_call_operand.vmem [shape: f32[8,1600], index: 0, kind: input, shape index: {}]
  %s1 = inlined_call_operand.vmem [shape: bf16[1600,640], index: 1, kind: input, shape index: {}]
  %s2 = inlined_call_operand.vmem [shape: f32[1,640], index: 2, kind: input, shape index: {}]
  %s3 = inlined_call_operand.vmem [shape: bf16[640,10], index: 3, kind: input, shape index: {}]
  %s4 = inlined_call_operand.vmem [shape: f32[1,10], index: 4, kind: input, shape index: {}]
  %s5 = inlined_call_operand.vmem [shape: f32[8,10], index: 5, kind: output, shape index: {}]
  %s6 = sld [smem:[#allocation0]]
  $region30: #{self_onn_forward.5} parent=0
    _
  %s8 = ssub.s32 1, %s6
  %s9 = scalar_select 0, %s8, %s6
  // Predicated region
  $region2: #{self_onn_forward.5} parent=0 // pred_check
    _
  $region3: #{self_onn_forward.5} parent=0 // pred_check_branch
    %11 = sbr.rel (0) target = $region5
  $region4: #{self_onn_forward.5} parent=0 // pred_region
    _
  $region5: #{self_onn_forward.5} parent=0 // pred_fallthru
    _
  // Predicated region
  $region6: #{self_onn_forward.5} parent=0 // pred_check
    _
  $region7: #{self_onn_forward.5} parent=0 // pred_check_branch
    %13 = sbr.rel (0) target = $region9
  $region8: #{self_onn_forward.5} parent=0 // pred_region
    _
  $region9: #{self_onn_forward.5} parent=0 // pred_fallthru
    _
  // Predicated region
  $region10: #{self_onn_forward.5} parent=0 // pred_check
    _
  $region11: #{self_onn_forward.5} parent=0 // pred_check_branch
    %15 = sbr.rel (0) target = $region13
  $region12: #{self_onn_forward.5} parent=0 // pred_region
    _
  $region13: #{self_onn_forward.5} parent=0 // pred_fallthru
    _
  // Predicated region
  $region14: #{self_onn_forward.5} parent=0 // pred_check
    _
  $region15: #{self_onn_forward.5} parent=0 // pred_check_branch
    %17 = sbr.rel (0) target = $region17
  $region16: #{self_onn_forward.5} parent=0 // pred_region
    _
  $region17: #{self_onn_forward.5} parent=0 // pred_fallthru
    _
  // Predicated region
  $region18: #{self_onn_forward.5} parent=0 // pred_check
    _
  $region19: #{self_onn_forward.5} parent=0 // pred_check_branch
    %19 = sbr.rel (0) target = $region21
  $region20: #{self_onn_forward.5} parent=0 // pred_region
    _
  $region21: #{self_onn_forward.5} parent=0 // pred_fallthru
    _
  %v21 = vld [vmem:[%s0] sm:$0xff]
  %v22 = vld [vmem:[%s0 + $0x8] sm:$0xff]
  %v23 = vld [vmem:[%s0 + $0x10] sm:$0xff]
  %v24 = vld [vmem:[%s0 + $0x18] sm:$0xff]
  %v25 = vld [vmem:[%s0 + $0x20] sm:$0xff]
  %v26 = vld [vmem:[%s0 + $0x28] sm:$0xff]
  %v27 = vld [vmem:[%s0 + $0x30] sm:$0xff]
  %v28 = vld [vmem:[%s0 + $0x38] sm:$0xff]
  %v29 = vld [vmem:[%s0 + $0x40] sm:$0xff]
  %v30 = vld [vmem:[%s0 + $0x48] sm:$0xff]
  %v31 = vld [vmem:[%s0 + $0x50] sm:$0xff]
  %v32 = vld [vmem:[%s0 + $0x58] sm:$0xff]
  %v33 = vld [vmem:[%s0 + $0x60] sm:$0xff]
  %v34 = vpack.c.bf16 %v21, %v21
  %v35 = vpack.c.bf16 %v22, %v22
  %v36 = vpack.c.bf16 %v23, %v23
  %v37 = vpack.c.bf16 %v24, %v24
  %v38 = vpack.c.bf16 %v25, %v25
  %v39 = vpack.c.bf16 %v26, %v26
  %v40 = vpack.c.bf16 %v27, %v27
  %v41 = vpack.c.bf16 %v28, %v28
  %v42 = vpack.c.bf16 %v29, %v29
  %v43 = vpack.c.bf16 %v30, %v30
  %v44 = vpack.c.bf16 %v31, %v31
  %v45 = vpack.c.bf16 %v32, %v32
  %v46 = vpack.c.bf16 %v33, %v33
  %v47 = vld [vmem:[%s1] sm:$0xff]
  %v48 = vld [vmem:[%s1 + $0x8] sm:$0xff]
  %v49 = vld [vmem:[%s1 + $0x10] sm:$0xf]
  %v50 = vld [vmem:[%s1 + $0x14] sm:$0xff]
  %v51 = vld [vmem:[%s1 + $0x1c] sm:$0xff]
  %v52 = vld [vmem:[%s1 + $0x24] sm:$0xf]
  %v53 = vld [vmem:[%s1 + $0x28] sm:$0xff]
  %v54 = vld [vmem:[%s1 + $0x30] sm:$0xff]
  %v55 = vld [vmem:[%s1 + $0x38] sm:$0xf]
  %v56 = vld [vmem:[%s1 + $0x3c] sm:$0xff]
  %v57 = vld [vmem:[%s1 + $0x44] sm:$0xff]
  %v58 = vld [vmem:[%s1 + $0x4c] sm:$0xf]
  %v59 = vld [vmem:[%s1 + $0x50] sm:$0xff]
  %v60 = vld [vmem:[%s1 + $0x58] sm:$0xff]
  %v61 = vld [vmem:[%s1 + $0x60] sm:$0xf]
  %v62 = vld [vmem:[%s1 + $0x64] sm:$0xff]
  %v63 = vld [vmem:[%s1 + $0x6c] sm:$0xff]
  %v64 = vld [vmem:[%s1 + $0x74] sm:$0xf]
  %v65 = vld [vmem:[%s1 + $0x78] sm:$0xff]
  %v66 = vld [vmem:[%s1 + $0x80] sm:$0xff]
  %v67 = vld [vmem:[%s1 + $0x88] sm:$0xf]
  %v68 = vld [vmem:[%s1 + $0x8c] sm:$0xff]
  %v69 = vld [vmem:[%s1 + $0x94] sm:$0xff]
  %v70 = vld [vmem:[%s1 + $0x9c] sm:$0xf]
  %v71 = vld [vmem:[%s1 + $0xa0] sm:$0xff]
  %v72 = vld [vmem:[%s1 + $0xa8] sm:$0xff]
  %v73 = vld [vmem:[%s1 + $0xb0] sm:$0xf]
  %v74 = vld [vmem:[%s1 + $0xb4] sm:$0xff]
  %v75 = vld [vmem:[%s1 + $0xbc] sm:$0xff]
  %v76 = vld [vmem:[%s1 + $0xc4] sm:$0xf]
  %v77 = vld [vmem:[%s1 + $0xc8] sm:$0xff]
  %v78 = vld [vmem:[%s1 + $0xd0] sm:$0xff]
  %v79 = vld [vmem:[%s1 + $0xd8] sm:$0xf]
  %v80 = vld [vmem:[%s1 + $0xdc] sm:$0xff]
  %v81 = vld [vmem:[%s1 + $0xe4] sm:$0xff]
  %v82 = vld [vmem:[%s1 + $0xec] sm:$0xf]
  %v83 = vld [vmem:[%s1 + $0xf0] sm:$0xff]
  %v84 = vld [vmem:[%s1 + $0xf8] sm:$0xff]
  %v85 = vld [vmem:[%s1 + $0x100] sm:$0xf]
  %v86 = vld [vmem:[%s1 + $0x104] sm:$0xff]
  %v87 = vld [vmem:[%s1 + $0x10c] sm:$0xff]
  %v88 = vld [vmem:[%s1 + $0x114] sm:$0xf]
  %v89 = vld [vmem:[%s1 + $0x118] sm:$0xff]
  %v90 = vld [vmem:[%s1 + $0x120] sm:$0xff]
  %v91 = vld [vmem:[%s1 + $0x128] sm:$0xf]
  %v92 = vld [vmem:[%s1 + $0x12c] sm:$0xff]
  %v93 = vld [vmem:[%s1 + $0x134] sm:$0xff]
  %v94 = vld [vmem:[%s1 + $0x13c] sm:$0xf]
  %v95 = vld [vmem:[%s1 + $0x140] sm:$0xff]
  %v96 = vld [vmem:[%s1 + $0x148] sm:$0xff]
  %v97 = vld [vmem:[%s1 + $0x150] sm:$0xf]
  %v98 = vld [vmem:[%s1 + $0x154] sm:$0xff]
  %v99 = vld [vmem:[%s1 + $0x15c] sm:$0xff]
  %v100 = vld [vmem:[%s1 + $0x164] sm:$0xf]
  %v101 = vld [vmem:[%s1 + $0x168] sm:$0xff]
  %v102 = vld [vmem:[%s1 + $0x170] sm:$0xff]
  %v103 = vld [vmem:[%s1 + $0x178] sm:$0xf]
  %v104 = vld [vmem:[%s1 + $0x17c] sm:$0xff]
  %v105 = vld [vmem:[%s1 + $0x184] sm:$0xff]
  %v106 = vld [vmem:[%s1 + $0x18c] sm:$0xf]
  %v107 = vld [vmem:[%s1 + $0x190] sm:$0xff]
  %v108 = vld [vmem:[%s1 + $0x198] sm:$0xff]
  %v109 = vld [vmem:[%s1 + $0x1a0] sm:$0xf]
  %v110 = vld [vmem:[%s1 + $0x1a4] sm:$0xff]
  %v111 = vld [vmem:[%s1 + $0x1ac] sm:$0xff]
  %v112 = vld [vmem:[%s1 + $0x1b4] sm:$0xf]
  %v113 = vld [vmem:[%s1 + $0x1b8] sm:$0xff]
  %v114 = vld [vmem:[%s1 + $0x1c0] sm:$0xff]
  %v115 = vld [vmem:[%s1 + $0x1c8] sm:$0xf]
  %v116 = vld [vmem:[%s1 + $0x1cc] sm:$0xff]
  %v117 = vld [vmem:[%s1 + $0x1d4] sm:$0xff]
  %v118 = vld [vmem:[%s1 + $0x1dc] sm:$0xf]
  %v119 = vld [vmem:[%s1 + $0x1e0] sm:$0xff]
  %v120 = vld [vmem:[%s1 + $0x1e8] sm:$0xff]
  %v121 = vld [vmem:[%s1 + $0x1f0] sm:$0xf]
  %v122 = vld [vmem:[%s1 + $0x1f4] sm:$0xff]
  %v123 = vld [vmem:[%s1 + $0x1fc] sm:$0xff]
  %v124 = vld [vmem:[%s1 + $0x204] sm:$0xf]
  %v125 = vld [vmem:[%s1 + $0x208] sm:$0xff]
  %v126 = vld [vmem:[%s1 + $0x210] sm:$0xff]
  %v127 = vld [vmem:[%s1 + $0x218] sm:$0xf]
  %v128 = vld [vmem:[%s1 + $0x21c] sm:$0xff]
  %v129 = vld [vmem:[%s1 + $0x224] sm:$0xff]
  %v130 = vld [vmem:[%s1 + $0x22c] sm:$0xf]
  %v131 = vld [vmem:[%s1 + $0x230] sm:$0xff]
  %v132 = vld [vmem:[%s1 + $0x238] sm:$0xff]
  %v133 = vld [vmem:[%s1 + $0x240] sm:$0xf]
  %v134 = vld [vmem:[%s1 + $0x244] sm:$0xff]
  %v135 = vld [vmem:[%s1 + $0x24c] sm:$0xff]
  %v136 = vld [vmem:[%s1 + $0x254] sm:$0xf]
  %v137 = vld [vmem:[%s1 + $0x258] sm:$0xff]
  %v138 = vld [vmem:[%s1 + $0x260] sm:$0xff]
  %v139 = vld [vmem:[%s1 + $0x268] sm:$0xf]
  %v140 = vld [vmem:[%s1 + $0x26c] sm:$0xff]
  %v141 = vld [vmem:[%s1 + $0x274] sm:$0xff]
  %v142 = vld [vmem:[%s1 + $0x27c] sm:$0xf]
  %v143 = vld [vmem:[%s1 + $0x280] sm:$0xff]
  %v144 = vld [vmem:[%s1 + $0x288] sm:$0xff]
  %v145 = vld [vmem:[%s1 + $0x290] sm:$0xf]
  %v146 = vld [vmem:[%s1 + $0x294] sm:$0xff]
  %v147 = vld [vmem:[%s1 + $0x29c] sm:$0xff]
  %v148 = vld [vmem:[%s1 + $0x2a4] sm:$0xf]
  %v149 = vld [vmem:[%s1 + $0x2a8] sm:$0xff]
  %v150 = vld [vmem:[%s1 + $0x2b0] sm:$0xff]
  %v151 = vld [vmem:[%s1 + $0x2b8] sm:$0xf]
  %v152 = vld [vmem:[%s1 + $0x2bc] sm:$0xff]
  %v153 = vld [vmem:[%s1 + $0x2c4] sm:$0xff]
  %v154 = vld [vmem:[%s1 + $0x2cc] sm:$0xf]
  %v155 = vld [vmem:[%s1 + $0x2d0] sm:$0xff]
  %v156 = vld [vmem:[%s1 + $0x2d8] sm:$0xff]
  %v157 = vld [vmem:[%s1 + $0x2e0] sm:$0xf]
  %v158 = vld [vmem:[%s1 + $0x2e4] sm:$0xff]
  %v159 = vld [vmem:[%s1 + $0x2ec] sm:$0xff]
  %v160 = vld [vmem:[%s1 + $0x2f4] sm:$0xf]
  %v161 = vld [vmem:[%s1 + $0x2f8] sm:$0xff]
  %v162 = vld [vmem:[%s1 + $0x300] sm:$0xff]
  %v163 = vld [vmem:[%s1 + $0x308] sm:$0xf]
  %v164 = vld [vmem:[%s1 + $0x30c] sm:$0xff]
  %v165 = vld [vmem:[%s1 + $0x314] sm:$0xff]
  %v166 = vld [vmem:[%s1 + $0x31c] sm:$0xf]
  %v167 = vld [vmem:[%s1 + $0x320] sm:$0xff]
  %v168 = vld [vmem:[%s1 + $0x328] sm:$0xff]
  %v169 = vld [vmem:[%s1 + $0x330] sm:$0xf]
  %v170 = vld [vmem:[%s1 + $0x334] sm:$0xff]
  %v171 = vld [vmem:[%s1 + $0x33c] sm:$0xff]
  %v172 = vld [vmem:[%s1 + $0x344] sm:$0xf]
  %v173 = vld [vmem:[%s1 + $0x348] sm:$0xff]
  %v174 = vld [vmem:[%s1 + $0x350] sm:$0xff]
  %v175 = vld [vmem:[%s1 + $0x358] sm:$0xf]
  %v176 = vld [vmem:[%s1 + $0x35c] sm:$0xff]
  %v177 = vld [vmem:[%s1 + $0x364] sm:$0xff]
  %v178 = vld [vmem:[%s1 + $0x36c] sm:$0xf]
  %v179 = vld [vmem:[%s1 + $0x370] sm:$0xff]
  %v180 = vld [vmem:[%s1 + $0x378] sm:$0xff]
  %v181 = vld [vmem:[%s1 + $0x380] sm:$0xf]
  %v182 = vld [vmem:[%s1 + $0x384] sm:$0xff]
  %v183 = vld [vmem:[%s1 + $0x38c] sm:$0xff]
  %v184 = vld [vmem:[%s1 + $0x394] sm:$0xf]
  %v185 = vld [vmem:[%s1 + $0x398] sm:$0xff]
  %v186 = vld [vmem:[%s1 + $0x3a0] sm:$0xff]
  %v187 = vld [vmem:[%s1 + $0x3a8] sm:$0xf]
  %v188 = vld [vmem:[%s1 + $0x3ac] sm:$0xff]
  %v189 = vld [vmem:[%s1 + $0x3b4] sm:$0xff]
  %v190 = vld [vmem:[%s1 + $0x3bc] sm:$0xf]
  %v191 = vld [vmem:[%s1 + $0x3c0] sm:$0xff]
  %v192 = vld [vmem:[%s1 + $0x3c8] sm:$0xff]
  %v193 = vld [vmem:[%s1 + $0x3d0] sm:$0xf]
  %v194 = vld [vmem:[%s1 + $0x3d4] sm:$0xff]
  %v195 = vld [vmem:[%s1 + $0x3dc] sm:$0xff]
  %v196 = vld [vmem:[%s1 + $0x3e4] sm:$0xf]
  %v197 = vld [vmem:[%s1 + $0x3e8] sm:$0xff]
  %v198 = vld [vmem:[%s1 + $0x3f0] sm:$0xff]
  %v199 = vld [vmem:[%s1 + $0x3f8] sm:$0xf]
  %v200 = vld [vmem:[%s1 + $0x3fc] sm:$0xff]
  %v201 = vld [vmem:[%s1 + $0x404] sm:$0xff]
  %v202 = vld [vmem:[%s1 + $0x40c] sm:$0xf]
  %v203 = vld [vmem:[%s1 + $0x410] sm:$0xff]
  %v204 = vld [vmem:[%s1 + $0x418] sm:$0xff]
  %v205 = vld [vmem:[%s1 + $0x420] sm:$0xf]
  %v206 = vld [vmem:[%s1 + $0x424] sm:$0xff]
  %v207 = vld [vmem:[%s1 + $0x42c] sm:$0xff]
  %v208 = vld [vmem:[%s1 + $0x434] sm:$0xf]
  %v209 = vld [vmem:[%s1 + $0x438] sm:$0xff]
  %v210 = vld [vmem:[%s1 + $0x440] sm:$0xff]
  %v211 = vld [vmem:[%s1 + $0x448] sm:$0xf]
  %v212 = vld [vmem:[%s1 + $0x44c] sm:$0xff]
  %v213 = vld [vmem:[%s1 + $0x454] sm:$0xff]
  %v214 = vld [vmem:[%s1 + $0x45c] sm:$0xf]
  %v215 = vld [vmem:[%s1 + $0x460] sm:$0xff]
  %v216 = vld [vmem:[%s1 + $0x468] sm:$0xff]
  %v217 = vld [vmem:[%s1 + $0x470] sm:$0xf]
  %v218 = vld [vmem:[%s1 + $0x474] sm:$0xff]
  %v219 = vld [vmem:[%s1 + $0x47c] sm:$0xff]
  %v220 = vld [vmem:[%s1 + $0x484] sm:$0xf]
  %v221 = vld [vmem:[%s1 + $0x488] sm:$0xff]
  %v222 = vld [vmem:[%s1 + $0x490] sm:$0xff]
  %v223 = vld [vmem:[%s1 + $0x498] sm:$0xf]
  %v224 = vld [vmem:[%s1 + $0x49c] sm:$0xff]
  %v225 = vld [vmem:[%s1 + $0x4a4] sm:$0xff]
  %v226 = vld [vmem:[%s1 + $0x4ac] sm:$0xf]
  %v227 = vld [vmem:[%s1 + $0x4b0] sm:$0xff]
  %v228 = vld [vmem:[%s1 + $0x4b8] sm:$0xff]
  %v229 = vld [vmem:[%s1 + $0x4c0] sm:$0xf]
  %v230 = vld [vmem:[%s1 + $0x4c4] sm:$0xff]
  %v231 = vld [vmem:[%s1 + $0x4cc] sm:$0xff]
  %v232 = vld [vmem:[%s1 + $0x4d4] sm:$0xf]
  %v233 = vld [vmem:[%s1 + $0x4d8] sm:$0xff]
  %v234 = vld [vmem:[%s1 + $0x4e0] sm:$0xff]
  %v235 = vld [vmem:[%s1 + $0x4e8] sm:$0xf]
  %v236 = vld [vmem:[%s1 + $0x4ec] sm:$0xff]
  %v237 = vld [vmem:[%s1 + $0x4f4] sm:$0xff]
  %v238 = vld [vmem:[%s1 + $0x4fc] sm:$0xf]
  %v239 = vld [vmem:[%s1 + $0x500] sm:$0xff]
  %v240 = vld [vmem:[%s1 + $0x508] sm:$0xff]
  %v241 = vld [vmem:[%s1 + $0x510] sm:$0xf]
  %v242 = vld [vmem:[%s1 + $0x514] sm:$0xff]
  %v243 = vld [vmem:[%s1 + $0x51c] sm:$0xff]
  %v244 = vld [vmem:[%s1 + $0x524] sm:$0xf]
  %v245 = vld [vmem:[%s1 + $0x528] sm:$0xff]
  %v246 = vld [vmem:[%s1 + $0x530] sm:$0xff]
  %v247 = vld [vmem:[%s1 + $0x538] sm:$0xf]
  %v248 = vld [vmem:[%s1 + $0x53c] sm:$0xff]
  %v249 = vld [vmem:[%s1 + $0x544] sm:$0xff]
  %v250 = vld [vmem:[%s1 + $0x54c] sm:$0xf]
  %v251 = vld [vmem:[%s1 + $0x550] sm:$0xff]
  %v252 = vld [vmem:[%s1 + $0x558] sm:$0xff]
  %v253 = vld [vmem:[%s1 + $0x560] sm:$0xf]
  %v254 = vld [vmem:[%s1 + $0x564] sm:$0xff]
  %v255 = vld [vmem:[%s1 + $0x56c] sm:$0xff]
  %v256 = vld [vmem:[%s1 + $0x574] sm:$0xf]
  %v257 = vld [vmem:[%s1 + $0x578] sm:$0xff]
  %v258 = vld [vmem:[%s1 + $0x580] sm:$0xff]
  %v259 = vld [vmem:[%s1 + $0x588] sm:$0xf]
  %v260 = vld [vmem:[%s1 + $0x58c] sm:$0xff]
  %v261 = vld [vmem:[%s1 + $0x594] sm:$0xff]
  %v262 = vld [vmem:[%s1 + $0x59c] sm:$0xf]
  %v263 = vld [vmem:[%s1 + $0x5a0] sm:$0xff]
  %v264 = vld [vmem:[%s1 + $0x5a8] sm:$0xff]
  %v265 = vld [vmem:[%s1 + $0x5b0] sm:$0xf]
  %v266 = vld [vmem:[%s1 + $0x5b4] sm:$0xff]
  %v267 = vld [vmem:[%s1 + $0x5bc] sm:$0xff]
  %v268 = vld [vmem:[%s1 + $0x5c4] sm:$0xf]
  %v269 = vld [vmem:[%s1 + $0x5c8] sm:$0xff]
  %v270 = vld [vmem:[%s1 + $0x5d0] sm:$0xff]
  %v271 = vld [vmem:[%s1 + $0x5d8] sm:$0xf]
  %v272 = vld [vmem:[%s1 + $0x5dc] sm:$0xff]
  %v273 = vld [vmem:[%s1 + $0x5e4] sm:$0xff]
  %v274 = vld [vmem:[%s1 + $0x5ec] sm:$0xf]
  %v275 = vld [vmem:[%s1 + $0x5f0] sm:$0xff]
  %v276 = vld [vmem:[%s1 + $0x5f8] sm:$0xff]
  %v277 = vld [vmem:[%s1 + $0x600] sm:$0xf]
  %v278 = vld [vmem:[%s1 + $0x604] sm:$0xff]
  %v279 = vld [vmem:[%s1 + $0x60c] sm:$0xff]
  %v280 = vld [vmem:[%s1 + $0x614] sm:$0xf]
  %v281 = vld [vmem:[%s1 + $0x618] sm:$0xff]
  %v282 = vld [vmem:[%s1 + $0x620] sm:$0xff]
  %v283 = vld [vmem:[%s1 + $0x628] sm:$0xf]
  %v284 = vld [vmem:[%s1 + $0x62c] sm:$0xff]
  %v285 = vld [vmem:[%s1 + $0x634] sm:$0xff]
  %v286 = vld [vmem:[%s1 + $0x63c] sm:$0xf]
  %v287 = vld [vmem:[%s1 + $0x640] sm:$0xff]
  %v288 = vld [vmem:[%s1 + $0x648] sm:$0xff]
  %v289 = vld [vmem:[%s1 + $0x650] sm:$0xf]
  %v290 = vld [vmem:[%s1 + $0x654] sm:$0xff]
  %v291 = vld [vmem:[%s1 + $0x65c] sm:$0xff]
  %v292 = vld [vmem:[%s1 + $0x664] sm:$0xf]
  %v293 = vld [vmem:[%s1 + $0x668] sm:$0xff]
  %v294 = vld [vmem:[%s1 + $0x670] sm:$0xff]
  %v295 = vld [vmem:[%s1 + $0x678] sm:$0xf]
  %v296 = vld [vmem:[%s1 + $0x67c] sm:$0xff]
  %v297 = vld [vmem:[%s1 + $0x684] sm:$0xff]
  %v298 = vld [vmem:[%s1 + $0x68c] sm:$0xf]
  %v299 = vld [vmem:[%s1 + $0x690] sm:$0xff]
  %v300 = vld [vmem:[%s1 + $0x698] sm:$0xff]
  %v301 = vld [vmem:[%s1 + $0x6a0] sm:$0xf]
  %v302 = vld [vmem:[%s1 + $0x6a4] sm:$0xff]
  %v303 = vld [vmem:[%s1 + $0x6ac] sm:$0xff]
  %v304 = vld [vmem:[%s1 + $0x6b4] sm:$0xf]
  %v305 = vld [vmem:[%s1 + $0x6b8] sm:$0xff]
  %v306 = vld [vmem:[%s1 + $0x6c0] sm:$0xff]
  %v307 = vld [vmem:[%s1 + $0x6c8] sm:$0xf]
  %v308 = vld [vmem:[%s1 + $0x6cc] sm:$0xff]
  %v309 = vld [vmem:[%s1 + $0x6d4] sm:$0xff]
  %v310 = vld [vmem:[%s1 + $0x6dc] sm:$0xf]
  %v311 = vld [vmem:[%s1 + $0x6e0] sm:$0xff]
  %v312 = vld [vmem:[%s1 + $0x6e8] sm:$0xff]
  %v313 = vld [vmem:[%s1 + $0x6f0] sm:$0xf]
  %v314 = vld [vmem:[%s1 + $0x6f4] sm:$0xff]
  %v315 = vld [vmem:[%s1 + $0x6fc] sm:$0xff]
  %v316 = vld [vmem:[%s1 + $0x704] sm:$0xf]
  %v317 = vld [vmem:[%s1 + $0x708] sm:$0xff]
  %v318 = vld [vmem:[%s1 + $0x710] sm:$0xff]
  %v319 = vld [vmem:[%s1 + $0x718] sm:$0xf]
  %v320 = vld [vmem:[%s1 + $0x71c] sm:$0xff]
  %v321 = vld [vmem:[%s1 + $0x724] sm:$0xff]
  %v322 = vld [vmem:[%s1 + $0x72c] sm:$0xf]
  %v323 = vld [vmem:[%s1 + $0x730] sm:$0xff]
  %v324 = vld [vmem:[%s1 + $0x738] sm:$0xff]
  %v325 = vld [vmem:[%s1 + $0x740] sm:$0xf]
  %v326 = vld [vmem:[%s1 + $0x744] sm:$0xff]
  %v327 = vld [vmem:[%s1 + $0x74c] sm:$0xff]
  %v328 = vld [vmem:[%s1 + $0x754] sm:$0xf]
  %v329 = vld [vmem:[%s1 + $0x758] sm:$0xff]
  %v330 = vld [vmem:[%s1 + $0x760] sm:$0xff]
  %v331 = vld [vmem:[%s1 + $0x768] sm:$0xf]
  %v332 = vld [vmem:[%s1 + $0x76c] sm:$0xff]
  %v333 = vld [vmem:[%s1 + $0x774] sm:$0xff]
  %v334 = vld [vmem:[%s1 + $0x77c] sm:$0xf]
  %v335 = vld [vmem:[%s1 + $0x780] sm:$0xff]
  %v336 = vld [vmem:[%s1 + $0x788] sm:$0xff]
  %v337 = vld [vmem:[%s1 + $0x790] sm:$0xf]
  %v338 = vld [vmem:[%s1 + $0x794] sm:$0xff]
  %v339 = vld [vmem:[%s1 + $0x79c] sm:$0xff]
  %v340 = vld [vmem:[%s1 + $0x7a4] sm:$0xf]
  %v341 = vld [vmem:[%s1 + $0x7a8] sm:$0xff]
  %v342 = vld [vmem:[%s1 + $0x7b0] sm:$0xff]
  %v343 = vld [vmem:[%s1 + $0x7b8] sm:$0xf]
  %v344 = vld [vmem:[%s1 + $0x7bc] sm:$0xff]
  %v345 = vld [vmem:[%s1 + $0x7c4] sm:$0xff]
  %v346 = vld [vmem:[%s1 + $0x7cc] sm:$0xf]
  %v347 = vld [vmem:[%s1 + $0x7d0] sm:$0xff]
  %v348 = vld [vmem:[%s1 + $0x7d8] sm:$0xff]
  %v349 = vld [vmem:[%s1 + $0x7e0] sm:$0xf]
  %v350 = vld [vmem:[%s1 + $0x7e4] sm:$0xff]
  %v351 = vld [vmem:[%s1 + $0x7ec] sm:$0xff]
  %v352 = vld [vmem:[%s1 + $0x7f4] sm:$0xf]
  %v353 = vld [vmem:[%s1 + $0x7f8] sm:$0xff]
  %v354 = vld [vmem:[%s1 + $0x800] sm:$0xff]
  %v355 = vld [vmem:[%s1 + $0x808] sm:$0xf]
  %v356 = vld [vmem:[%s1 + $0x80c] sm:$0xff]
  %v357 = vld [vmem:[%s1 + $0x814] sm:$0xff]
  %v358 = vld [vmem:[%s1 + $0x81c] sm:$0xf]
  %v359 = vld [vmem:[%s1 + $0x820] sm:$0xff]
  %v360 = vld [vmem:[%s1 + $0x828] sm:$0xff]
  %v361 = vld [vmem:[%s1 + $0x830] sm:$0xf]
  %v362 = vld [vmem:[%s1 + $0x834] sm:$0xff]
  %v363 = vld [vmem:[%s1 + $0x83c] sm:$0xff]
  %v364 = vld [vmem:[%s1 + $0x844] sm:$0xf]
  %v365 = vld [vmem:[%s1 + $0x848] sm:$0xff]
  %v366 = vld [vmem:[%s1 + $0x850] sm:$0xff]
  %v367 = vld [vmem:[%s1 + $0x858] sm:$0xf]
  %v368 = vld [vmem:[%s1 + $0x85c] sm:$0xff]
  %v369 = vld [vmem:[%s1 + $0x864] sm:$0xff]
  %v370 = vld [vmem:[%s1 + $0x86c] sm:$0xf]
  %v371 = vld [vmem:[%s1 + $0x870] sm:$0xff]
  %v372 = vld [vmem:[%s1 + $0x878] sm:$0xff]
  %v373 = vld [vmem:[%s1 + $0x880] sm:$0xf]
  %v374 = vld [vmem:[%s1 + $0x884] sm:$0xff]
  %v375 = vld [vmem:[%s1 + $0x88c] sm:$0xff]
  %v376 = vld [vmem:[%s1 + $0x894] sm:$0xf]
  %v377 = vld [vmem:[%s1 + $0x898] sm:$0xff]
  %v378 = vld [vmem:[%s1 + $0x8a0] sm:$0xff]
  %v379 = vld [vmem:[%s1 + $0x8a8] sm:$0xf]
  %v380 = vld [vmem:[%s1 + $0x8ac] sm:$0xff]
  %v381 = vld [vmem:[%s1 + $0x8b4] sm:$0xff]
  %v382 = vld [vmem:[%s1 + $0x8bc] sm:$0xf]
  %v383 = vld [vmem:[%s1 + $0x8c0] sm:$0xff]
  %v384 = vld [vmem:[%s1 + $0x8c8] sm:$0xff]
  %v385 = vld [vmem:[%s1 + $0x8d0] sm:$0xf]
  %v386 = vld [vmem:[%s1 + $0x8d4] sm:$0xff]
  %v387 = vld [vmem:[%s1 + $0x8dc] sm:$0xff]
  %v388 = vld [vmem:[%s1 + $0x8e4] sm:$0xf]
  %v389 = vld [vmem:[%s1 + $0x8e8] sm:$0xff]
  %v390 = vld [vmem:[%s1 + $0x8f0] sm:$0xff]
  %v391 = vld [vmem:[%s1 + $0x8f8] sm:$0xf]
  %v392 = vld [vmem:[%s1 + $0x8fc] sm:$0xff]
  %v393 = vld [vmem:[%s1 + $0x904] sm:$0xff]
  %v394 = vld [vmem:[%s1 + $0x90c] sm:$0xf]
  %v395 = vld [vmem:[%s1 + $0x910] sm:$0xff]
  %v396 = vld [vmem:[%s1 + $0x918] sm:$0xff]
  %v397 = vld [vmem:[%s1 + $0x920] sm:$0xf]
  %v398 = vld [vmem:[%s1 + $0x924] sm:$0xff]
  %v399 = vld [vmem:[%s1 + $0x92c] sm:$0xff]
  %v400 = vld [vmem:[%s1 + $0x934] sm:$0xf]
  %v401 = vld [vmem:[%s1 + $0x938] sm:$0xff]
  %v402 = vld [vmem:[%s1 + $0x940] sm:$0xff]
  %v403 = vld [vmem:[%s1 + $0x948] sm:$0xf]
  %v404 = vld [vmem:[%s1 + $0x94c] sm:$0xff]
  %v405 = vld [vmem:[%s1 + $0x954] sm:$0xff]
  %v406 = vld [vmem:[%s1 + $0x95c] sm:$0xf]
  %v407 = vld [vmem:[%s1 + $0x960] sm:$0xff]
  %v408 = vld [vmem:[%s1 + $0x968] sm:$0xff]
  %v409 = vld [vmem:[%s1 + $0x970] sm:$0xf]
  %v410 = vld [vmem:[%s1 + $0x974] sm:$0xff]
  %v411 = vld [vmem:[%s1 + $0x97c] sm:$0xff]
  %v412 = vld [vmem:[%s1 + $0x984] sm:$0xf]
  %v413 = vld [vmem:[%s1 + $0x988] sm:$0xff]
  %v414 = vld [vmem:[%s1 + $0x990] sm:$0xff]
  %v415 = vld [vmem:[%s1 + $0x998] sm:$0xf]
  %v416 = vld [vmem:[%s1 + $0x99c] sm:$0xff]
  %v417 = vld [vmem:[%s1 + $0x9a4] sm:$0xff]
  %v418 = vld [vmem:[%s1 + $0x9ac] sm:$0xf]
  %v419 = vld [vmem:[%s1 + $0x9b0] sm:$0xff]
  %v420 = vld [vmem:[%s1 + $0x9b8] sm:$0xff]
  %v421 = vld [vmem:[%s1 + $0x9c0] sm:$0xf]
  %v422 = vld [vmem:[%s1 + $0x9c4] sm:$0xff]
  %v423 = vld [vmem:[%s1 + $0x9cc] sm:$0xff]
  %v424 = vld [vmem:[%s1 + $0x9d4] sm:$0xf]
  %v425 = vld [vmem:[%s1 + $0x9d8] sm:$0xff]
  %v426 = vld [vmem:[%s1 + $0x9e0] sm:$0xff]
  %v427 = vld [vmem:[%s1 + $0x9e8] sm:$0xf]
  %v428 = vld [vmem:[%s1 + $0x9ec] sm:$0xff]
  %v429 = vld [vmem:[%s1 + $0x9f4] sm:$0xff]
  %v430 = vld [vmem:[%s1 + $0x9fc] sm:$0xf]
  %v431 = vld [vmem:[%s1 + $0xa00] sm:$0xff]
  %v432 = vld [vmem:[%s1 + $0xa08] sm:$0xff]
  %v433 = vld [vmem:[%s1 + $0xa10] sm:$0xf]
  %v434 = vld [vmem:[%s1 + $0xa14] sm:$0xff]
  %v435 = vld [vmem:[%s1 + $0xa1c] sm:$0xff]
  %v436 = vld [vmem:[%s1 + $0xa24] sm:$0xf]
  %v437 = vld [vmem:[%s1 + $0xa28] sm:$0xff]
  %v438 = vld [vmem:[%s1 + $0xa30] sm:$0xff]
  %v439 = vld [vmem:[%s1 + $0xa38] sm:$0xf]
  %v440 = vld [vmem:[%s1 + $0xa3c] sm:$0xff]
  %v441 = vld [vmem:[%s1 + $0xa44] sm:$0xff]
  %v442 = vld [vmem:[%s1 + $0xa4c] sm:$0xf]
  %v443 = vld [vmem:[%s1 + $0xa50] sm:$0xff]
  %v444 = vld [vmem:[%s1 + $0xa58] sm:$0xff]
  %v445 = vld [vmem:[%s1 + $0xa60] sm:$0xf]
  %v446 = vld [vmem:[%s1 + $0xa64] sm:$0xff]
  %v447 = vld [vmem:[%s1 + $0xa6c] sm:$0xff]
  %v448 = vld [vmem:[%s1 + $0xa74] sm:$0xf]
  %v449 = vld [vmem:[%s1 + $0xa78] sm:$0xff]
  %v450 = vld [vmem:[%s1 + $0xa80] sm:$0xff]
  %v451 = vld [vmem:[%s1 + $0xa88] sm:$0xf]
  %v452 = vld [vmem:[%s1 + $0xa8c] sm:$0xff]
  %v453 = vld [vmem:[%s1 + $0xa94] sm:$0xff]
  %v454 = vld [vmem:[%s1 + $0xa9c] sm:$0xf]
  %v455 = vld [vmem:[%s1 + $0xaa0] sm:$0xff]
  %v456 = vld [vmem:[%s1 + $0xaa8] sm:$0xff]
  %v457 = vld [vmem:[%s1 + $0xab0] sm:$0xf]
  %v458 = vld [vmem:[%s1 + $0xab4] sm:$0xff]
  %v459 = vld [vmem:[%s1 + $0xabc] sm:$0xff]
  %v460 = vld [vmem:[%s1 + $0xac4] sm:$0xf]
  %v461 = vld [vmem:[%s1 + $0xac8] sm:$0xff]
  %v462 = vld [vmem:[%s1 + $0xad0] sm:$0xff]
  %v463 = vld [vmem:[%s1 + $0xad8] sm:$0xf]
  %v464 = vld [vmem:[%s1 + $0xadc] sm:$0xff]
  %v465 = vld [vmem:[%s1 + $0xae4] sm:$0xff]
  %v466 = vld [vmem:[%s1 + $0xaec] sm:$0xf]
  %v467 = vld [vmem:[%s1 + $0xaf0] sm:$0xff]
  %v468 = vld [vmem:[%s1 + $0xaf8] sm:$0xff]
  %v469 = vld [vmem:[%s1 + $0xb00] sm:$0xf]
  %v470 = vld [vmem:[%s1 + $0xb04] sm:$0xff]
  %v471 = vld [vmem:[%s1 + $0xb0c] sm:$0xff]
  %v472 = vld [vmem:[%s1 + $0xb14] sm:$0xf]
  %v473 = vld [vmem:[%s1 + $0xb18] sm:$0xff]
  %v474 = vld [vmem:[%s1 + $0xb20] sm:$0xff]
  %v475 = vld [vmem:[%s1 + $0xb28] sm:$0xf]
  %v476 = vld [vmem:[%s1 + $0xb2c] sm:$0xff]
  %v477 = vld [vmem:[%s1 + $0xb34] sm:$0xff]
  %v478 = vld [vmem:[%s1 + $0xb3c] sm:$0xf]
  %v479 = vld [vmem:[%s1 + $0xb40] sm:$0xff]
  %v480 = vld [vmem:[%s1 + $0xb48] sm:$0xff]
  %v481 = vld [vmem:[%s1 + $0xb50] sm:$0xf]
  %v482 = vld [vmem:[%s1 + $0xb54] sm:$0xff]
  %v483 = vld [vmem:[%s1 + $0xb5c] sm:$0xff]
  %v484 = vld [vmem:[%s1 + $0xb64] sm:$0xf]
  %v485 = vld [vmem:[%s1 + $0xb68] sm:$0xff]
  %v486 = vld [vmem:[%s1 + $0xb70] sm:$0xff]
  %v487 = vld [vmem:[%s1 + $0xb78] sm:$0xf]
  %v488 = vld [vmem:[%s1 + $0xb7c] sm:$0xff]
  %v489 = vld [vmem:[%s1 + $0xb84] sm:$0xff]
  %v490 = vld [vmem:[%s1 + $0xb8c] sm:$0xf]
  %v491 = vld [vmem:[%s1 + $0xb90] sm:$0xff]
  %v492 = vld [vmem:[%s1 + $0xb98] sm:$0xff]
  %v493 = vld [vmem:[%s1 + $0xba0] sm:$0xf]
  %v494 = vld [vmem:[%s1 + $0xba4] sm:$0xff]
  %v495 = vld [vmem:[%s1 + $0xbac] sm:$0xff]
  %v496 = vld [vmem:[%s1 + $0xbb4] sm:$0xf]
  %v497 = vld [vmem:[%s1 + $0xbb8] sm:$0xff]
  %v498 = vld [vmem:[%s1 + $0xbc0] sm:$0xff]
  %v499 = vld [vmem:[%s1 + $0xbc8] sm:$0xf]
  %v500 = vld [vmem:[%s1 + $0xbcc] sm:$0xff]
  %v501 = vld [vmem:[%s1 + $0xbd4] sm:$0xff]
  %v502 = vld [vmem:[%s1 + $0xbdc] sm:$0xf]
  %v503 = vld [vmem:[%s1 + $0xbe0] sm:$0xff]
  %v504 = vld [vmem:[%s1 + $0xbe8] sm:$0xff]
  %v505 = vld [vmem:[%s1 + $0xbf0] sm:$0xf]
  %v506 = vld [vmem:[%s1 + $0xbf4] sm:$0xff]
  %v507 = vld [vmem:[%s1 + $0xbfc] sm:$0xff]
  %v508 = vld [vmem:[%s1 + $0xc04] sm:$0xf]
  %v509 = vld [vmem:[%s1 + $0xc08] sm:$0xff]
  %v510 = vld [vmem:[%s1 + $0xc10] sm:$0xff]
  %v511 = vld [vmem:[%s1 + $0xc18] sm:$0xf]
  %v512 = vld [vmem:[%s1 + $0xc1c] sm:$0xff]
  %v513 = vld [vmem:[%s1 + $0xc24] sm:$0xff]
  %v514 = vld [vmem:[%s1 + $0xc2c] sm:$0xf]
  %v515 = vld [vmem:[%s1 + $0xc30] sm:$0xff]
  %v516 = vld [vmem:[%s1 + $0xc38] sm:$0xff]
  %v517 = vld [vmem:[%s1 + $0xc40] sm:$0xf]
  %v518 = vld [vmem:[%s1 + $0xc44] sm:$0xff]
  %v519 = vld [vmem:[%s1 + $0xc4c] sm:$0xff]
  %v520 = vld [vmem:[%s1 + $0xc54] sm:$0xf]
  %v521 = vld [vmem:[%s1 + $0xc58] sm:$0xff]
  %v522 = vld [vmem:[%s1 + $0xc60] sm:$0xff]
  %v523 = vld [vmem:[%s1 + $0xc68] sm:$0xf]
  %v524 = vld [vmem:[%s1 + $0xc6c] sm:$0xff]
  %v525 = vld [vmem:[%s1 + $0xc74] sm:$0xff]
  %v526 = vld [vmem:[%s1 + $0xc7c] sm:$0xf]
  %v527 = vld [vmem:[%s1 + $0xc80] sm:$0xff]
  %v528 = vld [vmem:[%s1 + $0xc88] sm:$0xff]
  %v529 = vld [vmem:[%s1 + $0xc90] sm:$0xf]
  %v530 = vld [vmem:[%s1 + $0xc94] sm:$0xff]
  %v531 = vld [vmem:[%s1 + $0xc9c] sm:$0xff]
  %v532 = vld [vmem:[%s1 + $0xca4] sm:$0xf]
  %v533 = vld [vmem:[%s1 + $0xca8] sm:$0xff]
  %v534 = vld [vmem:[%s1 + $0xcb0] sm:$0xff]
  %v535 = vld [vmem:[%s1 + $0xcb8] sm:$0xf]
  %v536 = vld [vmem:[%s1 + $0xcbc] sm:$0xff]
  %v537 = vld [vmem:[%s1 + $0xcc4] sm:$0xff]
  %v538 = vld [vmem:[%s1 + $0xccc] sm:$0xf]
  %v539 = vld [vmem:[%s1 + $0xcd0] sm:$0xff]
  %v540 = vld [vmem:[%s1 + $0xcd8] sm:$0xff]
  %v541 = vld [vmem:[%s1 + $0xce0] sm:$0xf]
  %v542 = vld [vmem:[%s1 + $0xce4] sm:$0xff]
  %v543 = vld [vmem:[%s1 + $0xcec] sm:$0xff]
  %v544 = vld [vmem:[%s1 + $0xcf4] sm:$0xf]
  %v545 = vld [vmem:[%s1 + $0xcf8] sm:$0xff]
  %v546 = vld [vmem:[%s1 + $0xd00] sm:$0xff]
  %v547 = vld [vmem:[%s1 + $0xd08] sm:$0xf]
  %v548 = vld [vmem:[%s1 + $0xd0c] sm:$0xff]
  %v549 = vld [vmem:[%s1 + $0xd14] sm:$0xff]
  %v550 = vld [vmem:[%s1 + $0xd1c] sm:$0xf]
  %v551 = vld [vmem:[%s1 + $0xd20] sm:$0xff]
  %v552 = vld [vmem:[%s1 + $0xd28] sm:$0xff]
  %v553 = vld [vmem:[%s1 + $0xd30] sm:$0xf]
  %v554 = vld [vmem:[%s1 + $0xd34] sm:$0xff]
  %v555 = vld [vmem:[%s1 + $0xd3c] sm:$0xff]
  %v556 = vld [vmem:[%s1 + $0xd44] sm:$0xf]
  %v557 = vld [vmem:[%s1 + $0xd48] sm:$0xff]
  %v558 = vld [vmem:[%s1 + $0xd50] sm:$0xff]
  %v559 = vld [vmem:[%s1 + $0xd58] sm:$0xf]
  %v560 = vld [vmem:[%s1 + $0xd5c] sm:$0xff]
  %v561 = vld [vmem:[%s1 + $0xd64] sm:$0xff]
  %v562 = vld [vmem:[%s1 + $0xd6c] sm:$0xf]
  %v563 = vld [vmem:[%s1 + $0xd70] sm:$0xff]
  %v564 = vld [vmem:[%s1 + $0xd78] sm:$0xff]
  %v565 = vld [vmem:[%s1 + $0xd80] sm:$0xf]
  %v566 = vld [vmem:[%s1 + $0xd84] sm:$0xff]
  %v567 = vld [vmem:[%s1 + $0xd8c] sm:$0xff]
  %v568 = vld [vmem:[%s1 + $0xd94] sm:$0xf]
  %v569 = vld [vmem:[%s1 + $0xd98] sm:$0xff]
  %v570 = vld [vmem:[%s1 + $0xda0] sm:$0xff]
  %v571 = vld [vmem:[%s1 + $0xda8] sm:$0xf]
  %v572 = vld [vmem:[%s1 + $0xdac] sm:$0xff]
  %v573 = vld [vmem:[%s1 + $0xdb4] sm:$0xff]
  %v574 = vld [vmem:[%s1 + $0xdbc] sm:$0xf]
  %v575 = vld [vmem:[%s1 + $0xdc0] sm:$0xff]
  %v576 = vld [vmem:[%s1 + $0xdc8] sm:$0xff]
  %v577 = vld [vmem:[%s1 + $0xdd0] sm:$0xf]
  %v578 = vld [vmem:[%s1 + $0xdd4] sm:$0xff]
  %v579 = vld [vmem:[%s1 + $0xddc] sm:$0xff]
  %v580 = vld [vmem:[%s1 + $0xde4] sm:$0xf]
  %v581 = vld [vmem:[%s1 + $0xde8] sm:$0xff]
  %v582 = vld [vmem:[%s1 + $0xdf0] sm:$0xff]
  %v583 = vld [vmem:[%s1 + $0xdf8] sm:$0xf]
  %v584 = vld [vmem:[%s1 + $0xdfc] sm:$0xff]
  %v585 = vld [vmem:[%s1 + $0xe04] sm:$0xff]
  %v586 = vld [vmem:[%s1 + $0xe0c] sm:$0xf]
  %v587 = vld [vmem:[%s1 + $0xe10] sm:$0xff]
  %v588 = vld [vmem:[%s1 + $0xe18] sm:$0xff]
  %v589 = vld [vmem:[%s1 + $0xe20] sm:$0xf]
  %v590 = vld [vmem:[%s1 + $0xe24] sm:$0xff]
  %v591 = vld [vmem:[%s1 + $0xe2c] sm:$0xff]
  %v592 = vld [vmem:[%s1 + $0xe34] sm:$0xf]
  %v593 = vld [vmem:[%s1 + $0xe38] sm:$0xff]
  %v594 = vld [vmem:[%s1 + $0xe40] sm:$0xff]
  %v595 = vld [vmem:[%s1 + $0xe48] sm:$0xf]
  %v596 = vld [vmem:[%s1 + $0xe4c] sm:$0xff]
  %v597 = vld [vmem:[%s1 + $0xe54] sm:$0xff]
  %v598 = vld [vmem:[%s1 + $0xe5c] sm:$0xf]
  %v599 = vld [vmem:[%s1 + $0xe60] sm:$0xff]
  %v600 = vld [vmem:[%s1 + $0xe68] sm:$0xff]
  %v601 = vld [vmem:[%s1 + $0xe70] sm:$0xf]
  %v602 = vld [vmem:[%s1 + $0xe74] sm:$0xff]
  %v603 = vld [vmem:[%s1 + $0xe7c] sm:$0xff]
  %v604 = vld [vmem:[%s1 + $0xe84] sm:$0xf]
  %v605 = vld [vmem:[%s1 + $0xe88] sm:$0xff]
  %v606 = vld [vmem:[%s1 + $0xe90] sm:$0xff]
  %v607 = vld [vmem:[%s1 + $0xe98] sm:$0xf]
  %v608 = vld [vmem:[%s1 + $0xe9c] sm:$0xff]
  %v609 = vld [vmem:[%s1 + $0xea4] sm:$0xff]
  %v610 = vld [vmem:[%s1 + $0xeac] sm:$0xf]
  %v611 = vld [vmem:[%s1 + $0xeb0] sm:$0xff]
  %v612 = vld [vmem:[%s1 + $0xeb8] sm:$0xff]
  %v613 = vld [vmem:[%s1 + $0xec0] sm:$0xf]
  %v614 = vld [vmem:[%s1 + $0xec4] sm:$0xff]
  %v615 = vld [vmem:[%s1 + $0xecc] sm:$0xff]
  %v616 = vld [vmem:[%s1 + $0xed4] sm:$0xf]
  %v617 = vld [vmem:[%s1 + $0xed8] sm:$0xff]
  %v618 = vld [vmem:[%s1 + $0xee0] sm:$0xff]
  %v619 = vld [vmem:[%s1 + $0xee8] sm:$0xf]
  %v620 = vld [vmem:[%s1 + $0xeec] sm:$0xff]
  %v621 = vld [vmem:[%s1 + $0xef4] sm:$0xff]
  %v622 = vld [vmem:[%s1 + $0xefc] sm:$0xf]
  %v623 = vld [vmem:[%s1 + $0xf00] sm:$0xff]
  %v624 = vld [vmem:[%s1 + $0xf08] sm:$0xff]
  %v625 = vld [vmem:[%s1 + $0xf10] sm:$0xf]
  %v626 = vld [vmem:[%s1 + $0xf14] sm:$0xff]
  %v627 = vld [vmem:[%s1 + $0xf1c] sm:$0xff]
  %v628 = vld [vmem:[%s1 + $0xf24] sm:$0xf]
  %v629 = vld [vmem:[%s1 + $0xf28] sm:$0xff]
  %v630 = vld [vmem:[%s1 + $0xf30] sm:$0xff]
  %v631 = vld [vmem:[%s1 + $0xf38] sm:$0xf]
  %v632 = vld [vmem:[%s1 + $0xf3c] sm:$0xff]
  %v633 = vld [vmem:[%s1 + $0xf44] sm:$0xff]
  %v634 = vld [vmem:[%s1 + $0xf4c] sm:$0xf]
  %v635 = vld [vmem:[%s1 + $0xf50] sm:$0xff]
  %v636 = vld [vmem:[%s1 + $0xf58] sm:$0xff]
  %v637 = vld [vmem:[%s1 + $0xf60] sm:$0xf]
  %v638 = vld [vmem:[%s1 + $0xf64] sm:$0xff]
  %v639 = vld [vmem:[%s1 + $0xf6c] sm:$0xff]
  %v640 = vld [vmem:[%s1 + $0xf74] sm:$0xf]
  %v641 = vld [vmem:[%s1 + $0xf78] sm:$0xff]
  %v642 = vld [vmem:[%s1 + $0xf80] sm:$0xff]
  %v643 = vld [vmem:[%s1 + $0xf88] sm:$0xf]
  %v644 = vld [vmem:[%s1 + $0xf8c] sm:$0xff]
  %v645 = vld [vmem:[%s1 + $0xf94] sm:$0xff]
  %v646 = vld [vmem:[%s1 + $0xf9c] sm:$0xf]
  %v647 = vld [vmem:[%s2] sm:$0x1f]
  %v649 = vlaneseq
  %v650 = vshrl.u32 %v649, 7
  %v651 = vsub.s32 0, %v650
  %v652 = vrot.slane %v647, %v651
  %v653 = vlaneseq
  %v654 = vshrl.u32 %v653, 7
  %v655 = vsub.s32 1, %v654
  %v656 = vrot.slane %v647, %v655
  %v657 = vlaneseq
  %v658 = vshrl.u32 %v657, 7
  %v659 = vsub.s32 2, %v658
  %v660 = vrot.slane %v647, %v659
  %v661 = vlaneseq
  %v662 = vshrl.u32 %v661, 7
  %v663 = vsub.s32 3, %v662
  %v664 = vrot.slane %v647, %v663
  %v665 = vlaneseq
  %v666 = vshrl.u32 %v665, 7
  %v667 = vsub.s32 4, %v666
  %v668 = vrot.slane %v647, %v667
  %v1274 = vunpack.c.l.b16 %v47
  %v1275 = vunpack.c.h.b16 %v47
  %v1276 = vunpack.c.l.b16 %v48
  %v1277 = vunpack.c.h.b16 %v48
  %v1278 = vunpack.c.l.b16 %v49
  %v1279 = vunpack.c.l.b16 %v50
  %v1280 = vunpack.c.h.b16 %v50
  %v1281 = vunpack.c.l.b16 %v51
  %v1282 = vunpack.c.h.b16 %v51
  %v1283 = vunpack.c.l.b16 %v52
  %v1284 = vunpack.c.l.b16 %v53
  %v1285 = vunpack.c.h.b16 %v53
  %v1286 = vunpack.c.l.b16 %v54
  %v1287 = vunpack.c.h.b16 %v54
  %v1288 = vunpack.c.l.b16 %v55
  %v1289 = vunpack.c.l.b16 %v56
  %v1290 = vunpack.c.h.b16 %v56
  %v1291 = vunpack.c.l.b16 %v57
  %v1292 = vunpack.c.h.b16 %v57
  %v1293 = vunpack.c.l.b16 %v58
  %v1294 = vunpack.c.l.b16 %v59
  %v1295 = vunpack.c.h.b16 %v59
  %v1296 = vunpack.c.l.b16 %v60
  %v1297 = vunpack.c.h.b16 %v60
  %v1298 = vunpack.c.l.b16 %v61
  %v1299 = vunpack.c.l.b16 %v62
  %v1300 = vunpack.c.h.b16 %v62
  %v1301 = vunpack.c.l.b16 %v63
  %v1302 = vunpack.c.h.b16 %v63
  %v1303 = vunpack.c.l.b16 %v64
  %v1304 = vunpack.c.l.b16 %v65
  %v1305 = vunpack.c.h.b16 %v65
  %v1306 = vunpack.c.l.b16 %v66
  %v1307 = vunpack.c.h.b16 %v66
  %v1308 = vunpack.c.l.b16 %v67
  %v1309 = vunpack.c.l.b16 %v68
  %v1310 = vunpack.c.h.b16 %v68
  %v1311 = vunpack.c.l.b16 %v69
  %v1312 = vunpack.c.h.b16 %v69
  %v1313 = vunpack.c.l.b16 %v70
  %v1314 = vunpack.c.l.b16 %v71
  %v1315 = vunpack.c.h.b16 %v71
  %v1316 = vunpack.c.l.b16 %v72
  %v1317 = vunpack.c.h.b16 %v72
  %v1318 = vunpack.c.l.b16 %v73
  %v1319 = vunpack.c.l.b16 %v74
  %v1320 = vunpack.c.h.b16 %v74
  %v1321 = vunpack.c.l.b16 %v75
  %v1322 = vunpack.c.h.b16 %v75
  %v1323 = vunpack.c.l.b16 %v76
  %v1324 = vunpack.c.l.b16 %v77
  %v1325 = vunpack.c.h.b16 %v77
  %v1326 = vunpack.c.l.b16 %v78
  %v1327 = vunpack.c.h.b16 %v78
  %v1328 = vunpack.c.l.b16 %v79
  %v1329 = vunpack.c.l.b16 %v80
  %v1330 = vunpack.c.h.b16 %v80
  %v1331 = vunpack.c.l.b16 %v81
  %v1332 = vunpack.c.h.b16 %v81
  %v1333 = vunpack.c.l.b16 %v82
  %v1334 = vunpack.c.l.b16 %v83
  %v1335 = vunpack.c.h.b16 %v83
  %v1336 = vunpack.c.l.b16 %v84
  %v1337 = vunpack.c.h.b16 %v84
  %v1338 = vunpack.c.l.b16 %v85
  %v1339 = vunpack.c.l.b16 %v86
  %v1340 = vunpack.c.h.b16 %v86
  %v1341 = vunpack.c.l.b16 %v87
  %v1342 = vunpack.c.h.b16 %v87
  %v1343 = vunpack.c.l.b16 %v88
  %v1344 = vunpack.c.l.b16 %v89
  %v1345 = vunpack.c.h.b16 %v89
  %v1346 = vunpack.c.l.b16 %v90
  %v1347 = vunpack.c.h.b16 %v90
  %v1348 = vunpack.c.l.b16 %v91
  %v1349 = vunpack.c.l.b16 %v92
  %v1350 = vunpack.c.h.b16 %v92
  %v1351 = vunpack.c.l.b16 %v93
  %v1352 = vunpack.c.h.b16 %v93
  %v1353 = vunpack.c.l.b16 %v94
  %v1354 = vunpack.c.l.b16 %v95
  %v1355 = vunpack.c.h.b16 %v95
  %v1356 = vunpack.c.l.b16 %v96
  %v1357 = vunpack.c.h.b16 %v96
  %v1358 = vunpack.c.l.b16 %v97
  %v1359 = vunpack.c.l.b16 %v98
  %v1360 = vunpack.c.h.b16 %v98
  %v1361 = vunpack.c.l.b16 %v99
  %v1362 = vunpack.c.h.b16 %v99
  %v1363 = vunpack.c.l.b16 %v100
  %v1364 = vunpack.c.l.b16 %v101
  %v1365 = vunpack.c.h.b16 %v101
  %v1366 = vunpack.c.l.b16 %v102
  %v1367 = vunpack.c.h.b16 %v102
  %v1368 = vunpack.c.l.b16 %v103
  %v1369 = vunpack.c.l.b16 %v104
  %v1370 = vunpack.c.h.b16 %v104
  %v1371 = vunpack.c.l.b16 %v105
  %v1372 = vunpack.c.h.b16 %v105
  %v1373 = vunpack.c.l.b16 %v106
  %v1374 = vunpack.c.l.b16 %v107
  %v1375 = vunpack.c.h.b16 %v107
  %v1376 = vunpack.c.l.b16 %v108
  %v1377 = vunpack.c.h.b16 %v108
  %v1378 = vunpack.c.l.b16 %v109
  %v1379 = vunpack.c.l.b16 %v110
  %v1380 = vunpack.c.h.b16 %v110
  %v1381 = vunpack.c.l.b16 %v111
  %v1382 = vunpack.c.h.b16 %v111
  %v1383 = vunpack.c.l.b16 %v112
  %v1384 = vunpack.c.l.b16 %v113
  %v1385 = vunpack.c.h.b16 %v113
  %v1386 = vunpack.c.l.b16 %v114
  %v1387 = vunpack.c.h.b16 %v114
  %v1388 = vunpack.c.l.b16 %v115
  %v1389 = vunpack.c.l.b16 %v116
  %v1390 = vunpack.c.h.b16 %v116
  %v1391 = vunpack.c.l.b16 %v117
  %v1392 = vunpack.c.h.b16 %v117
  %v1393 = vunpack.c.l.b16 %v118
  %v1394 = vunpack.c.l.b16 %v119
  %v1395 = vunpack.c.h.b16 %v119
  %v1396 = vunpack.c.l.b16 %v120
  %v1397 = vunpack.c.h.b16 %v120
  %v1398 = vunpack.c.l.b16 %v121
  %v1399 = vunpack.c.l.b16 %v122
  %v1400 = vunpack.c.h.b16 %v122
  %v1401 = vunpack.c.l.b16 %v123
  %v1402 = vunpack.c.h.b16 %v123
  %v1403 = vunpack.c.l.b16 %v124
  %v1404 = vunpack.c.l.b16 %v125
  %v1405 = vunpack.c.h.b16 %v125
  %v1406 = vunpack.c.l.b16 %v126
  %v1407 = vunpack.c.h.b16 %v126
  %v1408 = vunpack.c.l.b16 %v127
  %v1409 = vunpack.c.l.b16 %v128
  %v1410 = vunpack.c.h.b16 %v128
  %v1411 = vunpack.c.l.b16 %v129
  %v1412 = vunpack.c.h.b16 %v129
  %v1413 = vunpack.c.l.b16 %v130
  %v1414 = vunpack.c.l.b16 %v131
  %v1415 = vunpack.c.h.b16 %v131
  %v1416 = vunpack.c.l.b16 %v132
  %v1417 = vunpack.c.h.b16 %v132
  %v1418 = vunpack.c.l.b16 %v133
  %v1419 = vunpack.c.l.b16 %v134
  %v1420 = vunpack.c.h.b16 %v134
  %v1421 = vunpack.c.l.b16 %v135
  %v1422 = vunpack.c.h.b16 %v135
  %v1423 = vunpack.c.l.b16 %v136
  %v1424 = vunpack.c.l.b16 %v137
  %v1425 = vunpack.c.h.b16 %v137
  %v1426 = vunpack.c.l.b16 %v138
  %v1427 = vunpack.c.h.b16 %v138
  %v1428 = vunpack.c.l.b16 %v139
  %v1429 = vunpack.c.l.b16 %v140
  %v1430 = vunpack.c.h.b16 %v140
  %v1431 = vunpack.c.l.b16 %v141
  %v1432 = vunpack.c.h.b16 %v141
  %v1433 = vunpack.c.l.b16 %v142
  %v1434 = vunpack.c.l.b16 %v143
  %v1435 = vunpack.c.h.b16 %v143
  %v1436 = vunpack.c.l.b16 %v144
  %v1437 = vunpack.c.h.b16 %v144
  %v1438 = vunpack.c.l.b16 %v145
  %v1439 = vunpack.c.l.b16 %v146
  %v1440 = vunpack.c.h.b16 %v146
  %v1441 = vunpack.c.l.b16 %v147
  %v1442 = vunpack.c.h.b16 %v147
  %v1443 = vunpack.c.l.b16 %v148
  %v1444 = vunpack.c.l.b16 %v149
  %v1445 = vunpack.c.h.b16 %v149
  %v1446 = vunpack.c.l.b16 %v150
  %v1447 = vunpack.c.h.b16 %v150
  %v1448 = vunpack.c.l.b16 %v151
  %v1449 = vunpack.c.l.b16 %v152
  %v1450 = vunpack.c.h.b16 %v152
  %v1451 = vunpack.c.l.b16 %v153
  %v1452 = vunpack.c.h.b16 %v153
  %v1453 = vunpack.c.l.b16 %v154
  %v1454 = vunpack.c.l.b16 %v155
  %v1455 = vunpack.c.h.b16 %v155
  %v1456 = vunpack.c.l.b16 %v156
  %v1457 = vunpack.c.h.b16 %v156
  %v1458 = vunpack.c.l.b16 %v157
  %v1459 = vunpack.c.l.b16 %v158
  %v1460 = vunpack.c.h.b16 %v158
  %v1461 = vunpack.c.l.b16 %v159
  %v1462 = vunpack.c.h.b16 %v159
  %v1463 = vunpack.c.l.b16 %v160
  %v1464 = vunpack.c.l.b16 %v161
  %v1465 = vunpack.c.h.b16 %v161
  %v1466 = vunpack.c.l.b16 %v162
  %v1467 = vunpack.c.h.b16 %v162
  %v1468 = vunpack.c.l.b16 %v163
  %v1469 = vunpack.c.l.b16 %v164
  %v1470 = vunpack.c.h.b16 %v164
  %v1471 = vunpack.c.l.b16 %v165
  %v1472 = vunpack.c.h.b16 %v165
  %v1473 = vunpack.c.l.b16 %v166
  %v1474 = vunpack.c.l.b16 %v167
  %v1475 = vunpack.c.h.b16 %v167
  %v1476 = vunpack.c.l.b16 %v168
  %v1477 = vunpack.c.h.b16 %v168
  %v1478 = vunpack.c.l.b16 %v169
  %v1479 = vunpack.c.l.b16 %v170
  %v1480 = vunpack.c.h.b16 %v170
  %v1481 = vunpack.c.l.b16 %v171
  %v1482 = vunpack.c.h.b16 %v171
  %v1483 = vunpack.c.l.b16 %v172
  %v1484 = vunpack.c.l.b16 %v173
  %v1485 = vunpack.c.h.b16 %v173
  %v1486 = vunpack.c.l.b16 %v174
  %v1487 = vunpack.c.h.b16 %v174
  %v1488 = vunpack.c.l.b16 %v175
  %v1489 = vunpack.c.l.b16 %v176
  %v1490 = vunpack.c.h.b16 %v176
  %v1491 = vunpack.c.l.b16 %v177
  %v1492 = vunpack.c.h.b16 %v177
  %v1493 = vunpack.c.l.b16 %v178
  %v1494 = vunpack.c.l.b16 %v179
  %v1495 = vunpack.c.h.b16 %v179
  %v1496 = vunpack.c.l.b16 %v180
  %v1497 = vunpack.c.h.b16 %v180
  %v1498 = vunpack.c.l.b16 %v181
  %v1499 = vunpack.c.l.b16 %v182
  %v1500 = vunpack.c.h.b16 %v182
  %v1501 = vunpack.c.l.b16 %v183
  %v1502 = vunpack.c.h.b16 %v183
  %v1503 = vunpack.c.l.b16 %v184
  %v1504 = vunpack.c.l.b16 %v185
  %v1505 = vunpack.c.h.b16 %v185
  %v1506 = vunpack.c.l.b16 %v186
  %v1507 = vunpack.c.h.b16 %v186
  %v1508 = vunpack.c.l.b16 %v187
  %v1509 = vunpack.c.l.b16 %v188
  %v1510 = vunpack.c.h.b16 %v188
  %v1511 = vunpack.c.l.b16 %v189
  %v1512 = vunpack.c.h.b16 %v189
  %v1513 = vunpack.c.l.b16 %v190
  %v1514 = vunpack.c.l.b16 %v191
  %v1515 = vunpack.c.h.b16 %v191
  %v1516 = vunpack.c.l.b16 %v192
  %v1517 = vunpack.c.h.b16 %v192
  %v1518 = vunpack.c.l.b16 %v193
  %v1519 = vunpack.c.l.b16 %v194
  %v1520 = vunpack.c.h.b16 %v194
  %v1521 = vunpack.c.l.b16 %v195
  %v1522 = vunpack.c.h.b16 %v195
  %v1523 = vunpack.c.l.b16 %v196
  %v1524 = vunpack.c.l.b16 %v197
  %v1525 = vunpack.c.h.b16 %v197
  %v1526 = vunpack.c.l.b16 %v198
  %v1527 = vunpack.c.h.b16 %v198
  %v1528 = vunpack.c.l.b16 %v199
  %v1529 = vunpack.c.l.b16 %v200
  %v1530 = vunpack.c.h.b16 %v200
  %v1531 = vunpack.c.l.b16 %v201
  %v1532 = vunpack.c.h.b16 %v201
  %v1533 = vunpack.c.l.b16 %v202
  %v1534 = vunpack.c.l.b16 %v203
  %v1535 = vunpack.c.h.b16 %v203
  %v1536 = vunpack.c.l.b16 %v204
  %v1537 = vunpack.c.h.b16 %v204
  %v1538 = vunpack.c.l.b16 %v205
  %v1539 = vunpack.c.l.b16 %v206
  %v1540 = vunpack.c.h.b16 %v206
  %v1541 = vunpack.c.l.b16 %v207
  %v1542 = vunpack.c.h.b16 %v207
  %v1543 = vunpack.c.l.b16 %v208
  %v1544 = vunpack.c.l.b16 %v209
  %v1545 = vunpack.c.h.b16 %v209
  %v1546 = vunpack.c.l.b16 %v210
  %v1547 = vunpack.c.h.b16 %v210
  %v1548 = vunpack.c.l.b16 %v211
  %v1549 = vunpack.c.l.b16 %v212
  %v1550 = vunpack.c.h.b16 %v212
  %v1551 = vunpack.c.l.b16 %v213
  %v1552 = vunpack.c.h.b16 %v213
  %v1553 = vunpack.c.l.b16 %v214
  %v1554 = vunpack.c.l.b16 %v215
  %v1555 = vunpack.c.h.b16 %v215
  %v1556 = vunpack.c.l.b16 %v216
  %v1557 = vunpack.c.h.b16 %v216
  %v1558 = vunpack.c.l.b16 %v217
  %v1559 = vunpack.c.l.b16 %v218
  %v1560 = vunpack.c.h.b16 %v218
  %v1561 = vunpack.c.l.b16 %v219
  %v1562 = vunpack.c.h.b16 %v219
  %v1563 = vunpack.c.l.b16 %v220
  %v1564 = vunpack.c.l.b16 %v221
  %v1565 = vunpack.c.h.b16 %v221
  %v1566 = vunpack.c.l.b16 %v222
  %v1567 = vunpack.c.h.b16 %v222
  %v1568 = vunpack.c.l.b16 %v223
  %v1569 = vunpack.c.l.b16 %v224
  %v1570 = vunpack.c.h.b16 %v224
  %v1571 = vunpack.c.l.b16 %v225
  %v1572 = vunpack.c.h.b16 %v225
  %v1573 = vunpack.c.l.b16 %v226
  %v1574 = vunpack.c.l.b16 %v227
  %v1575 = vunpack.c.h.b16 %v227
  %v1576 = vunpack.c.l.b16 %v228
  %v1577 = vunpack.c.h.b16 %v228
  %v1578 = vunpack.c.l.b16 %v229
  %v1579 = vunpack.c.l.b16 %v230
  %v1580 = vunpack.c.h.b16 %v230
  %v1581 = vunpack.c.l.b16 %v231
  %v1582 = vunpack.c.h.b16 %v231
  %v1583 = vunpack.c.l.b16 %v232
  %v1584 = vunpack.c.l.b16 %v233
  %v1585 = vunpack.c.h.b16 %v233
  %v1586 = vunpack.c.l.b16 %v234
  %v1587 = vunpack.c.h.b16 %v234
  %v1588 = vunpack.c.l.b16 %v235
  %v1589 = vunpack.c.l.b16 %v236
  %v1590 = vunpack.c.h.b16 %v236
  %v1591 = vunpack.c.l.b16 %v237
  %v1592 = vunpack.c.h.b16 %v237
  %v1593 = vunpack.c.l.b16 %v238
  %v1594 = vunpack.c.l.b16 %v239
  %v1595 = vunpack.c.h.b16 %v239
  %v1596 = vunpack.c.l.b16 %v240
  %v1597 = vunpack.c.h.b16 %v240
  %v1598 = vunpack.c.l.b16 %v241
  %v1599 = vunpack.c.l.b16 %v242
  %v1600 = vunpack.c.h.b16 %v242
  %v1601 = vunpack.c.l.b16 %v243
  %v1602 = vunpack.c.h.b16 %v243
  %v1603 = vunpack.c.l.b16 %v244
  %v1604 = vunpack.c.l.b16 %v245
  %v1605 = vunpack.c.h.b16 %v245
  %v1606 = vunpack.c.l.b16 %v246
  %v1607 = vunpack.c.h.b16 %v246
  %v1608 = vunpack.c.l.b16 %v247
  %v1609 = vunpack.c.l.b16 %v248
  %v1610 = vunpack.c.h.b16 %v248
  %v1611 = vunpack.c.l.b16 %v249
  %v1612 = vunpack.c.h.b16 %v249
  %v1613 = vunpack.c.l.b16 %v250
  %v1614 = vunpack.c.l.b16 %v251
  %v1615 = vunpack.c.h.b16 %v251
  %v1616 = vunpack.c.l.b16 %v252
  %v1617 = vunpack.c.h.b16 %v252
  %v1618 = vunpack.c.l.b16 %v253
  %v1619 = vunpack.c.l.b16 %v254
  %v1620 = vunpack.c.h.b16 %v254
  %v1621 = vunpack.c.l.b16 %v255
  %v1622 = vunpack.c.h.b16 %v255
  %v1623 = vunpack.c.l.b16 %v256
  %v1624 = vunpack.c.l.b16 %v257
  %v1625 = vunpack.c.h.b16 %v257
  %v1626 = vunpack.c.l.b16 %v258
  %v1627 = vunpack.c.h.b16 %v258
  %v1628 = vunpack.c.l.b16 %v259
  %v1629 = vunpack.c.l.b16 %v260
  %v1630 = vunpack.c.h.b16 %v260
  %v1631 = vunpack.c.l.b16 %v261
  %v1632 = vunpack.c.h.b16 %v261
  %v1633 = vunpack.c.l.b16 %v262
  %v1634 = vunpack.c.l.b16 %v263
  %v1635 = vunpack.c.h.b16 %v263
  %v1636 = vunpack.c.l.b16 %v264
  %v1637 = vunpack.c.h.b16 %v264
  %v1638 = vunpack.c.l.b16 %v265
  %v1639 = vunpack.c.l.b16 %v266
  %v1640 = vunpack.c.h.b16 %v266
  %v1641 = vunpack.c.l.b16 %v267
  %v1642 = vunpack.c.h.b16 %v267
  %v1643 = vunpack.c.l.b16 %v268
  %v1644 = vunpack.c.l.b16 %v269
  %v1645 = vunpack.c.h.b16 %v269
  %v1646 = vunpack.c.l.b16 %v270
  %v1647 = vunpack.c.h.b16 %v270
  %v1648 = vunpack.c.l.b16 %v271
  %v1649 = vunpack.c.l.b16 %v272
  %v1650 = vunpack.c.h.b16 %v272
  %v1651 = vunpack.c.l.b16 %v273
  %v1652 = vunpack.c.h.b16 %v273
  %v1653 = vunpack.c.l.b16 %v274
  %v1654 = vunpack.c.l.b16 %v275
  %v1655 = vunpack.c.h.b16 %v275
  %v1656 = vunpack.c.l.b16 %v276
  %v1657 = vunpack.c.h.b16 %v276
  %v1658 = vunpack.c.l.b16 %v277
  %v1659 = vunpack.c.l.b16 %v278
  %v1660 = vunpack.c.h.b16 %v278
  %v1661 = vunpack.c.l.b16 %v279
  %v1662 = vunpack.c.h.b16 %v279
  %v1663 = vunpack.c.l.b16 %v280
  %v1664 = vunpack.c.l.b16 %v281
  %v1665 = vunpack.c.h.b16 %v281
  %v1666 = vunpack.c.l.b16 %v282
  %v1667 = vunpack.c.h.b16 %v282
  %v1668 = vunpack.c.l.b16 %v283
  %v1669 = vunpack.c.l.b16 %v284
  %v1670 = vunpack.c.h.b16 %v284
  %v1671 = vunpack.c.l.b16 %v285
  %v1672 = vunpack.c.h.b16 %v285
  %v1673 = vunpack.c.l.b16 %v286
  %v1674 = vunpack.c.l.b16 %v287
  %v1675 = vunpack.c.h.b16 %v287
  %v1676 = vunpack.c.l.b16 %v288
  %v1677 = vunpack.c.h.b16 %v288
  %v1678 = vunpack.c.l.b16 %v289
  %v1679 = vunpack.c.l.b16 %v290
  %v1680 = vunpack.c.h.b16 %v290
  %v1681 = vunpack.c.l.b16 %v291
  %v1682 = vunpack.c.h.b16 %v291
  %v1683 = vunpack.c.l.b16 %v292
  %v1684 = vunpack.c.l.b16 %v293
  %v1685 = vunpack.c.h.b16 %v293
  %v1686 = vunpack.c.l.b16 %v294
  %v1687 = vunpack.c.h.b16 %v294
  %v1688 = vunpack.c.l.b16 %v295
  %v1689 = vunpack.c.l.b16 %v296
  %v1690 = vunpack.c.h.b16 %v296
  %v1691 = vunpack.c.l.b16 %v297
  %v1692 = vunpack.c.h.b16 %v297
  %v1693 = vunpack.c.l.b16 %v298
  %v1694 = vunpack.c.l.b16 %v299
  %v1695 = vunpack.c.h.b16 %v299
  %v1696 = vunpack.c.l.b16 %v300
  %v1697 = vunpack.c.h.b16 %v300
  %v1698 = vunpack.c.l.b16 %v301
  %v1699 = vunpack.c.l.b16 %v302
  %v1700 = vunpack.c.h.b16 %v302
  %v1701 = vunpack.c.l.b16 %v303
  %v1702 = vunpack.c.h.b16 %v303
  %v1703 = vunpack.c.l.b16 %v304
  %v1704 = vunpack.c.l.b16 %v305
  %v1705 = vunpack.c.h.b16 %v305
  %v1706 = vunpack.c.l.b16 %v306
  %v1707 = vunpack.c.h.b16 %v306
  %v1708 = vunpack.c.l.b16 %v307
  %v1709 = vunpack.c.l.b16 %v308
  %v1710 = vunpack.c.h.b16 %v308
  %v1711 = vunpack.c.l.b16 %v309
  %v1712 = vunpack.c.h.b16 %v309
  %v1713 = vunpack.c.l.b16 %v310
  %v1714 = vunpack.c.l.b16 %v311
  %v1715 = vunpack.c.h.b16 %v311
  %v1716 = vunpack.c.l.b16 %v312
  %v1717 = vunpack.c.h.b16 %v312
  %v1718 = vunpack.c.l.b16 %v313
  %v1719 = vunpack.c.l.b16 %v314
  %v1720 = vunpack.c.h.b16 %v314
  %v1721 = vunpack.c.l.b16 %v315
  %v1722 = vunpack.c.h.b16 %v315
  %v1723 = vunpack.c.l.b16 %v316
  %v1724 = vunpack.c.l.b16 %v317
  %v1725 = vunpack.c.h.b16 %v317
  %v1726 = vunpack.c.l.b16 %v318
  %v1727 = vunpack.c.h.b16 %v318
  %v1728 = vunpack.c.l.b16 %v319
  %v1729 = vunpack.c.l.b16 %v320
  %v1730 = vunpack.c.h.b16 %v320
  %v1731 = vunpack.c.l.b16 %v321
  %v1732 = vunpack.c.h.b16 %v321
  %v1733 = vunpack.c.l.b16 %v322
  %v1734 = vunpack.c.l.b16 %v323
  %v1735 = vunpack.c.h.b16 %v323
  %v1736 = vunpack.c.l.b16 %v324
  %v1737 = vunpack.c.h.b16 %v324
  %v1738 = vunpack.c.l.b16 %v325
  %v1739 = vunpack.c.l.b16 %v326
  %v1740 = vunpack.c.h.b16 %v326
  %v1741 = vunpack.c.l.b16 %v327
  %v1742 = vunpack.c.h.b16 %v327
  %v1743 = vunpack.c.l.b16 %v328
  %v1744 = vunpack.c.l.b16 %v329
  %v1745 = vunpack.c.h.b16 %v329
  %v1746 = vunpack.c.l.b16 %v330
  %v1747 = vunpack.c.h.b16 %v330
  %v1748 = vunpack.c.l.b16 %v331
  %v1749 = vunpack.c.l.b16 %v332
  %v1750 = vunpack.c.h.b16 %v332
  %v1751 = vunpack.c.l.b16 %v333
  %v1752 = vunpack.c.h.b16 %v333
  %v1753 = vunpack.c.l.b16 %v334
  %v1754 = vunpack.c.l.b16 %v335
  %v1755 = vunpack.c.h.b16 %v335
  %v1756 = vunpack.c.l.b16 %v336
  %v1757 = vunpack.c.h.b16 %v336
  %v1758 = vunpack.c.l.b16 %v337
  %v1759 = vunpack.c.l.b16 %v338
  %v1760 = vunpack.c.h.b16 %v338
  %v1761 = vunpack.c.l.b16 %v339
  %v1762 = vunpack.c.h.b16 %v339
  %v1763 = vunpack.c.l.b16 %v340
  %v1764 = vunpack.c.l.b16 %v341
  %v1765 = vunpack.c.h.b16 %v341
  %v1766 = vunpack.c.l.b16 %v342
  %v1767 = vunpack.c.h.b16 %v342
  %v1768 = vunpack.c.l.b16 %v343
  %v1769 = vunpack.c.l.b16 %v344
  %v1770 = vunpack.c.h.b16 %v344
  %v1771 = vunpack.c.l.b16 %v345
  %v1772 = vunpack.c.h.b16 %v345
  %v1773 = vunpack.c.l.b16 %v346
  %v1774 = vunpack.c.l.b16 %v347
  %v1775 = vunpack.c.h.b16 %v347
  %v1776 = vunpack.c.l.b16 %v348
  %v1777 = vunpack.c.h.b16 %v348
  %v1778 = vunpack.c.l.b16 %v349
  %v1779 = vunpack.c.l.b16 %v350
  %v1780 = vunpack.c.h.b16 %v350
  %v1781 = vunpack.c.l.b16 %v351
  %v1782 = vunpack.c.h.b16 %v351
  %v1783 = vunpack.c.l.b16 %v352
  %v1784 = vunpack.c.l.b16 %v353
  %v1785 = vunpack.c.h.b16 %v353
  %v1786 = vunpack.c.l.b16 %v354
  %v1787 = vunpack.c.h.b16 %v354
  %v1788 = vunpack.c.l.b16 %v355
  %v1789 = vunpack.c.l.b16 %v356
  %v1790 = vunpack.c.h.b16 %v356
  %v1791 = vunpack.c.l.b16 %v357
  %v1792 = vunpack.c.h.b16 %v357
  %v1793 = vunpack.c.l.b16 %v358
  %v1794 = vunpack.c.l.b16 %v359
  %v1795 = vunpack.c.h.b16 %v359
  %v1796 = vunpack.c.l.b16 %v360
  %v1797 = vunpack.c.h.b16 %v360
  %v1798 = vunpack.c.l.b16 %v361
  %v1799 = vunpack.c.l.b16 %v362
  %v1800 = vunpack.c.h.b16 %v362
  %v1801 = vunpack.c.l.b16 %v363
  %v1802 = vunpack.c.h.b16 %v363
  %v1803 = vunpack.c.l.b16 %v364
  %v1804 = vunpack.c.l.b16 %v365
  %v1805 = vunpack.c.h.b16 %v365
  %v1806 = vunpack.c.l.b16 %v366
  %v1807 = vunpack.c.h.b16 %v366
  %v1808 = vunpack.c.l.b16 %v367
  %v1809 = vunpack.c.l.b16 %v368
  %v1810 = vunpack.c.h.b16 %v368
  %v1811 = vunpack.c.l.b16 %v369
  %v1812 = vunpack.c.h.b16 %v369
  %v1813 = vunpack.c.l.b16 %v370
  %v1814 = vunpack.c.l.b16 %v371
  %v1815 = vunpack.c.h.b16 %v371
  %v1816 = vunpack.c.l.b16 %v372
  %v1817 = vunpack.c.h.b16 %v372
  %v1818 = vunpack.c.l.b16 %v373
  %v1819 = vunpack.c.l.b16 %v374
  %v1820 = vunpack.c.h.b16 %v374
  %v1821 = vunpack.c.l.b16 %v375
  %v1822 = vunpack.c.h.b16 %v375
  %v1823 = vunpack.c.l.b16 %v376
  %v1824 = vunpack.c.l.b16 %v377
  %v1825 = vunpack.c.h.b16 %v377
  %v1826 = vunpack.c.l.b16 %v378
  %v1827 = vunpack.c.h.b16 %v378
  %v1828 = vunpack.c.l.b16 %v379
  %v1829 = vunpack.c.l.b16 %v380
  %v1830 = vunpack.c.h.b16 %v380
  %v1831 = vunpack.c.l.b16 %v381
  %v1832 = vunpack.c.h.b16 %v381
  %v1833 = vunpack.c.l.b16 %v382
  %v1834 = vunpack.c.l.b16 %v383
  %v1835 = vunpack.c.h.b16 %v383
  %v1836 = vunpack.c.l.b16 %v384
  %v1837 = vunpack.c.h.b16 %v384
  %v1838 = vunpack.c.l.b16 %v385
  %v1839 = vunpack.c.l.b16 %v386
  %v1840 = vunpack.c.h.b16 %v386
  %v1841 = vunpack.c.l.b16 %v387
  %v1842 = vunpack.c.h.b16 %v387
  %v1843 = vunpack.c.l.b16 %v388
  %v1844 = vunpack.c.l.b16 %v389
  %v1845 = vunpack.c.h.b16 %v389
  %v1846 = vunpack.c.l.b16 %v390
  %v1847 = vunpack.c.h.b16 %v390
  %v1848 = vunpack.c.l.b16 %v391
  %v1849 = vunpack.c.l.b16 %v392
  %v1850 = vunpack.c.h.b16 %v392
  %v1851 = vunpack.c.l.b16 %v393
  %v1852 = vunpack.c.h.b16 %v393
  %v1853 = vunpack.c.l.b16 %v394
  %v1854 = vunpack.c.l.b16 %v395
  %v1855 = vunpack.c.h.b16 %v395
  %v1856 = vunpack.c.l.b16 %v396
  %v1857 = vunpack.c.h.b16 %v396
  %v1858 = vunpack.c.l.b16 %v397
  %v1859 = vunpack.c.l.b16 %v398
  %v1860 = vunpack.c.h.b16 %v398
  %v1861 = vunpack.c.l.b16 %v399
  %v1862 = vunpack.c.h.b16 %v399
  %v1863 = vunpack.c.l.b16 %v400
  %v1864 = vunpack.c.l.b16 %v401
  %v1865 = vunpack.c.h.b16 %v401
  %v1866 = vunpack.c.l.b16 %v402
  %v1867 = vunpack.c.h.b16 %v402
  %v1868 = vunpack.c.l.b16 %v403
  %v1869 = vunpack.c.l.b16 %v404
  %v1870 = vunpack.c.h.b16 %v404
  %v1871 = vunpack.c.l.b16 %v405
  %v1872 = vunpack.c.h.b16 %v405
  %v1873 = vunpack.c.l.b16 %v406
  %v1874 = vunpack.c.l.b16 %v407
  %v1875 = vunpack.c.h.b16 %v407
  %v1876 = vunpack.c.l.b16 %v408
  %v1877 = vunpack.c.h.b16 %v408
  %v1878 = vunpack.c.l.b16 %v409
  %v1879 = vunpack.c.l.b16 %v410
  %v1880 = vunpack.c.h.b16 %v410
  %v1881 = vunpack.c.l.b16 %v411
  %v1882 = vunpack.c.h.b16 %v411
  %v1883 = vunpack.c.l.b16 %v412
  %v1884 = vunpack.c.l.b16 %v413
  %v1885 = vunpack.c.h.b16 %v413
  %v1886 = vunpack.c.l.b16 %v414
  %v1887 = vunpack.c.h.b16 %v414
  %v1888 = vunpack.c.l.b16 %v415
  %v1889 = vunpack.c.l.b16 %v416
  %v1890 = vunpack.c.h.b16 %v416
  %v1891 = vunpack.c.l.b16 %v417
  %v1892 = vunpack.c.h.b16 %v417
  %v1893 = vunpack.c.l.b16 %v418
  %v1894 = vunpack.c.l.b16 %v419
  %v1895 = vunpack.c.h.b16 %v419
  %v1896 = vunpack.c.l.b16 %v420
  %v1897 = vunpack.c.h.b16 %v420
  %v1898 = vunpack.c.l.b16 %v421
  %v1899 = vunpack.c.l.b16 %v422
  %v1900 = vunpack.c.h.b16 %v422
  %v1901 = vunpack.c.l.b16 %v423
  %v1902 = vunpack.c.h.b16 %v423
  %v1903 = vunpack.c.l.b16 %v424
  %v1904 = vunpack.c.l.b16 %v425
  %v1905 = vunpack.c.h.b16 %v425
  %v1906 = vunpack.c.l.b16 %v426
  %v1907 = vunpack.c.h.b16 %v426
  %v1908 = vunpack.c.l.b16 %v427
  %v1909 = vunpack.c.l.b16 %v428
  %v1910 = vunpack.c.h.b16 %v428
  %v1911 = vunpack.c.l.b16 %v429
  %v1912 = vunpack.c.h.b16 %v429
  %v1913 = vunpack.c.l.b16 %v430
  %v1914 = vunpack.c.l.b16 %v431
  %v1915 = vunpack.c.h.b16 %v431
  %v1916 = vunpack.c.l.b16 %v432
  %v1917 = vunpack.c.h.b16 %v432
  %v1918 = vunpack.c.l.b16 %v433
  %v1919 = vunpack.c.l.b16 %v434
  %v1920 = vunpack.c.h.b16 %v434
  %v1921 = vunpack.c.l.b16 %v435
  %v1922 = vunpack.c.h.b16 %v435
  %v1923 = vunpack.c.l.b16 %v436
  %v1924 = vunpack.c.l.b16 %v437
  %v1925 = vunpack.c.h.b16 %v437
  %v1926 = vunpack.c.l.b16 %v438
  %v1927 = vunpack.c.h.b16 %v438
  %v1928 = vunpack.c.l.b16 %v439
  %v1929 = vunpack.c.l.b16 %v440
  %v1930 = vunpack.c.h.b16 %v440
  %v1931 = vunpack.c.l.b16 %v441
  %v1932 = vunpack.c.h.b16 %v441
  %v1933 = vunpack.c.l.b16 %v442
  %v1934 = vunpack.c.l.b16 %v443
  %v1935 = vunpack.c.h.b16 %v443
  %v1936 = vunpack.c.l.b16 %v444
  %v1937 = vunpack.c.h.b16 %v444
  %v1938 = vunpack.c.l.b16 %v445
  %v1939 = vunpack.c.l.b16 %v446
  %v1940 = vunpack.c.h.b16 %v446
  %v1941 = vunpack.c.l.b16 %v447
  %v1942 = vunpack.c.h.b16 %v447
  %v1943 = vunpack.c.l.b16 %v448
  %v1944 = vunpack.c.l.b16 %v449
  %v1945 = vunpack.c.h.b16 %v449
  %v1946 = vunpack.c.l.b16 %v450
  %v1947 = vunpack.c.h.b16 %v450
  %v1948 = vunpack.c.l.b16 %v451
  %v1949 = vunpack.c.l.b16 %v452
  %v1950 = vunpack.c.h.b16 %v452
  %v1951 = vunpack.c.l.b16 %v453
  %v1952 = vunpack.c.h.b16 %v453
  %v1953 = vunpack.c.l.b16 %v454
  %v1954 = vunpack.c.l.b16 %v455
  %v1955 = vunpack.c.h.b16 %v455
  %v1956 = vunpack.c.l.b16 %v456
  %v1957 = vunpack.c.h.b16 %v456
  %v1958 = vunpack.c.l.b16 %v457
  %v1959 = vunpack.c.l.b16 %v458
  %v1960 = vunpack.c.h.b16 %v458
  %v1961 = vunpack.c.l.b16 %v459
  %v1962 = vunpack.c.h.b16 %v459
  %v1963 = vunpack.c.l.b16 %v460
  %v1964 = vunpack.c.l.b16 %v461
  %v1965 = vunpack.c.h.b16 %v461
  %v1966 = vunpack.c.l.b16 %v462
  %v1967 = vunpack.c.h.b16 %v462
  %v1968 = vunpack.c.l.b16 %v463
  %v1969 = vunpack.c.l.b16 %v464
  %v1970 = vunpack.c.h.b16 %v464
  %v1971 = vunpack.c.l.b16 %v465
  %v1972 = vunpack.c.h.b16 %v465
  %v1973 = vunpack.c.l.b16 %v466
  %v1974 = vunpack.c.l.b16 %v467
  %v1975 = vunpack.c.h.b16 %v467
  %v1976 = vunpack.c.l.b16 %v468
  %v1977 = vunpack.c.h.b16 %v468
  %v1978 = vunpack.c.l.b16 %v469
  %v1979 = vunpack.c.l.b16 %v470
  %v1980 = vunpack.c.h.b16 %v470
  %v1981 = vunpack.c.l.b16 %v471
  %v1982 = vunpack.c.h.b16 %v471
  %v1983 = vunpack.c.l.b16 %v472
  %v1984 = vunpack.c.l.b16 %v473
  %v1985 = vunpack.c.h.b16 %v473
  %v1986 = vunpack.c.l.b16 %v474
  %v1987 = vunpack.c.h.b16 %v474
  %v1988 = vunpack.c.l.b16 %v475
  %v1989 = vunpack.c.l.b16 %v476
  %v1990 = vunpack.c.h.b16 %v476
  %v1991 = vunpack.c.l.b16 %v477
  %v1992 = vunpack.c.h.b16 %v477
  %v1993 = vunpack.c.l.b16 %v478
  %v1994 = vunpack.c.l.b16 %v479
  %v1995 = vunpack.c.h.b16 %v479
  %v1996 = vunpack.c.l.b16 %v480
  %v1997 = vunpack.c.h.b16 %v480
  %v1998 = vunpack.c.l.b16 %v481
  %v1999 = vunpack.c.l.b16 %v482
  %v2000 = vunpack.c.h.b16 %v482
  %v2001 = vunpack.c.l.b16 %v483
  %v2002 = vunpack.c.h.b16 %v483
  %v2003 = vunpack.c.l.b16 %v484
  %v2004 = vunpack.c.l.b16 %v485
  %v2005 = vunpack.c.h.b16 %v485
  %v2006 = vunpack.c.l.b16 %v486
  %v2007 = vunpack.c.h.b16 %v486
  %v2008 = vunpack.c.l.b16 %v487
  %v2009 = vunpack.c.l.b16 %v488
  %v2010 = vunpack.c.h.b16 %v488
  %v2011 = vunpack.c.l.b16 %v489
  %v2012 = vunpack.c.h.b16 %v489
  %v2013 = vunpack.c.l.b16 %v490
  %v2014 = vunpack.c.l.b16 %v491
  %v2015 = vunpack.c.h.b16 %v491
  %v2016 = vunpack.c.l.b16 %v492
  %v2017 = vunpack.c.h.b16 %v492
  %v2018 = vunpack.c.l.b16 %v493
  %v2019 = vunpack.c.l.b16 %v494
  %v2020 = vunpack.c.h.b16 %v494
  %v2021 = vunpack.c.l.b16 %v495
  %v2022 = vunpack.c.h.b16 %v495
  %v2023 = vunpack.c.l.b16 %v496
  %v2024 = vunpack.c.l.b16 %v497
  %v2025 = vunpack.c.h.b16 %v497
  %v2026 = vunpack.c.l.b16 %v498
  %v2027 = vunpack.c.h.b16 %v498
  %v2028 = vunpack.c.l.b16 %v499
  %v2029 = vunpack.c.l.b16 %v500
  %v2030 = vunpack.c.h.b16 %v500
  %v2031 = vunpack.c.l.b16 %v501
  %v2032 = vunpack.c.h.b16 %v501
  %v2033 = vunpack.c.l.b16 %v502
  %v2034 = vunpack.c.l.b16 %v503
  %v2035 = vunpack.c.h.b16 %v503
  %v2036 = vunpack.c.l.b16 %v504
  %v2037 = vunpack.c.h.b16 %v504
  %v2038 = vunpack.c.l.b16 %v505
  %v2039 = vunpack.c.l.b16 %v506
  %v2040 = vunpack.c.h.b16 %v506
  %v2041 = vunpack.c.l.b16 %v507
  %v2042 = vunpack.c.h.b16 %v507
  %v2043 = vunpack.c.l.b16 %v508
  %v2044 = vunpack.c.l.b16 %v509
  %v2045 = vunpack.c.h.b16 %v509
  %v2046 = vunpack.c.l.b16 %v510
  %v2047 = vunpack.c.h.b16 %v510
  %v2048 = vunpack.c.l.b16 %v511
  %v2049 = vunpack.c.l.b16 %v512
  %v2050 = vunpack.c.h.b16 %v512
  %v2051 = vunpack.c.l.b16 %v513
  %v2052 = vunpack.c.h.b16 %v513
  %v2053 = vunpack.c.l.b16 %v514
  %v2054 = vunpack.c.l.b16 %v515
  %v2055 = vunpack.c.h.b16 %v515
  %v2056 = vunpack.c.l.b16 %v516
  %v2057 = vunpack.c.h.b16 %v516
  %v2058 = vunpack.c.l.b16 %v517
  %v2059 = vunpack.c.l.b16 %v518
  %v2060 = vunpack.c.h.b16 %v518
  %v2061 = vunpack.c.l.b16 %v519
  %v2062 = vunpack.c.h.b16 %v519
  %v2063 = vunpack.c.l.b16 %v520
  %v2064 = vunpack.c.l.b16 %v521
  %v2065 = vunpack.c.h.b16 %v521
  %v2066 = vunpack.c.l.b16 %v522
  %v2067 = vunpack.c.h.b16 %v522
  %v2068 = vunpack.c.l.b16 %v523
  %v2069 = vunpack.c.l.b16 %v524
  %v2070 = vunpack.c.h.b16 %v524
  %v2071 = vunpack.c.l.b16 %v525
  %v2072 = vunpack.c.h.b16 %v525
  %v2073 = vunpack.c.l.b16 %v526
  %v2074 = vunpack.c.l.b16 %v527
  %v2075 = vunpack.c.h.b16 %v527
  %v2076 = vunpack.c.l.b16 %v528
  %v2077 = vunpack.c.h.b16 %v528
  %v2078 = vunpack.c.l.b16 %v529
  %v2079 = vunpack.c.l.b16 %v530
  %v2080 = vunpack.c.h.b16 %v530
  %v2081 = vunpack.c.l.b16 %v531
  %v2082 = vunpack.c.h.b16 %v531
  %v2083 = vunpack.c.l.b16 %v532
  %v2084 = vunpack.c.l.b16 %v533
  %v2085 = vunpack.c.h.b16 %v533
  %v2086 = vunpack.c.l.b16 %v534
  %v2087 = vunpack.c.h.b16 %v534
  %v2088 = vunpack.c.l.b16 %v535
  %v2089 = vunpack.c.l.b16 %v536
  %v2090 = vunpack.c.h.b16 %v536
  %v2091 = vunpack.c.l.b16 %v537
  %v2092 = vunpack.c.h.b16 %v537
  %v2093 = vunpack.c.l.b16 %v538
  %v2094 = vunpack.c.l.b16 %v539
  %v2095 = vunpack.c.h.b16 %v539
  %v2096 = vunpack.c.l.b16 %v540
  %v2097 = vunpack.c.h.b16 %v540
  %v2098 = vunpack.c.l.b16 %v541
  %v2099 = vunpack.c.l.b16 %v542
  %v2100 = vunpack.c.h.b16 %v542
  %v2101 = vunpack.c.l.b16 %v543
  %v2102 = vunpack.c.h.b16 %v543
  %v2103 = vunpack.c.l.b16 %v544
  %v2104 = vunpack.c.l.b16 %v545
  %v2105 = vunpack.c.h.b16 %v545
  %v2106 = vunpack.c.l.b16 %v546
  %v2107 = vunpack.c.h.b16 %v546
  %v2108 = vunpack.c.l.b16 %v547
  %v2109 = vunpack.c.l.b16 %v548
  %v2110 = vunpack.c.h.b16 %v548
  %v2111 = vunpack.c.l.b16 %v549
  %v2112 = vunpack.c.h.b16 %v549
  %v2113 = vunpack.c.l.b16 %v550
  %v2114 = vunpack.c.l.b16 %v551
  %v2115 = vunpack.c.h.b16 %v551
  %v2116 = vunpack.c.l.b16 %v552
  %v2117 = vunpack.c.h.b16 %v552
  %v2118 = vunpack.c.l.b16 %v553
  %v2119 = vunpack.c.l.b16 %v554
  %v2120 = vunpack.c.h.b16 %v554
  %v2121 = vunpack.c.l.b16 %v555
  %v2122 = vunpack.c.h.b16 %v555
  %v2123 = vunpack.c.l.b16 %v556
  %v2124 = vunpack.c.l.b16 %v557
  %v2125 = vunpack.c.h.b16 %v557
  %v2126 = vunpack.c.l.b16 %v558
  %v2127 = vunpack.c.h.b16 %v558
  %v2128 = vunpack.c.l.b16 %v559
  %v2129 = vunpack.c.l.b16 %v560
  %v2130 = vunpack.c.h.b16 %v560
  %v2131 = vunpack.c.l.b16 %v561
  %v2132 = vunpack.c.h.b16 %v561
  %v2133 = vunpack.c.l.b16 %v562
  %v2134 = vunpack.c.l.b16 %v563
  %v2135 = vunpack.c.h.b16 %v563
  %v2136 = vunpack.c.l.b16 %v564
  %v2137 = vunpack.c.h.b16 %v564
  %v2138 = vunpack.c.l.b16 %v565
  %v2139 = vunpack.c.l.b16 %v566
  %v2140 = vunpack.c.h.b16 %v566
  %v2141 = vunpack.c.l.b16 %v567
  %v2142 = vunpack.c.h.b16 %v567
  %v2143 = vunpack.c.l.b16 %v568
  %v2144 = vunpack.c.l.b16 %v569
  %v2145 = vunpack.c.h.b16 %v569
  %v2146 = vunpack.c.l.b16 %v570
  %v2147 = vunpack.c.h.b16 %v570
  %v2148 = vunpack.c.l.b16 %v571
  %v2149 = vunpack.c.l.b16 %v572
  %v2150 = vunpack.c.h.b16 %v572
  %v2151 = vunpack.c.l.b16 %v573
  %v2152 = vunpack.c.h.b16 %v573
  %v2153 = vunpack.c.l.b16 %v574
  %v2154 = vunpack.c.l.b16 %v575
  %v2155 = vunpack.c.h.b16 %v575
  %v2156 = vunpack.c.l.b16 %v576
  %v2157 = vunpack.c.h.b16 %v576
  %v2158 = vunpack.c.l.b16 %v577
  %v2159 = vunpack.c.l.b16 %v578
  %v2160 = vunpack.c.h.b16 %v578
  %v2161 = vunpack.c.l.b16 %v579
  %v2162 = vunpack.c.h.b16 %v579
  %v2163 = vunpack.c.l.b16 %v580
  %v2164 = vunpack.c.l.b16 %v581
  %v2165 = vunpack.c.h.b16 %v581
  %v2166 = vunpack.c.l.b16 %v582
  %v2167 = vunpack.c.h.b16 %v582
  %v2168 = vunpack.c.l.b16 %v583
  %v2169 = vunpack.c.l.b16 %v584
  %v2170 = vunpack.c.h.b16 %v584
  %v2171 = vunpack.c.l.b16 %v585
  %v2172 = vunpack.c.h.b16 %v585
  %v2173 = vunpack.c.l.b16 %v586
  %v2174 = vunpack.c.l.b16 %v587
  %v2175 = vunpack.c.h.b16 %v587
  %v2176 = vunpack.c.l.b16 %v588
  %v2177 = vunpack.c.h.b16 %v588
  %v2178 = vunpack.c.l.b16 %v589
  %v2179 = vunpack.c.l.b16 %v590
  %v2180 = vunpack.c.h.b16 %v590
  %v2181 = vunpack.c.l.b16 %v591
  %v2182 = vunpack.c.h.b16 %v591
  %v2183 = vunpack.c.l.b16 %v592
  %v2184 = vunpack.c.l.b16 %v593
  %v2185 = vunpack.c.h.b16 %v593
  %v2186 = vunpack.c.l.b16 %v594
  %v2187 = vunpack.c.h.b16 %v594
  %v2188 = vunpack.c.l.b16 %v595
  %v2189 = vunpack.c.l.b16 %v596
  %v2190 = vunpack.c.h.b16 %v596
  %v2191 = vunpack.c.l.b16 %v597
  %v2192 = vunpack.c.h.b16 %v597
  %v2193 = vunpack.c.l.b16 %v598
  %v2194 = vunpack.c.l.b16 %v599
  %v2195 = vunpack.c.h.b16 %v599
  %v2196 = vunpack.c.l.b16 %v600
  %v2197 = vunpack.c.h.b16 %v600
  %v2198 = vunpack.c.l.b16 %v601
  %v2199 = vunpack.c.l.b16 %v602
  %v2200 = vunpack.c.h.b16 %v602
  %v2201 = vunpack.c.l.b16 %v603
  %v2202 = vunpack.c.h.b16 %v603
  %v2203 = vunpack.c.l.b16 %v604
  %v2204 = vunpack.c.l.b16 %v605
  %v2205 = vunpack.c.h.b16 %v605
  %v2206 = vunpack.c.l.b16 %v606
  %v2207 = vunpack.c.h.b16 %v606
  %v2208 = vunpack.c.l.b16 %v607
  %v2209 = vunpack.c.l.b16 %v608
  %v2210 = vunpack.c.h.b16 %v608
  %v2211 = vunpack.c.l.b16 %v609
  %v2212 = vunpack.c.h.b16 %v609
  %v2213 = vunpack.c.l.b16 %v610
  %v2214 = vunpack.c.l.b16 %v611
  %v2215 = vunpack.c.h.b16 %v611
  %v2216 = vunpack.c.l.b16 %v612
  %v2217 = vunpack.c.h.b16 %v612
  %v2218 = vunpack.c.l.b16 %v613
  %v2219 = vunpack.c.l.b16 %v614
  %v2220 = vunpack.c.h.b16 %v614
  %v2221 = vunpack.c.l.b16 %v615
  %v2222 = vunpack.c.h.b16 %v615
  %v2223 = vunpack.c.l.b16 %v616
  %v2224 = vunpack.c.l.b16 %v617
  %v2225 = vunpack.c.h.b16 %v617
  %v2226 = vunpack.c.l.b16 %v618
  %v2227 = vunpack.c.h.b16 %v618
  %v2228 = vunpack.c.l.b16 %v619
  %v2229 = vunpack.c.l.b16 %v620
  %v2230 = vunpack.c.h.b16 %v620
  %v2231 = vunpack.c.l.b16 %v621
  %v2232 = vunpack.c.h.b16 %v621
  %v2233 = vunpack.c.l.b16 %v622
  %v2234 = vunpack.c.l.b16 %v623
  %v2235 = vunpack.c.h.b16 %v623
  %v2236 = vunpack.c.l.b16 %v624
  %v2237 = vunpack.c.h.b16 %v624
  %v2238 = vunpack.c.l.b16 %v625
  %v2239 = vunpack.c.l.b16 %v626
  %v2240 = vunpack.c.h.b16 %v626
  %v2241 = vunpack.c.l.b16 %v627
  %v2242 = vunpack.c.h.b16 %v627
  %v2243 = vunpack.c.l.b16 %v628
  %v2244 = vunpack.c.l.b16 %v629
  %v2245 = vunpack.c.h.b16 %v629
  %v2246 = vunpack.c.l.b16 %v630
  %v2247 = vunpack.c.h.b16 %v630
  %v2248 = vunpack.c.l.b16 %v631
  %v2249 = vunpack.c.l.b16 %v632
  %v2250 = vunpack.c.h.b16 %v632
  %v2251 = vunpack.c.l.b16 %v633
  %v2252 = vunpack.c.h.b16 %v633
  %v2253 = vunpack.c.l.b16 %v634
  %v2254 = vunpack.c.l.b16 %v635
  %v2255 = vunpack.c.h.b16 %v635
  %v2256 = vunpack.c.l.b16 %v636
  %v2257 = vunpack.c.h.b16 %v636
  %v2258 = vunpack.c.l.b16 %v637
  %v2259 = vunpack.c.l.b16 %v638
  %v2260 = vunpack.c.h.b16 %v638
  %v2261 = vunpack.c.l.b16 %v639
  %v2262 = vunpack.c.h.b16 %v639
  %v2263 = vunpack.c.l.b16 %v640
  %v2264 = vunpack.c.l.b16 %v641
  %v2265 = vunpack.c.h.b16 %v641
  %v2266 = vunpack.c.l.b16 %v642
  %v2267 = vunpack.c.h.b16 %v642
  %v2268 = vunpack.c.l.b16 %v643
  %v2269 = vunpack.c.l.b16 %v644
  %v2270 = vunpack.c.h.b16 %v644
  %v2271 = vunpack.c.l.b16 %v645
  %v2272 = vunpack.c.h.b16 %v645
  %v2273 = vunpack.c.l.b16 %v646
  %v2274 = vpack.c.b16 %v1279, %v1274
  %v2275 = vpack.c.b16 %v1280, %v1275
  %v2276 = vpack.c.b16 %v1281, %v1276
  %v2277 = vpack.c.b16 %v1282, %v1277
  %v2278 = vpack.c.b16 %v1283, %v1278
  %v2279 = vpack.c.b16 %v1289, %v1284
  %v2280 = vpack.c.b16 %v1290, %v1285
  %v2281 = vpack.c.b16 %v1291, %v1286
  %v2282 = vpack.c.b16 %v1292, %v1287
  %v2283 = vpack.c.b16 %v1293, %v1288
  %v2284 = vpack.c.b16 %v1299, %v1294
  %v2285 = vpack.c.b16 %v1300, %v1295
  %v2286 = vpack.c.b16 %v1301, %v1296
  %v2287 = vpack.c.b16 %v1302, %v1297
  %v2288 = vpack.c.b16 %v1303, %v1298
  %v2289 = vpack.c.b16 %v1309, %v1304
  %v2290 = vpack.c.b16 %v1310, %v1305
  %v2291 = vpack.c.b16 %v1311, %v1306
  %v2292 = vpack.c.b16 %v1312, %v1307
  %v2293 = vpack.c.b16 %v1313, %v1308
  %v2294 = vpack.c.b16 %v1319, %v1314
  %v2295 = vpack.c.b16 %v1320, %v1315
  %v2296 = vpack.c.b16 %v1321, %v1316
  %v2297 = vpack.c.b16 %v1322, %v1317
  %v2298 = vpack.c.b16 %v1323, %v1318
  %v2299 = vpack.c.b16 %v1329, %v1324
  %v2300 = vpack.c.b16 %v1330, %v1325
  %v2301 = vpack.c.b16 %v1331, %v1326
  %v2302 = vpack.c.b16 %v1332, %v1327
  %v2303 = vpack.c.b16 %v1333, %v1328
  %v2304 = vpack.c.b16 %v1339, %v1334
  %v2305 = vpack.c.b16 %v1340, %v1335
  %v2306 = vpack.c.b16 %v1341, %v1336
  %v2307 = vpack.c.b16 %v1342, %v1337
  %v2308 = vpack.c.b16 %v1343, %v1338
  %v2309 = vpack.c.b16 %v1349, %v1344
  %v2310 = vpack.c.b16 %v1350, %v1345
  %v2311 = vpack.c.b16 %v1351, %v1346
  %v2312 = vpack.c.b16 %v1352, %v1347
  %v2313 = vpack.c.b16 %v1353, %v1348
  %v2314 = vpack.c.b16 %v1359, %v1354
  %v2315 = vpack.c.b16 %v1360, %v1355
  %v2316 = vpack.c.b16 %v1361, %v1356
  %v2317 = vpack.c.b16 %v1362, %v1357
  %v2318 = vpack.c.b16 %v1363, %v1358
  %v2319 = vpack.c.b16 %v1369, %v1364
  %v2320 = vpack.c.b16 %v1370, %v1365
  %v2321 = vpack.c.b16 %v1371, %v1366
  %v2322 = vpack.c.b16 %v1372, %v1367
  %v2323 = vpack.c.b16 %v1373, %v1368
  %v2324 = vpack.c.b16 %v1379, %v1374
  %v2325 = vpack.c.b16 %v1380, %v1375
  %v2326 = vpack.c.b16 %v1381, %v1376
  %v2327 = vpack.c.b16 %v1382, %v1377
  %v2328 = vpack.c.b16 %v1383, %v1378
  %v2329 = vpack.c.b16 %v1389, %v1384
  %v2330 = vpack.c.b16 %v1390, %v1385
  %v2331 = vpack.c.b16 %v1391, %v1386
  %v2332 = vpack.c.b16 %v1392, %v1387
  %v2333 = vpack.c.b16 %v1393, %v1388
  %v2334 = vpack.c.b16 %v1399, %v1394
  %v2335 = vpack.c.b16 %v1400, %v1395
  %v2336 = vpack.c.b16 %v1401, %v1396
  %v2337 = vpack.c.b16 %v1402, %v1397
  %v2338 = vpack.c.b16 %v1403, %v1398
  %v2339 = vpack.c.b16 %v1409, %v1404
  %v2340 = vpack.c.b16 %v1410, %v1405
  %v2341 = vpack.c.b16 %v1411, %v1406
  %v2342 = vpack.c.b16 %v1412, %v1407
  %v2343 = vpack.c.b16 %v1413, %v1408
  %v2344 = vpack.c.b16 %v1419, %v1414
  %v2345 = vpack.c.b16 %v1420, %v1415
  %v2346 = vpack.c.b16 %v1421, %v1416
  %v2347 = vpack.c.b16 %v1422, %v1417
  %v2348 = vpack.c.b16 %v1423, %v1418
  %v2349 = vpack.c.b16 %v1429, %v1424
  %v2350 = vpack.c.b16 %v1430, %v1425
  %v2351 = vpack.c.b16 %v1431, %v1426
  %v2352 = vpack.c.b16 %v1432, %v1427
  %v2353 = vpack.c.b16 %v1433, %v1428
  %v2354 = vpack.c.b16 %v1439, %v1434
  %v2355 = vpack.c.b16 %v1440, %v1435
  %v2356 = vpack.c.b16 %v1441, %v1436
  %v2357 = vpack.c.b16 %v1442, %v1437
  %v2358 = vpack.c.b16 %v1443, %v1438
  %v2359 = vpack.c.b16 %v1449, %v1444
  %v2360 = vpack.c.b16 %v1450, %v1445
  %v2361 = vpack.c.b16 %v1451, %v1446
  %v2362 = vpack.c.b16 %v1452, %v1447
  %v2363 = vpack.c.b16 %v1453, %v1448
  %v2364 = vpack.c.b16 %v1459, %v1454
  %v2365 = vpack.c.b16 %v1460, %v1455
  %v2366 = vpack.c.b16 %v1461, %v1456
  %v2367 = vpack.c.b16 %v1462, %v1457
  %v2368 = vpack.c.b16 %v1463, %v1458
  %v2369 = vpack.c.b16 %v1469, %v1464
  %v2370 = vpack.c.b16 %v1470, %v1465
  %v2371 = vpack.c.b16 %v1471, %v1466
  %v2372 = vpack.c.b16 %v1472, %v1467
  %v2373 = vpack.c.b16 %v1473, %v1468
  %v2374 = vpack.c.b16 %v1479, %v1474
  %v2375 = vpack.c.b16 %v1480, %v1475
  %v2376 = vpack.c.b16 %v1481, %v1476
  %v2377 = vpack.c.b16 %v1482, %v1477
  %v2378 = vpack.c.b16 %v1483, %v1478
  %v2379 = vpack.c.b16 %v1489, %v1484
  %v2380 = vpack.c.b16 %v1490, %v1485
  %v2381 = vpack.c.b16 %v1491, %v1486
  %v2382 = vpack.c.b16 %v1492, %v1487
  %v2383 = vpack.c.b16 %v1493, %v1488
  %v2384 = vpack.c.b16 %v1499, %v1494
  %v2385 = vpack.c.b16 %v1500, %v1495
  %v2386 = vpack.c.b16 %v1501, %v1496
  %v2387 = vpack.c.b16 %v1502, %v1497
  %v2388 = vpack.c.b16 %v1503, %v1498
  %v2389 = vpack.c.b16 %v1509, %v1504
  %v2390 = vpack.c.b16 %v1510, %v1505
  %v2391 = vpack.c.b16 %v1511, %v1506
  %v2392 = vpack.c.b16 %v1512, %v1507
  %v2393 = vpack.c.b16 %v1513, %v1508
  %v2394 = vpack.c.b16 %v1519, %v1514
  %v2395 = vpack.c.b16 %v1520, %v1515
  %v2396 = vpack.c.b16 %v1521, %v1516
  %v2397 = vpack.c.b16 %v1522, %v1517
  %v2398 = vpack.c.b16 %v1523, %v1518
  %v2399 = vpack.c.b16 %v1529, %v1524
  %v2400 = vpack.c.b16 %v1530, %v1525
  %v2401 = vpack.c.b16 %v1531, %v1526
  %v2402 = vpack.c.b16 %v1532, %v1527
  %v2403 = vpack.c.b16 %v1533, %v1528
  %v2404 = vpack.c.b16 %v1539, %v1534
  %v2405 = vpack.c.b16 %v1540, %v1535
  %v2406 = vpack.c.b16 %v1541, %v1536
  %v2407 = vpack.c.b16 %v1542, %v1537
  %v2408 = vpack.c.b16 %v1543, %v1538
  %v2409 = vpack.c.b16 %v1549, %v1544
  %v2410 = vpack.c.b16 %v1550, %v1545
  %v2411 = vpack.c.b16 %v1551, %v1546
  %v2412 = vpack.c.b16 %v1552, %v1547
  %v2413 = vpack.c.b16 %v1553, %v1548
  %v2414 = vpack.c.b16 %v1559, %v1554
  %v2415 = vpack.c.b16 %v1560, %v1555
  %v2416 = vpack.c.b16 %v1561, %v1556
  %v2417 = vpack.c.b16 %v1562, %v1557
  %v2418 = vpack.c.b16 %v1563, %v1558
  %v2419 = vpack.c.b16 %v1569, %v1564
  %v2420 = vpack.c.b16 %v1570, %v1565
  %v2421 = vpack.c.b16 %v1571, %v1566
  %v2422 = vpack.c.b16 %v1572, %v1567
  %v2423 = vpack.c.b16 %v1573, %v1568
  %v2424 = vpack.c.b16 %v1579, %v1574
  %v2425 = vpack.c.b16 %v1580, %v1575
  %v2426 = vpack.c.b16 %v1581, %v1576
  %v2427 = vpack.c.b16 %v1582, %v1577
  %v2428 = vpack.c.b16 %v1583, %v1578
  %v2429 = vpack.c.b16 %v1589, %v1584
  %v2430 = vpack.c.b16 %v1590, %v1585
  %v2431 = vpack.c.b16 %v1591, %v1586
  %v2432 = vpack.c.b16 %v1592, %v1587
  %v2433 = vpack.c.b16 %v1593, %v1588
  %v2434 = vpack.c.b16 %v1599, %v1594
  %v2435 = vpack.c.b16 %v1600, %v1595
  %v2436 = vpack.c.b16 %v1601, %v1596
  %v2437 = vpack.c.b16 %v1602, %v1597
  %v2438 = vpack.c.b16 %v1603, %v1598
  %v2439 = vpack.c.b16 %v1609, %v1604
  %v2440 = vpack.c.b16 %v1610, %v1605
  %v2441 = vpack.c.b16 %v1611, %v1606
  %v2442 = vpack.c.b16 %v1612, %v1607
  %v2443 = vpack.c.b16 %v1613, %v1608
  %v2444 = vpack.c.b16 %v1619, %v1614
  %v2445 = vpack.c.b16 %v1620, %v1615
  %v2446 = vpack.c.b16 %v1621, %v1616
  %v2447 = vpack.c.b16 %v1622, %v1617
  %v2448 = vpack.c.b16 %v1623, %v1618
  %v2449 = vpack.c.b16 %v1629, %v1624
  %v2450 = vpack.c.b16 %v1630, %v1625
  %v2451 = vpack.c.b16 %v1631, %v1626
  %v2452 = vpack.c.b16 %v1632, %v1627
  %v2453 = vpack.c.b16 %v1633, %v1628
  %v2454 = vpack.c.b16 %v1639, %v1634
  %v2455 = vpack.c.b16 %v1640, %v1635
  %v2456 = vpack.c.b16 %v1641, %v1636
  %v2457 = vpack.c.b16 %v1642, %v1637
  %v2458 = vpack.c.b16 %v1643, %v1638
  %v2459 = vpack.c.b16 %v1649, %v1644
  %v2460 = vpack.c.b16 %v1650, %v1645
  %v2461 = vpack.c.b16 %v1651, %v1646
  %v2462 = vpack.c.b16 %v1652, %v1647
  %v2463 = vpack.c.b16 %v1653, %v1648
  %v2464 = vpack.c.b16 %v1659, %v1654
  %v2465 = vpack.c.b16 %v1660, %v1655
  %v2466 = vpack.c.b16 %v1661, %v1656
  %v2467 = vpack.c.b16 %v1662, %v1657
  %v2468 = vpack.c.b16 %v1663, %v1658
  %v2469 = vpack.c.b16 %v1669, %v1664
  %v2470 = vpack.c.b16 %v1670, %v1665
  %v2471 = vpack.c.b16 %v1671, %v1666
  %v2472 = vpack.c.b16 %v1672, %v1667
  %v2473 = vpack.c.b16 %v1673, %v1668
  %v2474 = vpack.c.b16 %v1679, %v1674
  %v2475 = vpack.c.b16 %v1680, %v1675
  %v2476 = vpack.c.b16 %v1681, %v1676
  %v2477 = vpack.c.b16 %v1682, %v1677
  %v2478 = vpack.c.b16 %v1683, %v1678
  %v2479 = vpack.c.b16 %v1689, %v1684
  %v2480 = vpack.c.b16 %v1690, %v1685
  %v2481 = vpack.c.b16 %v1691, %v1686
  %v2482 = vpack.c.b16 %v1692, %v1687
  %v2483 = vpack.c.b16 %v1693, %v1688
  %v2484 = vpack.c.b16 %v1699, %v1694
  %v2485 = vpack.c.b16 %v1700, %v1695
  %v2486 = vpack.c.b16 %v1701, %v1696
  %v2487 = vpack.c.b16 %v1702, %v1697
  %v2488 = vpack.c.b16 %v1703, %v1698
  %v2489 = vpack.c.b16 %v1709, %v1704
  %v2490 = vpack.c.b16 %v1710, %v1705
  %v2491 = vpack.c.b16 %v1711, %v1706
  %v2492 = vpack.c.b16 %v1712, %v1707
  %v2493 = vpack.c.b16 %v1713, %v1708
  %v2494 = vpack.c.b16 %v1719, %v1714
  %v2495 = vpack.c.b16 %v1720, %v1715
  %v2496 = vpack.c.b16 %v1721, %v1716
  %v2497 = vpack.c.b16 %v1722, %v1717
  %v2498 = vpack.c.b16 %v1723, %v1718
  %v2499 = vpack.c.b16 %v1729, %v1724
  %v2500 = vpack.c.b16 %v1730, %v1725
  %v2501 = vpack.c.b16 %v1731, %v1726
  %v2502 = vpack.c.b16 %v1732, %v1727
  %v2503 = vpack.c.b16 %v1733, %v1728
  %v2504 = vpack.c.b16 %v1739, %v1734
  %v2505 = vpack.c.b16 %v1740, %v1735
  %v2506 = vpack.c.b16 %v1741, %v1736
  %v2507 = vpack.c.b16 %v1742, %v1737
  %v2508 = vpack.c.b16 %v1743, %v1738
  %v2509 = vpack.c.b16 %v1749, %v1744
  %v2510 = vpack.c.b16 %v1750, %v1745
  %v2511 = vpack.c.b16 %v1751, %v1746
  %v2512 = vpack.c.b16 %v1752, %v1747
  %v2513 = vpack.c.b16 %v1753, %v1748
  %v2514 = vpack.c.b16 %v1759, %v1754
  %v2515 = vpack.c.b16 %v1760, %v1755
  %v2516 = vpack.c.b16 %v1761, %v1756
  %v2517 = vpack.c.b16 %v1762, %v1757
  %v2518 = vpack.c.b16 %v1763, %v1758
  %v2519 = vpack.c.b16 %v1769, %v1764
  %v2520 = vpack.c.b16 %v1770, %v1765
  %v2521 = vpack.c.b16 %v1771, %v1766
  %v2522 = vpack.c.b16 %v1772, %v1767
  %v2523 = vpack.c.b16 %v1773, %v1768
  %v2524 = vpack.c.b16 %v1779, %v1774
  %v2525 = vpack.c.b16 %v1780, %v1775
  %v2526 = vpack.c.b16 %v1781, %v1776
  %v2527 = vpack.c.b16 %v1782, %v1777
  %v2528 = vpack.c.b16 %v1783, %v1778
  %v2529 = vpack.c.b16 %v1789, %v1784
  %v2530 = vpack.c.b16 %v1790, %v1785
  %v2531 = vpack.c.b16 %v1791, %v1786
  %v2532 = vpack.c.b16 %v1792, %v1787
  %v2533 = vpack.c.b16 %v1793, %v1788
  %v2534 = vpack.c.b16 %v1799, %v1794
  %v2535 = vpack.c.b16 %v1800, %v1795
  %v2536 = vpack.c.b16 %v1801, %v1796
  %v2537 = vpack.c.b16 %v1802, %v1797
  %v2538 = vpack.c.b16 %v1803, %v1798
  %v2539 = vpack.c.b16 %v1809, %v1804
  %v2540 = vpack.c.b16 %v1810, %v1805
  %v2541 = vpack.c.b16 %v1811, %v1806
  %v2542 = vpack.c.b16 %v1812, %v1807
  %v2543 = vpack.c.b16 %v1813, %v1808
  %v2544 = vpack.c.b16 %v1819, %v1814
  %v2545 = vpack.c.b16 %v1820, %v1815
  %v2546 = vpack.c.b16 %v1821, %v1816
  %v2547 = vpack.c.b16 %v1822, %v1817
  %v2548 = vpack.c.b16 %v1823, %v1818
  %v2549 = vpack.c.b16 %v1829, %v1824
  %v2550 = vpack.c.b16 %v1830, %v1825
  %v2551 = vpack.c.b16 %v1831, %v1826
  %v2552 = vpack.c.b16 %v1832, %v1827
  %v2553 = vpack.c.b16 %v1833, %v1828
  %v2554 = vpack.c.b16 %v1839, %v1834
  %v2555 = vpack.c.b16 %v1840, %v1835
  %v2556 = vpack.c.b16 %v1841, %v1836
  %v2557 = vpack.c.b16 %v1842, %v1837
  %v2558 = vpack.c.b16 %v1843, %v1838
  %v2559 = vpack.c.b16 %v1849, %v1844
  %v2560 = vpack.c.b16 %v1850, %v1845
  %v2561 = vpack.c.b16 %v1851, %v1846
  %v2562 = vpack.c.b16 %v1852, %v1847
  %v2563 = vpack.c.b16 %v1853, %v1848
  %v2564 = vpack.c.b16 %v1859, %v1854
  %v2565 = vpack.c.b16 %v1860, %v1855
  %v2566 = vpack.c.b16 %v1861, %v1856
  %v2567 = vpack.c.b16 %v1862, %v1857
  %v2568 = vpack.c.b16 %v1863, %v1858
  %v2569 = vpack.c.b16 %v1869, %v1864
  %v2570 = vpack.c.b16 %v1870, %v1865
  %v2571 = vpack.c.b16 %v1871, %v1866
  %v2572 = vpack.c.b16 %v1872, %v1867
  %v2573 = vpack.c.b16 %v1873, %v1868
  %v2574 = vpack.c.b16 %v1879, %v1874
  %v2575 = vpack.c.b16 %v1880, %v1875
  %v2576 = vpack.c.b16 %v1881, %v1876
  %v2577 = vpack.c.b16 %v1882, %v1877
  %v2578 = vpack.c.b16 %v1883, %v1878
  %v2579 = vpack.c.b16 %v1889, %v1884
  %v2580 = vpack.c.b16 %v1890, %v1885
  %v2581 = vpack.c.b16 %v1891, %v1886
  %v2582 = vpack.c.b16 %v1892, %v1887
  %v2583 = vpack.c.b16 %v1893, %v1888
  %v2584 = vpack.c.b16 %v1899, %v1894
  %v2585 = vpack.c.b16 %v1900, %v1895
  %v2586 = vpack.c.b16 %v1901, %v1896
  %v2587 = vpack.c.b16 %v1902, %v1897
  %v2588 = vpack.c.b16 %v1903, %v1898
  %v2589 = vpack.c.b16 %v1909, %v1904
  %v2590 = vpack.c.b16 %v1910, %v1905
  %v2591 = vpack.c.b16 %v1911, %v1906
  %v2592 = vpack.c.b16 %v1912, %v1907
  %v2593 = vpack.c.b16 %v1913, %v1908
  %v2594 = vpack.c.b16 %v1919, %v1914
  %v2595 = vpack.c.b16 %v1920, %v1915
  %v2596 = vpack.c.b16 %v1921, %v1916
  %v2597 = vpack.c.b16 %v1922, %v1917
  %v2598 = vpack.c.b16 %v1923, %v1918
  %v2599 = vpack.c.b16 %v1929, %v1924
  %v2600 = vpack.c.b16 %v1930, %v1925
  %v2601 = vpack.c.b16 %v1931, %v1926
  %v2602 = vpack.c.b16 %v1932, %v1927
  %v2603 = vpack.c.b16 %v1933, %v1928
  %v2604 = vpack.c.b16 %v1939, %v1934
  %v2605 = vpack.c.b16 %v1940, %v1935
  %v2606 = vpack.c.b16 %v1941, %v1936
  %v2607 = vpack.c.b16 %v1942, %v1937
  %v2608 = vpack.c.b16 %v1943, %v1938
  %v2609 = vpack.c.b16 %v1949, %v1944
  %v2610 = vpack.c.b16 %v1950, %v1945
  %v2611 = vpack.c.b16 %v1951, %v1946
  %v2612 = vpack.c.b16 %v1952, %v1947
  %v2613 = vpack.c.b16 %v1953, %v1948
  %v2614 = vpack.c.b16 %v1959, %v1954
  %v2615 = vpack.c.b16 %v1960, %v1955
  %v2616 = vpack.c.b16 %v1961, %v1956
  %v2617 = vpack.c.b16 %v1962, %v1957
  %v2618 = vpack.c.b16 %v1963, %v1958
  %v2619 = vpack.c.b16 %v1969, %v1964
  %v2620 = vpack.c.b16 %v1970, %v1965
  %v2621 = vpack.c.b16 %v1971, %v1966
  %v2622 = vpack.c.b16 %v1972, %v1967
  %v2623 = vpack.c.b16 %v1973, %v1968
  %v2624 = vpack.c.b16 %v1979, %v1974
  %v2625 = vpack.c.b16 %v1980, %v1975
  %v2626 = vpack.c.b16 %v1981, %v1976
  %v2627 = vpack.c.b16 %v1982, %v1977
  %v2628 = vpack.c.b16 %v1983, %v1978
  %v2629 = vpack.c.b16 %v1989, %v1984
  %v2630 = vpack.c.b16 %v1990, %v1985
  %v2631 = vpack.c.b16 %v1991, %v1986
  %v2632 = vpack.c.b16 %v1992, %v1987
  %v2633 = vpack.c.b16 %v1993, %v1988
  %v2634 = vpack.c.b16 %v1999, %v1994
  %v2635 = vpack.c.b16 %v2000, %v1995
  %v2636 = vpack.c.b16 %v2001, %v1996
  %v2637 = vpack.c.b16 %v2002, %v1997
  %v2638 = vpack.c.b16 %v2003, %v1998
  %v2639 = vpack.c.b16 %v2009, %v2004
  %v2640 = vpack.c.b16 %v2010, %v2005
  %v2641 = vpack.c.b16 %v2011, %v2006
  %v2642 = vpack.c.b16 %v2012, %v2007
  %v2643 = vpack.c.b16 %v2013, %v2008
  %v2644 = vpack.c.b16 %v2019, %v2014
  %v2645 = vpack.c.b16 %v2020, %v2015
  %v2646 = vpack.c.b16 %v2021, %v2016
  %v2647 = vpack.c.b16 %v2022, %v2017
  %v2648 = vpack.c.b16 %v2023, %v2018
  %v2649 = vpack.c.b16 %v2029, %v2024
  %v2650 = vpack.c.b16 %v2030, %v2025
  %v2651 = vpack.c.b16 %v2031, %v2026
  %v2652 = vpack.c.b16 %v2032, %v2027
  %v2653 = vpack.c.b16 %v2033, %v2028
  %v2654 = vpack.c.b16 %v2039, %v2034
  %v2655 = vpack.c.b16 %v2040, %v2035
  %v2656 = vpack.c.b16 %v2041, %v2036
  %v2657 = vpack.c.b16 %v2042, %v2037
  %v2658 = vpack.c.b16 %v2043, %v2038
  %v2659 = vpack.c.b16 %v2049, %v2044
  %v2660 = vpack.c.b16 %v2050, %v2045
  %v2661 = vpack.c.b16 %v2051, %v2046
  %v2662 = vpack.c.b16 %v2052, %v2047
  %v2663 = vpack.c.b16 %v2053, %v2048
  %v2664 = vpack.c.b16 %v2059, %v2054
  %v2665 = vpack.c.b16 %v2060, %v2055
  %v2666 = vpack.c.b16 %v2061, %v2056
  %v2667 = vpack.c.b16 %v2062, %v2057
  %v2668 = vpack.c.b16 %v2063, %v2058
  %v2669 = vpack.c.b16 %v2069, %v2064
  %v2670 = vpack.c.b16 %v2070, %v2065
  %v2671 = vpack.c.b16 %v2071, %v2066
  %v2672 = vpack.c.b16 %v2072, %v2067
  %v2673 = vpack.c.b16 %v2073, %v2068
  %v2674 = vpack.c.b16 %v2079, %v2074
  %v2675 = vpack.c.b16 %v2080, %v2075
  %v2676 = vpack.c.b16 %v2081, %v2076
  %v2677 = vpack.c.b16 %v2082, %v2077
  %v2678 = vpack.c.b16 %v2083, %v2078
  %v2679 = vpack.c.b16 %v2089, %v2084
  %v2680 = vpack.c.b16 %v2090, %v2085
  %v2681 = vpack.c.b16 %v2091, %v2086
  %v2682 = vpack.c.b16 %v2092, %v2087
  %v2683 = vpack.c.b16 %v2093, %v2088
  %v2684 = vpack.c.b16 %v2099, %v2094
  %v2685 = vpack.c.b16 %v2100, %v2095
  %v2686 = vpack.c.b16 %v2101, %v2096
  %v2687 = vpack.c.b16 %v2102, %v2097
  %v2688 = vpack.c.b16 %v2103, %v2098
  %v2689 = vpack.c.b16 %v2109, %v2104
  %v2690 = vpack.c.b16 %v2110, %v2105
  %v2691 = vpack.c.b16 %v2111, %v2106
  %v2692 = vpack.c.b16 %v2112, %v2107
  %v2693 = vpack.c.b16 %v2113, %v2108
  %v2694 = vpack.c.b16 %v2119, %v2114
  %v2695 = vpack.c.b16 %v2120, %v2115
  %v2696 = vpack.c.b16 %v2121, %v2116
  %v2697 = vpack.c.b16 %v2122, %v2117
  %v2698 = vpack.c.b16 %v2123, %v2118
  %v2699 = vpack.c.b16 %v2129, %v2124
  %v2700 = vpack.c.b16 %v2130, %v2125
  %v2701 = vpack.c.b16 %v2131, %v2126
  %v2702 = vpack.c.b16 %v2132, %v2127
  %v2703 = vpack.c.b16 %v2133, %v2128
  %v2704 = vpack.c.b16 %v2139, %v2134
  %v2705 = vpack.c.b16 %v2140, %v2135
  %v2706 = vpack.c.b16 %v2141, %v2136
  %v2707 = vpack.c.b16 %v2142, %v2137
  %v2708 = vpack.c.b16 %v2143, %v2138
  %v2709 = vpack.c.b16 %v2149, %v2144
  %v2710 = vpack.c.b16 %v2150, %v2145
  %v2711 = vpack.c.b16 %v2151, %v2146
  %v2712 = vpack.c.b16 %v2152, %v2147
  %v2713 = vpack.c.b16 %v2153, %v2148
  %v2714 = vpack.c.b16 %v2159, %v2154
  %v2715 = vpack.c.b16 %v2160, %v2155
  %v2716 = vpack.c.b16 %v2161, %v2156
  %v2717 = vpack.c.b16 %v2162, %v2157
  %v2718 = vpack.c.b16 %v2163, %v2158
  %v2719 = vpack.c.b16 %v2169, %v2164
  %v2720 = vpack.c.b16 %v2170, %v2165
  %v2721 = vpack.c.b16 %v2171, %v2166
  %v2722 = vpack.c.b16 %v2172, %v2167
  %v2723 = vpack.c.b16 %v2173, %v2168
  %v2724 = vpack.c.b16 %v2179, %v2174
  %v2725 = vpack.c.b16 %v2180, %v2175
  %v2726 = vpack.c.b16 %v2181, %v2176
  %v2727 = vpack.c.b16 %v2182, %v2177
  %v2728 = vpack.c.b16 %v2183, %v2178
  %v2729 = vpack.c.b16 %v2189, %v2184
  %v2730 = vpack.c.b16 %v2190, %v2185
  %v2731 = vpack.c.b16 %v2191, %v2186
  %v2732 = vpack.c.b16 %v2192, %v2187
  %v2733 = vpack.c.b16 %v2193, %v2188
  %v2734 = vpack.c.b16 %v2199, %v2194
  %v2735 = vpack.c.b16 %v2200, %v2195
  %v2736 = vpack.c.b16 %v2201, %v2196
  %v2737 = vpack.c.b16 %v2202, %v2197
  %v2738 = vpack.c.b16 %v2203, %v2198
  %v2739 = vpack.c.b16 %v2209, %v2204
  %v2740 = vpack.c.b16 %v2210, %v2205
  %v2741 = vpack.c.b16 %v2211, %v2206
  %v2742 = vpack.c.b16 %v2212, %v2207
  %v2743 = vpack.c.b16 %v2213, %v2208
  %v2744 = vpack.c.b16 %v2219, %v2214
  %v2745 = vpack.c.b16 %v2220, %v2215
  %v2746 = vpack.c.b16 %v2221, %v2216
  %v2747 = vpack.c.b16 %v2222, %v2217
  %v2748 = vpack.c.b16 %v2223, %v2218
  %v2749 = vpack.c.b16 %v2229, %v2224
  %v2750 = vpack.c.b16 %v2230, %v2225
  %v2751 = vpack.c.b16 %v2231, %v2226
  %v2752 = vpack.c.b16 %v2232, %v2227
  %v2753 = vpack.c.b16 %v2233, %v2228
  %v2754 = vpack.c.b16 %v2239, %v2234
  %v2755 = vpack.c.b16 %v2240, %v2235
  %v2756 = vpack.c.b16 %v2241, %v2236
  %v2757 = vpack.c.b16 %v2242, %v2237
  %v2758 = vpack.c.b16 %v2243, %v2238
  %v2759 = vpack.c.b16 %v2249, %v2244
  %v2760 = vpack.c.b16 %v2250, %v2245
  %v2761 = vpack.c.b16 %v2251, %v2246
  %v2762 = vpack.c.b16 %v2252, %v2247
  %v2763 = vpack.c.b16 %v2253, %v2248
  %v2764 = vpack.c.b16 %v2259, %v2254
  %v2765 = vpack.c.b16 %v2260, %v2255
  %v2766 = vpack.c.b16 %v2261, %v2256
  %v2767 = vpack.c.b16 %v2262, %v2257
  %v2768 = vpack.c.b16 %v2263, %v2258
  %v2769 = vpack.c.b16 %v2269, %v2264
  %v2770 = vpack.c.b16 %v2270, %v2265
  %v2771 = vpack.c.b16 %v2271, %v2266
  %v2772 = vpack.c.b16 %v2272, %v2267
  %v2773 = vpack.c.b16 %v2273, %v2268
  %vm3274 = vcmask 523264
  %v3276 = vsel %vm3274, %v46, 0
  %3278 = vmatprep.subr.bf16.mxu0 %v2310
  %3279 = vmatpush1.bf16.msra.mxu0 %v2309
  %3280 = vmatprep.subr.bf16.mxu0 %v2305
  %3281 = vmatpush1.bf16.msra.mxu0 %v2304
  %3282 = vmatprep.subr.bf16.mxu0 %v2300
  %3283 = vmatpush1.bf16.msra.mxu0 %v2299
  %3284 = vmatprep.subr.bf16.mxu0 %v2295
  %3285 = vmatpush1.bf16.msra.mxu0 %v2294
  %3286 = vmatprep.subr.bf16.mxu0 %v2290
  %3287 = vmatpush1.bf16.msra.mxu0 %v2289
  %3288 = vmatprep.subr.bf16.mxu0 %v2285
  %3289 = vmatpush1.bf16.msra.mxu0 %v2284
  %3290 = vmatprep.subr.bf16.mxu0 %v2280
  %3291 = vmatpush1.bf16.msra.mxu0 %v2279
  %3292 = vmatprep.subr.bf16.mxu0 %v2275
  %3293 = vmatpush1.bf16.msra.mxu0 %v2274
  %3294 = vmatprep.subr.bf16.mxu0 %v2350
  %3295 = vmatpush2.bf16.msra.mxu0 %v2349
  %3296 = vmatprep.subr.bf16.mxu0 %v2345
  %3297 = vmatpush2.bf16.msra.mxu0 %v2344
  %3298 = vmatprep.subr.bf16.mxu0 %v2340
  %3299 = vmatpush2.bf16.msra.mxu0 %v2339
  %3300 = vmatprep.subr.bf16.mxu0 %v2335
  %3301 = vmatpush2.bf16.msra.mxu0 %v2334
  %3302 = vmatprep.subr.bf16.mxu0 %v2330
  %3303 = vmatpush2.bf16.msra.mxu0 %v2329
  %3304 = vmatprep.subr.bf16.mxu0 %v2325
  %3305 = vmatpush2.bf16.msra.mxu0 %v2324
  %3306 = vmatprep.subr.bf16.mxu0 %v2320
  %3307 = vmatpush2.bf16.msra.mxu0 %v2319
  %3308 = vmatprep.subr.bf16.mxu0 %v2315
  %3309 = vmatpush2.bf16.msra.mxu0 %v2314
  %3310 = vmatprep.mubr.bf16.mxu0 %v35
  %3311 = vmatmul.mubr.bf16.gmra.mxu0 %v34
  %v3312 = vpop.f32.mrf.mxu0
  %v3313 = vadd.f32 %v652, %v3312
  %v3314 = vpop.f32.mrf.mxu0
  %v3315 = vadd.f32 %v656, %v3314
  %v3316 = vpop.f32.mrf.mxu0
  %v3317 = vpop.f32.mrf.mxu0
  %3318 = vdwg.mxu0
  %3319 = vmatprep.subr.bf16.mxu0 %v2390
  %3320 = vmatpush1.bf16.msra.mxu0 %v2389
  %3321 = vmatprep.subr.bf16.mxu0 %v2385
  %3322 = vmatpush1.bf16.msra.mxu0 %v2384
  %3323 = vmatprep.subr.bf16.mxu0 %v2380
  %3324 = vmatpush1.bf16.msra.mxu0 %v2379
  %3325 = vmatprep.subr.bf16.mxu0 %v2375
  %3326 = vmatpush1.bf16.msra.mxu0 %v2374
  %3327 = vmatprep.subr.bf16.mxu0 %v2370
  %3328 = vmatpush1.bf16.msra.mxu0 %v2369
  %3329 = vmatprep.subr.bf16.mxu0 %v2365
  %3330 = vmatpush1.bf16.msra.mxu0 %v2364
  %3331 = vmatprep.subr.bf16.mxu0 %v2360
  %3332 = vmatpush1.bf16.msra.mxu0 %v2359
  %3333 = vmatprep.subr.bf16.mxu0 %v2355
  %3334 = vmatpush1.bf16.msra.mxu0 %v2354
  %3335 = vmatprep.subr.bf16.mxu0 %v2430
  %3336 = vmatpush2.bf16.msra.mxu0 %v2429
  %3337 = vmatprep.subr.bf16.mxu0 %v2425
  %3338 = vmatpush2.bf16.msra.mxu0 %v2424
  %3339 = vmatprep.subr.bf16.mxu0 %v2420
  %3340 = vmatpush2.bf16.msra.mxu0 %v2419
  %3341 = vmatprep.subr.bf16.mxu0 %v2415
  %3342 = vmatpush2.bf16.msra.mxu0 %v2414
  %3343 = vmatprep.subr.bf16.mxu0 %v2410
  %3344 = vmatpush2.bf16.msra.mxu0 %v2409
  %3345 = vmatprep.subr.bf16.mxu0 %v2405
  %3346 = vmatpush2.bf16.msra.mxu0 %v2404
  %3347 = vmatprep.subr.bf16.mxu0 %v2400
  %3348 = vmatpush2.bf16.msra.mxu0 %v2399
  %3349 = vmatprep.subr.bf16.mxu0 %v2395
  %3350 = vmatpush2.bf16.msra.mxu0 %v2394
  %3351 = vmatprep.mubr.bf16.mxu0 %v37
  %3352 = vmatmul.mubr.bf16.gmra.mxu0 %v36
  %v3353 = vpop.f32.mrf.mxu0
  %v3354 = vadd.f32 %v3313, %v3353
  %v3355 = vpop.f32.mrf.mxu0
  %v3356 = vadd.f32 %v3315, %v3355
  %v3357 = vpop.f32.mrf.mxu0
  %v3358 = vpop.f32.mrf.mxu0
  %3359 = vdwg.mxu0
  %3360 = vmatprep.subr.bf16.mxu0 %v2470
  %3361 = vmatpush1.bf16.msra.mxu0 %v2469
  %3362 = vmatprep.subr.bf16.mxu0 %v2465
  %3363 = vmatpush1.bf16.msra.mxu0 %v2464
  %3364 = vmatprep.subr.bf16.mxu0 %v2460
  %3365 = vmatpush1.bf16.msra.mxu0 %v2459
  %3366 = vmatprep.subr.bf16.mxu0 %v2455
  %3367 = vmatpush1.bf16.msra.mxu0 %v2454
  %3368 = vmatprep.subr.bf16.mxu0 %v2450
  %3369 = vmatpush1.bf16.msra.mxu0 %v2449
  %3370 = vmatprep.subr.bf16.mxu0 %v2445
  %3371 = vmatpush1.bf16.msra.mxu0 %v2444
  %3372 = vmatprep.subr.bf16.mxu0 %v2440
  %3373 = vmatpush1.bf16.msra.mxu0 %v2439
  %3374 = vmatprep.subr.bf16.mxu0 %v2435
  %3375 = vmatpush1.bf16.msra.mxu0 %v2434
  %3376 = vmatprep.subr.bf16.mxu0 %v2510
  %3377 = vmatpush2.bf16.msra.mxu0 %v2509
  %3378 = vmatprep.subr.bf16.mxu0 %v2505
  %3379 = vmatpush2.bf16.msra.mxu0 %v2504
  %3380 = vmatprep.subr.bf16.mxu0 %v2500
  %3381 = vmatpush2.bf16.msra.mxu0 %v2499
  %3382 = vmatprep.subr.bf16.mxu0 %v2495
  %3383 = vmatpush2.bf16.msra.mxu0 %v2494
  %3384 = vmatprep.subr.bf16.mxu0 %v2490
  %3385 = vmatpush2.bf16.msra.mxu0 %v2489
  %3386 = vmatprep.subr.bf16.mxu0 %v2485
  %3387 = vmatpush2.bf16.msra.mxu0 %v2484
  %3388 = vmatprep.subr.bf16.mxu0 %v2480
  %3389 = vmatpush2.bf16.msra.mxu0 %v2479
  %3390 = vmatprep.subr.bf16.mxu0 %v2475
  %3391 = vmatpush2.bf16.msra.mxu0 %v2474
  %3392 = vmatprep.mubr.bf16.mxu0 %v39
  %3393 = vmatmul.mubr.bf16.gmra.mxu0 %v38
  %v3394 = vpop.f32.mrf.mxu0
  %v3395 = vadd.f32 %v3354, %v3394
  %v3396 = vpop.f32.mrf.mxu0
  %v3397 = vadd.f32 %v3356, %v3396
  %v3398 = vpop.f32.mrf.mxu0
  %v3399 = vpop.f32.mrf.mxu0
  %3400 = vdwg.mxu0
  %3401 = vmatprep.subr.bf16.mxu0 %v2550
  %3402 = vmatpush1.bf16.msra.mxu0 %v2549
  %3403 = vmatprep.subr.bf16.mxu0 %v2545
  %3404 = vmatpush1.bf16.msra.mxu0 %v2544
  %3405 = vmatprep.subr.bf16.mxu0 %v2540
  %3406 = vmatpush1.bf16.msra.mxu0 %v2539
  %3407 = vmatprep.subr.bf16.mxu0 %v2535
  %3408 = vmatpush1.bf16.msra.mxu0 %v2534
  %3409 = vmatprep.subr.bf16.mxu0 %v2530
  %3410 = vmatpush1.bf16.msra.mxu0 %v2529
  %3411 = vmatprep.subr.bf16.mxu0 %v2525
  %3412 = vmatpush1.bf16.msra.mxu0 %v2524
  %3413 = vmatprep.subr.bf16.mxu0 %v2520
  %3414 = vmatpush1.bf16.msra.mxu0 %v2519
  %3415 = vmatprep.subr.bf16.mxu0 %v2515
  %3416 = vmatpush1.bf16.msra.mxu0 %v2514
  %3417 = vmatprep.subr.bf16.mxu0 %v2590
  %3418 = vmatpush2.bf16.msra.mxu0 %v2589
  %3419 = vmatprep.subr.bf16.mxu0 %v2585
  %3420 = vmatpush2.bf16.msra.mxu0 %v2584
  %3421 = vmatprep.subr.bf16.mxu0 %v2580
  %3422 = vmatpush2.bf16.msra.mxu0 %v2579
  %3423 = vmatprep.subr.bf16.mxu0 %v2575
  %3424 = vmatpush2.bf16.msra.mxu0 %v2574
  %3425 = vmatprep.subr.bf16.mxu0 %v2570
  %3426 = vmatpush2.bf16.msra.mxu0 %v2569
  %3427 = vmatprep.subr.bf16.mxu0 %v2565
  %3428 = vmatpush2.bf16.msra.mxu0 %v2564
  %3429 = vmatprep.subr.bf16.mxu0 %v2560
  %3430 = vmatpush2.bf16.msra.mxu0 %v2559
  %3431 = vmatprep.subr.bf16.mxu0 %v2555
  %3432 = vmatpush2.bf16.msra.mxu0 %v2554
  %3433 = vmatprep.mubr.bf16.mxu0 %v41
  %3434 = vmatmul.mubr.bf16.gmra.mxu0 %v40
  %v3435 = vpop.f32.mrf.mxu0
  %v3436 = vadd.f32 %v3395, %v3435
  %v3437 = vpop.f32.mrf.mxu0
  %v3438 = vadd.f32 %v3397, %v3437
  %v3439 = vpop.f32.mrf.mxu0
  %v3440 = vpop.f32.mrf.mxu0
  %3441 = vdwg.mxu0
  %3442 = vmatprep.subr.bf16.mxu0 %v2630
  %3443 = vmatpush1.bf16.msra.mxu0 %v2629
  %3444 = vmatprep.subr.bf16.mxu0 %v2625
  %3445 = vmatpush1.bf16.msra.mxu0 %v2624
  %3446 = vmatprep.subr.bf16.mxu0 %v2620
  %3447 = vmatpush1.bf16.msra.mxu0 %v2619
  %3448 = vmatprep.subr.bf16.mxu0 %v2615
  %3449 = vmatpush1.bf16.msra.mxu0 %v2614
  %3450 = vmatprep.subr.bf16.mxu0 %v2610
  %3451 = vmatpush1.bf16.msra.mxu0 %v2609
  %3452 = vmatprep.subr.bf16.mxu0 %v2605
  %3453 = vmatpush1.bf16.msra.mxu0 %v2604
  %3454 = vmatprep.subr.bf16.mxu0 %v2600
  %3455 = vmatpush1.bf16.msra.mxu0 %v2599
  %3456 = vmatprep.subr.bf16.mxu0 %v2595
  %3457 = vmatpush1.bf16.msra.mxu0 %v2594
  %3458 = vmatprep.subr.bf16.mxu0 %v2670
  %3459 = vmatpush2.bf16.msra.mxu0 %v2669
  %3460 = vmatprep.subr.bf16.mxu0 %v2665
  %3461 = vmatpush2.bf16.msra.mxu0 %v2664
  %3462 = vmatprep.subr.bf16.mxu0 %v2660
  %3463 = vmatpush2.bf16.msra.mxu0 %v2659
  %3464 = vmatprep.subr.bf16.mxu0 %v2655
  %3465 = vmatpush2.bf16.msra.mxu0 %v2654
  %3466 = vmatprep.subr.bf16.mxu0 %v2650
  %3467 = vmatpush2.bf16.msra.mxu0 %v2649
  %3468 = vmatprep.subr.bf16.mxu0 %v2645
  %3469 = vmatpush2.bf16.msra.mxu0 %v2644
  %3470 = vmatprep.subr.bf16.mxu0 %v2640
  %3471 = vmatpush2.bf16.msra.mxu0 %v2639
  %3472 = vmatprep.subr.bf16.mxu0 %v2635
  %3473 = vmatpush2.bf16.msra.mxu0 %v2634
  %3474 = vmatprep.mubr.bf16.mxu0 %v43
  %3475 = vmatmul.mubr.bf16.gmra.mxu0 %v42
  %v3476 = vpop.f32.mrf.mxu0
  %v3477 = vadd.f32 %v3436, %v3476
  %v3478 = vpop.f32.mrf.mxu0
  %v3479 = vadd.f32 %v3438, %v3478
  %v3480 = vpop.f32.mrf.mxu0
  %v3481 = vpop.f32.mrf.mxu0
  %3482 = vdwg.mxu0
  %3483 = vmatprep.subr.bf16.mxu0 %v2710
  %3484 = vmatpush1.bf16.msra.mxu0 %v2709
  %3485 = vmatprep.subr.bf16.mxu0 %v2705
  %3486 = vmatpush1.bf16.msra.mxu0 %v2704
  %3487 = vmatprep.subr.bf16.mxu0 %v2700
  %3488 = vmatpush1.bf16.msra.mxu0 %v2699
  %3489 = vmatprep.subr.bf16.mxu0 %v2695
  %3490 = vmatpush1.bf16.msra.mxu0 %v2694
  %3491 = vmatprep.subr.bf16.mxu0 %v2690
  %3492 = vmatpush1.bf16.msra.mxu0 %v2689
  %3493 = vmatprep.subr.bf16.mxu0 %v2685
  %3494 = vmatpush1.bf16.msra.mxu0 %v2684
  %3495 = vmatprep.subr.bf16.mxu0 %v2680
  %3496 = vmatpush1.bf16.msra.mxu0 %v2679
  %3497 = vmatprep.subr.bf16.mxu0 %v2675
  %3498 = vmatpush1.bf16.msra.mxu0 %v2674
  %3499 = vmatprep.subr.bf16.mxu0 %v2750
  %3500 = vmatpush2.bf16.msra.mxu0 %v2749
  %3501 = vmatprep.subr.bf16.mxu0 %v2745
  %3502 = vmatpush2.bf16.msra.mxu0 %v2744
  %3503 = vmatprep.subr.bf16.mxu0 %v2740
  %3504 = vmatpush2.bf16.msra.mxu0 %v2739
  %3505 = vmatprep.subr.bf16.mxu0 %v2735
  %3506 = vmatpush2.bf16.msra.mxu0 %v2734
  %3507 = vmatprep.subr.bf16.mxu0 %v2730
  %3508 = vmatpush2.bf16.msra.mxu0 %v2729
  %3509 = vmatprep.subr.bf16.mxu0 %v2725
  %3510 = vmatpush2.bf16.msra.mxu0 %v2724
  %3511 = vmatprep.subr.bf16.mxu0 %v2720
  %3512 = vmatpush2.bf16.msra.mxu0 %v2719
  %3513 = vmatprep.subr.bf16.mxu0 %v2715
  %3514 = vmatpush2.bf16.msra.mxu0 %v2714
  %3515 = vmatprep.mubr.bf16.mxu0 %v45
  %3516 = vmatmul.mubr.bf16.gmra.mxu0 %v44
  %v3517 = vpop.f32.mrf.mxu0
  %v3518 = vadd.f32 %v3477, %v3517
  %v3519 = vpop.f32.mrf.mxu0
  %v3520 = vadd.f32 %v3479, %v3519
  %v3521 = vpop.f32.mrf.mxu0
  %v3522 = vpop.f32.mrf.mxu0
  %3523 = vdwg.mxu0
  %3524 = vmatprep.subr.bf16.mxu0 0
  %3525 = vmatpush1.bf16.msra.mxu0 0
  %3526 = vmatprep.subr.bf16.mxu0 0
  %3527 = vmatpush1.bf16.msra.mxu0 0
  %3528 = vmatprep.subr.bf16.mxu0 0
  %3529 = vmatpush1.bf16.msra.mxu0 0
  %3530 = vmatprep.subr.bf16.mxu0 0
  %3531 = vmatpush1.bf16.msra.mxu0 0
  %3532 = vmatprep.subr.bf16.mxu0 %v2770
  %3533 = vmatpush1.bf16.msra.mxu0 %v2769
  %3534 = vmatprep.subr.bf16.mxu0 %v2765
  %3535 = vmatpush1.bf16.msra.mxu0 %v2764
  %3536 = vmatprep.subr.bf16.mxu0 %v2760
  %3537 = vmatpush1.bf16.msra.mxu0 %v2759
  %3538 = vmatprep.subr.bf16.mxu0 %v2755
  %3539 = vmatpush1.bf16.msra.mxu0 %v2754
  %3540 = vmatprep.subr.bf16.mxu0 0
  %3541 = vmatpush2.bf16.msra.mxu0 0
  %3542 = vmatprep.subr.bf16.mxu0 0
  %3543 = vmatpush2.bf16.msra.mxu0 0
  %3544 = vmatprep.subr.bf16.mxu0 0
  %3545 = vmatpush2.bf16.msra.mxu0 0
  %3546 = vmatprep.subr.bf16.mxu0 0
  %3547 = vmatpush2.bf16.msra.mxu0 0
  %3548 = vmatprep.subr.bf16.mxu0 0
  %3549 = vmatpush2.bf16.msra.mxu0 0
  %3550 = vmatprep.subr.bf16.mxu0 0
  %3551 = vmatpush2.bf16.msra.mxu0 0
  %3552 = vmatprep.subr.bf16.mxu0 0
  %3553 = vmatpush2.bf16.msra.mxu0 0
  %3554 = vmatprep.subr.bf16.mxu0 0
  %3555 = vmatpush2.bf16.msra.mxu0 0
  %3556 = vmatprep.mubr.bf16.mxu0 0
  %3557 = vmatmul.mubr.bf16.gmra.mxu0 %v3276
  %v3558 = vpop.f32.mrf.mxu0
  %v3559 = vadd.f32 %v3518, %v3558
  %v3560 = vpop.f32.mrf.mxu0
  %v3561 = vadd.f32 %v3520, %v3560
  %v3562 = vpop.f32.mrf.mxu0
  %v3563 = vpop.f32.mrf.mxu0
  %3564 = vdwg.mxu0
  %3565 = vmatprep.subr.bf16.mxu0 %v2312
  %3566 = vmatpush1.bf16.msra.mxu0 %v2311
  %3567 = vmatprep.subr.bf16.mxu0 %v2307
  %3568 = vmatpush1.bf16.msra.mxu0 %v2306
  %3569 = vmatprep.subr.bf16.mxu0 %v2302
  %3570 = vmatpush1.bf16.msra.mxu0 %v2301
  %3571 = vmatprep.subr.bf16.mxu0 %v2297
  %3572 = vmatpush1.bf16.msra.mxu0 %v2296
  %3573 = vmatprep.subr.bf16.mxu0 %v2292
  %3574 = vmatpush1.bf16.msra.mxu0 %v2291
  %3575 = vmatprep.subr.bf16.mxu0 %v2287
  %3576 = vmatpush1.bf16.msra.mxu0 %v2286
  %3577 = vmatprep.subr.bf16.mxu0 %v2282
  %3578 = vmatpush1.bf16.msra.mxu0 %v2281
  %3579 = vmatprep.subr.bf16.mxu0 %v2277
  %3580 = vmatpush1.bf16.msra.mxu0 %v2276
  %3581 = vmatprep.subr.bf16.mxu0 %v2352
  %3582 = vmatpush2.bf16.msra.mxu0 %v2351
  %3583 = vmatprep.subr.bf16.mxu0 %v2347
  %3584 = vmatpush2.bf16.msra.mxu0 %v2346
  %3585 = vmatprep.subr.bf16.mxu0 %v2342
  %3586 = vmatpush2.bf16.msra.mxu0 %v2341
  %3587 = vmatprep.subr.bf16.mxu0 %v2337
  %3588 = vmatpush2.bf16.msra.mxu0 %v2336
  %3589 = vmatprep.subr.bf16.mxu0 %v2332
  %3590 = vmatpush2.bf16.msra.mxu0 %v2331
  %3591 = vmatprep.subr.bf16.mxu0 %v2327
  %3592 = vmatpush2.bf16.msra.mxu0 %v2326
  %3593 = vmatprep.subr.bf16.mxu0 %v2322
  %3594 = vmatpush2.bf16.msra.mxu0 %v2321
  %3595 = vmatprep.subr.bf16.mxu0 %v2317
  %3596 = vmatpush2.bf16.msra.mxu0 %v2316
  %3597 = vmatprep.mubr.bf16.mxu0 %v35
  %3598 = vmatmul.mubr.bf16.gmra.mxu0 %v34
  %v3599 = vpop.f32.mrf.mxu0
  %v3600 = vadd.f32 %v660, %v3599
  %v3601 = vpop.f32.mrf.mxu0
  %v3602 = vadd.f32 %v664, %v3601
  %v3603 = vpop.f32.mrf.mxu0
  %v3604 = vpop.f32.mrf.mxu0
  %3605 = vdwg.mxu0
  %3606 = vmatprep.subr.bf16.mxu0 %v2392
  %3607 = vmatpush1.bf16.msra.mxu0 %v2391
  %3608 = vmatprep.subr.bf16.mxu0 %v2387
  %3609 = vmatpush1.bf16.msra.mxu0 %v2386
  %3610 = vmatprep.subr.bf16.mxu0 %v2382
  %3611 = vmatpush1.bf16.msra.mxu0 %v2381
  %3612 = vmatprep.subr.bf16.mxu0 %v2377
  %3613 = vmatpush1.bf16.msra.mxu0 %v2376
  %3614 = vmatprep.subr.bf16.mxu0 %v2372
  %3615 = vmatpush1.bf16.msra.mxu0 %v2371
  %3616 = vmatprep.subr.bf16.mxu0 %v2367
  %3617 = vmatpush1.bf16.msra.mxu0 %v2366
  %3618 = vmatprep.subr.bf16.mxu0 %v2362
  %3619 = vmatpush1.bf16.msra.mxu0 %v2361
  %3620 = vmatprep.subr.bf16.mxu0 %v2357
  %3621 = vmatpush1.bf16.msra.mxu0 %v2356
  %3622 = vmatprep.subr.bf16.mxu0 %v2432
  %3623 = vmatpush2.bf16.msra.mxu0 %v2431
  %3624 = vmatprep.subr.bf16.mxu0 %v2427
  %3625 = vmatpush2.bf16.msra.mxu0 %v2426
  %3626 = vmatprep.subr.bf16.mxu0 %v2422
  %3627 = vmatpush2.bf16.msra.mxu0 %v2421
  %3628 = vmatprep.subr.bf16.mxu0 %v2417
  %3629 = vmatpush2.bf16.msra.mxu0 %v2416
  %3630 = vmatprep.subr.bf16.mxu0 %v2412
  %3631 = vmatpush2.bf16.msra.mxu0 %v2411
  %3632 = vmatprep.subr.bf16.mxu0 %v2407
  %3633 = vmatpush2.bf16.msra.mxu0 %v2406
  %3634 = vmatprep.subr.bf16.mxu0 %v2402
  %3635 = vmatpush2.bf16.msra.mxu0 %v2401
  %3636 = vmatprep.subr.bf16.mxu0 %v2397
  %3637 = vmatpush2.bf16.msra.mxu0 %v2396
  %3638 = vmatprep.mubr.bf16.mxu0 %v37
  %3639 = vmatmul.mubr.bf16.gmra.mxu0 %v36
  %v3640 = vpop.f32.mrf.mxu0
  %v3641 = vadd.f32 %v3600, %v3640
  %v3642 = vpop.f32.mrf.mxu0
  %v3643 = vadd.f32 %v3602, %v3642
  %v3644 = vpop.f32.mrf.mxu0
  %v3645 = vpop.f32.mrf.mxu0
  %3646 = vdwg.mxu0
  %3647 = vmatprep.subr.bf16.mxu0 %v2472
  %3648 = vmatpush1.bf16.msra.mxu0 %v2471
  %3649 = vmatprep.subr.bf16.mxu0 %v2467
  %3650 = vmatpush1.bf16.msra.mxu0 %v2466
  %3651 = vmatprep.subr.bf16.mxu0 %v2462
  %3652 = vmatpush1.bf16.msra.mxu0 %v2461
  %3653 = vmatprep.subr.bf16.mxu0 %v2457
  %3654 = vmatpush1.bf16.msra.mxu0 %v2456
  %3655 = vmatprep.subr.bf16.mxu0 %v2452
  %3656 = vmatpush1.bf16.msra.mxu0 %v2451
  %3657 = vmatprep.subr.bf16.mxu0 %v2447
  %3658 = vmatpush1.bf16.msra.mxu0 %v2446
  %3659 = vmatprep.subr.bf16.mxu0 %v2442
  %3660 = vmatpush1.bf16.msra.mxu0 %v2441
  %3661 = vmatprep.subr.bf16.mxu0 %v2437
  %3662 = vmatpush1.bf16.msra.mxu0 %v2436
  %3663 = vmatprep.subr.bf16.mxu0 %v2512
  %3664 = vmatpush2.bf16.msra.mxu0 %v2511
  %3665 = vmatprep.subr.bf16.mxu0 %v2507
  %3666 = vmatpush2.bf16.msra.mxu0 %v2506
  %3667 = vmatprep.subr.bf16.mxu0 %v2502
  %3668 = vmatpush2.bf16.msra.mxu0 %v2501
  %3669 = vmatprep.subr.bf16.mxu0 %v2497
  %3670 = vmatpush2.bf16.msra.mxu0 %v2496
  %3671 = vmatprep.subr.bf16.mxu0 %v2492
  %3672 = vmatpush2.bf16.msra.mxu0 %v2491
  %3673 = vmatprep.subr.bf16.mxu0 %v2487
  %3674 = vmatpush2.bf16.msra.mxu0 %v2486
  %3675 = vmatprep.subr.bf16.mxu0 %v2482
  %3676 = vmatpush2.bf16.msra.mxu0 %v2481
  %3677 = vmatprep.subr.bf16.mxu0 %v2477
  %3678 = vmatpush2.bf16.msra.mxu0 %v2476
  %3679 = vmatprep.mubr.bf16.mxu0 %v39
  %3680 = vmatmul.mubr.bf16.gmra.mxu0 %v38
  %v3681 = vpop.f32.mrf.mxu0
  %v3682 = vadd.f32 %v3641, %v3681
  %v3683 = vpop.f32.mrf.mxu0
  %v3684 = vadd.f32 %v3643, %v3683
  %v3685 = vpop.f32.mrf.mxu0
  %v3686 = vpop.f32.mrf.mxu0
  %3687 = vdwg.mxu0
  %3688 = vmatprep.subr.bf16.mxu0 %v2552
  %3689 = vmatpush1.bf16.msra.mxu0 %v2551
  %3690 = vmatprep.subr.bf16.mxu0 %v2547
  %3691 = vmatpush1.bf16.msra.mxu0 %v2546
  %3692 = vmatprep.subr.bf16.mxu0 %v2542
  %3693 = vmatpush1.bf16.msra.mxu0 %v2541
  %3694 = vmatprep.subr.bf16.mxu0 %v2537
  %3695 = vmatpush1.bf16.msra.mxu0 %v2536
  %3696 = vmatprep.subr.bf16.mxu0 %v2532
  %3697 = vmatpush1.bf16.msra.mxu0 %v2531
  %3698 = vmatprep.subr.bf16.mxu0 %v2527
  %3699 = vmatpush1.bf16.msra.mxu0 %v2526
  %3700 = vmatprep.subr.bf16.mxu0 %v2522
  %3701 = vmatpush1.bf16.msra.mxu0 %v2521
  %3702 = vmatprep.subr.bf16.mxu0 %v2517
  %3703 = vmatpush1.bf16.msra.mxu0 %v2516
  %3704 = vmatprep.subr.bf16.mxu0 %v2592
  %3705 = vmatpush2.bf16.msra.mxu0 %v2591
  %3706 = vmatprep.subr.bf16.mxu0 %v2587
  %3707 = vmatpush2.bf16.msra.mxu0 %v2586
  %3708 = vmatprep.subr.bf16.mxu0 %v2582
  %3709 = vmatpush2.bf16.msra.mxu0 %v2581
  %3710 = vmatprep.subr.bf16.mxu0 %v2577
  %3711 = vmatpush2.bf16.msra.mxu0 %v2576
  %3712 = vmatprep.subr.bf16.mxu0 %v2572
  %3713 = vmatpush2.bf16.msra.mxu0 %v2571
  %3714 = vmatprep.subr.bf16.mxu0 %v2567
  %3715 = vmatpush2.bf16.msra.mxu0 %v2566
  %3716 = vmatprep.subr.bf16.mxu0 %v2562
  %3717 = vmatpush2.bf16.msra.mxu0 %v2561
  %3718 = vmatprep.subr.bf16.mxu0 %v2557
  %3719 = vmatpush2.bf16.msra.mxu0 %v2556
  %3720 = vmatprep.mubr.bf16.mxu0 %v41
  %3721 = vmatmul.mubr.bf16.gmra.mxu0 %v40
  %v3722 = vpop.f32.mrf.mxu0
  %v3723 = vadd.f32 %v3682, %v3722
  %v3724 = vpop.f32.mrf.mxu0
  %v3725 = vadd.f32 %v3684, %v3724
  %v3726 = vpop.f32.mrf.mxu0
  %v3727 = vpop.f32.mrf.mxu0
  %3728 = vdwg.mxu0
  %3729 = vmatprep.subr.bf16.mxu0 %v2632
  %3730 = vmatpush1.bf16.msra.mxu0 %v2631
  %3731 = vmatprep.subr.bf16.mxu0 %v2627
  %3732 = vmatpush1.bf16.msra.mxu0 %v2626
  %3733 = vmatprep.subr.bf16.mxu0 %v2622
  %3734 = vmatpush1.bf16.msra.mxu0 %v2621
  %3735 = vmatprep.subr.bf16.mxu0 %v2617
  %3736 = vmatpush1.bf16.msra.mxu0 %v2616
  %3737 = vmatprep.subr.bf16.mxu0 %v2612
  %3738 = vmatpush1.bf16.msra.mxu0 %v2611
  %3739 = vmatprep.subr.bf16.mxu0 %v2607
  %3740 = vmatpush1.bf16.msra.mxu0 %v2606
  %3741 = vmatprep.subr.bf16.mxu0 %v2602
  %3742 = vmatpush1.bf16.msra.mxu0 %v2601
  %3743 = vmatprep.subr.bf16.mxu0 %v2597
  %3744 = vmatpush1.bf16.msra.mxu0 %v2596
  %3745 = vmatprep.subr.bf16.mxu0 %v2672
  %3746 = vmatpush2.bf16.msra.mxu0 %v2671
  %3747 = vmatprep.subr.bf16.mxu0 %v2667
  %3748 = vmatpush2.bf16.msra.mxu0 %v2666
  %3749 = vmatprep.subr.bf16.mxu0 %v2662
  %3750 = vmatpush2.bf16.msra.mxu0 %v2661
  %3751 = vmatprep.subr.bf16.mxu0 %v2657
  %3752 = vmatpush2.bf16.msra.mxu0 %v2656
  %3753 = vmatprep.subr.bf16.mxu0 %v2652
  %3754 = vmatpush2.bf16.msra.mxu0 %v2651
  %3755 = vmatprep.subr.bf16.mxu0 %v2647
  %3756 = vmatpush2.bf16.msra.mxu0 %v2646
  %3757 = vmatprep.subr.bf16.mxu0 %v2642
  %3758 = vmatpush2.bf16.msra.mxu0 %v2641
  %3759 = vmatprep.subr.bf16.mxu0 %v2637
  %3760 = vmatpush2.bf16.msra.mxu0 %v2636
  %3761 = vmatprep.mubr.bf16.mxu0 %v43
  %3762 = vmatmul.mubr.bf16.gmra.mxu0 %v42
  %v3763 = vpop.f32.mrf.mxu0
  %v3764 = vadd.f32 %v3723, %v3763
  %v3765 = vpop.f32.mrf.mxu0
  %v3766 = vadd.f32 %v3725, %v3765
  %v3767 = vpop.f32.mrf.mxu0
  %v3768 = vpop.f32.mrf.mxu0
  %3769 = vdwg.mxu0
  %3770 = vmatprep.subr.bf16.mxu0 %v2712
  %3771 = vmatpush1.bf16.msra.mxu0 %v2711
  %3772 = vmatprep.subr.bf16.mxu0 %v2707
  %3773 = vmatpush1.bf16.msra.mxu0 %v2706
  %3774 = vmatprep.subr.bf16.mxu0 %v2702
  %3775 = vmatpush1.bf16.msra.mxu0 %v2701
  %3776 = vmatprep.subr.bf16.mxu0 %v2697
  %3777 = vmatpush1.bf16.msra.mxu0 %v2696
  %3778 = vmatprep.subr.bf16.mxu0 %v2692
  %3779 = vmatpush1.bf16.msra.mxu0 %v2691
  %3780 = vmatprep.subr.bf16.mxu0 %v2687
  %3781 = vmatpush1.bf16.msra.mxu0 %v2686
  %3782 = vmatprep.subr.bf16.mxu0 %v2682
  %3783 = vmatpush1.bf16.msra.mxu0 %v2681
  %3784 = vmatprep.subr.bf16.mxu0 %v2677
  %3785 = vmatpush1.bf16.msra.mxu0 %v2676
  %3786 = vmatprep.subr.bf16.mxu0 %v2752
  %3787 = vmatpush2.bf16.msra.mxu0 %v2751
  %3788 = vmatprep.subr.bf16.mxu0 %v2747
  %3789 = vmatpush2.bf16.msra.mxu0 %v2746
  %3790 = vmatprep.subr.bf16.mxu0 %v2742
  %3791 = vmatpush2.bf16.msra.mxu0 %v2741
  %3792 = vmatprep.subr.bf16.mxu0 %v2737
  %3793 = vmatpush2.bf16.msra.mxu0 %v2736
  %3794 = vmatprep.subr.bf16.mxu0 %v2732
  %3795 = vmatpush2.bf16.msra.mxu0 %v2731
  %3796 = vmatprep.subr.bf16.mxu0 %v2727
  %3797 = vmatpush2.bf16.msra.mxu0 %v2726
  %3798 = vmatprep.subr.bf16.mxu0 %v2722
  %3799 = vmatpush2.bf16.msra.mxu0 %v2721
  %3800 = vmatprep.subr.bf16.mxu0 %v2717
  %3801 = vmatpush2.bf16.msra.mxu0 %v2716
  %3802 = vmatprep.mubr.bf16.mxu0 %v45
  %3803 = vmatmul.mubr.bf16.gmra.mxu0 %v44
  %v3804 = vpop.f32.mrf.mxu0
  %v3805 = vadd.f32 %v3764, %v3804
  %v3806 = vpop.f32.mrf.mxu0
  %v3807 = vadd.f32 %v3766, %v3806
  %v3808 = vpop.f32.mrf.mxu0
  %v3809 = vpop.f32.mrf.mxu0
  %3810 = vdwg.mxu0
  %3811 = vmatprep.subr.bf16.mxu0 0
  %3812 = vmatpush1.bf16.msra.mxu0 0
  %3813 = vmatprep.subr.bf16.mxu0 0
  %3814 = vmatpush1.bf16.msra.mxu0 0
  %3815 = vmatprep.subr.bf16.mxu0 0
  %3816 = vmatpush1.bf16.msra.mxu0 0
  %3817 = vmatprep.subr.bf16.mxu0 0
  %3818 = vmatpush1.bf16.msra.mxu0 0
  %3819 = vmatprep.subr.bf16.mxu0 %v2772
  %3820 = vmatpush1.bf16.msra.mxu0 %v2771
  %3821 = vmatprep.subr.bf16.mxu0 %v2767
  %3822 = vmatpush1.bf16.msra.mxu0 %v2766
  %3823 = vmatprep.subr.bf16.mxu0 %v2762
  %3824 = vmatpush1.bf16.msra.mxu0 %v2761
  %3825 = vmatprep.subr.bf16.mxu0 %v2757
  %3826 = vmatpush1.bf16.msra.mxu0 %v2756
  %3827 = vmatprep.subr.bf16.mxu0 0
  %3828 = vmatpush2.bf16.msra.mxu0 0
  %3829 = vmatprep.subr.bf16.mxu0 0
  %3830 = vmatpush2.bf16.msra.mxu0 0
  %3831 = vmatprep.subr.bf16.mxu0 0
  %3832 = vmatpush2.bf16.msra.mxu0 0
  %3833 = vmatprep.subr.bf16.mxu0 0
  %3834 = vmatpush2.bf16.msra.mxu0 0
  %3835 = vmatprep.subr.bf16.mxu0 0
  %3836 = vmatpush2.bf16.msra.mxu0 0
  %3837 = vmatprep.subr.bf16.mxu0 0
  %3838 = vmatpush2.bf16.msra.mxu0 0
  %3839 = vmatprep.subr.bf16.mxu0 0
  %3840 = vmatpush2.bf16.msra.mxu0 0
  %3841 = vmatprep.subr.bf16.mxu0 0
  %3842 = vmatpush2.bf16.msra.mxu0 0
  %3843 = vmatprep.mubr.bf16.mxu0 0
  %3844 = vmatmul.mubr.bf16.gmra.mxu0 %v3276
  %v3845 = vpop.f32.mrf.mxu0
  %v3846 = vadd.f32 %v3805, %v3845
  %v3847 = vpop.f32.mrf.mxu0
  %v3848 = vadd.f32 %v3807, %v3847
  %v3849 = vpop.f32.mrf.mxu0
  %v3850 = vpop.f32.mrf.mxu0
  %3851 = vdwg.mxu0
  %3852 = vmatprep.subr.bf16.mxu0 0
  %3853 = vmatpush1.bf16.msra.mxu0 %v2313
  %3854 = vmatprep.subr.bf16.mxu0 0
  %3855 = vmatpush1.bf16.msra.mxu0 %v2308
  %3856 = vmatprep.subr.bf16.mxu0 0
  %3857 = vmatpush1.bf16.msra.mxu0 %v2303
  %3858 = vmatprep.subr.bf16.mxu0 0
  %3859 = vmatpush1.bf16.msra.mxu0 %v2298
  %3860 = vmatprep.subr.bf16.mxu0 0
  %3861 = vmatpush1.bf16.msra.mxu0 %v2293
  %3862 = vmatprep.subr.bf16.mxu0 0
  %3863 = vmatpush1.bf16.msra.mxu0 %v2288
  %3864 = vmatprep.subr.bf16.mxu0 0
  %3865 = vmatpush1.bf16.msra.mxu0 %v2283
  %3866 = vmatprep.subr.bf16.mxu0 0
  %3867 = vmatpush1.bf16.msra.mxu0 %v2278
  %3868 = vmatprep.subr.bf16.mxu0 0
  %3869 = vmatpush2.bf16.msra.mxu0 %v2353
  %3870 = vmatprep.subr.bf16.mxu0 0
  %3871 = vmatpush2.bf16.msra.mxu0 %v2348
  %3872 = vmatprep.subr.bf16.mxu0 0
  %3873 = vmatpush2.bf16.msra.mxu0 %v2343
  %3874 = vmatprep.subr.bf16.mxu0 0
  %3875 = vmatpush2.bf16.msra.mxu0 %v2338
  %3876 = vmatprep.subr.bf16.mxu0 0
  %3877 = vmatpush2.bf16.msra.mxu0 %v2333
  %3878 = vmatprep.subr.bf16.mxu0 0
  %3879 = vmatpush2.bf16.msra.mxu0 %v2328
  %3880 = vmatprep.subr.bf16.mxu0 0
  %3881 = vmatpush2.bf16.msra.mxu0 %v2323
  %3882 = vmatprep.subr.bf16.mxu0 0
  %3883 = vmatpush2.bf16.msra.mxu0 %v2318
  %3884 = vmatprep.mubr.bf16.mxu0 %v35
  %3885 = vmatmul.mubr.bf16.gmra.mxu0 %v34
  %v3886 = vpop.f32.mrf.mxu0
  %v3887 = vadd.f32 %v668, %v3886
  %v3888 = vpop.f32.mrf.mxu0
  %v3889 = vpop.f32.mrf.mxu0
  %v3890 = vpop.f32.mrf.mxu0
  %3891 = vdwg.mxu0
  %3892 = vmatprep.subr.bf16.mxu0 0
  %3893 = vmatpush1.bf16.msra.mxu0 %v2393
  %3894 = vmatprep.subr.bf16.mxu0 0
  %3895 = vmatpush1.bf16.msra.mxu0 %v2388
  %3896 = vmatprep.subr.bf16.mxu0 0
  %3897 = vmatpush1.bf16.msra.mxu0 %v2383
  %3898 = vmatprep.subr.bf16.mxu0 0
  %3899 = vmatpush1.bf16.msra.mxu0 %v2378
  %3900 = vmatprep.subr.bf16.mxu0 0
  %3901 = vmatpush1.bf16.msra.mxu0 %v2373
  %3902 = vmatprep.subr.bf16.mxu0 0
  %3903 = vmatpush1.bf16.msra.mxu0 %v2368
  %3904 = vmatprep.subr.bf16.mxu0 0
  %3905 = vmatpush1.bf16.msra.mxu0 %v2363
  %3906 = vmatprep.subr.bf16.mxu0 0
  %3907 = vmatpush1.bf16.msra.mxu0 %v2358
  %3908 = vmatprep.subr.bf16.mxu0 0
  %3909 = vmatpush2.bf16.msra.mxu0 %v2433
  %3910 = vmatprep.subr.bf16.mxu0 0
  %3911 = vmatpush2.bf16.msra.mxu0 %v2428
  %3912 = vmatprep.subr.bf16.mxu0 0
  %3913 = vmatpush2.bf16.msra.mxu0 %v2423
  %3914 = vmatprep.subr.bf16.mxu0 0
  %3915 = vmatpush2.bf16.msra.mxu0 %v2418
  %3916 = vmatprep.subr.bf16.mxu0 0
  %3917 = vmatpush2.bf16.msra.mxu0 %v2413
  %3918 = vmatprep.subr.bf16.mxu0 0
  %3919 = vmatpush2.bf16.msra.mxu0 %v2408
  %3920 = vmatprep.subr.bf16.mxu0 0
  %3921 = vmatpush2.bf16.msra.mxu0 %v2403
  %3922 = vmatprep.subr.bf16.mxu0 0
  %3923 = vmatpush2.bf16.msra.mxu0 %v2398
  %3924 = vmatprep.mubr.bf16.mxu0 %v37
  %3925 = vmatmul.mubr.bf16.gmra.mxu0 %v36
  %v3926 = vpop.f32.mrf.mxu0
  %v3927 = vadd.f32 %v3887, %v3926
  %v3928 = vpop.f32.mrf.mxu0
  %v3929 = vpop.f32.mrf.mxu0
  %v3930 = vpop.f32.mrf.mxu0
  %3931 = vdwg.mxu0
  %3932 = vmatprep.subr.bf16.mxu0 0
  %3933 = vmatpush1.bf16.msra.mxu0 %v2473
  %3934 = vmatprep.subr.bf16.mxu0 0
  %3935 = vmatpush1.bf16.msra.mxu0 %v2468
  %3936 = vmatprep.subr.bf16.mxu0 0
  %3937 = vmatpush1.bf16.msra.mxu0 %v2463
  %3938 = vmatprep.subr.bf16.mxu0 0
  %3939 = vmatpush1.bf16.msra.mxu0 %v2458
  %3940 = vmatprep.subr.bf16.mxu0 0
  %3941 = vmatpush1.bf16.msra.mxu0 %v2453
  %3942 = vmatprep.subr.bf16.mxu0 0
  %3943 = vmatpush1.bf16.msra.mxu0 %v2448
  %3944 = vmatprep.subr.bf16.mxu0 0
  %3945 = vmatpush1.bf16.msra.mxu0 %v2443
  %3946 = vmatprep.subr.bf16.mxu0 0
  %3947 = vmatpush1.bf16.msra.mxu0 %v2438
  %3948 = vmatprep.subr.bf16.mxu0 0
  %3949 = vmatpush2.bf16.msra.mxu0 %v2513
  %3950 = vmatprep.subr.bf16.mxu0 0
  %3951 = vmatpush2.bf16.msra.mxu0 %v2508
  %3952 = vmatprep.subr.bf16.mxu0 0
  %3953 = vmatpush2.bf16.msra.mxu0 %v2503
  %3954 = vmatprep.subr.bf16.mxu0 0
  %3955 = vmatpush2.bf16.msra.mxu0 %v2498
  %3956 = vmatprep.subr.bf16.mxu0 0
  %3957 = vmatpush2.bf16.msra.mxu0 %v2493
  %3958 = vmatprep.subr.bf16.mxu0 0
  %3959 = vmatpush2.bf16.msra.mxu0 %v2488
  %3960 = vmatprep.subr.bf16.mxu0 0
  %3961 = vmatpush2.bf16.msra.mxu0 %v2483
  %3962 = vmatprep.subr.bf16.mxu0 0
  %3963 = vmatpush2.bf16.msra.mxu0 %v2478
  %3964 = vmatprep.mubr.bf16.mxu0 %v39
  %3965 = vmatmul.mubr.bf16.gmra.mxu0 %v38
  %v3966 = vpop.f32.mrf.mxu0
  %v3967 = vadd.f32 %v3927, %v3966
  %v3968 = vpop.f32.mrf.mxu0
  %v3969 = vpop.f32.mrf.mxu0
  %v3970 = vpop.f32.mrf.mxu0
  %3971 = vdwg.mxu0
  %3972 = vmatprep.subr.bf16.mxu0 0
  %3973 = vmatpush1.bf16.msra.mxu0 %v2553
  %3974 = vmatprep.subr.bf16.mxu0 0
  %3975 = vmatpush1.bf16.msra.mxu0 %v2548
  %3976 = vmatprep.subr.bf16.mxu0 0
  %3977 = vmatpush1.bf16.msra.mxu0 %v2543
  %3978 = vmatprep.subr.bf16.mxu0 0
  %3979 = vmatpush1.bf16.msra.mxu0 %v2538
  %3980 = vmatprep.subr.bf16.mxu0 0
  %3981 = vmatpush1.bf16.msra.mxu0 %v2533
  %3982 = vmatprep.subr.bf16.mxu0 0
  %3983 = vmatpush1.bf16.msra.mxu0 %v2528
  %3984 = vmatprep.subr.bf16.mxu0 0
  %3985 = vmatpush1.bf16.msra.mxu0 %v2523
  %3986 = vmatprep.subr.bf16.mxu0 0
  %3987 = vmatpush1.bf16.msra.mxu0 %v2518
  %3988 = vmatprep.subr.bf16.mxu0 0
  %3989 = vmatpush2.bf16.msra.mxu0 %v2593
  %3990 = vmatprep.subr.bf16.mxu0 0
  %3991 = vmatpush2.bf16.msra.mxu0 %v2588
  %3992 = vmatprep.subr.bf16.mxu0 0
  %3993 = vmatpush2.bf16.msra.mxu0 %v2583
  %3994 = vmatprep.subr.bf16.mxu0 0
  %3995 = vmatpush2.bf16.msra.mxu0 %v2578
  %3996 = vmatprep.subr.bf16.mxu0 0
  %3997 = vmatpush2.bf16.msra.mxu0 %v2573
  %3998 = vmatprep.subr.bf16.mxu0 0
  %3999 = vmatpush2.bf16.msra.mxu0 %v2568
  %4000 = vmatprep.subr.bf16.mxu0 0
  %4001 = vmatpush2.bf16.msra.mxu0 %v2563
  %4002 = vmatprep.subr.bf16.mxu0 0
  %4003 = vmatpush2.bf16.msra.mxu0 %v2558
  %4004 = vmatprep.mubr.bf16.mxu0 %v41
  %4005 = vmatmul.mubr.bf16.gmra.mxu0 %v40
  %v4006 = vpop.f32.mrf.mxu0
  %v4007 = vadd.f32 %v3967, %v4006
  %v4008 = vpop.f32.mrf.mxu0
  %v4009 = vpop.f32.mrf.mxu0
  %v4010 = vpop.f32.mrf.mxu0
  %4011 = vdwg.mxu0
  %4012 = vmatprep.subr.bf16.mxu0 0
  %4013 = vmatpush1.bf16.msra.mxu0 %v2633
  %4014 = vmatprep.subr.bf16.mxu0 0
  %4015 = vmatpush1.bf16.msra.mxu0 %v2628
  %4016 = vmatprep.subr.bf16.mxu0 0
  %4017 = vmatpush1.bf16.msra.mxu0 %v2623
  %4018 = vmatprep.subr.bf16.mxu0 0
  %4019 = vmatpush1.bf16.msra.mxu0 %v2618
  %4020 = vmatprep.subr.bf16.mxu0 0
  %4021 = vmatpush1.bf16.msra.mxu0 %v2613
  %4022 = vmatprep.subr.bf16.mxu0 0
  %4023 = vmatpush1.bf16.msra.mxu0 %v2608
  %4024 = vmatprep.subr.bf16.mxu0 0
  %4025 = vmatpush1.bf16.msra.mxu0 %v2603
  %4026 = vmatprep.subr.bf16.mxu0 0
  %4027 = vmatpush1.bf16.msra.mxu0 %v2598
  %4028 = vmatprep.subr.bf16.mxu0 0
  %4029 = vmatpush2.bf16.msra.mxu0 %v2673
  %4030 = vmatprep.subr.bf16.mxu0 0
  %4031 = vmatpush2.bf16.msra.mxu0 %v2668
  %4032 = vmatprep.subr.bf16.mxu0 0
  %4033 = vmatpush2.bf16.msra.mxu0 %v2663
  %4034 = vmatprep.subr.bf16.mxu0 0
  %4035 = vmatpush2.bf16.msra.mxu0 %v2658
  %4036 = vmatprep.subr.bf16.mxu0 0
  %4037 = vmatpush2.bf16.msra.mxu0 %v2653
  %4038 = vmatprep.subr.bf16.mxu0 0
  %4039 = vmatpush2.bf16.msra.mxu0 %v2648
  %4040 = vmatprep.subr.bf16.mxu0 0
  %4041 = vmatpush2.bf16.msra.mxu0 %v2643
  %4042 = vmatprep.subr.bf16.mxu0 0
  %4043 = vmatpush2.bf16.msra.mxu0 %v2638
  %4044 = vmatprep.mubr.bf16.mxu0 %v43
  %4045 = vmatmul.mubr.bf16.gmra.mxu0 %v42
  %v4046 = vpop.f32.mrf.mxu0
  %v4047 = vadd.f32 %v4007, %v4046
  %v4048 = vpop.f32.mrf.mxu0
  %v4049 = vpop.f32.mrf.mxu0
  %v4050 = vpop.f32.mrf.mxu0
  %4051 = vdwg.mxu0
  %4052 = vmatprep.subr.bf16.mxu0 0
  %4053 = vmatpush1.bf16.msra.mxu0 %v2713
  %4054 = vmatprep.subr.bf16.mxu0 0
  %4055 = vmatpush1.bf16.msra.mxu0 %v2708
  %4056 = vmatprep.subr.bf16.mxu0 0
  %4057 = vmatpush1.bf16.msra.mxu0 %v2703
  %4058 = vmatprep.subr.bf16.mxu0 0
  %4059 = vmatpush1.bf16.msra.mxu0 %v2698
  %4060 = vmatprep.subr.bf16.mxu0 0
  %4061 = vmatpush1.bf16.msra.mxu0 %v2693
  %4062 = vmatprep.subr.bf16.mxu0 0
  %4063 = vmatpush1.bf16.msra.mxu0 %v2688
  %4064 = vmatprep.subr.bf16.mxu0 0
  %4065 = vmatpush1.bf16.msra.mxu0 %v2683
  %4066 = vmatprep.subr.bf16.mxu0 0
  %4067 = vmatpush1.bf16.msra.mxu0 %v2678
  %4068 = vmatprep.subr.bf16.mxu0 0
  %4069 = vmatpush2.bf16.msra.mxu0 %v2753
  %4070 = vmatprep.subr.bf16.mxu0 0
  %4071 = vmatpush2.bf16.msra.mxu0 %v2748
  %4072 = vmatprep.subr.bf16.mxu0 0
  %4073 = vmatpush2.bf16.msra.mxu0 %v2743
  %4074 = vmatprep.subr.bf16.mxu0 0
  %4075 = vmatpush2.bf16.msra.mxu0 %v2738
  %4076 = vmatprep.subr.bf16.mxu0 0
  %4077 = vmatpush2.bf16.msra.mxu0 %v2733
  %4078 = vmatprep.subr.bf16.mxu0 0
  %4079 = vmatpush2.bf16.msra.mxu0 %v2728
  %4080 = vmatprep.subr.bf16.mxu0 0
  %4081 = vmatpush2.bf16.msra.mxu0 %v2723
  %4082 = vmatprep.subr.bf16.mxu0 0
  %4083 = vmatpush2.bf16.msra.mxu0 %v2718
  %4084 = vmatprep.mubr.bf16.mxu0 %v45
  %4085 = vmatmul.mubr.bf16.gmra.mxu0 %v44
  %v4086 = vpop.f32.mrf.mxu0
  %v4087 = vadd.f32 %v4047, %v4086
  %v4088 = vpop.f32.mrf.mxu0
  %v4089 = vpop.f32.mrf.mxu0
  %v4090 = vpop.f32.mrf.mxu0
  %4091 = vdwg.mxu0
  %4092 = vmatprep.subr.bf16.mxu0 0
  %4093 = vmatpush1.bf16.msra.mxu0 0
  %4094 = vmatprep.subr.bf16.mxu0 0
  %4095 = vmatpush1.bf16.msra.mxu0 0
  %4096 = vmatprep.subr.bf16.mxu0 0
  %4097 = vmatpush1.bf16.msra.mxu0 0
  %4098 = vmatprep.subr.bf16.mxu0 0
  %4099 = vmatpush1.bf16.msra.mxu0 0
  %4100 = vmatprep.subr.bf16.mxu0 0
  %4101 = vmatpush1.bf16.msra.mxu0 %v2773
  %4102 = vmatprep.subr.bf16.mxu0 0
  %4103 = vmatpush1.bf16.msra.mxu0 %v2768
  %4104 = vmatprep.subr.bf16.mxu0 0
  %4105 = vmatpush1.bf16.msra.mxu0 %v2763
  %4106 = vmatprep.subr.bf16.mxu0 0
  %4107 = vmatpush1.bf16.msra.mxu0 %v2758
  %4108 = vmatprep.subr.bf16.mxu0 0
  %4109 = vmatpush2.bf16.msra.mxu0 0
  %4110 = vmatprep.subr.bf16.mxu0 0
  %4111 = vmatpush2.bf16.msra.mxu0 0
  %4112 = vmatprep.subr.bf16.mxu0 0
  %4113 = vmatpush2.bf16.msra.mxu0 0
  %4114 = vmatprep.subr.bf16.mxu0 0
  %4115 = vmatpush2.bf16.msra.mxu0 0
  %4116 = vmatprep.subr.bf16.mxu0 0
  %4117 = vmatpush2.bf16.msra.mxu0 0
  %4118 = vmatprep.subr.bf16.mxu0 0
  %4119 = vmatpush2.bf16.msra.mxu0 0
  %4120 = vmatprep.subr.bf16.mxu0 0
  %4121 = vmatpush2.bf16.msra.mxu0 0
  %4122 = vmatprep.subr.bf16.mxu0 0
  %4123 = vmatpush2.bf16.msra.mxu0 0
  %4124 = vmatprep.mubr.bf16.mxu0 0
  %4125 = vmatmul.mubr.bf16.gmra.mxu0 %v3276
  %v4126 = vpop.f32.mrf.mxu0
  %v4127 = vadd.f32 %v4087, %v4126
  %v4128 = vpop.f32.mrf.mxu0
  %v4129 = vpop.f32.mrf.mxu0
  %v4130 = vpop.f32.mrf.mxu0
  %4131 = vdwg.mxu0
  %v4132 = vtanh.pop %v3559
  %v4133 = vtanh.pop %v3561
  %v4134 = vtanh.pop %v3846
  %v4135 = vtanh.pop %v3848
  %v4136 = vtanh.pop %v4127
  %v4137 = vpack.c.bf16 %v4132, %v4132
  %v4138 = vpack.c.bf16 %v4133, %v4133
  %v4139 = vpack.c.bf16 %v4134, %v4134
  %v4140 = vpack.c.bf16 %v4135, %v4135
  %v4141 = vpack.c.bf16 %v4136, %v4136
  %v4142 = vld [vmem:[%s3] sm:$0xf]
  %v4143 = vld [vmem:[%s3 + $0x4] sm:$0xf]
  %v4144 = vld [vmem:[%s3 + $0x8] sm:$0xf]
  %v4145 = vld [vmem:[%s3 + $0xc] sm:$0xf]
  %v4146 = vld [vmem:[%s3 + $0x10] sm:$0xf]
  %v4147 = vld [vmem:[%s3 + $0x14] sm:$0xf]
  %v4148 = vld [vmem:[%s3 + $0x18] sm:$0xf]
  %v4149 = vld [vmem:[%s3 + $0x1c] sm:$0xf]
  %v4150 = vld [vmem:[%s3 + $0x20] sm:$0xf]
  %v4151 = vld [vmem:[%s3 + $0x24] sm:$0xf]
  %v4152 = vld [vmem:[%s3 + $0x28] sm:$0xf]
  %v4153 = vld [vmem:[%s3 + $0x2c] sm:$0xf]
  %v4154 = vld [vmem:[%s3 + $0x30] sm:$0xf]
  %v4155 = vld [vmem:[%s3 + $0x34] sm:$0xf]
  %v4156 = vld [vmem:[%s3 + $0x38] sm:$0xf]
  %v4157 = vld [vmem:[%s3 + $0x3c] sm:$0xf]
  %v4158 = vld [vmem:[%s3 + $0x40] sm:$0xf]
  %v4159 = vld [vmem:[%s3 + $0x44] sm:$0xf]
  %v4160 = vld [vmem:[%s3 + $0x48] sm:$0xf]
  %v4161 = vld [vmem:[%s3 + $0x4c] sm:$0xf]
  %v4162 = vld [vmem:[%s3 + $0x50] sm:$0xf]
  %v4163 = vld [vmem:[%s3 + $0x54] sm:$0xf]
  %v4164 = vld [vmem:[%s3 + $0x58] sm:$0xf]
  %v4165 = vld [vmem:[%s3 + $0x5c] sm:$0xf]
  %v4166 = vld [vmem:[%s3 + $0x60] sm:$0xf]
  %v4167 = vld [vmem:[%s3 + $0x64] sm:$0xf]
  %v4168 = vld [vmem:[%s3 + $0x68] sm:$0xf]
  %v4169 = vld [vmem:[%s3 + $0x6c] sm:$0xf]
  %v4170 = vld [vmem:[%s3 + $0x70] sm:$0xf]
  %v4171 = vld [vmem:[%s3 + $0x74] sm:$0xf]
  %v4172 = vld [vmem:[%s3 + $0x78] sm:$0xf]
  %v4173 = vld [vmem:[%s3 + $0x7c] sm:$0xf]
  %v4174 = vld [vmem:[%s3 + $0x80] sm:$0xf]
  %v4175 = vld [vmem:[%s3 + $0x84] sm:$0xf]
  %v4176 = vld [vmem:[%s3 + $0x88] sm:$0xf]
  %v4177 = vld [vmem:[%s3 + $0x8c] sm:$0xf]
  %v4178 = vld [vmem:[%s3 + $0x90] sm:$0xf]
  %v4179 = vld [vmem:[%s3 + $0x94] sm:$0xf]
  %v4180 = vld [vmem:[%s3 + $0x98] sm:$0xf]
  %v4181 = vld [vmem:[%s3 + $0x9c] sm:$0xf]
  %v4182 = vld [vmem:[%s3 + $0xa0] sm:$0xf]
  %v4183 = vld [vmem:[%s3 + $0xa4] sm:$0xf]
  %v4184 = vld [vmem:[%s3 + $0xa8] sm:$0xf]
  %v4185 = vld [vmem:[%s3 + $0xac] sm:$0xf]
  %v4186 = vld [vmem:[%s3 + $0xb0] sm:$0xf]
  %v4187 = vld [vmem:[%s3 + $0xb4] sm:$0xf]
  %v4188 = vld [vmem:[%s3 + $0xb8] sm:$0xf]
  %v4189 = vld [vmem:[%s3 + $0xbc] sm:$0xf]
  %v4190 = vld [vmem:[%s3 + $0xc0] sm:$0xf]
  %v4191 = vld [vmem:[%s3 + $0xc4] sm:$0xf]
  %v4192 = vld [vmem:[%s3 + $0xc8] sm:$0xf]
  %v4193 = vld [vmem:[%s3 + $0xcc] sm:$0xf]
  %v4194 = vld [vmem:[%s3 + $0xd0] sm:$0xf]
  %v4195 = vld [vmem:[%s3 + $0xd4] sm:$0xf]
  %v4196 = vld [vmem:[%s3 + $0xd8] sm:$0xf]
  %v4197 = vld [vmem:[%s3 + $0xdc] sm:$0xf]
  %v4198 = vld [vmem:[%s3 + $0xe0] sm:$0xf]
  %v4199 = vld [vmem:[%s3 + $0xe4] sm:$0xf]
  %v4200 = vld [vmem:[%s3 + $0xe8] sm:$0xf]
  %v4201 = vld [vmem:[%s3 + $0xec] sm:$0xf]
  %v4202 = vld [vmem:[%s3 + $0xf0] sm:$0xf]
  %v4203 = vld [vmem:[%s3 + $0xf4] sm:$0xf]
  %v4204 = vld [vmem:[%s3 + $0xf8] sm:$0xf]
  %v4205 = vld [vmem:[%s3 + $0xfc] sm:$0xf]
  %v4206 = vld [vmem:[%s3 + $0x100] sm:$0xf]
  %v4207 = vld [vmem:[%s3 + $0x104] sm:$0xf]
  %v4208 = vld [vmem:[%s3 + $0x108] sm:$0xf]
  %v4209 = vld [vmem:[%s3 + $0x10c] sm:$0xf]
  %v4210 = vld [vmem:[%s3 + $0x110] sm:$0xf]
  %v4211 = vld [vmem:[%s3 + $0x114] sm:$0xf]
  %v4212 = vld [vmem:[%s3 + $0x118] sm:$0xf]
  %v4213 = vld [vmem:[%s3 + $0x11c] sm:$0xf]
  %v4214 = vld [vmem:[%s3 + $0x120] sm:$0xf]
  %v4215 = vld [vmem:[%s3 + $0x124] sm:$0xf]
  %v4216 = vld [vmem:[%s3 + $0x128] sm:$0xf]
  %v4217 = vld [vmem:[%s3 + $0x12c] sm:$0xf]
  %v4218 = vld [vmem:[%s3 + $0x130] sm:$0xf]
  %v4219 = vld [vmem:[%s3 + $0x134] sm:$0xf]
  %v4220 = vld [vmem:[%s3 + $0x138] sm:$0xf]
  %v4221 = vld [vmem:[%s3 + $0x13c] sm:$0xf]
  %v4222 = vld [vmem:[%s4] sm:$0x1]
  %v4224 = vlaneseq
  %v4225 = vshrl.u32 %v4224, 7
  %v4226 = vsub.s32 0, %v4225
  %v4227 = vrot.slane %v4222, %v4226
  %v4309 = vunpack.c.l.b16 %v4142
  %v4310 = vunpack.c.l.b16 %v4143
  %v4311 = vunpack.c.l.b16 %v4144
  %v4312 = vunpack.c.l.b16 %v4145
  %v4313 = vunpack.c.l.b16 %v4146
  %v4314 = vunpack.c.l.b16 %v4147
  %v4315 = vunpack.c.l.b16 %v4148
  %v4316 = vunpack.c.l.b16 %v4149
  %v4317 = vunpack.c.l.b16 %v4150
  %v4318 = vunpack.c.l.b16 %v4151
  %v4319 = vunpack.c.l.b16 %v4152
  %v4320 = vunpack.c.l.b16 %v4153
  %v4321 = vunpack.c.l.b16 %v4154
  %v4322 = vunpack.c.l.b16 %v4155
  %v4323 = vunpack.c.l.b16 %v4156
  %v4324 = vunpack.c.l.b16 %v4157
  %v4325 = vunpack.c.l.b16 %v4158
  %v4326 = vunpack.c.l.b16 %v4159
  %v4327 = vunpack.c.l.b16 %v4160
  %v4328 = vunpack.c.l.b16 %v4161
  %v4329 = vunpack.c.l.b16 %v4162
  %v4330 = vunpack.c.l.b16 %v4163
  %v4331 = vunpack.c.l.b16 %v4164
  %v4332 = vunpack.c.l.b16 %v4165
  %v4333 = vunpack.c.l.b16 %v4166
  %v4334 = vunpack.c.l.b16 %v4167
  %v4335 = vunpack.c.l.b16 %v4168
  %v4336 = vunpack.c.l.b16 %v4169
  %v4337 = vunpack.c.l.b16 %v4170
  %v4338 = vunpack.c.l.b16 %v4171
  %v4339 = vunpack.c.l.b16 %v4172
  %v4340 = vunpack.c.l.b16 %v4173
  %v4341 = vunpack.c.l.b16 %v4174
  %v4342 = vunpack.c.l.b16 %v4175
  %v4343 = vunpack.c.l.b16 %v4176
  %v4344 = vunpack.c.l.b16 %v4177
  %v4345 = vunpack.c.l.b16 %v4178
  %v4346 = vunpack.c.l.b16 %v4179
  %v4347 = vunpack.c.l.b16 %v4180
  %v4348 = vunpack.c.l.b16 %v4181
  %v4349 = vunpack.c.l.b16 %v4182
  %v4350 = vunpack.c.l.b16 %v4183
  %v4351 = vunpack.c.l.b16 %v4184
  %v4352 = vunpack.c.l.b16 %v4185
  %v4353 = vunpack.c.l.b16 %v4186
  %v4354 = vunpack.c.l.b16 %v4187
  %v4355 = vunpack.c.l.b16 %v4188
  %v4356 = vunpack.c.l.b16 %v4189
  %v4357 = vunpack.c.l.b16 %v4190
  %v4358 = vunpack.c.l.b16 %v4191
  %v4359 = vunpack.c.l.b16 %v4192
  %v4360 = vunpack.c.l.b16 %v4193
  %v4361 = vunpack.c.l.b16 %v4194
  %v4362 = vunpack.c.l.b16 %v4195
  %v4363 = vunpack.c.l.b16 %v4196
  %v4364 = vunpack.c.l.b16 %v4197
  %v4365 = vunpack.c.l.b16 %v4198
  %v4366 = vunpack.c.l.b16 %v4199
  %v4367 = vunpack.c.l.b16 %v4200
  %v4368 = vunpack.c.l.b16 %v4201
  %v4369 = vunpack.c.l.b16 %v4202
  %v4370 = vunpack.c.l.b16 %v4203
  %v4371 = vunpack.c.l.b16 %v4204
  %v4372 = vunpack.c.l.b16 %v4205
  %v4373 = vunpack.c.l.b16 %v4206
  %v4374 = vunpack.c.l.b16 %v4207
  %v4375 = vunpack.c.l.b16 %v4208
  %v4376 = vunpack.c.l.b16 %v4209
  %v4377 = vunpack.c.l.b16 %v4210
  %v4378 = vunpack.c.l.b16 %v4211
  %v4379 = vunpack.c.l.b16 %v4212
  %v4380 = vunpack.c.l.b16 %v4213
  %v4381 = vunpack.c.l.b16 %v4214
  %v4382 = vunpack.c.l.b16 %v4215
  %v4383 = vunpack.c.l.b16 %v4216
  %v4384 = vunpack.c.l.b16 %v4217
  %v4385 = vunpack.c.l.b16 %v4218
  %v4386 = vunpack.c.l.b16 %v4219
  %v4387 = vunpack.c.l.b16 %v4220
  %v4388 = vunpack.c.l.b16 %v4221
  %v4389 = vpack.c.b16 %v4310, %v4309
  %v4390 = vpack.c.b16 %v4312, %v4311
  %v4391 = vpack.c.b16 %v4314, %v4313
  %v4392 = vpack.c.b16 %v4316, %v4315
  %v4393 = vpack.c.b16 %v4318, %v4317
  %v4394 = vpack.c.b16 %v4320, %v4319
  %v4395 = vpack.c.b16 %v4322, %v4321
  %v4396 = vpack.c.b16 %v4324, %v4323
  %v4397 = vpack.c.b16 %v4326, %v4325
  %v4398 = vpack.c.b16 %v4328, %v4327
  %v4399 = vpack.c.b16 %v4330, %v4329
  %v4400 = vpack.c.b16 %v4332, %v4331
  %v4401 = vpack.c.b16 %v4334, %v4333
  %v4402 = vpack.c.b16 %v4336, %v4335
  %v4403 = vpack.c.b16 %v4338, %v4337
  %v4404 = vpack.c.b16 %v4340, %v4339
  %v4405 = vpack.c.b16 %v4342, %v4341
  %v4406 = vpack.c.b16 %v4344, %v4343
  %v4407 = vpack.c.b16 %v4346, %v4345
  %v4408 = vpack.c.b16 %v4348, %v4347
  %v4409 = vpack.c.b16 %v4350, %v4349
  %v4410 = vpack.c.b16 %v4352, %v4351
  %v4411 = vpack.c.b16 %v4354, %v4353
  %v4412 = vpack.c.b16 %v4356, %v4355
  %v4413 = vpack.c.b16 %v4358, %v4357
  %v4414 = vpack.c.b16 %v4360, %v4359
  %v4415 = vpack.c.b16 %v4362, %v4361
  %v4416 = vpack.c.b16 %v4364, %v4363
  %v4417 = vpack.c.b16 %v4366, %v4365
  %v4418 = vpack.c.b16 %v4368, %v4367
  %v4419 = vpack.c.b16 %v4370, %v4369
  %v4420 = vpack.c.b16 %v4372, %v4371
  %v4421 = vpack.c.b16 %v4374, %v4373
  %v4422 = vpack.c.b16 %v4376, %v4375
  %v4423 = vpack.c.b16 %v4378, %v4377
  %v4424 = vpack.c.b16 %v4380, %v4379
  %v4425 = vpack.c.b16 %v4382, %v4381
  %v4426 = vpack.c.b16 %v4384, %v4383
  %v4427 = vpack.c.b16 %v4386, %v4385
  %v4428 = vpack.c.b16 %v4388, %v4387
  %4469 = vmatprep.subr.bf16.mxu0 0
  %4470 = vmatpush1.bf16.msra.mxu0 %v4396
  %4471 = vmatprep.subr.bf16.mxu0 0
  %4472 = vmatpush1.bf16.msra.mxu0 %v4395
  %4473 = vmatprep.subr.bf16.mxu0 0
  %4474 = vmatpush1.bf16.msra.mxu0 %v4394
  %4475 = vmatprep.subr.bf16.mxu0 0
  %4476 = vmatpush1.bf16.msra.mxu0 %v4393
  %4477 = vmatprep.subr.bf16.mxu0 0
  %4478 = vmatpush1.bf16.msra.mxu0 %v4392
  %4479 = vmatprep.subr.bf16.mxu0 0
  %4480 = vmatpush1.bf16.msra.mxu0 %v4391
  %4481 = vmatprep.subr.bf16.mxu0 0
  %4482 = vmatpush1.bf16.msra.mxu0 %v4390
  %4483 = vmatprep.subr.bf16.mxu0 0
  %4484 = vmatpush1.bf16.msra.mxu0 %v4389
  %4485 = vmatprep.subr.bf16.mxu0 0
  %4486 = vmatpush2.bf16.msra.mxu0 %v4404
  %4487 = vmatprep.subr.bf16.mxu0 0
  %4488 = vmatpush2.bf16.msra.mxu0 %v4403
  %4489 = vmatprep.subr.bf16.mxu0 0
  %4490 = vmatpush2.bf16.msra.mxu0 %v4402
  %4491 = vmatprep.subr.bf16.mxu0 0
  %4492 = vmatpush2.bf16.msra.mxu0 %v4401
  %4493 = vmatprep.subr.bf16.mxu0 0
  %4494 = vmatpush2.bf16.msra.mxu0 %v4400
  %4495 = vmatprep.subr.bf16.mxu0 0
  %4496 = vmatpush2.bf16.msra.mxu0 %v4399
  %4497 = vmatprep.subr.bf16.mxu0 0
  %4498 = vmatpush2.bf16.msra.mxu0 %v4398
  %4499 = vmatprep.subr.bf16.mxu0 0
  %4500 = vmatpush2.bf16.msra.mxu0 %v4397
  %4501 = vmatprep.mubr.bf16.mxu0 %v4138
  %4502 = vmatmul.mubr.bf16.gmra.mxu0 %v4137
  %v4503 = vpop.f32.mrf.mxu0
  %v4504 = vadd.f32 %v4227, %v4503
  %v4505 = vpop.f32.mrf.mxu0
  %v4506 = vpop.f32.mrf.mxu0
  %v4507 = vpop.f32.mrf.mxu0
  %4508 = vdwg.mxu0
  %4509 = vmatprep.subr.bf16.mxu0 0
  %4510 = vmatpush1.bf16.msra.mxu0 %v4412
  %4511 = vmatprep.subr.bf16.mxu0 0
  %4512 = vmatpush1.bf16.msra.mxu0 %v4411
  %4513 = vmatprep.subr.bf16.mxu0 0
  %4514 = vmatpush1.bf16.msra.mxu0 %v4410
  %4515 = vmatprep.subr.bf16.mxu0 0
  %4516 = vmatpush1.bf16.msra.mxu0 %v4409
  %4517 = vmatprep.subr.bf16.mxu0 0
  %4518 = vmatpush1.bf16.msra.mxu0 %v4408
  %4519 = vmatprep.subr.bf16.mxu0 0
  %4520 = vmatpush1.bf16.msra.mxu0 %v4407
  %4521 = vmatprep.subr.bf16.mxu0 0
  %4522 = vmatpush1.bf16.msra.mxu0 %v4406
  %4523 = vmatprep.subr.bf16.mxu0 0
  %4524 = vmatpush1.bf16.msra.mxu0 %v4405
  %4525 = vmatprep.subr.bf16.mxu0 0
  %4526 = vmatpush2.bf16.msra.mxu0 %v4420
  %4527 = vmatprep.subr.bf16.mxu0 0
  %4528 = vmatpush2.bf16.msra.mxu0 %v4419
  %4529 = vmatprep.subr.bf16.mxu0 0
  %4530 = vmatpush2.bf16.msra.mxu0 %v4418
  %4531 = vmatprep.subr.bf16.mxu0 0
  %4532 = vmatpush2.bf16.msra.mxu0 %v4417
  %4533 = vmatprep.subr.bf16.mxu0 0
  %4534 = vmatpush2.bf16.msra.mxu0 %v4416
  %4535 = vmatprep.subr.bf16.mxu0 0
  %4536 = vmatpush2.bf16.msra.mxu0 %v4415
  %4537 = vmatprep.subr.bf16.mxu0 0
  %4538 = vmatpush2.bf16.msra.mxu0 %v4414
  %4539 = vmatprep.subr.bf16.mxu0 0
  %4540 = vmatpush2.bf16.msra.mxu0 %v4413
  %4541 = vmatprep.mubr.bf16.mxu0 %v4140
  %4542 = vmatmul.mubr.bf16.gmra.mxu0 %v4139
  %v4543 = vpop.f32.mrf.mxu0
  %v4544 = vadd.f32 %v4504, %v4543
  %v4545 = vpop.f32.mrf.mxu0
  %v4546 = vpop.f32.mrf.mxu0
  %v4547 = vpop.f32.mrf.mxu0
  %4548 = vdwg.mxu0
  %4549 = vmatprep.subr.bf16.mxu0 0
  %4550 = vmatpush1.bf16.msra.mxu0 %v4428
  %4551 = vmatprep.subr.bf16.mxu0 0
  %4552 = vmatpush1.bf16.msra.mxu0 %v4427
  %4553 = vmatprep.subr.bf16.mxu0 0
  %4554 = vmatpush1.bf16.msra.mxu0 %v4426
  %4555 = vmatprep.subr.bf16.mxu0 0
  %4556 = vmatpush1.bf16.msra.mxu0 %v4425
  %4557 = vmatprep.subr.bf16.mxu0 0
  %4558 = vmatpush1.bf16.msra.mxu0 %v4424
  %4559 = vmatprep.subr.bf16.mxu0 0
  %4560 = vmatpush1.bf16.msra.mxu0 %v4423
  %4561 = vmatprep.subr.bf16.mxu0 0
  %4562 = vmatpush1.bf16.msra.mxu0 %v4422
  %4563 = vmatprep.subr.bf16.mxu0 0
  %4564 = vmatpush1.bf16.msra.mxu0 %v4421
  %4565 = vmatprep.subr.bf16.mxu0 0
  %4566 = vmatpush2.bf16.msra.mxu0 0
  %4567 = vmatprep.subr.bf16.mxu0 0
  %4568 = vmatpush2.bf16.msra.mxu0 0
  %4569 = vmatprep.subr.bf16.mxu0 0
  %4570 = vmatpush2.bf16.msra.mxu0 0
  %4571 = vmatprep.subr.bf16.mxu0 0
  %4572 = vmatpush2.bf16.msra.mxu0 0
  %4573 = vmatprep.subr.bf16.mxu0 0
  %4574 = vmatpush2.bf16.msra.mxu0 0
  %4575 = vmatprep.subr.bf16.mxu0 0
  %4576 = vmatpush2.bf16.msra.mxu0 0
  %4577 = vmatprep.subr.bf16.mxu0 0
  %4578 = vmatpush2.bf16.msra.mxu0 0
  %4579 = vmatprep.subr.bf16.mxu0 0
  %4580 = vmatpush2.bf16.msra.mxu0 0
  %4581 = vmatprep.mubr.bf16.mxu0 0
  %4582 = vmatmul.mubr.bf16.gmra.mxu0 %v4141
  %v4583 = vpop.f32.mrf.mxu0
  %v4584 = vadd.f32 %v4544, %v4583
  %v4585 = vpop.f32.mrf.mxu0
  %v4586 = vpop.f32.mrf.mxu0
  %v4587 = vpop.f32.mrf.mxu0
  %4588 = vdwg.mxu0
  %vm4589 = vcmask 80896
  %v4590 = vsel %vm4589, %v4584, -inf
  %4591 = vmax.xlane.f32.xlu0 %v4590
  %v4592 = vpop.xlane.xlu0 %4591
  %v4593 = vsub.f32 %v4584, %v4592
  %v4594 = vmul.f32 %v4593, 1.442695
  %v4595 = vpow.pop %v4594
  %v4596 = vsel %vm4589, %v4595, 0.0
  %4597 = vadd.xlane.f32.xlu0 %v4596
  %v4598 = vpop.xlane.xlu0 %4597
  %v4599 = vrcp.pop %v4598
  %v4600 = vmul.f32 %v4595, %v4599
  %4601 = vst.msk [vmem:[%s5] sm:$0xff] %vm4589, %v4600
  // Predicated region
  $region22: #{self_onn_forward.5} parent=0 // pred_check
    _
  $region23: #{self_onn_forward.5} parent=0 // pred_check_branch
    %4603 = sbr.rel (0) target = $region25
  $region24: #{self_onn_forward.5} parent=0 // pred_region
    _
  $region25: #{self_onn_forward.5} parent=0 // pred_fallthru
    _
  // Predicated region
  $region26: #{self_onn_forward.5} parent=0 // pred_check
    _
  $region27: #{self_onn_forward.5} parent=0 // pred_check_branch
    %4605 = sbr.rel (0) target = $region29
  $region28: #{self_onn_forward.5} parent=0 // pred_region
    _
  $region29: #{self_onn_forward.5} parent=0 // pred_fallthru
    _

</llo_original>
